<compile_context>
chip_gen: v7x
topology: tpu7x:2x2x1
jax: 0.10.0
libtpu: 0.0.40
codegen_flags: <defaults>
</compile_context>

<pallas_src>
import math

import jax
import jax.numpy as jnp
from jax import lax
from jax.experimental import pallas as pl
from jax.experimental.pallas import tpu as pltpu
from jax.scipy.special import erf as _erf_ref

NODES = [3, 64, 64, 64, 64, 64, 64, 2]   # [3] + nodes_hidden_layers + [2]
PARAM_SPACE = (0.0, 0.6)

PACK = 2                       # samples packed per 128-lane row
REAL_HID = 64                  # true hidden width
HID = PACK * REAL_HID          # 128 lanes = 2 x 64 real hidden units
SAMPLE_IN = 8                  # compact input lanes per sample (x, param, pad)
SAMPLE_OUT = 8                 # compact output lanes per sample
IN_PAD = PACK * SAMPLE_IN      # 16-lane packed input row
OUT_PAD = PACK * SAMPLE_OUT    # 16-lane packed output row
TB_MAX = 1024                  # max packed rows per grid step (= 2048 samples)


def _ceil_div(a, b):
    return -(-a // b)


# ----------------------------------------------------------------------------
# Exact erf: the Eigen/XLA float32 rational approximation
# erf(x) ~= x * P(x^2) / Q(x^2), with x clamped so the result stays in [-1, 1].
# Accurate to a few float32 ulps (checked against jax.scipy.special.erf below).
# ----------------------------------------------------------------------------
_ERF_P = (-2.72614225801306e-10, 2.77068142495902e-08, -2.10102402082508e-06,
          -5.69250639462346e-05, -7.34990630326855e-04, -2.95459980854025e-03,
          -1.60960333262415e-02)
_ERF_Q = (-1.45660718464996e-05, -2.13374055278905e-04, -1.68282697438203e-03,
          -7.37332916720468e-03, -1.42647390514189e-02)
_ERF_CLAMP = 3.832506856900711


def _recip_exact(q):
    # Plain divide; used for the out-of-kernel coefficient validation.
    return 1.0 / q


def _recip_eup(q):
    # EUP approximate reciprocal (separate VLIW slot from the VALU) refined
    # with one Newton step, so precision stays ~float32 while the seed is
    # off the VALU critical path.
    r = pl.reciprocal(q, approx=True)
    return r * (2.0 - q * r)


def _erf_rational(x, recip):
    x = jnp.clip(x, -_ERF_CLAMP, _ERF_CLAMP)
    x2 = x * x
    p = jnp.full_like(x2, _ERF_P[0])
    for c in _ERF_P[1:]:
        p = p * x2 + c
    q = jnp.full_like(x2, _ERF_Q[0])
    for c in _ERF_Q[1:]:
        q = q * x2 + c
    return x * p * recip(q)


def _gelu_exact(x, recip):
    # torch.nn.GELU() default: x * 0.5 * (1 + erf(x / sqrt(2)))
    return 0.5 * x * (1.0 + _erf_rational(x * 0.7071067811865476, recip))


# ----------------------------------------------------------------------------
# Pallas kernel: fused 7-layer MLP on a (TB, IN_PAD) packed batch tile.
# Refs: x (TB,16), w0 (16,128), w_mid (5,128,128), b_mid (6,128),
#       w_last (128,16), b_last (1,16), out (TB,16).
# Block-diagonal weights keep the two packed samples independent; GELU is
# elementwise, so no cross-talk between the lane halves.
# ----------------------------------------------------------------------------
def mlp_kernel(x_ref, w0_ref, wmid_ref, bmid_ref, wlast_ref, blast_ref, o_ref):
    recip = _recip_eup

    # Layer 0 on the MXU: (TB,16) @ (16,128).  K=16 is nearly free there,
    # and this removes the rank-1 VPU/XLU broadcast work from the VALU slot.
    h = jnp.dot(x_ref[...], w0_ref[...], preferred_element_type=jnp.float32)
    h = h + bmid_ref[0:1, :]
    h = _gelu_exact(h, recip)

    # Hidden layers 1..5: 128x128 block-diagonal MXU matmuls + exact GELU.
    for i in range(wmid_ref.shape[0]):
        h = jnp.dot(h, wmid_ref[i], preferred_element_type=jnp.float32)
        h = h + bmid_ref[i + 1:i + 2, :]
        h = _gelu_exact(h, recip)

    # Final layer: (TB,128) @ (128,16), no activation.
    out = jnp.dot(h, wlast_ref[...], preferred_element_type=jnp.float32)
    out = out + blast_ref[...]
    o_ref[...] = out.astype(o_ref.dtype)


def _run_mlp(x_packed, tb, w0, wmid, bmid, wlast, blast):
    rows_pad = x_packed.shape[0]
    grid = (rows_pad // tb,)
    return pl.pallas_call(
        mlp_kernel,
        out_shape=jax.ShapeDtypeStruct((rows_pad, OUT_PAD), jnp.float32),
        grid=grid,
        in_specs=[
            pl.BlockSpec((tb, IN_PAD), lambda i: (i, 0)),
            pl.BlockSpec((IN_PAD, HID), lambda i: (0, 0)),
            pl.BlockSpec((wmid.shape[0], HID, HID), lambda i: (0, 0, 0)),
            pl.BlockSpec((bmid.shape[0], HID), lambda i: (0, 0)),
            pl.BlockSpec((HID, OUT_PAD), lambda i: (0, 0)),
            pl.BlockSpec((1, OUT_PAD), lambda i: (0, 0)),
        ],
        out_specs=pl.BlockSpec((tb, OUT_PAD), lambda i: (i, 0)),
        compiler_params=pltpu.CompilerParams(
            dimension_semantics=("parallel",)),
    )(x_packed, w0, wmid, bmid, wlast, blast)


# ----------------------------------------------------------------------------
# Parameter construction (mirrors initialise_weights(): xavier_uniform_
# weights, zero biases) and two-sample block-diagonal packing.
# ----------------------------------------------------------------------------
def init_params(key):
    params = []
    for i in range(len(NODES) - 1):
        fan_in, fan_out = NODES[i], NODES[i + 1]
        key, sub = jax.random.split(key)
        a = math.sqrt(6.0 / (fan_in + fan_out))
        w = jax.random.uniform(sub, (fan_in, fan_out), jnp.float32, -a, a)
        b = jnp.zeros((fan_out,), jnp.float32)
        params.append((w, b))
    return params


def pack_params(params):
    # Sample slot s occupies input lanes [s*8, s*8+8), hidden lanes
    # [s*64, s*64+64), output lanes [s*8, s*8+8).
    w0, _ = params[0]                                   # (3, 64)
    w0_p = jnp.zeros((IN_PAD, HID), jnp.float32)
    for s in range(PACK):
        w0_p = w0_p.at[s * SAMPLE_IN: s * SAMPLE_IN + w0.shape[0],
                       s * REAL_HID: s * REAL_HID + w0.shape[1]].set(w0)

    n_mid = len(params) - 2                             # hidden layers 1..5
    wmid_p = jnp.zeros((n_mid, HID, HID), jnp.float32)
    for i in range(n_mid):
        w, _ = params[i + 1]                            # (64, 64)
        for s in range(PACK):
            wmid_p = wmid_p.at[i,
                               s * REAL_HID: s * REAL_HID + w.shape[0],
                               s * REAL_HID: s * REAL_HID + w.shape[1]].set(w)

    bmid_p = jnp.zeros((n_mid + 1, HID), jnp.float32)   # biases of layers 0..5
    for i in range(n_mid + 1):
        b = params[i][1]
        for s in range(PACK):
            bmid_p = bmid_p.at[i,
                               s * REAL_HID: s * REAL_HID + b.shape[0]].set(b)

    w_last, b_last = params[-1]                         # (64, 2), (2,)
    wlast_p = jnp.zeros((HID, OUT_PAD), jnp.float32)
    blast_p = jnp.zeros((1, OUT_PAD), jnp.float32)
    for s in range(PACK):
        wlast_p = wlast_p.at[s * REAL_HID: s * REAL_HID + w_last.shape[0],
                             s * SAMPLE_OUT: s * SAMPLE_OUT + w_last.shape[1]
                             ].set(w_last)
        blast_p = blast_p.at[0, s * SAMPLE_OUT: s * SAMPLE_OUT + b_last.shape[0]
                             ].set(b_last)

    return w0_p, wmid_p, bmid_p, wlast_p, blast_p


def _pick_tile(rows_packed):
    # Keep >= 2 grid steps when the batch allows (v7x has 2 TensorCores and
    # the grid axis is "parallel"); cap at TB_MAX packed rows and keep the
    # tile sublane-aligned (multiple of 8).
    half = _ceil_div(rows_packed, 2)
    tb = max(8, _ceil_div(half, 8) * 8)
    return min(TB_MAX, tb)


# ----------------------------------------------------------------------------
# Forward pass wrapper: param handling, two-sample packing, batch padding.
# ----------------------------------------------------------------------------
def parametric_hm_forward(x, params, param=None, key=None):
    n, d = x.shape
    assert d == NODES[0] - 1, d
    if param is None:
        if key is None:
            key = jax.random.PRNGKey(0)
        param = jax.random.uniform(key, (), jnp.float32) * (
            PARAM_SPACE[1] - PARAM_SPACE[0]) + PARAM_SPACE[0]
    elif isinstance(param, (int, float)):
        assert PARAM_SPACE[0] <= param <= PARAM_SPACE[1], (
            f"Parameter {param} is out of the range {PARAM_SPACE}")
        param = jnp.float32(param)
    param = jnp.reshape(jnp.asarray(param, jnp.float32), ())
    # TODO(synk): self.PDE = PDE_class(curvature=param) builds an external PDE
    # object with no tensor semantics; not translatable to a Pallas kernel.

    rows = _ceil_div(n, PACK)
    tb = _pick_tile(rows)
    grid_steps = _ceil_div(rows, tb)
    rows_pad = grid_steps * tb
    n_slots = rows_pad * PACK

    # Compact per-sample rows (x, param, zero pad), then a free row-major
    # reshape packs two consecutive samples into one 16-lane row.
    x_aug = jnp.zeros((n_slots, SAMPLE_IN), jnp.float32)
    x_aug = x_aug.at[:n, :d].set(x.astype(jnp.float32))
    x_aug = x_aug.at[:n, d].set(param)          # appended PDE parameter column
    x_packed = x_aug.reshape(rows_pad, IN_PAD)

    out_packed = _run_mlp(x_packed, tb, *pack_params(params))
    out = out_packed.reshape(n_slots, SAMPLE_OUT)
    return out[:n, : NODES[-1]]                 # (N, 2)


# Pure-JAX reference (exact erf GELU, full-precision matmuls).
def _reference_forward(x, params, param):
    p = jnp.full((x.shape[0], 1), param, dtype=jnp.float32)
    h = jnp.concatenate((x.astype(jnp.float32), p), axis=-1)
    for i, (w, b) in enumerate(params):
        h = jnp.dot(h, w, precision=lax.Precision.HIGHEST) + b
        if i != len(params) - 1:
            h = 0.5 * h * (1.0 + _erf_ref(h * 0.7071067811865476))
    return h


if __name__ == "__main__":
    key = jax.random.PRNGKey(0)
    k_x, k_w = jax.random.split(key)

    N = 1000       # odd packing tail + batch padding + a 2-step parallel grid
    x = jax.random.normal(k_x, (N, 2), jnp.float32)
    params = init_params(k_w)
    param_value = 0.3

    # Tight validation of the in-kernel erf polynomial (coefficients + clamp)
    # against the library erf.
    xs = jnp.linspace(-6.0, 6.0, 4097, dtype=jnp.float32)
    erf_err = jnp.max(jnp.abs(_erf_rational(xs, _recip_exact) - _erf_ref(xs)))
    assert float(erf_err) < 1e-5, f"erf polynomial max abs error {erf_err}"

    out = parametric_hm_forward(x, params, param=param_value)
    out = jax.block_until_ready(out)
    assert out.shape == (N, 2), out.shape

    ref = _reference_forward(x, params, param_value)
    max_diff = jnp.max(jnp.abs(out - ref))
    # Only intentional deviation from the exact reference is the EUP-seeded
    # (Newton-refined) reciprocal inside erf -> well below 2e-4.
    assert jnp.allclose(out, ref, atol=2e-4, rtol=2e-4), (
        f"max abs diff {max_diff}")

    print("KERNEL_OK")
</pallas_src>

<mosaic_0001>
module attributes {stable_mosaic.version = 11 : i64} {
  func.func @mlp_kernel(%arg0: i32, %arg1: memref<256x16xf32, #tpu.memory_space<vmem>>, %arg2: memref<16x128xf32, #tpu.memory_space<vmem>>, %arg3: memref<5x128x128xf32, #tpu.memory_space<vmem>>, %arg4: memref<6x128xf32, #tpu.memory_space<vmem>>, %arg5: memref<128x16xf32, #tpu.memory_space<vmem>>, %arg6: memref<1x16xf32, #tpu.memory_space<vmem>>, %arg7: memref<256x16xf32, #tpu.memory_space<vmem>>) attributes {dimension_semantics = [#tpu.dimension_semantics<parallel>], iteration_bounds = array<i64: 2>, scalar_prefetch = 0 : i64, scratch_operands = 0 : i64, tpu.core_type = #tpu.core_type<tc>, window_params = [{transform_indices = @transform_0, window_bounds = array<i64: 256, 16>}, {pipeline_mode = #tpu.pipeline_mode<synchronous>, transform_indices = @transform_1, window_bounds = array<i64: 16, 128>}, {pipeline_mode = #tpu.pipeline_mode<synchronous>, transform_indices = @transform_2, window_bounds = array<i64: 5, 128, 128>}, {pipeline_mode = #tpu.pipeline_mode<synchronous>, transform_indices = @transform_3, window_bounds = array<i64: 6, 128>}, {pipeline_mode = #tpu.pipeline_mode<synchronous>, transform_indices = @transform_4, window_bounds = array<i64: 128, 16>}, {pipeline_mode = #tpu.pipeline_mode<synchronous>, transform_indices = @transform_5, window_bounds = array<i64: 1, 16>}, {transform_indices = @transform_6, window_bounds = array<i64: 256, 16>}]} {
    %c0 = arith.constant 0 : index
    %c0_0 = arith.constant 0 : index
    %0 = vector.load %arg1[%c0, %c0_0] : memref<256x16xf32, #tpu.memory_space<vmem>>, vector<256x16xf32>
    %c0_1 = arith.constant 0 : index
    %c0_2 = arith.constant 0 : index
    %1 = vector.load %arg2[%c0_1, %c0_2] : memref<16x128xf32, #tpu.memory_space<vmem>>, vector<16x128xf32>
    %cst = arith.constant dense<0.000000e+00> : vector<256x128xf32>
    %2 = tpu.matmul %0, %1, %cst {dimension_numbers = #tpu.dot_dimension_numbers<[1], [0], [0], [1], [0, 0, 1, 1], [], []>} : vector<256x16xf32>, vector<16x128xf32>, vector<256x128xf32> -> vector<256x128xf32>
    %c0_3 = arith.constant 0 : index
    %c0_4 = arith.constant 0 : index
    %3 = vector.load %arg4[%c0_3, %c0_4] : memref<6x128xf32, #tpu.memory_space<vmem>>, vector<1x128xf32>
    %4 = vector.broadcast %3 : vector<1x128xf32> to vector<256x128xf32>
    %5 = arith.addf %2, %4 : vector<256x128xf32>
    %cst_5 = arith.constant 5.000000e-01 : f32
    %6 = vector.broadcast %cst_5 : f32 to vector<256x128xf32>
    %7 = arith.mulf %6, %5 : vector<256x128xf32>
    %cst_6 = arith.constant 0.707106769 : f32
    %8 = vector.broadcast %cst_6 : f32 to vector<256x128xf32>
    %9 = arith.mulf %5, %8 : vector<256x128xf32>
    %cst_7 = arith.constant -3.8325069 : f32
    %cst_8 = arith.constant 3.8325069 : f32
    %10 = vector.broadcast %cst_7 : f32 to vector<256x128xf32>
    %11 = arith.maximumf %10, %9 : vector<256x128xf32>
    %12 = vector.broadcast %cst_8 : f32 to vector<256x128xf32>
    %13 = arith.minimumf %12, %11 : vector<256x128xf32>
    %14 = arith.mulf %13, %13 : vector<256x128xf32>
    %cst_9 = arith.constant -2.72614237E-10 : f32
    %15 = vector.broadcast %cst_9 : f32 to vector<256x128xf32>
    %16 = arith.mulf %15, %14 : vector<256x128xf32>
    %cst_10 = arith.constant 2.77068146E-8 : f32
    %17 = vector.broadcast %cst_10 : f32 to vector<256x128xf32>
    %18 = arith.addf %16, %17 : vector<256x128xf32>
    %19 = arith.mulf %18, %14 : vector<256x128xf32>
    %cst_11 = arith.constant -2.10102394E-6 : f32
    %20 = vector.broadcast %cst_11 : f32 to vector<256x128xf32>
    %21 = arith.addf %19, %20 : vector<256x128xf32>
    %22 = arith.mulf %21, %14 : vector<256x128xf32>
    %cst_12 = arith.constant -5.69250624E-5 : f32
    %23 = vector.broadcast %cst_12 : f32 to vector<256x128xf32>
    %24 = arith.addf %22, %23 : vector<256x128xf32>
    %25 = arith.mulf %24, %14 : vector<256x128xf32>
    %cst_13 = arith.constant -7.34990637E-4 : f32
    %26 = vector.broadcast %cst_13 : f32 to vector<256x128xf32>
    %27 = arith.addf %25, %26 : vector<256x128xf32>
    %28 = arith.mulf %27, %14 : vector<256x128xf32>
    %cst_14 = arith.constant -2.954600e-03 : f32
    %29 = vector.broadcast %cst_14 : f32 to vector<256x128xf32>
    %30 = arith.addf %28, %29 : vector<256x128xf32>
    %31 = arith.mulf %30, %14 : vector<256x128xf32>
    %cst_15 = arith.constant -0.0160960332 : f32
    %32 = vector.broadcast %cst_15 : f32 to vector<256x128xf32>
    %33 = arith.addf %31, %32 : vector<256x128xf32>
    %cst_16 = arith.constant -1.45660715E-5 : f32
    %34 = vector.broadcast %cst_16 : f32 to vector<256x128xf32>
    %35 = arith.mulf %34, %14 : vector<256x128xf32>
    %cst_17 = arith.constant -2.13374049E-4 : f32
    %36 = vector.broadcast %cst_17 : f32 to vector<256x128xf32>
    %37 = arith.addf %35, %36 : vector<256x128xf32>
    %38 = arith.mulf %37, %14 : vector<256x128xf32>
    %cst_18 = arith.constant -0.00168282702 : f32
    %39 = vector.broadcast %cst_18 : f32 to vector<256x128xf32>
    %40 = arith.addf %38, %39 : vector<256x128xf32>
    %41 = arith.mulf %40, %14 : vector<256x128xf32>
    %cst_19 = arith.constant -0.00737332925 : f32
    %42 = vector.broadcast %cst_19 : f32 to vector<256x128xf32>
    %43 = arith.addf %41, %42 : vector<256x128xf32>
    %44 = arith.mulf %43, %14 : vector<256x128xf32>
    %cst_20 = arith.constant -0.0142647391 : f32
    %45 = vector.broadcast %cst_20 : f32 to vector<256x128xf32>
    %46 = arith.addf %44, %45 : vector<256x128xf32>
    %47 = arith.mulf %13, %33 : vector<256x128xf32>
    %48 = tpu.reciprocal %46 {approx = true} : vector<256x128xf32> -> vector<256x128xf32>
    %49 = arith.mulf %46, %48 : vector<256x128xf32>
    %cst_21 = arith.constant 2.000000e+00 : f32
    %50 = vector.broadcast %cst_21 : f32 to vector<256x128xf32>
    %51 = arith.subf %50, %49 : vector<256x128xf32>
    %52 = arith.mulf %48, %51 : vector<256x128xf32>
    %53 = arith.mulf %47, %52 : vector<256x128xf32>
    %cst_22 = arith.constant 1.000000e+00 : f32
    %54 = vector.broadcast %cst_22 : f32 to vector<256x128xf32>
    %55 = arith.addf %54, %53 : vector<256x128xf32>
    %56 = arith.mulf %7, %55 : vector<256x128xf32>
    %c0_23 = arith.constant 0 : index
    %c0_24 = arith.constant 0 : index
    %c0_25 = arith.constant 0 : index
    %57 = vector.load %arg3[%c0_23, %c0_24, %c0_25] : memref<5x128x128xf32, #tpu.memory_space<vmem>>, vector<1x128x128xf32>
    %58 = vector.shape_cast %57 : vector<1x128x128xf32> to vector<128x128xf32>
    %cst_26 = arith.constant dense<0.000000e+00> : vector<256x128xf32>
    %59 = tpu.matmul %56, %58, %cst_26 {dimension_numbers = #tpu.dot_dimension_numbers<[1], [0], [0], [1], [0, 0, 1, 1], [], []>} : vector<256x128xf32>, vector<128x128xf32>, vector<256x128xf32> -> vector<256x128xf32>
    %c1 = arith.constant 1 : index
    %c0_27 = arith.constant 0 : index
    %60 = vector.load %arg4[%c1, %c0_27] : memref<6x128xf32, #tpu.memory_space<vmem>>, vector<1x128xf32>
    %61 = vector.broadcast %60 : vector<1x128xf32> to vector<256x128xf32>
    %62 = arith.addf %59, %61 : vector<256x128xf32>
    %cst_28 = arith.constant 5.000000e-01 : f32
    %63 = vector.broadcast %cst_28 : f32 to vector<256x128xf32>
    %64 = arith.mulf %63, %62 : vector<256x128xf32>
    %cst_29 = arith.constant 0.707106769 : f32
    %65 = vector.broadcast %cst_29 : f32 to vector<256x128xf32>
    %66 = arith.mulf %62, %65 : vector<256x128xf32>
    %cst_30 = arith.constant -3.8325069 : f32
    %cst_31 = arith.constant 3.8325069 : f32
    %67 = vector.broadcast %cst_30 : f32 to vector<256x128xf32>
    %68 = arith.maximumf %67, %66 : vector<256x128xf32>
    %69 = vector.broadcast %cst_31 : f32 to vector<256x128xf32>
    %70 = arith.minimumf %69, %68 : vector<256x128xf32>
    %71 = arith.mulf %70, %70 : vector<256x128xf32>
    %cst_32 = arith.constant -2.72614237E-10 : f32
    %72 = vector.broadcast %cst_32 : f32 to vector<256x128xf32>
    %73 = arith.mulf %72, %71 : vector<256x128xf32>
    %cst_33 = arith.constant 2.77068146E-8 : f32
    %74 = vector.broadcast %cst_33 : f32 to vector<256x128xf32>
    %75 = arith.addf %73, %74 : vector<256x128xf32>
    %76 = arith.mulf %75, %71 : vector<256x128xf32>
    %cst_34 = arith.constant -2.10102394E-6 : f32
    %77 = vector.broadcast %cst_34 : f32 to vector<256x128xf32>
    %78 = arith.addf %76, %77 : vector<256x128xf32>
    %79 = arith.mulf %78, %71 : vector<256x128xf32>
    %cst_35 = arith.constant -5.69250624E-5 : f32
    %80 = vector.broadcast %cst_35 : f32 to vector<256x128xf32>
    %81 = arith.addf %79, %80 : vector<256x128xf32>
    %82 = arith.mulf %81, %71 : vector<256x128xf32>
    %cst_36 = arith.constant -7.34990637E-4 : f32
    %83 = vector.broadcast %cst_36 : f32 to vector<256x128xf32>
    %84 = arith.addf %82, %83 : vector<256x128xf32>
    %85 = arith.mulf %84, %71 : vector<256x128xf32>
    %cst_37 = arith.constant -2.954600e-03 : f32
    %86 = vector.broadcast %cst_37 : f32 to vector<256x128xf32>
    %87 = arith.addf %85, %86 : vector<256x128xf32>
    %88 = arith.mulf %87, %71 : vector<256x128xf32>
    %cst_38 = arith.constant -0.0160960332 : f32
    %89 = vector.broadcast %cst_38 : f32 to vector<256x128xf32>
    %90 = arith.addf %88, %89 : vector<256x128xf32>
    %cst_39 = arith.constant -1.45660715E-5 : f32
    %91 = vector.broadcast %cst_39 : f32 to vector<256x128xf32>
    %92 = arith.mulf %91, %71 : vector<256x128xf32>
    %cst_40 = arith.constant -2.13374049E-4 : f32
    %93 = vector.broadcast %cst_40 : f32 to vector<256x128xf32>
    %94 = arith.addf %92, %93 : vector<256x128xf32>
    %95 = arith.mulf %94, %71 : vector<256x128xf32>
    %cst_41 = arith.constant -0.00168282702 : f32
    %96 = vector.broadcast %cst_41 : f32 to vector<256x128xf32>
    %97 = arith.addf %95, %96 : vector<256x128xf32>
    %98 = arith.mulf %97, %71 : vector<256x128xf32>
    %cst_42 = arith.constant -0.00737332925 : f32
    %99 = vector.broadcast %cst_42 : f32 to vector<256x128xf32>
    %100 = arith.addf %98, %99 : vector<256x128xf32>
    %101 = arith.mulf %100, %71 : vector<256x128xf32>
    %cst_43 = arith.constant -0.0142647391 : f32
    %102 = vector.broadcast %cst_43 : f32 to vector<256x128xf32>
    %103 = arith.addf %101, %102 : vector<256x128xf32>
    %104 = arith.mulf %70, %90 : vector<256x128xf32>
    %105 = tpu.reciprocal %103 {approx = true} : vector<256x128xf32> -> vector<256x128xf32>
    %106 = arith.mulf %103, %105 : vector<256x128xf32>
    %cst_44 = arith.constant 2.000000e+00 : f32
    %107 = vector.broadcast %cst_44 : f32 to vector<256x128xf32>
    %108 = arith.subf %107, %106 : vector<256x128xf32>
    %109 = arith.mulf %105, %108 : vector<256x128xf32>
    %110 = arith.mulf %104, %109 : vector<256x128xf32>
    %cst_45 = arith.constant 1.000000e+00 : f32
    %111 = vector.broadcast %cst_45 : f32 to vector<256x128xf32>
    %112 = arith.addf %111, %110 : vector<256x128xf32>
    %113 = arith.mulf %64, %112 : vector<256x128xf32>
    %c1_46 = arith.constant 1 : index
    %c0_47 = arith.constant 0 : index
    %c0_48 = arith.constant 0 : index
    %114 = vector.load %arg3[%c1_46, %c0_47, %c0_48] : memref<5x128x128xf32, #tpu.memory_space<vmem>>, vector<1x128x128xf32>
    %115 = vector.shape_cast %114 : vector<1x128x128xf32> to vector<128x128xf32>
    %cst_49 = arith.constant dense<0.000000e+00> : vector<256x128xf32>
    %116 = tpu.matmul %113, %115, %cst_49 {dimension_numbers = #tpu.dot_dimension_numbers<[1], [0], [0], [1], [0, 0, 1, 1], [], []>} : vector<256x128xf32>, vector<128x128xf32>, vector<256x128xf32> -> vector<256x128xf32>
    %c2 = arith.constant 2 : index
    %c0_50 = arith.constant 0 : index
    %117 = vector.load %arg4[%c2, %c0_50] : memref<6x128xf32, #tpu.memory_space<vmem>>, vector<1x128xf32>
    %118 = vector.broadcast %117 : vector<1x128xf32> to vector<256x128xf32>
    %119 = arith.addf %116, %118 : vector<256x128xf32>
    %cst_51 = arith.constant 5.000000e-01 : f32
    %120 = vector.broadcast %cst_51 : f32 to vector<256x128xf32>
    %121 = arith.mulf %120, %119 : vector<256x128xf32>
    %cst_52 = arith.constant 0.707106769 : f32
    %122 = vector.broadcast %cst_52 : f32 to vector<256x128xf32>
    %123 = arith.mulf %119, %122 : vector<256x128xf32>
    %cst_53 = arith.constant -3.8325069 : f32
    %cst_54 = arith.constant 3.8325069 : f32
    %124 = vector.broadcast %cst_53 : f32 to vector<256x128xf32>
    %125 = arith.maximumf %124, %123 : vector<256x128xf32>
    %126 = vector.broadcast %cst_54 : f32 to vector<256x128xf32>
    %127 = arith.minimumf %126, %125 : vector<256x128xf32>
    %128 = arith.mulf %127, %127 : vector<256x128xf32>
    %cst_55 = arith.constant -2.72614237E-10 : f32
    %129 = vector.broadcast %cst_55 : f32 to vector<256x128xf32>
    %130 = arith.mulf %129, %128 : vector<256x128xf32>
    %cst_56 = arith.constant 2.77068146E-8 : f32
    %131 = vector.broadcast %cst_56 : f32 to vector<256x128xf32>
    %132 = arith.addf %130, %131 : vector<256x128xf32>
    %133 = arith.mulf %132, %128 : vector<256x128xf32>
    %cst_57 = arith.constant -2.10102394E-6 : f32
    %134 = vector.broadcast %cst_57 : f32 to vector<256x128xf32>
    %135 = arith.addf %133, %134 : vector<256x128xf32>
    %136 = arith.mulf %135, %128 : vector<256x128xf32>
    %cst_58 = arith.constant -5.69250624E-5 : f32
    %137 = vector.broadcast %cst_58 : f32 to vector<256x128xf32>
    %138 = arith.addf %136, %137 : vector<256x128xf32>
    %139 = arith.mulf %138, %128 : vector<256x128xf32>
    %cst_59 = arith.constant -7.34990637E-4 : f32
    %140 = vector.broadcast %cst_59 : f32 to vector<256x128xf32>
    %141 = arith.addf %139, %140 : vector<256x128xf32>
    %142 = arith.mulf %141, %128 : vector<256x128xf32>
    %cst_60 = arith.constant -2.954600e-03 : f32
    %143 = vector.broadcast %cst_60 : f32 to vector<256x128xf32>
    %144 = arith.addf %142, %143 : vector<256x128xf32>
    %145 = arith.mulf %144, %128 : vector<256x128xf32>
    %cst_61 = arith.constant -0.0160960332 : f32
    %146 = vector.broadcast %cst_61 : f32 to vector<256x128xf32>
    %147 = arith.addf %145, %146 : vector<256x128xf32>
    %cst_62 = arith.constant -1.45660715E-5 : f32
    %148 = vector.broadcast %cst_62 : f32 to vector<256x128xf32>
    %149 = arith.mulf %148, %128 : vector<256x128xf32>
    %cst_63 = arith.constant -2.13374049E-4 : f32
    %150 = vector.broadcast %cst_63 : f32 to vector<256x128xf32>
    %151 = arith.addf %149, %150 : vector<256x128xf32>
    %152 = arith.mulf %151, %128 : vector<256x128xf32>
    %cst_64 = arith.constant -0.00168282702 : f32
    %153 = vector.broadcast %cst_64 : f32 to vector<256x128xf32>
    %154 = arith.addf %152, %153 : vector<256x128xf32>
    %155 = arith.mulf %154, %128 : vector<256x128xf32>
    %cst_65 = arith.constant -0.00737332925 : f32
    %156 = vector.broadcast %cst_65 : f32 to vector<256x128xf32>
    %157 = arith.addf %155, %156 : vector<256x128xf32>
    %158 = arith.mulf %157, %128 : vector<256x128xf32>
    %cst_66 = arith.constant -0.0142647391 : f32
    %159 = vector.broadcast %cst_66 : f32 to vector<256x128xf32>
    %160 = arith.addf %158, %159 : vector<256x128xf32>
    %161 = arith.mulf %127, %147 : vector<256x128xf32>
    %162 = tpu.reciprocal %160 {approx = true} : vector<256x128xf32> -> vector<256x128xf32>
    %163 = arith.mulf %160, %162 : vector<256x128xf32>
    %cst_67 = arith.constant 2.000000e+00 : f32
    %164 = vector.broadcast %cst_67 : f32 to vector<256x128xf32>
    %165 = arith.subf %164, %163 : vector<256x128xf32>
    %166 = arith.mulf %162, %165 : vector<256x128xf32>
    %167 = arith.mulf %161, %166 : vector<256x128xf32>
    %cst_68 = arith.constant 1.000000e+00 : f32
    %168 = vector.broadcast %cst_68 : f32 to vector<256x128xf32>
    %169 = arith.addf %168, %167 : vector<256x128xf32>
    %170 = arith.mulf %121, %169 : vector<256x128xf32>
    %c2_69 = arith.constant 2 : index
    %c0_70 = arith.constant 0 : index
    %c0_71 = arith.constant 0 : index
    %171 = vector.load %arg3[%c2_69, %c0_70, %c0_71] : memref<5x128x128xf32, #tpu.memory_space<vmem>>, vector<1x128x128xf32>
    %172 = vector.shape_cast %171 : vector<1x128x128xf32> to vector<128x128xf32>
    %cst_72 = arith.constant dense<0.000000e+00> : vector<256x128xf32>
    %173 = tpu.matmul %170, %172, %cst_72 {dimension_numbers = #tpu.dot_dimension_numbers<[1], [0], [0], [1], [0, 0, 1, 1], [], []>} : vector<256x128xf32>, vector<128x128xf32>, vector<256x128xf32> -> vector<256x128xf32>
    %c3 = arith.constant 3 : index
    %c0_73 = arith.constant 0 : index
    %174 = vector.load %arg4[%c3, %c0_73] : memref<6x128xf32, #tpu.memory_space<vmem>>, vector<1x128xf32>
    %175 = vector.broadcast %174 : vector<1x128xf32> to vector<256x128xf32>
    %176 = arith.addf %173, %175 : vector<256x128xf32>
    %cst_74 = arith.constant 5.000000e-01 : f32
    %177 = vector.broadcast %cst_74 : f32 to vector<256x128xf32>
    %178 = arith.mulf %177, %176 : vector<256x128xf32>
    %cst_75 = arith.constant 0.707106769 : f32
    %179 = vector.broadcast %cst_75 : f32 to vector<256x128xf32>
    %180 = arith.mulf %176, %179 : vector<256x128xf32>
    %cst_76 = arith.constant -3.8325069 : f32
    %cst_77 = arith.constant 3.8325069 : f32
    %181 = vector.broadcast %cst_76 : f32 to vector<256x128xf32>
    %182 = arith.maximumf %181, %180 : vector<256x128xf32>
    %183 = vector.broadcast %cst_77 : f32 to vector<256x128xf32>
    %184 = arith.minimumf %183, %182 : vector<256x128xf32>
    %185 = arith.mulf %184, %184 : vector<256x128xf32>
    %cst_78 = arith.constant -2.72614237E-10 : f32
    %186 = vector.broadcast %cst_78 : f32 to vector<256x128xf32>
    %187 = arith.mulf %186, %185 : vector<256x128xf32>
    %cst_79 = arith.constant 2.77068146E-8 : f32
    %188 = vector.broadcast %cst_79 : f32 to vector<256x128xf32>
    %189 = arith.addf %187, %188 : vector<256x128xf32>
    %190 = arith.mulf %189, %185 : vector<256x128xf32>
    %cst_80 = arith.constant -2.10102394E-6 : f32
    %191 = vector.broadcast %cst_80 : f32 to vector<256x128xf32>
    %192 = arith.addf %190, %191 : vector<256x128xf32>
    %193 = arith.mulf %192, %185 : vector<256x128xf32>
    %cst_81 = arith.constant -5.69250624E-5 : f32
    %194 = vector.broadcast %cst_81 : f32 to vector<256x128xf32>
    %195 = arith.addf %193, %194 : vector<256x128xf32>
    %196 = arith.mulf %195, %185 : vector<256x128xf32>
    %cst_82 = arith.constant -7.34990637E-4 : f32
    %197 = vector.broadcast %cst_82 : f32 to vector<256x128xf32>
    %198 = arith.addf %196, %197 : vector<256x128xf32>
    %199 = arith.mulf %198, %185 : vector<256x128xf32>
    %cst_83 = arith.constant -2.954600e-03 : f32
    %200 = vector.broadcast %cst_83 : f32 to vector<256x128xf32>
    %201 = arith.addf %199, %200 : vector<256x128xf32>
    %202 = arith.mulf %201, %185 : vector<256x128xf32>
    %cst_84 = arith.constant -0.0160960332 : f32
    %203 = vector.broadcast %cst_84 : f32 to vector<256x128xf32>
    %204 = arith.addf %202, %203 : vector<256x128xf32>
    %cst_85 = arith.constant -1.45660715E-5 : f32
    %205 = vector.broadcast %cst_85 : f32 to vector<256x128xf32>
    %206 = arith.mulf %205, %185 : vector<256x128xf32>
    %cst_86 = arith.constant -2.13374049E-4 : f32
    %207 = vector.broadcast %cst_86 : f32 to vector<256x128xf32>
    %208 = arith.addf %206, %207 : vector<256x128xf32>
    %209 = arith.mulf %208, %185 : vector<256x128xf32>
    %cst_87 = arith.constant -0.00168282702 : f32
    %210 = vector.broadcast %cst_87 : f32 to vector<256x128xf32>
    %211 = arith.addf %209, %210 : vector<256x128xf32>
    %212 = arith.mulf %211, %185 : vector<256x128xf32>
    %cst_88 = arith.constant -0.00737332925 : f32
    %213 = vector.broadcast %cst_88 : f32 to vector<256x128xf32>
    %214 = arith.addf %212, %213 : vector<256x128xf32>
    %215 = arith.mulf %214, %185 : vector<256x128xf32>
    %cst_89 = arith.constant -0.0142647391 : f32
    %216 = vector.broadcast %cst_89 : f32 to vector<256x128xf32>
    %217 = arith.addf %215, %216 : vector<256x128xf32>
    %218 = arith.mulf %184, %204 : vector<256x128xf32>
    %219 = tpu.reciprocal %217 {approx = true} : vector<256x128xf32> -> vector<256x128xf32>
    %220 = arith.mulf %217, %219 : vector<256x128xf32>
    %cst_90 = arith.constant 2.000000e+00 : f32
    %221 = vector.broadcast %cst_90 : f32 to vector<256x128xf32>
    %222 = arith.subf %221, %220 : vector<256x128xf32>
    %223 = arith.mulf %219, %222 : vector<256x128xf32>
    %224 = arith.mulf %218, %223 : vector<256x128xf32>
    %cst_91 = arith.constant 1.000000e+00 : f32
    %225 = vector.broadcast %cst_91 : f32 to vector<256x128xf32>
    %226 = arith.addf %225, %224 : vector<256x128xf32>
    %227 = arith.mulf %178, %226 : vector<256x128xf32>
    %c3_92 = arith.constant 3 : index
    %c0_93 = arith.constant 0 : index
    %c0_94 = arith.constant 0 : index
    %228 = vector.load %arg3[%c3_92, %c0_93, %c0_94] : memref<5x128x128xf32, #tpu.memory_space<vmem>>, vector<1x128x128xf32>
    %229 = vector.shape_cast %228 : vector<1x128x128xf32> to vector<128x128xf32>
    %cst_95 = arith.constant dense<0.000000e+00> : vector<256x128xf32>
    %230 = tpu.matmul %227, %229, %cst_95 {dimension_numbers = #tpu.dot_dimension_numbers<[1], [0], [0], [1], [0, 0, 1, 1], [], []>} : vector<256x128xf32>, vector<128x128xf32>, vector<256x128xf32> -> vector<256x128xf32>
    %c4 = arith.constant 4 : index
    %c0_96 = arith.constant 0 : index
    %231 = vector.load %arg4[%c4, %c0_96] : memref<6x128xf32, #tpu.memory_space<vmem>>, vector<1x128xf32>
    %232 = vector.broadcast %231 : vector<1x128xf32> to vector<256x128xf32>
    %233 = arith.addf %230, %232 : vector<256x128xf32>
    %cst_97 = arith.constant 5.000000e-01 : f32
    %234 = vector.broadcast %cst_97 : f32 to vector<256x128xf32>
    %235 = arith.mulf %234, %233 : vector<256x128xf32>
    %cst_98 = arith.constant 0.707106769 : f32
    %236 = vector.broadcast %cst_98 : f32 to vector<256x128xf32>
    %237 = arith.mulf %233, %236 : vector<256x128xf32>
    %cst_99 = arith.constant -3.8325069 : f32
    %cst_100 = arith.constant 3.8325069 : f32
    %238 = vector.broadcast %cst_99 : f32 to vector<256x128xf32>
    %239 = arith.maximumf %238, %237 : vector<256x128xf32>
    %240 = vector.broadcast %cst_100 : f32 to vector<256x128xf32>
    %241 = arith.minimumf %240, %239 : vector<256x128xf32>
    %242 = arith.mulf %241, %241 : vector<256x128xf32>
    %cst_101 = arith.constant -2.72614237E-10 : f32
    %243 = vector.broadcast %cst_101 : f32 to vector<256x128xf32>
    %244 = arith.mulf %243, %242 : vector<256x128xf32>
    %cst_102 = arith.constant 2.77068146E-8 : f32
    %245 = vector.broadcast %cst_102 : f32 to vector<256x128xf32>
    %246 = arith.addf %244, %245 : vector<256x128xf32>
    %247 = arith.mulf %246, %242 : vector<256x128xf32>
    %cst_103 = arith.constant -2.10102394E-6 : f32
    %248 = vector.broadcast %cst_103 : f32 to vector<256x128xf32>
    %249 = arith.addf %247, %248 : vector<256x128xf32>
    %250 = arith.mulf %249, %242 : vector<256x128xf32>
    %cst_104 = arith.constant -5.69250624E-5 : f32
    %251 = vector.broadcast %cst_104 : f32 to vector<256x128xf32>
    %252 = arith.addf %250, %251 : vector<256x128xf32>
    %253 = arith.mulf %252, %242 : vector<256x128xf32>
    %cst_105 = arith.constant -7.34990637E-4 : f32
    %254 = vector.broadcast %cst_105 : f32 to vector<256x128xf32>
    %255 = arith.addf %253, %254 : vector<256x128xf32>
    %256 = arith.mulf %255, %242 : vector<256x128xf32>
    %cst_106 = arith.constant -2.954600e-03 : f32
    %257 = vector.broadcast %cst_106 : f32 to vector<256x128xf32>
    %258 = arith.addf %256, %257 : vector<256x128xf32>
    %259 = arith.mulf %258, %242 : vector<256x128xf32>
    %cst_107 = arith.constant -0.0160960332 : f32
    %260 = vector.broadcast %cst_107 : f32 to vector<256x128xf32>
    %261 = arith.addf %259, %260 : vector<256x128xf32>
    %cst_108 = arith.constant -1.45660715E-5 : f32
    %262 = vector.broadcast %cst_108 : f32 to vector<256x128xf32>
    %263 = arith.mulf %262, %242 : vector<256x128xf32>
    %cst_109 = arith.constant -2.13374049E-4 : f32
    %264 = vector.broadcast %cst_109 : f32 to vector<256x128xf32>
    %265 = arith.addf %263, %264 : vector<256x128xf32>
    %266 = arith.mulf %265, %242 : vector<256x128xf32>
    %cst_110 = arith.constant -0.00168282702 : f32
    %267 = vector.broadcast %cst_110 : f32 to vector<256x128xf32>
    %268 = arith.addf %266, %267 : vector<256x128xf32>
    %269 = arith.mulf %268, %242 : vector<256x128xf32>
    %cst_111 = arith.constant -0.00737332925 : f32
    %270 = vector.broadcast %cst_111 : f32 to vector<256x128xf32>
    %271 = arith.addf %269, %270 : vector<256x128xf32>
    %272 = arith.mulf %271, %242 : vector<256x128xf32>
    %cst_112 = arith.constant -0.0142647391 : f32
    %273 = vector.broadcast %cst_112 : f32 to vector<256x128xf32>
    %274 = arith.addf %272, %273 : vector<256x128xf32>
    %275 = arith.mulf %241, %261 : vector<256x128xf32>
    %276 = tpu.reciprocal %274 {approx = true} : vector<256x128xf32> -> vector<256x128xf32>
    %277 = arith.mulf %274, %276 : vector<256x128xf32>
    %cst_113 = arith.constant 2.000000e+00 : f32
    %278 = vector.broadcast %cst_113 : f32 to vector<256x128xf32>
    %279 = arith.subf %278, %277 : vector<256x128xf32>
    %280 = arith.mulf %276, %279 : vector<256x128xf32>
    %281 = arith.mulf %275, %280 : vector<256x128xf32>
    %cst_114 = arith.constant 1.000000e+00 : f32
    %282 = vector.broadcast %cst_114 : f32 to vector<256x128xf32>
    %283 = arith.addf %282, %281 : vector<256x128xf32>
    %284 = arith.mulf %235, %283 : vector<256x128xf32>
    %c4_115 = arith.constant 4 : index
    %c0_116 = arith.constant 0 : index
    %c0_117 = arith.constant 0 : index
    %285 = vector.load %arg3[%c4_115, %c0_116, %c0_117] : memref<5x128x128xf32, #tpu.memory_space<vmem>>, vector<1x128x128xf32>
    %286 = vector.shape_cast %285 : vector<1x128x128xf32> to vector<128x128xf32>
    %cst_118 = arith.constant dense<0.000000e+00> : vector<256x128xf32>
    %287 = tpu.matmul %284, %286, %cst_118 {dimension_numbers = #tpu.dot_dimension_numbers<[1], [0], [0], [1], [0, 0, 1, 1], [], []>} : vector<256x128xf32>, vector<128x128xf32>, vector<256x128xf32> -> vector<256x128xf32>
    %c5 = arith.constant 5 : index
    %c0_119 = arith.constant 0 : index
    %288 = vector.load %arg4[%c5, %c0_119] : memref<6x128xf32, #tpu.memory_space<vmem>>, vector<1x128xf32>
    %289 = vector.broadcast %288 : vector<1x128xf32> to vector<256x128xf32>
    %290 = arith.addf %287, %289 : vector<256x128xf32>
    %cst_120 = arith.constant 5.000000e-01 : f32
    %291 = vector.broadcast %cst_120 : f32 to vector<256x128xf32>
    %292 = arith.mulf %291, %290 : vector<256x128xf32>
    %cst_121 = arith.constant 0.707106769 : f32
    %293 = vector.broadcast %cst_121 : f32 to vector<256x128xf32>
    %294 = arith.mulf %290, %293 : vector<256x128xf32>
    %cst_122 = arith.constant -3.8325069 : f32
    %cst_123 = arith.constant 3.8325069 : f32
    %295 = vector.broadcast %cst_122 : f32 to vector<256x128xf32>
    %296 = arith.maximumf %295, %294 : vector<256x128xf32>
    %297 = vector.broadcast %cst_123 : f32 to vector<256x128xf32>
    %298 = arith.minimumf %297, %296 : vector<256x128xf32>
    %299 = arith.mulf %298, %298 : vector<256x128xf32>
    %cst_124 = arith.constant -2.72614237E-10 : f32
    %300 = vector.broadcast %cst_124 : f32 to vector<256x128xf32>
    %301 = arith.mulf %300, %299 : vector<256x128xf32>
    %cst_125 = arith.constant 2.77068146E-8 : f32
    %302 = vector.broadcast %cst_125 : f32 to vector<256x128xf32>
    %303 = arith.addf %301, %302 : vector<256x128xf32>
    %304 = arith.mulf %303, %299 : vector<256x128xf32>
    %cst_126 = arith.constant -2.10102394E-6 : f32
    %305 = vector.broadcast %cst_126 : f32 to vector<256x128xf32>
    %306 = arith.addf %304, %305 : vector<256x128xf32>
    %307 = arith.mulf %306, %299 : vector<256x128xf32>
    %cst_127 = arith.constant -5.69250624E-5 : f32
    %308 = vector.broadcast %cst_127 : f32 to vector<256x128xf32>
    %309 = arith.addf %307, %308 : vector<256x128xf32>
    %310 = arith.mulf %309, %299 : vector<256x128xf32>
    %cst_128 = arith.constant -7.34990637E-4 : f32
    %311 = vector.broadcast %cst_128 : f32 to vector<256x128xf32>
    %312 = arith.addf %310, %311 : vector<256x128xf32>
    %313 = arith.mulf %312, %299 : vector<256x128xf32>
    %cst_129 = arith.constant -2.954600e-03 : f32
    %314 = vector.broadcast %cst_129 : f32 to vector<256x128xf32>
    %315 = arith.addf %313, %314 : vector<256x128xf32>
    %316 = arith.mulf %315, %299 : vector<256x128xf32>
    %cst_130 = arith.constant -0.0160960332 : f32
    %317 = vector.broadcast %cst_130 : f32 to vector<256x128xf32>
    %318 = arith.addf %316, %317 : vector<256x128xf32>
    %cst_131 = arith.constant -1.45660715E-5 : f32
    %319 = vector.broadcast %cst_131 : f32 to vector<256x128xf32>
    %320 = arith.mulf %319, %299 : vector<256x128xf32>
    %cst_132 = arith.constant -2.13374049E-4 : f32
    %321 = vector.broadcast %cst_132 : f32 to vector<256x128xf32>
    %322 = arith.addf %320, %321 : vector<256x128xf32>
    %323 = arith.mulf %322, %299 : vector<256x128xf32>
    %cst_133 = arith.constant -0.00168282702 : f32
    %324 = vector.broadcast %cst_133 : f32 to vector<256x128xf32>
    %325 = arith.addf %323, %324 : vector<256x128xf32>
    %326 = arith.mulf %325, %299 : vector<256x128xf32>
    %cst_134 = arith.constant -0.00737332925 : f32
    %327 = vector.broadcast %cst_134 : f32 to vector<256x128xf32>
    %328 = arith.addf %326, %327 : vector<256x128xf32>
    %329 = arith.mulf %328, %299 : vector<256x128xf32>
    %cst_135 = arith.constant -0.0142647391 : f32
    %330 = vector.broadcast %cst_135 : f32 to vector<256x128xf32>
    %331 = arith.addf %329, %330 : vector<256x128xf32>
    %332 = arith.mulf %298, %318 : vector<256x128xf32>
    %333 = tpu.reciprocal %331 {approx = true} : vector<256x128xf32> -> vector<256x128xf32>
    %334 = arith.mulf %331, %333 : vector<256x128xf32>
    %cst_136 = arith.constant 2.000000e+00 : f32
    %335 = vector.broadcast %cst_136 : f32 to vector<256x128xf32>
    %336 = arith.subf %335, %334 : vector<256x128xf32>
    %337 = arith.mulf %333, %336 : vector<256x128xf32>
    %338 = arith.mulf %332, %337 : vector<256x128xf32>
    %cst_137 = arith.constant 1.000000e+00 : f32
    %339 = vector.broadcast %cst_137 : f32 to vector<256x128xf32>
    %340 = arith.addf %339, %338 : vector<256x128xf32>
    %341 = arith.mulf %292, %340 : vector<256x128xf32>
    %c0_138 = arith.constant 0 : index
    %c0_139 = arith.constant 0 : index
    %342 = vector.load %arg5[%c0_138, %c0_139] : memref<128x16xf32, #tpu.memory_space<vmem>>, vector<128x16xf32>
    %cst_140 = arith.constant dense<0.000000e+00> : vector<256x16xf32>
    %343 = tpu.matmul %341, %342, %cst_140 {dimension_numbers = #tpu.dot_dimension_numbers<[1], [0], [0], [1], [0, 0, 1, 1], [], []>} : vector<256x128xf32>, vector<128x16xf32>, vector<256x16xf32> -> vector<256x16xf32>
    %c0_141 = arith.constant 0 : index
    %c0_142 = arith.constant 0 : index
    %344 = vector.load %arg6[%c0_141, %c0_142] : memref<1x16xf32, #tpu.memory_space<vmem>>, vector<1x16xf32>
    %345 = vector.broadcast %344 : vector<1x16xf32> to vector<256x16xf32>
    %346 = arith.addf %343, %345 : vector<256x16xf32>
    %c0_143 = arith.constant 0 : index
    %c0_144 = arith.constant 0 : index
    %347 = vector.load %arg7[%c0_143, %c0_144] : memref<256x16xf32, #tpu.memory_space<vmem>>, vector<256x16xf32>
    tpu.vector_store %arg7[%c0_143, %c0_144], %346 {strides = array<i32>} : memref<256x16xf32, #tpu.memory_space<vmem>>, vector<256x16xf32>,
    return
  }
  func.func @transform_0(%arg0: i32) -> (i32, i32) {
    %c0_i32 = arith.constant 0 : i32
    %c0_i32_0 = arith.constant 0 : i32
    return %arg0, %c0_i32 : i32, i32
  }
  func.func @transform_1(%arg0: i32) -> (i32, i32) {
    %c0_i32 = arith.constant 0 : i32
    %c0_i32_0 = arith.constant 0 : i32
    %c0_i32_1 = arith.constant 0 : i32
    return %c0_i32, %c0_i32_0 : i32, i32
  }
  func.func @transform_2(%arg0: i32) -> (i32, i32, i32) {
    %c0_i32 = arith.constant 0 : i32
    %c0_i32_0 = arith.constant 0 : i32
    %c0_i32_1 = arith.constant 0 : i32
    %c0_i32_2 = arith.constant 0 : i32
    return %c0_i32, %c0_i32_0, %c0_i32_1 : i32, i32, i32
  }
  func.func @transform_3(%arg0: i32) -> (i32, i32) {
    %c0_i32 = arith.constant 0 : i32
    %c0_i32_0 = arith.constant 0 : i32
    %c0_i32_1 = arith.constant 0 : i32
    return %c0_i32, %c0_i32_0 : i32, i32
  }
  func.func @transform_4(%arg0: i32) -> (i32, i32) {
    %c0_i32 = arith.constant 0 : i32
    %c0_i32_0 = arith.constant 0 : i32
    %c0_i32_1 = arith.constant 0 : i32
    return %c0_i32, %c0_i32_0 : i32, i32
  }
  func.func @transform_5(%arg0: i32) -> (i32, i32) {
    %c0_i32 = arith.constant 0 : i32
    %c0_i32_0 = arith.constant 0 : i32
    %c0_i32_1 = arith.constant 0 : i32
    return %c0_i32, %c0_i32_0 : i32, i32
  }
  func.func @transform_6(%arg0: i32) -> (i32, i32) {
    %c0_i32 = arith.constant 0 : i32
    %c0_i32_0 = arith.constant 0 : i32
    return %arg0, %c0_i32 : i32, i32
  }
}

</mosaic_0001>

<llo_original>
// kernel: tpu_custom_call.1
$region0: #{tpu_custom_call.1}
  #allocation0 [shape = 'u32[]', space=smem, size = 0x4, offset = 0x4, fixed_abs, tag = 'smem constant byte address 0x4 - core index']
  #allocation1 [shape = 'u32[144,128]{1,0:T(1,128)}', space=vmem, size = 0x12000, scoped, tag = 'internal scratch']
  %s0 = inlined_call_operand.vmem [shape: f32[512,16], index: 0, kind: input, shape index: {}]
  %s1 = inlined_call_operand.vmem [shape: f32[16,128], index: 1, kind: input, shape index: {}]
  %s2 = inlined_call_operand.vmem [shape: f32[5,128,128], index: 2, kind: input, shape index: {}]
  %s3 = inlined_call_operand.vmem [shape: f32[6,128], index: 3, kind: input, shape index: {}]
  %s4 = inlined_call_operand.vmem [shape: f32[128,16], index: 4, kind: input, shape index: {}]
  %s5 = inlined_call_operand.vmem [shape: f32[1,16], index: 5, kind: input, shape index: {}]
  %s6 = inlined_call_operand.vmem [shape: f32[512,16], index: 6, kind: output, shape index: {}]
  %s7 = sld [smem:[#allocation0]]
  $region57: #{tpu_custom_call.1} parent=0
    _
  %s9 = ssub.s32 1, %s7
  %s10 = scalar_select 0, %s9, %s7
  loop: start=0, step=1, limit=4
  $region2: #{tpu_custom_call.1} parent=0 // loop_pre_header
    _
  $region3: #{tpu_custom_call.1} parent=0 // loop_header
    %s12 = sphi 0, %s16
    %p13 = scmp.ge.s32.totalorder %s12, 4
    %s22 = sphi 0, %s24
    %s25 = sphi 0, %s22
    %s26 = sphi 0, %s25
    %s42 = sphi 0, %s26
    %s46 = sphi 0, %s46
    %s48 = sphi 0, %s46
    %s49 = sphi 0, %s48
    %s63 = sphi 0, %s49
    %s67 = sphi 0, %s67
    %s69 = sphi 0, %s67
    %s70 = sphi 0, %s69
    %s84 = sphi 0, %s70
    %s88 = sphi 0, %s88
    %s90 = sphi 0, %s88
    %s91 = sphi 0, %s90
    %s105 = sphi 0, %s91
    %s109 = sphi 0, %s109
    %s111 = sphi 0, %s109
    %s112 = sphi 0, %s111
    %s126 = sphi 0, %s112
    %s130 = sphi 0, %s130
    %s132 = sphi 0, %s130
    %s133 = sphi 0, %s132
    %s147 = sphi 0, %s133
    %s153 = sphi 0, %s155
    %s156 = sphi 0, %s153
    %s157 = sphi 0, %s156
    %s173 = sphi 0, %s157
  $region4: #{tpu_custom_call.1} parent=0 // loop_header_branch
    %15 = sbr.rel (%p13) target = $region8
  $region5: #{tpu_custom_call.1} parent=0 // loop_body
    %s17 = ssub.s32 %s12, 1
    %s18 = ssub.s32 %s12, 2
    %s19 = sadd.s32 %s12, 1
    %s20 = ssub.s32 %s12, %s19
    %p21 = scmp.eq.s32.totalorder %s20, 0
    %s23 = sadd.s32 %s22, 1
    %s24 = scalar_select %p21, %s22, %s23
    %p27 = pneg %p21
    %p28 = scmp.eq.s32.totalorder %s12, 1
    %p29 = por %p27, %p28
    %p30 = scmp.ne.s32.totalorder %s22, %s25
    %p31 = scmp.eq.s32.totalorder %s12, 0
    %p32 = por %p30, %p31
    %p33 = scmp.ne.s32.totalorder %s22, %s25
    %p34 = scmp.eq.s32.totalorder %s17, 1
    %p35 = por %p33, %p34
    %p36 = scmp.ne.s32.totalorder %s25, %s26
    %p37 = scmp.eq.s32.totalorder %s17, 0
    %p38 = por %p36, %p37
    %p39 = scmp.ne.s32.totalorder %s25, %s26
    %p40 = scmp.eq.s32.totalorder %s18, 1
    %p41 = por %p39, %p40
    %p43 = scmp.ne.s32.totalorder %s26, %s42
    %p44 = scmp.eq.s32.totalorder %s18, 0
    %p45 = por %p43, %p44
    %s47 = sadd.s32 %s46, 1
    %p50 = scmp.eq.s32.totalorder %s12, 1
    %p51 = scmp.ne.s32.totalorder %s46, %s48
    %p52 = scmp.eq.s32.totalorder %s12, 0
    %p53 = por %p51, %p52
    %p54 = scmp.ne.s32.totalorder %s46, %s48
    %p55 = scmp.eq.s32.totalorder %s17, 1
    %p56 = por %p54, %p55
    %p57 = scmp.ne.s32.totalorder %s48, %s49
    %p58 = scmp.eq.s32.totalorder %s17, 0
    %p59 = por %p57, %p58
    %p60 = scmp.ne.s32.totalorder %s48, %s49
    %p61 = scmp.eq.s32.totalorder %s18, 1
    %p62 = por %p60, %p61
    %p64 = scmp.ne.s32.totalorder %s49, %s63
    %p65 = scmp.eq.s32.totalorder %s18, 0
    %p66 = por %p64, %p65
    %s68 = sadd.s32 %s67, 1
    %p71 = scmp.eq.s32.totalorder %s12, 1
    %p72 = scmp.ne.s32.totalorder %s67, %s69
    %p73 = scmp.eq.s32.totalorder %s12, 0
    %p74 = por %p72, %p73
    %p75 = scmp.ne.s32.totalorder %s67, %s69
    %p76 = scmp.eq.s32.totalorder %s17, 1
    %p77 = por %p75, %p76
    %p78 = scmp.ne.s32.totalorder %s69, %s70
    %p79 = scmp.eq.s32.totalorder %s17, 0
    %p80 = por %p78, %p79
    %p81 = scmp.ne.s32.totalorder %s69, %s70
    %p82 = scmp.eq.s32.totalorder %s18, 1
    %p83 = por %p81, %p82
    %p85 = scmp.ne.s32.totalorder %s70, %s84
    %p86 = scmp.eq.s32.totalorder %s18, 0
    %p87 = por %p85, %p86
    %s89 = sadd.s32 %s88, 1
    %p92 = scmp.eq.s32.totalorder %s12, 1
    %p93 = scmp.ne.s32.totalorder %s88, %s90
    %p94 = scmp.eq.s32.totalorder %s12, 0
    %p95 = por %p93, %p94
    %p96 = scmp.ne.s32.totalorder %s88, %s90
    %p97 = scmp.eq.s32.totalorder %s17, 1
    %p98 = por %p96, %p97
    %p99 = scmp.ne.s32.totalorder %s90, %s91
    %p100 = scmp.eq.s32.totalorder %s17, 0
    %p101 = por %p99, %p100
    %p102 = scmp.ne.s32.totalorder %s90, %s91
    %p103 = scmp.eq.s32.totalorder %s18, 1
    %p104 = por %p102, %p103
    %p106 = scmp.ne.s32.totalorder %s91, %s105
    %p107 = scmp.eq.s32.totalorder %s18, 0
    %p108 = por %p106, %p107
    %s110 = sadd.s32 %s109, 1
    %p113 = scmp.eq.s32.totalorder %s12, 1
    %p114 = scmp.ne.s32.totalorder %s109, %s111
    %p115 = scmp.eq.s32.totalorder %s12, 0
    %p116 = por %p114, %p115
    %p117 = scmp.ne.s32.totalorder %s109, %s111
    %p118 = scmp.eq.s32.totalorder %s17, 1
    %p119 = por %p117, %p118
    %p120 = scmp.ne.s32.totalorder %s111, %s112
    %p121 = scmp.eq.s32.totalorder %s17, 0
    %p122 = por %p120, %p121
    %p123 = scmp.ne.s32.totalorder %s111, %s112
    %p124 = scmp.eq.s32.totalorder %s18, 1
    %p125 = por %p123, %p124
    %p127 = scmp.ne.s32.totalorder %s112, %s126
    %p128 = scmp.eq.s32.totalorder %s18, 0
    %p129 = por %p127, %p128
    %s131 = sadd.s32 %s130, 1
    %p134 = scmp.eq.s32.totalorder %s12, 1
    %p135 = scmp.ne.s32.totalorder %s130, %s132
    %p136 = scmp.eq.s32.totalorder %s12, 0
    %p137 = por %p135, %p136
    %p138 = scmp.ne.s32.totalorder %s130, %s132
    %p139 = scmp.eq.s32.totalorder %s17, 1
    %p140 = por %p138, %p139
    %p141 = scmp.ne.s32.totalorder %s132, %s133
    %p142 = scmp.eq.s32.totalorder %s17, 0
    %p143 = por %p141, %p142
    %p144 = scmp.ne.s32.totalorder %s132, %s133
    %p145 = scmp.eq.s32.totalorder %s18, 1
    %p146 = por %p144, %p145
    %p148 = scmp.ne.s32.totalorder %s133, %s147
    %p149 = scmp.eq.s32.totalorder %s18, 0
    %p150 = por %p148, %p149
    %s151 = ssub.s32 %s12, %s19
    %p152 = scmp.eq.s32.totalorder %s151, 0
    %s154 = sadd.s32 %s153, 1
    %s155 = scalar_select %p152, %s153, %s154
    %p158 = pneg %p152
    %p159 = scmp.eq.s32.totalorder %s12, 1
    %p160 = por %p158, %p159
    %p161 = scmp.ne.s32.totalorder %s153, %s156
    %p162 = scmp.eq.s32.totalorder %s12, 0
    %p163 = por %p161, %p162
    %p164 = scmp.ne.s32.totalorder %s153, %s156
    %p165 = scmp.eq.s32.totalorder %s17, 1
    %p166 = por %p164, %p165
    %p167 = scmp.ne.s32.totalorder %s156, %s157
    %p168 = scmp.eq.s32.totalorder %s17, 0
    %p169 = por %p167, %p168
    %p170 = scmp.ne.s32.totalorder %s156, %s157
    %p171 = scmp.eq.s32.totalorder %s18, 1
    %p172 = por %p170, %p171
    %p174 = scmp.ne.s32.totalorder %s157, %s173
    %p175 = scmp.eq.s32.totalorder %s18, 0
    %p176 = por %p174, %p175
    %p177 = scmp.le.s32.totalorder 1, %s12
    %p178 = scmp.lt.s32.totalorder %s12, 3
    %p179 = pnand %p177, %p178
    %p180 = pneg %p179
    // Predicated region
    $region9: #{tpu_custom_call.1} parent=5 // pred_check
      _
    $region10: #{tpu_custom_call.1} parent=5 // pred_check_branch
      %182 = sbr.rel (%p179) target = $region12
    $region11: #{tpu_custom_call.1} parent=5 // pred_region
      %s183 = ssub.s32 %s12, 1
      // Predicated region
      $region13: #{tpu_custom_call.1} parent=11 // pred_check
        %p184 = pneg %p59
      $region14: #{tpu_custom_call.1} parent=11 // pred_check_branch
        %186 = sbr.rel (%p184) target = $region16
      $region15: #{tpu_custom_call.1} parent=11 // pred_region
        _
      $region16: #{tpu_custom_call.1} parent=11 // pred_fallthru
        _
      // Predicated region
      $region17: #{tpu_custom_call.1} parent=11 // pred_check
        %p187 = pneg %p80
      $region18: #{tpu_custom_call.1} parent=11 // pred_check_branch
        %189 = sbr.rel (%p187) target = $region20
      $region19: #{tpu_custom_call.1} parent=11 // pred_region
        _
      $region20: #{tpu_custom_call.1} parent=11 // pred_fallthru
        _
      // Predicated region
      $region21: #{tpu_custom_call.1} parent=11 // pred_check
        %p190 = pneg %p101
      $region22: #{tpu_custom_call.1} parent=11 // pred_check_branch
        %192 = sbr.rel (%p190) target = $region24
      $region23: #{tpu_custom_call.1} parent=11 // pred_region
        _
      $region24: #{tpu_custom_call.1} parent=11 // pred_fallthru
        _
      // Predicated region
      $region25: #{tpu_custom_call.1} parent=11 // pred_check
        %p193 = pneg %p122
      $region26: #{tpu_custom_call.1} parent=11 // pred_check_branch
        %195 = sbr.rel (%p193) target = $region28
      $region27: #{tpu_custom_call.1} parent=11 // pred_region
        _
      $region28: #{tpu_custom_call.1} parent=11 // pred_fallthru
        _
      // Predicated region
      $region29: #{tpu_custom_call.1} parent=11 // pred_check
        %p196 = pneg %p143
      $region30: #{tpu_custom_call.1} parent=11 // pred_check_branch
        %198 = sbr.rel (%p196) target = $region32
      $region31: #{tpu_custom_call.1} parent=11 // pred_region
        _
      $region32: #{tpu_custom_call.1} parent=11 // pred_fallthru
        _
    $region12: #{tpu_custom_call.1} parent=5 // pred_fallthru
      _
    %p199 = scmp.lt.s32.totalorder %s12, 2
    // Predicated region
    $region33: #{tpu_custom_call.1} parent=5 // pred_check
      %p200 = pneg %p199
    $region34: #{tpu_custom_call.1} parent=5 // pred_check_branch
      %202 = sbr.rel (%p200) target = $region36
    $region35: #{tpu_custom_call.1} parent=5 // pred_region
      // Predicated region
      $region37: #{tpu_custom_call.1} parent=35 // pred_check
        %p203 = pneg %p32
      $region38: #{tpu_custom_call.1} parent=35 // pred_check_branch
        %205 = sbr.rel (%p203) target = $region40
      $region39: #{tpu_custom_call.1} parent=35 // pred_region
        %s206 = smul.u32 32, %s12
        %p207 = scmp.lt.s32.totalorder %s206, 63
        %s208 = scalar_select %p207, %s206, 63
        %s209 = smul.addr %s208, 8
        %s210 = scalar_lea.vmem %s0, %s209
        %s211 = smul.u32 32, %s12
      $region40: #{tpu_custom_call.1} parent=35 // pred_fallthru
        _
    $region36: #{tpu_custom_call.1} parent=5 // pred_fallthru
      _
    %p212 = scmp.le.s32.totalorder 1, %s12
    %p213 = scmp.lt.s32.totalorder %s12, 3
    %p214 = pnand %p212, %p213
    %p215 = pneg %p214
    // Predicated region
    $region41: #{tpu_custom_call.1} parent=5 // pred_check
      _
    $region42: #{tpu_custom_call.1} parent=5 // pred_check_branch
      %217 = sbr.rel (%p214) target = $region44
    $region43: #{tpu_custom_call.1} parent=5 // pred_region
      %s218 = ssub.s32 %s12, 1
      %s219 = smul.u32 32, %s17
      %p220 = scmp.lt.s32.totalorder %s219, 63
      %s221 = scalar_select %p220, %s219, 63
      %s222 = smul.addr %s221, 8
      %s223 = scalar_lea.vmem %s0, %s222
      %p224 = pneg %p38
      %p225 = pneg %p35
      %p226 = pneg %p59
      %p227 = pneg %p56
      %p228 = pneg %p80
      %p229 = pneg %p77
      %p230 = pneg %p101
      %p231 = pneg %p98
      %p232 = pneg %p122
      %p233 = pneg %p119
      %p234 = pneg %p143
      %p235 = pneg %p140
      %p236 = pneg %p169
      %p237 = pneg %p166
      %s238 = smul.u32 32, %s17
      %p239 = scmp.lt.s32.totalorder %s238, 63
      %s240 = scalar_select %p239, %s238, 63
      %s241 = smul.addr %s240, 8
      %s242 = scalar_lea.vmem %s6, %s241
      %s243 = smul.u32 32, %s17
      %p244 = scmp.lt.s32.totalorder %s243, 63
      %s245 = scalar_select %p244, %s243, 63
      %s246 = smul.addr %s245, 8
      %s247 = scalar_lea.vmem %s0, %s246
      %s248 = smul.u32 32, %s17
      %s249 = smul.u32 32, %s17
      %p250 = scmp.lt.s32.totalorder %s249, 63
      %s251 = scalar_select %p250, %s249, 63
      %s252 = smul.addr %s251, 8
      %s253 = scalar_lea.vmem %s6, %s252
      %s254 = smul.u32 32, %s17
      %v255 = vld [vmem:[%s247] sm:$0xff]
      %v256 = vld [vmem:[%s247 + $0x8] sm:$0xff]
      %v257 = vld [vmem:[%s247 + $0x10] sm:$0xff]
      %v258 = vld [vmem:[%s247 + $0x18] sm:$0xff]
      %v259 = vld [vmem:[%s247 + $0x20] sm:$0xff]
      %v260 = vld [vmem:[%s247 + $0x28] sm:$0xff]
      %v261 = vld [vmem:[%s247 + $0x30] sm:$0xff]
      %v262 = vld [vmem:[%s247 + $0x38] sm:$0xff]
      %v263 = vld [vmem:[%s247 + $0x40] sm:$0xff]
      %v264 = vld [vmem:[%s247 + $0x48] sm:$0xff]
      %v265 = vld [vmem:[%s247 + $0x50] sm:$0xff]
      %v266 = vld [vmem:[%s247 + $0x58] sm:$0xff]
      %v267 = vld [vmem:[%s247 + $0x60] sm:$0xff]
      %v268 = vld [vmem:[%s247 + $0x68] sm:$0xff]
      %v269 = vld [vmem:[%s247 + $0x70] sm:$0xff]
      %v270 = vld [vmem:[%s247 + $0x78] sm:$0xff]
      %v271 = vld [vmem:[%s247 + $0x80] sm:$0xff]
      %v272 = vld [vmem:[%s247 + $0x88] sm:$0xff]
      %v273 = vld [vmem:[%s247 + $0x90] sm:$0xff]
      %v274 = vld [vmem:[%s247 + $0x98] sm:$0xff]
      %v275 = vld [vmem:[%s247 + $0xa0] sm:$0xff]
      %v276 = vld [vmem:[%s247 + $0xa8] sm:$0xff]
      %v277 = vld [vmem:[%s247 + $0xb0] sm:$0xff]
      %v278 = vld [vmem:[%s247 + $0xb8] sm:$0xff]
      %v279 = vld [vmem:[%s247 + $0xc0] sm:$0xff]
      %v280 = vld [vmem:[%s247 + $0xc8] sm:$0xff]
      %v281 = vld [vmem:[%s247 + $0xd0] sm:$0xff]
      %v282 = vld [vmem:[%s247 + $0xd8] sm:$0xff]
      %v283 = vld [vmem:[%s247 + $0xe0] sm:$0xff]
      %v284 = vld [vmem:[%s247 + $0xe8] sm:$0xff]
      %v285 = vld [vmem:[%s247 + $0xf0] sm:$0xff]
      %v286 = vld [vmem:[%s247 + $0xf8] sm:$0xff]
      %v287 = vld [vmem:[%s1] sm:$0xff]
      %v288 = vld [vmem:[%s1 + $0x8] sm:$0xff]
      %v289 = vld [vmem:[%s3] sm:$0x1]
      %v290 = vlaneseq
      %v291 = vshrl.u32 %v290, 7
      %v292 = vsub.s32 0, %v291
      %v293 = vrot.slane %v289, %v292
      %vm294 = vcmask 130048
      %v296 = vsel %vm294, %v255, 0
      %v299 = vsel %vm294, %v256, 0
      %v302 = vsel %vm294, %v257, 0
      %v305 = vsel %vm294, %v258, 0
      %v308 = vsel %vm294, %v259, 0
      %v311 = vsel %vm294, %v260, 0
      %v314 = vsel %vm294, %v261, 0
      %v317 = vsel %vm294, %v262, 0
      %v320 = vsel %vm294, %v263, 0
      %v323 = vsel %vm294, %v264, 0
      %v326 = vsel %vm294, %v265, 0
      %v329 = vsel %vm294, %v266, 0
      %v332 = vsel %vm294, %v267, 0
      %v335 = vsel %vm294, %v268, 0
      %v338 = vsel %vm294, %v269, 0
      %v341 = vsel %vm294, %v270, 0
      %v344 = vsel %vm294, %v271, 0
      %v347 = vsel %vm294, %v272, 0
      %v350 = vsel %vm294, %v273, 0
      %v353 = vsel %vm294, %v274, 0
      %v356 = vsel %vm294, %v275, 0
      %v359 = vsel %vm294, %v276, 0
      %v362 = vsel %vm294, %v277, 0
      %v365 = vsel %vm294, %v278, 0
      %v368 = vsel %vm294, %v279, 0
      %v371 = vsel %vm294, %v280, 0
      %v374 = vsel %vm294, %v281, 0
      %v377 = vsel %vm294, %v282, 0
      %v380 = vsel %vm294, %v283, 0
      %v383 = vsel %vm294, %v284, 0
      %v386 = vsel %vm294, %v285, 0
      %v389 = vsel %vm294, %v286, 0
      %391 = vmatprep.subr.mxu0 0.0
      %392 = vmatpush1.msra.mxu0 %v287
      %393 = vmatprep.subr.mxu0 0.0
      %394 = vmatpush1.msra.mxu0 %v288
      %395 = vmatprep.subr.mxu0 0.0
      %396 = vmatpush1.msra.mxu0 0.0
      %397 = vmatprep.subr.mxu0 0.0
      %398 = vmatpush1.msra.mxu0 0.0
      %399 = vmatprep.subr.mxu0 0.0
      %400 = vmatpush1.msra.mxu0 0.0
      %401 = vmatprep.subr.mxu0 0.0
      %402 = vmatpush1.msra.mxu0 0.0
      %403 = vmatprep.subr.mxu0 0.0
      %404 = vmatpush1.msra.mxu0 0.0
      %405 = vmatprep.subr.mxu0 0.0
      %406 = vmatpush1.msra.mxu0 0.0
      %407 = vmatprep.subr.mxu0 0.0
      %408 = vmatpush1.msra.mxu0 0.0
      %409 = vmatprep.subr.mxu0 0.0
      %410 = vmatpush1.msra.mxu0 0.0
      %411 = vmatprep.subr.mxu0 0.0
      %412 = vmatpush1.msra.mxu0 0.0
      %413 = vmatprep.subr.mxu0 0.0
      %414 = vmatpush1.msra.mxu0 0.0
      %415 = vmatprep.subr.mxu0 0.0
      %416 = vmatpush1.msra.mxu0 0.0
      %417 = vmatprep.subr.mxu0 0.0
      %418 = vmatpush1.msra.mxu0 0.0
      %419 = vmatprep.subr.mxu0 0.0
      %420 = vmatpush1.msra.mxu0 0.0
      %421 = vmatprep.subr.mxu0 0.0
      %422 = vmatpush1.msra.mxu0 0.0
      %423 = vmatprep.subr.mxu0 0.0
      %424 = vmatpush1.msra.mxu0 0.0
      %425 = vmatprep.subr.mxu0 0.0
      %426 = vmatpush1.msra.mxu0 0.0
      %427 = vmatprep.subr.mxu0 0.0
      %428 = vmatpush1.msra.mxu0 0.0
      %429 = vmatprep.subr.mxu0 0.0
      %430 = vmatpush1.msra.mxu0 0.0
      %431 = vmatprep.subr.mxu0 0.0
      %432 = vmatpush1.msra.mxu0 0.0
      %433 = vmatprep.subr.mxu0 0.0
      %434 = vmatpush1.msra.mxu0 0.0
      %435 = vmatprep.subr.mxu0 0.0
      %436 = vmatpush1.msra.mxu0 0.0
      %437 = vmatprep.subr.mxu0 0.0
      %438 = vmatpush1.msra.mxu0 0.0
      %439 = vmatprep.subr.mxu0 0.0
      %440 = vmatpush1.msra.mxu0 0.0
      %441 = vmatprep.subr.mxu0 0.0
      %442 = vmatpush1.msra.mxu0 0.0
      %443 = vmatprep.subr.mxu0 0.0
      %444 = vmatpush1.msra.mxu0 0.0
      %445 = vmatprep.subr.mxu0 0.0
      %446 = vmatpush1.msra.mxu0 0.0
      %447 = vmatprep.subr.mxu0 0.0
      %448 = vmatpush1.msra.mxu0 0.0
      %449 = vmatprep.subr.mxu0 0.0
      %450 = vmatpush1.msra.mxu0 0.0
      %451 = vmatprep.subr.mxu0 0.0
      %452 = vmatpush1.msra.mxu0 0.0
      %453 = vmatprep.subr.mxu0 0.0
      %454 = vmatpush1.msra.mxu0 0.0
      %455 = vmatprep.mubr.f32.mxu0 0.0
      %456 = vmatmul.mubr.f32.gmra.mrb[0].mxu0 %v296
      %v457 = vpop.f32.mrb[0].mxu0
      %v458 = vadd.f32 %v293, %v457
      %v459 = vpop.f32.mrb[0].mxu0
      %460 = vmatprep.mubr.f32.mxu0 0.0
      %461 = vmatmul.mubr.f32.gmra.mrb[0].mxu0 %v299
      %v462 = vpop.f32.mrb[0].mxu0
      %v463 = vadd.f32 %v293, %v462
      %v464 = vpop.f32.mrb[0].mxu0
      %465 = vmatprep.mubr.f32.mxu0 0.0
      %466 = vmatmul.mubr.f32.gmra.mrb[0].mxu0 %v302
      %v467 = vpop.f32.mrb[0].mxu0
      %v468 = vadd.f32 %v293, %v467
      %v469 = vpop.f32.mrb[0].mxu0
      %470 = vmatprep.mubr.f32.mxu0 0.0
      %471 = vmatmul.mubr.f32.gmra.mrb[0].mxu0 %v305
      %v472 = vpop.f32.mrb[0].mxu0
      %v473 = vadd.f32 %v293, %v472
      %v474 = vpop.f32.mrb[0].mxu0
      %475 = vmatprep.mubr.f32.mxu0 0.0
      %476 = vmatmul.mubr.f32.gmra.mrb[0].mxu0 %v308
      %v477 = vpop.f32.mrb[0].mxu0
      %v478 = vadd.f32 %v293, %v477
      %v479 = vpop.f32.mrb[0].mxu0
      %480 = vmatprep.mubr.f32.mxu0 0.0
      %481 = vmatmul.mubr.f32.gmra.mrb[0].mxu0 %v311
      %v482 = vpop.f32.mrb[0].mxu0
      %v483 = vadd.f32 %v293, %v482
      %v484 = vpop.f32.mrb[0].mxu0
      %485 = vmatprep.mubr.f32.mxu0 0.0
      %486 = vmatmul.mubr.f32.gmra.mrb[0].mxu0 %v314
      %v487 = vpop.f32.mrb[0].mxu0
      %v488 = vadd.f32 %v293, %v487
      %v489 = vpop.f32.mrb[0].mxu0
      %490 = vmatprep.mubr.f32.mxu0 0.0
      %491 = vmatmul.mubr.f32.gmra.mrb[0].mxu0 %v317
      %v492 = vpop.f32.mrb[0].mxu0
      %v493 = vadd.f32 %v293, %v492
      %v494 = vpop.f32.mrb[0].mxu0
      %495 = vmatprep.mubr.f32.mxu0 0.0
      %496 = vmatmul.mubr.f32.gmra.mrb[0].mxu0 %v320
      %v497 = vpop.f32.mrb[0].mxu0
      %v498 = vadd.f32 %v293, %v497
      %v499 = vpop.f32.mrb[0].mxu0
      %500 = vmatprep.mubr.f32.mxu0 0.0
      %501 = vmatmul.mubr.f32.gmra.mrb[0].mxu0 %v323
      %v502 = vpop.f32.mrb[0].mxu0
      %v503 = vadd.f32 %v293, %v502
      %v504 = vpop.f32.mrb[0].mxu0
      %505 = vmatprep.mubr.f32.mxu0 0.0
      %506 = vmatmul.mubr.f32.gmra.mrb[0].mxu0 %v326
      %v507 = vpop.f32.mrb[0].mxu0
      %v508 = vadd.f32 %v293, %v507
      %v509 = vpop.f32.mrb[0].mxu0
      %510 = vmatprep.mubr.f32.mxu0 0.0
      %511 = vmatmul.mubr.f32.gmra.mrb[0].mxu0 %v329
      %v512 = vpop.f32.mrb[0].mxu0
      %v513 = vadd.f32 %v293, %v512
      %v514 = vpop.f32.mrb[0].mxu0
      %515 = vmatprep.mubr.f32.mxu0 0.0
      %516 = vmatmul.mubr.f32.gmra.mrb[0].mxu0 %v332
      %v517 = vpop.f32.mrb[0].mxu0
      %v518 = vadd.f32 %v293, %v517
      %v519 = vpop.f32.mrb[0].mxu0
      %520 = vmatprep.mubr.f32.mxu0 0.0
      %521 = vmatmul.mubr.f32.gmra.mrb[0].mxu0 %v335
      %v522 = vpop.f32.mrb[0].mxu0
      %v523 = vadd.f32 %v293, %v522
      %v524 = vpop.f32.mrb[0].mxu0
      %525 = vmatprep.mubr.f32.mxu0 0.0
      %526 = vmatmul.mubr.f32.gmra.mrb[0].mxu0 %v338
      %v527 = vpop.f32.mrb[0].mxu0
      %v528 = vadd.f32 %v293, %v527
      %v529 = vpop.f32.mrb[0].mxu0
      %530 = vmatprep.mubr.f32.mxu0 0.0
      %531 = vmatmul.mubr.f32.gmra.mrb[0].mxu0 %v341
      %v532 = vpop.f32.mrb[0].mxu0
      %v533 = vadd.f32 %v293, %v532
      %v534 = vpop.f32.mrb[0].mxu0
      %535 = vmatprep.mubr.f32.mxu0 0.0
      %536 = vmatmul.mubr.f32.gmra.mrb[0].mxu0 %v344
      %v537 = vpop.f32.mrb[0].mxu0
      %v538 = vadd.f32 %v293, %v537
      %v539 = vpop.f32.mrb[0].mxu0
      %540 = vmatprep.mubr.f32.mxu0 0.0
      %541 = vmatmul.mubr.f32.gmra.mrb[0].mxu0 %v347
      %v542 = vpop.f32.mrb[0].mxu0
      %v543 = vadd.f32 %v293, %v542
      %v544 = vpop.f32.mrb[0].mxu0
      %545 = vmatprep.mubr.f32.mxu0 0.0
      %546 = vmatmul.mubr.f32.gmra.mrb[0].mxu0 %v350
      %v547 = vpop.f32.mrb[0].mxu0
      %v548 = vadd.f32 %v293, %v547
      %v549 = vpop.f32.mrb[0].mxu0
      %550 = vmatprep.mubr.f32.mxu0 0.0
      %551 = vmatmul.mubr.f32.gmra.mrb[0].mxu0 %v353
      %v552 = vpop.f32.mrb[0].mxu0
      %v553 = vadd.f32 %v293, %v552
      %v554 = vpop.f32.mrb[0].mxu0
      %555 = vmatprep.mubr.f32.mxu0 0.0
      %556 = vmatmul.mubr.f32.gmra.mrb[0].mxu0 %v356
      %v557 = vpop.f32.mrb[0].mxu0
      %v558 = vadd.f32 %v293, %v557
      %v559 = vpop.f32.mrb[0].mxu0
      %560 = vmatprep.mubr.f32.mxu0 0.0
      %561 = vmatmul.mubr.f32.gmra.mrb[0].mxu0 %v359
      %v562 = vpop.f32.mrb[0].mxu0
      %v563 = vadd.f32 %v293, %v562
      %v564 = vpop.f32.mrb[0].mxu0
      %565 = vmatprep.mubr.f32.mxu0 0.0
      %566 = vmatmul.mubr.f32.gmra.mrb[0].mxu0 %v362
      %v567 = vpop.f32.mrb[0].mxu0
      %v568 = vadd.f32 %v293, %v567
      %v569 = vpop.f32.mrb[0].mxu0
      %570 = vmatprep.mubr.f32.mxu0 0.0
      %571 = vmatmul.mubr.f32.gmra.mrb[0].mxu0 %v365
      %v572 = vpop.f32.mrb[0].mxu0
      %v573 = vadd.f32 %v293, %v572
      %v574 = vpop.f32.mrb[0].mxu0
      %575 = vmatprep.mubr.f32.mxu0 0.0
      %576 = vmatmul.mubr.f32.gmra.mrb[0].mxu0 %v368
      %v577 = vpop.f32.mrb[0].mxu0
      %v578 = vadd.f32 %v293, %v577
      %v579 = vpop.f32.mrb[0].mxu0
      %580 = vmatprep.mubr.f32.mxu0 0.0
      %581 = vmatmul.mubr.f32.gmra.mrb[0].mxu0 %v371
      %v582 = vpop.f32.mrb[0].mxu0
      %v583 = vadd.f32 %v293, %v582
      %v584 = vpop.f32.mrb[0].mxu0
      %585 = vmatprep.mubr.f32.mxu0 0.0
      %586 = vmatmul.mubr.f32.gmra.mrb[0].mxu0 %v374
      %v587 = vpop.f32.mrb[0].mxu0
      %v588 = vadd.f32 %v293, %v587
      %v589 = vpop.f32.mrb[0].mxu0
      %590 = vmatprep.mubr.f32.mxu0 0.0
      %591 = vmatmul.mubr.f32.gmra.mrb[0].mxu0 %v377
      %v592 = vpop.f32.mrb[0].mxu0
      %v593 = vadd.f32 %v293, %v592
      %v594 = vpop.f32.mrb[0].mxu0
      %595 = vmatprep.mubr.f32.mxu0 0.0
      %596 = vmatmul.mubr.f32.gmra.mrb[0].mxu0 %v380
      %v597 = vpop.f32.mrb[0].mxu0
      %v598 = vadd.f32 %v293, %v597
      %v599 = vpop.f32.mrb[0].mxu0
      %600 = vmatprep.mubr.f32.mxu0 0.0
      %601 = vmatmul.mubr.f32.gmra.mrb[0].mxu0 %v383
      %v602 = vpop.f32.mrb[0].mxu0
      %v603 = vadd.f32 %v293, %v602
      %v604 = vpop.f32.mrb[0].mxu0
      %605 = vmatprep.mubr.f32.mxu0 0.0
      %606 = vmatmul.mubr.f32.gmra.mrb[0].mxu0 %v386
      %v607 = vpop.f32.mrb[0].mxu0
      %v608 = vadd.f32 %v293, %v607
      %v609 = vpop.f32.mrb[0].mxu0
      %610 = vmatprep.mubr.f32.mxu0 0.0
      %611 = vmatmul.mubr.f32.gmra.mrb[0].mxu0 %v389
      %v612 = vpop.f32.mrb[0].mxu0
      %v613 = vadd.f32 %v293, %v612
      %v614 = vpop.f32.mrb[0].mxu0
      %615 = vdwg.mxu0
      %v616 = vmul.f32 %v458, 0.5
      %v617 = vmul.f32 %v463, 0.5
      %v618 = vmul.f32 %v468, 0.5
      %v619 = vmul.f32 %v473, 0.5
      %v620 = vmul.f32 %v478, 0.5
      %v621 = vmul.f32 %v483, 0.5
      %v622 = vmul.f32 %v488, 0.5
      %v623 = vmul.f32 %v493, 0.5
      %v624 = vmul.f32 %v498, 0.5
      %v625 = vmul.f32 %v503, 0.5
      %v626 = vmul.f32 %v508, 0.5
      %v627 = vmul.f32 %v513, 0.5
      %v628 = vmul.f32 %v518, 0.5
      %v629 = vmul.f32 %v523, 0.5
      %v630 = vmul.f32 %v528, 0.5
      %v631 = vmul.f32 %v533, 0.5
      %v632 = vmul.f32 %v538, 0.5
      %v633 = vmul.f32 %v543, 0.5
      %v634 = vmul.f32 %v548, 0.5
      %v635 = vmul.f32 %v553, 0.5
      %v636 = vmul.f32 %v558, 0.5
      %v637 = vmul.f32 %v563, 0.5
      %v638 = vmul.f32 %v568, 0.5
      %v639 = vmul.f32 %v573, 0.5
      %v640 = vmul.f32 %v578, 0.5
      %v641 = vmul.f32 %v583, 0.5
      %v642 = vmul.f32 %v588, 0.5
      %v643 = vmul.f32 %v593, 0.5
      %v644 = vmul.f32 %v598, 0.5
      %v645 = vmul.f32 %v603, 0.5
      %v646 = vmul.f32 %v608, 0.5
      %v647 = vmul.f32 %v613, 0.5
      %v648 = vmul.f32 %v458, 0.70710677
      %v649 = vmul.f32 %v463, 0.70710677
      %v650 = vmul.f32 %v468, 0.70710677
      %v651 = vmul.f32 %v473, 0.70710677
      %v652 = vmul.f32 %v478, 0.70710677
      %v653 = vmul.f32 %v483, 0.70710677
      %v654 = vmul.f32 %v488, 0.70710677
      %v655 = vmul.f32 %v493, 0.70710677
      %v656 = vmul.f32 %v498, 0.70710677
      %v657 = vmul.f32 %v503, 0.70710677
      %v658 = vmul.f32 %v508, 0.70710677
      %v659 = vmul.f32 %v513, 0.70710677
      %v660 = vmul.f32 %v518, 0.70710677
      %v661 = vmul.f32 %v523, 0.70710677
      %v662 = vmul.f32 %v528, 0.70710677
      %v663 = vmul.f32 %v533, 0.70710677
      %v664 = vmul.f32 %v538, 0.70710677
      %v665 = vmul.f32 %v543, 0.70710677
      %v666 = vmul.f32 %v548, 0.70710677
      %v667 = vmul.f32 %v553, 0.70710677
      %v668 = vmul.f32 %v558, 0.70710677
      %v669 = vmul.f32 %v563, 0.70710677
      %v670 = vmul.f32 %v568, 0.70710677
      %v671 = vmul.f32 %v573, 0.70710677
      %v672 = vmul.f32 %v578, 0.70710677
      %v673 = vmul.f32 %v583, 0.70710677
      %v674 = vmul.f32 %v588, 0.70710677
      %v675 = vmul.f32 %v593, 0.70710677
      %v676 = vmul.f32 %v598, 0.70710677
      %v677 = vmul.f32 %v603, 0.70710677
      %v678 = vmul.f32 %v608, 0.70710677
      %v679 = vmul.f32 %v613, 0.70710677
      %v680 = vmax.f32 %v648, -3.832507
      %v681 = vmax.f32 %v649, -3.832507
      %v682 = vmax.f32 %v650, -3.832507
      %v683 = vmax.f32 %v651, -3.832507
      %v684 = vmax.f32 %v652, -3.832507
      %v685 = vmax.f32 %v653, -3.832507
      %v686 = vmax.f32 %v654, -3.832507
      %v687 = vmax.f32 %v655, -3.832507
      %v688 = vmax.f32 %v656, -3.832507
      %v689 = vmax.f32 %v657, -3.832507
      %v690 = vmax.f32 %v658, -3.832507
      %v691 = vmax.f32 %v659, -3.832507
      %v692 = vmax.f32 %v660, -3.832507
      %v693 = vmax.f32 %v661, -3.832507
      %v694 = vmax.f32 %v662, -3.832507
      %v695 = vmax.f32 %v663, -3.832507
      %v696 = vmax.f32 %v664, -3.832507
      %v697 = vmax.f32 %v665, -3.832507
      %v698 = vmax.f32 %v666, -3.832507
      %v699 = vmax.f32 %v667, -3.832507
      %v700 = vmax.f32 %v668, -3.832507
      %v701 = vmax.f32 %v669, -3.832507
      %v702 = vmax.f32 %v670, -3.832507
      %v703 = vmax.f32 %v671, -3.832507
      %v704 = vmax.f32 %v672, -3.832507
      %v705 = vmax.f32 %v673, -3.832507
      %v706 = vmax.f32 %v674, -3.832507
      %v707 = vmax.f32 %v675, -3.832507
      %v708 = vmax.f32 %v676, -3.832507
      %v709 = vmax.f32 %v677, -3.832507
      %v710 = vmax.f32 %v678, -3.832507
      %v711 = vmax.f32 %v679, -3.832507
      %v712 = vmin.f32 %v680, 3.832507
      %v713 = vmin.f32 %v681, 3.832507
      %v714 = vmin.f32 %v682, 3.832507
      %v715 = vmin.f32 %v683, 3.832507
      %v716 = vmin.f32 %v684, 3.832507
      %v717 = vmin.f32 %v685, 3.832507
      %v718 = vmin.f32 %v686, 3.832507
      %v719 = vmin.f32 %v687, 3.832507
      %v720 = vmin.f32 %v688, 3.832507
      %v721 = vmin.f32 %v689, 3.832507
      %v722 = vmin.f32 %v690, 3.832507
      %v723 = vmin.f32 %v691, 3.832507
      %v724 = vmin.f32 %v692, 3.832507
      %v725 = vmin.f32 %v693, 3.832507
      %v726 = vmin.f32 %v694, 3.832507
      %v727 = vmin.f32 %v695, 3.832507
      %v728 = vmin.f32 %v696, 3.832507
      %v729 = vmin.f32 %v697, 3.832507
      %v730 = vmin.f32 %v698, 3.832507
      %v731 = vmin.f32 %v699, 3.832507
      %v732 = vmin.f32 %v700, 3.832507
      %v733 = vmin.f32 %v701, 3.832507
      %v734 = vmin.f32 %v702, 3.832507
      %v735 = vmin.f32 %v703, 3.832507
      %v736 = vmin.f32 %v704, 3.832507
      %v737 = vmin.f32 %v705, 3.832507
      %v738 = vmin.f32 %v706, 3.832507
      %v739 = vmin.f32 %v707, 3.832507
      %v740 = vmin.f32 %v708, 3.832507
      %v741 = vmin.f32 %v709, 3.832507
      %v742 = vmin.f32 %v710, 3.832507
      %v743 = vmin.f32 %v711, 3.832507
      %v744 = vmul.f32 %v712, %v712
      %v745 = vmul.f32 %v713, %v713
      %v746 = vmul.f32 %v714, %v714
      %v747 = vmul.f32 %v715, %v715
      %v748 = vmul.f32 %v716, %v716
      %v749 = vmul.f32 %v717, %v717
      %v750 = vmul.f32 %v718, %v718
      %v751 = vmul.f32 %v719, %v719
      %v752 = vmul.f32 %v720, %v720
      %v753 = vmul.f32 %v721, %v721
      %v754 = vmul.f32 %v722, %v722
      %v755 = vmul.f32 %v723, %v723
      %v756 = vmul.f32 %v724, %v724
      %v757 = vmul.f32 %v725, %v725
      %v758 = vmul.f32 %v726, %v726
      %v759 = vmul.f32 %v727, %v727
      %v760 = vmul.f32 %v728, %v728
      %v761 = vmul.f32 %v729, %v729
      %v762 = vmul.f32 %v730, %v730
      %v763 = vmul.f32 %v731, %v731
      %v764 = vmul.f32 %v732, %v732
      %v765 = vmul.f32 %v733, %v733
      %v766 = vmul.f32 %v734, %v734
      %v767 = vmul.f32 %v735, %v735
      %v768 = vmul.f32 %v736, %v736
      %v769 = vmul.f32 %v737, %v737
      %v770 = vmul.f32 %v738, %v738
      %v771 = vmul.f32 %v739, %v739
      %v772 = vmul.f32 %v740, %v740
      %v773 = vmul.f32 %v741, %v741
      %v774 = vmul.f32 %v742, %v742
      %v775 = vmul.f32 %v743, %v743
      %v776 = vmul.f32 %v744, -2.7261424e-10
      %v777 = vmul.f32 %v745, -2.7261424e-10
      %v778 = vmul.f32 %v746, -2.7261424e-10
      %v779 = vmul.f32 %v747, -2.7261424e-10
      %v780 = vmul.f32 %v748, -2.7261424e-10
      %v781 = vmul.f32 %v749, -2.7261424e-10
      %v782 = vmul.f32 %v750, -2.7261424e-10
      %v783 = vmul.f32 %v751, -2.7261424e-10
      %v784 = vmul.f32 %v752, -2.7261424e-10
      %v785 = vmul.f32 %v753, -2.7261424e-10
      %v786 = vmul.f32 %v754, -2.7261424e-10
      %v787 = vmul.f32 %v755, -2.7261424e-10
      %v788 = vmul.f32 %v756, -2.7261424e-10
      %v789 = vmul.f32 %v757, -2.7261424e-10
      %v790 = vmul.f32 %v758, -2.7261424e-10
      %v791 = vmul.f32 %v759, -2.7261424e-10
      %v792 = vmul.f32 %v760, -2.7261424e-10
      %v793 = vmul.f32 %v761, -2.7261424e-10
      %v794 = vmul.f32 %v762, -2.7261424e-10
      %v795 = vmul.f32 %v763, -2.7261424e-10
      %v796 = vmul.f32 %v764, -2.7261424e-10
      %v797 = vmul.f32 %v765, -2.7261424e-10
      %v798 = vmul.f32 %v766, -2.7261424e-10
      %v799 = vmul.f32 %v767, -2.7261424e-10
      %v800 = vmul.f32 %v768, -2.7261424e-10
      %v801 = vmul.f32 %v769, -2.7261424e-10
      %v802 = vmul.f32 %v770, -2.7261424e-10
      %v803 = vmul.f32 %v771, -2.7261424e-10
      %v804 = vmul.f32 %v772, -2.7261424e-10
      %v805 = vmul.f32 %v773, -2.7261424e-10
      %v806 = vmul.f32 %v774, -2.7261424e-10
      %v807 = vmul.f32 %v775, -2.7261424e-10
      %v808 = vadd.f32 %v776, 2.7706815e-08
      %v809 = vadd.f32 %v777, 2.7706815e-08
      %v810 = vadd.f32 %v778, 2.7706815e-08
      %v811 = vadd.f32 %v779, 2.7706815e-08
      %v812 = vadd.f32 %v780, 2.7706815e-08
      %v813 = vadd.f32 %v781, 2.7706815e-08
      %v814 = vadd.f32 %v782, 2.7706815e-08
      %v815 = vadd.f32 %v783, 2.7706815e-08
      %v816 = vadd.f32 %v784, 2.7706815e-08
      %v817 = vadd.f32 %v785, 2.7706815e-08
      %v818 = vadd.f32 %v786, 2.7706815e-08
      %v819 = vadd.f32 %v787, 2.7706815e-08
      %v820 = vadd.f32 %v788, 2.7706815e-08
      %v821 = vadd.f32 %v789, 2.7706815e-08
      %v822 = vadd.f32 %v790, 2.7706815e-08
      %v823 = vadd.f32 %v791, 2.7706815e-08
      %v824 = vadd.f32 %v792, 2.7706815e-08
      %v825 = vadd.f32 %v793, 2.7706815e-08
      %v826 = vadd.f32 %v794, 2.7706815e-08
      %v827 = vadd.f32 %v795, 2.7706815e-08
      %v828 = vadd.f32 %v796, 2.7706815e-08
      %v829 = vadd.f32 %v797, 2.7706815e-08
      %v830 = vadd.f32 %v798, 2.7706815e-08
      %v831 = vadd.f32 %v799, 2.7706815e-08
      %v832 = vadd.f32 %v800, 2.7706815e-08
      %v833 = vadd.f32 %v801, 2.7706815e-08
      %v834 = vadd.f32 %v802, 2.7706815e-08
      %v835 = vadd.f32 %v803, 2.7706815e-08
      %v836 = vadd.f32 %v804, 2.7706815e-08
      %v837 = vadd.f32 %v805, 2.7706815e-08
      %v838 = vadd.f32 %v806, 2.7706815e-08
      %v839 = vadd.f32 %v807, 2.7706815e-08
      %v840 = vmul.f32 %v808, %v744
      %v841 = vmul.f32 %v809, %v745
      %v842 = vmul.f32 %v810, %v746
      %v843 = vmul.f32 %v811, %v747
      %v844 = vmul.f32 %v812, %v748
      %v845 = vmul.f32 %v813, %v749
      %v846 = vmul.f32 %v814, %v750
      %v847 = vmul.f32 %v815, %v751
      %v848 = vmul.f32 %v816, %v752
      %v849 = vmul.f32 %v817, %v753
      %v850 = vmul.f32 %v818, %v754
      %v851 = vmul.f32 %v819, %v755
      %v852 = vmul.f32 %v820, %v756
      %v853 = vmul.f32 %v821, %v757
      %v854 = vmul.f32 %v822, %v758
      %v855 = vmul.f32 %v823, %v759
      %v856 = vmul.f32 %v824, %v760
      %v857 = vmul.f32 %v825, %v761
      %v858 = vmul.f32 %v826, %v762
      %v859 = vmul.f32 %v827, %v763
      %v860 = vmul.f32 %v828, %v764
      %v861 = vmul.f32 %v829, %v765
      %v862 = vmul.f32 %v830, %v766
      %v863 = vmul.f32 %v831, %v767
      %v864 = vmul.f32 %v832, %v768
      %v865 = vmul.f32 %v833, %v769
      %v866 = vmul.f32 %v834, %v770
      %v867 = vmul.f32 %v835, %v771
      %v868 = vmul.f32 %v836, %v772
      %v869 = vmul.f32 %v837, %v773
      %v870 = vmul.f32 %v838, %v774
      %v871 = vmul.f32 %v839, %v775
      %v872 = vadd.f32 %v840, -2.101024e-06
      %v873 = vadd.f32 %v841, -2.101024e-06
      %v874 = vadd.f32 %v842, -2.101024e-06
      %v875 = vadd.f32 %v843, -2.101024e-06
      %v876 = vadd.f32 %v844, -2.101024e-06
      %v877 = vadd.f32 %v845, -2.101024e-06
      %v878 = vadd.f32 %v846, -2.101024e-06
      %v879 = vadd.f32 %v847, -2.101024e-06
      %v880 = vadd.f32 %v848, -2.101024e-06
      %v881 = vadd.f32 %v849, -2.101024e-06
      %v882 = vadd.f32 %v850, -2.101024e-06
      %v883 = vadd.f32 %v851, -2.101024e-06
      %v884 = vadd.f32 %v852, -2.101024e-06
      %v885 = vadd.f32 %v853, -2.101024e-06
      %v886 = vadd.f32 %v854, -2.101024e-06
      %v887 = vadd.f32 %v855, -2.101024e-06
      %v888 = vadd.f32 %v856, -2.101024e-06
      %v889 = vadd.f32 %v857, -2.101024e-06
      %v890 = vadd.f32 %v858, -2.101024e-06
      %v891 = vadd.f32 %v859, -2.101024e-06
      %v892 = vadd.f32 %v860, -2.101024e-06
      %v893 = vadd.f32 %v861, -2.101024e-06
      %v894 = vadd.f32 %v862, -2.101024e-06
      %v895 = vadd.f32 %v863, -2.101024e-06
      %v896 = vadd.f32 %v864, -2.101024e-06
      %v897 = vadd.f32 %v865, -2.101024e-06
      %v898 = vadd.f32 %v866, -2.101024e-06
      %v899 = vadd.f32 %v867, -2.101024e-06
      %v900 = vadd.f32 %v868, -2.101024e-06
      %v901 = vadd.f32 %v869, -2.101024e-06
      %v902 = vadd.f32 %v870, -2.101024e-06
      %v903 = vadd.f32 %v871, -2.101024e-06
      %v904 = vmul.f32 %v872, %v744
      %v905 = vmul.f32 %v873, %v745
      %v906 = vmul.f32 %v874, %v746
      %v907 = vmul.f32 %v875, %v747
      %v908 = vmul.f32 %v876, %v748
      %v909 = vmul.f32 %v877, %v749
      %v910 = vmul.f32 %v878, %v750
      %v911 = vmul.f32 %v879, %v751
      %v912 = vmul.f32 %v880, %v752
      %v913 = vmul.f32 %v881, %v753
      %v914 = vmul.f32 %v882, %v754
      %v915 = vmul.f32 %v883, %v755
      %v916 = vmul.f32 %v884, %v756
      %v917 = vmul.f32 %v885, %v757
      %v918 = vmul.f32 %v886, %v758
      %v919 = vmul.f32 %v887, %v759
      %v920 = vmul.f32 %v888, %v760
      %v921 = vmul.f32 %v889, %v761
      %v922 = vmul.f32 %v890, %v762
      %v923 = vmul.f32 %v891, %v763
      %v924 = vmul.f32 %v892, %v764
      %v925 = vmul.f32 %v893, %v765
      %v926 = vmul.f32 %v894, %v766
      %v927 = vmul.f32 %v895, %v767
      %v928 = vmul.f32 %v896, %v768
      %v929 = vmul.f32 %v897, %v769
      %v930 = vmul.f32 %v898, %v770
      %v931 = vmul.f32 %v899, %v771
      %v932 = vmul.f32 %v900, %v772
      %v933 = vmul.f32 %v901, %v773
      %v934 = vmul.f32 %v902, %v774
      %v935 = vmul.f32 %v903, %v775
      %v936 = vadd.f32 %v904, -5.6925062e-05
      %v937 = vadd.f32 %v905, -5.6925062e-05
      %v938 = vadd.f32 %v906, -5.6925062e-05
      %v939 = vadd.f32 %v907, -5.6925062e-05
      %v940 = vadd.f32 %v908, -5.6925062e-05
      %v941 = vadd.f32 %v909, -5.6925062e-05
      %v942 = vadd.f32 %v910, -5.6925062e-05
      %v943 = vadd.f32 %v911, -5.6925062e-05
      %v944 = vadd.f32 %v912, -5.6925062e-05
      %v945 = vadd.f32 %v913, -5.6925062e-05
      %v946 = vadd.f32 %v914, -5.6925062e-05
      %v947 = vadd.f32 %v915, -5.6925062e-05
      %v948 = vadd.f32 %v916, -5.6925062e-05
      %v949 = vadd.f32 %v917, -5.6925062e-05
      %v950 = vadd.f32 %v918, -5.6925062e-05
      %v951 = vadd.f32 %v919, -5.6925062e-05
      %v952 = vadd.f32 %v920, -5.6925062e-05
      %v953 = vadd.f32 %v921, -5.6925062e-05
      %v954 = vadd.f32 %v922, -5.6925062e-05
      %v955 = vadd.f32 %v923, -5.6925062e-05
      %v956 = vadd.f32 %v924, -5.6925062e-05
      %v957 = vadd.f32 %v925, -5.6925062e-05
      %v958 = vadd.f32 %v926, -5.6925062e-05
      %v959 = vadd.f32 %v927, -5.6925062e-05
      %v960 = vadd.f32 %v928, -5.6925062e-05
      %v961 = vadd.f32 %v929, -5.6925062e-05
      %v962 = vadd.f32 %v930, -5.6925062e-05
      %v963 = vadd.f32 %v931, -5.6925062e-05
      %v964 = vadd.f32 %v932, -5.6925062e-05
      %v965 = vadd.f32 %v933, -5.6925062e-05
      %v966 = vadd.f32 %v934, -5.6925062e-05
      %v967 = vadd.f32 %v935, -5.6925062e-05
      %v968 = vmul.f32 %v936, %v744
      %v969 = vmul.f32 %v937, %v745
      %v970 = vmul.f32 %v938, %v746
      %v971 = vmul.f32 %v939, %v747
      %v972 = vmul.f32 %v940, %v748
      %v973 = vmul.f32 %v941, %v749
      %v974 = vmul.f32 %v942, %v750
      %v975 = vmul.f32 %v943, %v751
      %v976 = vmul.f32 %v944, %v752
      %v977 = vmul.f32 %v945, %v753
      %v978 = vmul.f32 %v946, %v754
      %v979 = vmul.f32 %v947, %v755
      %v980 = vmul.f32 %v948, %v756
      %v981 = vmul.f32 %v949, %v757
      %v982 = vmul.f32 %v950, %v758
      %v983 = vmul.f32 %v951, %v759
      %v984 = vmul.f32 %v952, %v760
      %v985 = vmul.f32 %v953, %v761
      %v986 = vmul.f32 %v954, %v762
      %v987 = vmul.f32 %v955, %v763
      %v988 = vmul.f32 %v956, %v764
      %v989 = vmul.f32 %v957, %v765
      %v990 = vmul.f32 %v958, %v766
      %v991 = vmul.f32 %v959, %v767
      %v992 = vmul.f32 %v960, %v768
      %v993 = vmul.f32 %v961, %v769
      %v994 = vmul.f32 %v962, %v770
      %v995 = vmul.f32 %v963, %v771
      %v996 = vmul.f32 %v964, %v772
      %v997 = vmul.f32 %v965, %v773
      %v998 = vmul.f32 %v966, %v774
      %v999 = vmul.f32 %v967, %v775
      %v1000 = vadd.f32 %v968, -0.00073499064
      %v1001 = vadd.f32 %v969, -0.00073499064
      %v1002 = vadd.f32 %v970, -0.00073499064
      %v1003 = vadd.f32 %v971, -0.00073499064
      %v1004 = vadd.f32 %v972, -0.00073499064
      %v1005 = vadd.f32 %v973, -0.00073499064
      %v1006 = vadd.f32 %v974, -0.00073499064
      %v1007 = vadd.f32 %v975, -0.00073499064
      %v1008 = vadd.f32 %v976, -0.00073499064
      %v1009 = vadd.f32 %v977, -0.00073499064
      %v1010 = vadd.f32 %v978, -0.00073499064
      %v1011 = vadd.f32 %v979, -0.00073499064
      %v1012 = vadd.f32 %v980, -0.00073499064
      %v1013 = vadd.f32 %v981, -0.00073499064
      %v1014 = vadd.f32 %v982, -0.00073499064
      %v1015 = vadd.f32 %v983, -0.00073499064
      %v1016 = vadd.f32 %v984, -0.00073499064
      %v1017 = vadd.f32 %v985, -0.00073499064
      %v1018 = vadd.f32 %v986, -0.00073499064
      %v1019 = vadd.f32 %v987, -0.00073499064
      %v1020 = vadd.f32 %v988, -0.00073499064
      %v1021 = vadd.f32 %v989, -0.00073499064
      %v1022 = vadd.f32 %v990, -0.00073499064
      %v1023 = vadd.f32 %v991, -0.00073499064
      %v1024 = vadd.f32 %v992, -0.00073499064
      %v1025 = vadd.f32 %v993, -0.00073499064
      %v1026 = vadd.f32 %v994, -0.00073499064
      %v1027 = vadd.f32 %v995, -0.00073499064
      %v1028 = vadd.f32 %v996, -0.00073499064
      %v1029 = vadd.f32 %v997, -0.00073499064
      %v1030 = vadd.f32 %v998, -0.00073499064
      %v1031 = vadd.f32 %v999, -0.00073499064
      %v1032 = vmul.f32 %v1000, %v744
      %v1033 = vmul.f32 %v1001, %v745
      %v1034 = vmul.f32 %v1002, %v746
      %v1035 = vmul.f32 %v1003, %v747
      %v1036 = vmul.f32 %v1004, %v748
      %v1037 = vmul.f32 %v1005, %v749
      %v1038 = vmul.f32 %v1006, %v750
      %v1039 = vmul.f32 %v1007, %v751
      %v1040 = vmul.f32 %v1008, %v752
      %v1041 = vmul.f32 %v1009, %v753
      %v1042 = vmul.f32 %v1010, %v754
      %v1043 = vmul.f32 %v1011, %v755
      %v1044 = vmul.f32 %v1012, %v756
      %v1045 = vmul.f32 %v1013, %v757
      %v1046 = vmul.f32 %v1014, %v758
      %v1047 = vmul.f32 %v1015, %v759
      %v1048 = vmul.f32 %v1016, %v760
      %v1049 = vmul.f32 %v1017, %v761
      %v1050 = vmul.f32 %v1018, %v762
      %v1051 = vmul.f32 %v1019, %v763
      %v1052 = vmul.f32 %v1020, %v764
      %v1053 = vmul.f32 %v1021, %v765
      %v1054 = vmul.f32 %v1022, %v766
      %v1055 = vmul.f32 %v1023, %v767
      %v1056 = vmul.f32 %v1024, %v768
      %v1057 = vmul.f32 %v1025, %v769
      %v1058 = vmul.f32 %v1026, %v770
      %v1059 = vmul.f32 %v1027, %v771
      %v1060 = vmul.f32 %v1028, %v772
      %v1061 = vmul.f32 %v1029, %v773
      %v1062 = vmul.f32 %v1030, %v774
      %v1063 = vmul.f32 %v1031, %v775
      %v1064 = vadd.f32 %v1032, -0.0029546
      %v1065 = vadd.f32 %v1033, -0.0029546
      %v1066 = vadd.f32 %v1034, -0.0029546
      %v1067 = vadd.f32 %v1035, -0.0029546
      %v1068 = vadd.f32 %v1036, -0.0029546
      %v1069 = vadd.f32 %v1037, -0.0029546
      %v1070 = vadd.f32 %v1038, -0.0029546
      %v1071 = vadd.f32 %v1039, -0.0029546
      %v1072 = vadd.f32 %v1040, -0.0029546
      %v1073 = vadd.f32 %v1041, -0.0029546
      %v1074 = vadd.f32 %v1042, -0.0029546
      %v1075 = vadd.f32 %v1043, -0.0029546
      %v1076 = vadd.f32 %v1044, -0.0029546
      %v1077 = vadd.f32 %v1045, -0.0029546
      %v1078 = vadd.f32 %v1046, -0.0029546
      %v1079 = vadd.f32 %v1047, -0.0029546
      %v1080 = vadd.f32 %v1048, -0.0029546
      %v1081 = vadd.f32 %v1049, -0.0029546
      %v1082 = vadd.f32 %v1050, -0.0029546
      %v1083 = vadd.f32 %v1051, -0.0029546
      %v1084 = vadd.f32 %v1052, -0.0029546
      %v1085 = vadd.f32 %v1053, -0.0029546
      %v1086 = vadd.f32 %v1054, -0.0029546
      %v1087 = vadd.f32 %v1055, -0.0029546
      %v1088 = vadd.f32 %v1056, -0.0029546
      %v1089 = vadd.f32 %v1057, -0.0029546
      %v1090 = vadd.f32 %v1058, -0.0029546
      %v1091 = vadd.f32 %v1059, -0.0029546
      %v1092 = vadd.f32 %v1060, -0.0029546
      %v1093 = vadd.f32 %v1061, -0.0029546
      %v1094 = vadd.f32 %v1062, -0.0029546
      %v1095 = vadd.f32 %v1063, -0.0029546
      %v1096 = vmul.f32 %v1064, %v744
      %v1097 = vmul.f32 %v1065, %v745
      %v1098 = vmul.f32 %v1066, %v746
      %v1099 = vmul.f32 %v1067, %v747
      %v1100 = vmul.f32 %v1068, %v748
      %v1101 = vmul.f32 %v1069, %v749
      %v1102 = vmul.f32 %v1070, %v750
      %v1103 = vmul.f32 %v1071, %v751
      %v1104 = vmul.f32 %v1072, %v752
      %v1105 = vmul.f32 %v1073, %v753
      %v1106 = vmul.f32 %v1074, %v754
      %v1107 = vmul.f32 %v1075, %v755
      %v1108 = vmul.f32 %v1076, %v756
      %v1109 = vmul.f32 %v1077, %v757
      %v1110 = vmul.f32 %v1078, %v758
      %v1111 = vmul.f32 %v1079, %v759
      %v1112 = vmul.f32 %v1080, %v760
      %v1113 = vmul.f32 %v1081, %v761
      %v1114 = vmul.f32 %v1082, %v762
      %v1115 = vmul.f32 %v1083, %v763
      %v1116 = vmul.f32 %v1084, %v764
      %v1117 = vmul.f32 %v1085, %v765
      %v1118 = vmul.f32 %v1086, %v766
      %v1119 = vmul.f32 %v1087, %v767
      %v1120 = vmul.f32 %v1088, %v768
      %v1121 = vmul.f32 %v1089, %v769
      %v1122 = vmul.f32 %v1090, %v770
      %v1123 = vmul.f32 %v1091, %v771
      %v1124 = vmul.f32 %v1092, %v772
      %v1125 = vmul.f32 %v1093, %v773
      %v1126 = vmul.f32 %v1094, %v774
      %v1127 = vmul.f32 %v1095, %v775
      %v1128 = vadd.f32 %v1096, -0.016096033
      %v1129 = vadd.f32 %v1097, -0.016096033
      %v1130 = vadd.f32 %v1098, -0.016096033
      %v1131 = vadd.f32 %v1099, -0.016096033
      %v1132 = vadd.f32 %v1100, -0.016096033
      %v1133 = vadd.f32 %v1101, -0.016096033
      %v1134 = vadd.f32 %v1102, -0.016096033
      %v1135 = vadd.f32 %v1103, -0.016096033
      %v1136 = vadd.f32 %v1104, -0.016096033
      %v1137 = vadd.f32 %v1105, -0.016096033
      %v1138 = vadd.f32 %v1106, -0.016096033
      %v1139 = vadd.f32 %v1107, -0.016096033
      %v1140 = vadd.f32 %v1108, -0.016096033
      %v1141 = vadd.f32 %v1109, -0.016096033
      %v1142 = vadd.f32 %v1110, -0.016096033
      %v1143 = vadd.f32 %v1111, -0.016096033
      %v1144 = vadd.f32 %v1112, -0.016096033
      %v1145 = vadd.f32 %v1113, -0.016096033
      %v1146 = vadd.f32 %v1114, -0.016096033
      %v1147 = vadd.f32 %v1115, -0.016096033
      %v1148 = vadd.f32 %v1116, -0.016096033
      %v1149 = vadd.f32 %v1117, -0.016096033
      %v1150 = vadd.f32 %v1118, -0.016096033
      %v1151 = vadd.f32 %v1119, -0.016096033
      %v1152 = vadd.f32 %v1120, -0.016096033
      %v1153 = vadd.f32 %v1121, -0.016096033
      %v1154 = vadd.f32 %v1122, -0.016096033
      %v1155 = vadd.f32 %v1123, -0.016096033
      %v1156 = vadd.f32 %v1124, -0.016096033
      %v1157 = vadd.f32 %v1125, -0.016096033
      %v1158 = vadd.f32 %v1126, -0.016096033
      %v1159 = vadd.f32 %v1127, -0.016096033
      %v1160 = vmul.f32 %v744, -1.45660715e-05
      %v1161 = vmul.f32 %v745, -1.45660715e-05
      %v1162 = vmul.f32 %v746, -1.45660715e-05
      %v1163 = vmul.f32 %v747, -1.45660715e-05
      %v1164 = vmul.f32 %v748, -1.45660715e-05
      %v1165 = vmul.f32 %v749, -1.45660715e-05
      %v1166 = vmul.f32 %v750, -1.45660715e-05
      %v1167 = vmul.f32 %v751, -1.45660715e-05
      %v1168 = vmul.f32 %v752, -1.45660715e-05
      %v1169 = vmul.f32 %v753, -1.45660715e-05
      %v1170 = vmul.f32 %v754, -1.45660715e-05
      %v1171 = vmul.f32 %v755, -1.45660715e-05
      %v1172 = vmul.f32 %v756, -1.45660715e-05
      %v1173 = vmul.f32 %v757, -1.45660715e-05
      %v1174 = vmul.f32 %v758, -1.45660715e-05
      %v1175 = vmul.f32 %v759, -1.45660715e-05
      %v1176 = vmul.f32 %v760, -1.45660715e-05
      %v1177 = vmul.f32 %v761, -1.45660715e-05
      %v1178 = vmul.f32 %v762, -1.45660715e-05
      %v1179 = vmul.f32 %v763, -1.45660715e-05
      %v1180 = vmul.f32 %v764, -1.45660715e-05
      %v1181 = vmul.f32 %v765, -1.45660715e-05
      %v1182 = vmul.f32 %v766, -1.45660715e-05
      %v1183 = vmul.f32 %v767, -1.45660715e-05
      %v1184 = vmul.f32 %v768, -1.45660715e-05
      %v1185 = vmul.f32 %v769, -1.45660715e-05
      %v1186 = vmul.f32 %v770, -1.45660715e-05
      %v1187 = vmul.f32 %v771, -1.45660715e-05
      %v1188 = vmul.f32 %v772, -1.45660715e-05
      %v1189 = vmul.f32 %v773, -1.45660715e-05
      %v1190 = vmul.f32 %v774, -1.45660715e-05
      %v1191 = vmul.f32 %v775, -1.45660715e-05
      %v1192 = vadd.f32 %v1160, -0.00021337405
      %v1193 = vadd.f32 %v1161, -0.00021337405
      %v1194 = vadd.f32 %v1162, -0.00021337405
      %v1195 = vadd.f32 %v1163, -0.00021337405
      %v1196 = vadd.f32 %v1164, -0.00021337405
      %v1197 = vadd.f32 %v1165, -0.00021337405
      %v1198 = vadd.f32 %v1166, -0.00021337405
      %v1199 = vadd.f32 %v1167, -0.00021337405
      %v1200 = vadd.f32 %v1168, -0.00021337405
      %v1201 = vadd.f32 %v1169, -0.00021337405
      %v1202 = vadd.f32 %v1170, -0.00021337405
      %v1203 = vadd.f32 %v1171, -0.00021337405
      %v1204 = vadd.f32 %v1172, -0.00021337405
      %v1205 = vadd.f32 %v1173, -0.00021337405
      %v1206 = vadd.f32 %v1174, -0.00021337405
      %v1207 = vadd.f32 %v1175, -0.00021337405
      %v1208 = vadd.f32 %v1176, -0.00021337405
      %v1209 = vadd.f32 %v1177, -0.00021337405
      %v1210 = vadd.f32 %v1178, -0.00021337405
      %v1211 = vadd.f32 %v1179, -0.00021337405
      %v1212 = vadd.f32 %v1180, -0.00021337405
      %v1213 = vadd.f32 %v1181, -0.00021337405
      %v1214 = vadd.f32 %v1182, -0.00021337405
      %v1215 = vadd.f32 %v1183, -0.00021337405
      %v1216 = vadd.f32 %v1184, -0.00021337405
      %v1217 = vadd.f32 %v1185, -0.00021337405
      %v1218 = vadd.f32 %v1186, -0.00021337405
      %v1219 = vadd.f32 %v1187, -0.00021337405
      %v1220 = vadd.f32 %v1188, -0.00021337405
      %v1221 = vadd.f32 %v1189, -0.00021337405
      %v1222 = vadd.f32 %v1190, -0.00021337405
      %v1223 = vadd.f32 %v1191, -0.00021337405
      %v1224 = vmul.f32 %v1192, %v744
      %v1225 = vmul.f32 %v1193, %v745
      %v1226 = vmul.f32 %v1194, %v746
      %v1227 = vmul.f32 %v1195, %v747
      %v1228 = vmul.f32 %v1196, %v748
      %v1229 = vmul.f32 %v1197, %v749
      %v1230 = vmul.f32 %v1198, %v750
      %v1231 = vmul.f32 %v1199, %v751
      %v1232 = vmul.f32 %v1200, %v752
      %v1233 = vmul.f32 %v1201, %v753
      %v1234 = vmul.f32 %v1202, %v754
      %v1235 = vmul.f32 %v1203, %v755
      %v1236 = vmul.f32 %v1204, %v756
      %v1237 = vmul.f32 %v1205, %v757
      %v1238 = vmul.f32 %v1206, %v758
      %v1239 = vmul.f32 %v1207, %v759
      %v1240 = vmul.f32 %v1208, %v760
      %v1241 = vmul.f32 %v1209, %v761
      %v1242 = vmul.f32 %v1210, %v762
      %v1243 = vmul.f32 %v1211, %v763
      %v1244 = vmul.f32 %v1212, %v764
      %v1245 = vmul.f32 %v1213, %v765
      %v1246 = vmul.f32 %v1214, %v766
      %v1247 = vmul.f32 %v1215, %v767
      %v1248 = vmul.f32 %v1216, %v768
      %v1249 = vmul.f32 %v1217, %v769
      %v1250 = vmul.f32 %v1218, %v770
      %v1251 = vmul.f32 %v1219, %v771
      %v1252 = vmul.f32 %v1220, %v772
      %v1253 = vmul.f32 %v1221, %v773
      %v1254 = vmul.f32 %v1222, %v774
      %v1255 = vmul.f32 %v1223, %v775
      %v1256 = vadd.f32 %v1224, -0.001682827
      %v1257 = vadd.f32 %v1225, -0.001682827
      %v1258 = vadd.f32 %v1226, -0.001682827
      %v1259 = vadd.f32 %v1227, -0.001682827
      %v1260 = vadd.f32 %v1228, -0.001682827
      %v1261 = vadd.f32 %v1229, -0.001682827
      %v1262 = vadd.f32 %v1230, -0.001682827
      %v1263 = vadd.f32 %v1231, -0.001682827
      %v1264 = vadd.f32 %v1232, -0.001682827
      %v1265 = vadd.f32 %v1233, -0.001682827
      %v1266 = vadd.f32 %v1234, -0.001682827
      %v1267 = vadd.f32 %v1235, -0.001682827
      %v1268 = vadd.f32 %v1236, -0.001682827
      %v1269 = vadd.f32 %v1237, -0.001682827
      %v1270 = vadd.f32 %v1238, -0.001682827
      %v1271 = vadd.f32 %v1239, -0.001682827
      %v1272 = vadd.f32 %v1240, -0.001682827
      %v1273 = vadd.f32 %v1241, -0.001682827
      %v1274 = vadd.f32 %v1242, -0.001682827
      %v1275 = vadd.f32 %v1243, -0.001682827
      %v1276 = vadd.f32 %v1244, -0.001682827
      %v1277 = vadd.f32 %v1245, -0.001682827
      %v1278 = vadd.f32 %v1246, -0.001682827
      %v1279 = vadd.f32 %v1247, -0.001682827
      %v1280 = vadd.f32 %v1248, -0.001682827
      %v1281 = vadd.f32 %v1249, -0.001682827
      %v1282 = vadd.f32 %v1250, -0.001682827
      %v1283 = vadd.f32 %v1251, -0.001682827
      %v1284 = vadd.f32 %v1252, -0.001682827
      %v1285 = vadd.f32 %v1253, -0.001682827
      %v1286 = vadd.f32 %v1254, -0.001682827
      %v1287 = vadd.f32 %v1255, -0.001682827
      %v1288 = vmul.f32 %v1256, %v744
      %v1289 = vmul.f32 %v1257, %v745
      %v1290 = vmul.f32 %v1258, %v746
      %v1291 = vmul.f32 %v1259, %v747
      %v1292 = vmul.f32 %v1260, %v748
      %v1293 = vmul.f32 %v1261, %v749
      %v1294 = vmul.f32 %v1262, %v750
      %v1295 = vmul.f32 %v1263, %v751
      %v1296 = vmul.f32 %v1264, %v752
      %v1297 = vmul.f32 %v1265, %v753
      %v1298 = vmul.f32 %v1266, %v754
      %v1299 = vmul.f32 %v1267, %v755
      %v1300 = vmul.f32 %v1268, %v756
      %v1301 = vmul.f32 %v1269, %v757
      %v1302 = vmul.f32 %v1270, %v758
      %v1303 = vmul.f32 %v1271, %v759
      %v1304 = vmul.f32 %v1272, %v760
      %v1305 = vmul.f32 %v1273, %v761
      %v1306 = vmul.f32 %v1274, %v762
      %v1307 = vmul.f32 %v1275, %v763
      %v1308 = vmul.f32 %v1276, %v764
      %v1309 = vmul.f32 %v1277, %v765
      %v1310 = vmul.f32 %v1278, %v766
      %v1311 = vmul.f32 %v1279, %v767
      %v1312 = vmul.f32 %v1280, %v768
      %v1313 = vmul.f32 %v1281, %v769
      %v1314 = vmul.f32 %v1282, %v770
      %v1315 = vmul.f32 %v1283, %v771
      %v1316 = vmul.f32 %v1284, %v772
      %v1317 = vmul.f32 %v1285, %v773
      %v1318 = vmul.f32 %v1286, %v774
      %v1319 = vmul.f32 %v1287, %v775
      %v1320 = vadd.f32 %v1288, -0.0073733293
      %v1321 = vadd.f32 %v1289, -0.0073733293
      %v1322 = vadd.f32 %v1290, -0.0073733293
      %v1323 = vadd.f32 %v1291, -0.0073733293
      %v1324 = vadd.f32 %v1292, -0.0073733293
      %v1325 = vadd.f32 %v1293, -0.0073733293
      %v1326 = vadd.f32 %v1294, -0.0073733293
      %v1327 = vadd.f32 %v1295, -0.0073733293
      %v1328 = vadd.f32 %v1296, -0.0073733293
      %v1329 = vadd.f32 %v1297, -0.0073733293
      %v1330 = vadd.f32 %v1298, -0.0073733293
      %v1331 = vadd.f32 %v1299, -0.0073733293
      %v1332 = vadd.f32 %v1300, -0.0073733293
      %v1333 = vadd.f32 %v1301, -0.0073733293
      %v1334 = vadd.f32 %v1302, -0.0073733293
      %v1335 = vadd.f32 %v1303, -0.0073733293
      %v1336 = vadd.f32 %v1304, -0.0073733293
      %v1337 = vadd.f32 %v1305, -0.0073733293
      %v1338 = vadd.f32 %v1306, -0.0073733293
      %v1339 = vadd.f32 %v1307, -0.0073733293
      %v1340 = vadd.f32 %v1308, -0.0073733293
      %v1341 = vadd.f32 %v1309, -0.0073733293
      %v1342 = vadd.f32 %v1310, -0.0073733293
      %v1343 = vadd.f32 %v1311, -0.0073733293
      %v1344 = vadd.f32 %v1312, -0.0073733293
      %v1345 = vadd.f32 %v1313, -0.0073733293
      %v1346 = vadd.f32 %v1314, -0.0073733293
      %v1347 = vadd.f32 %v1315, -0.0073733293
      %v1348 = vadd.f32 %v1316, -0.0073733293
      %v1349 = vadd.f32 %v1317, -0.0073733293
      %v1350 = vadd.f32 %v1318, -0.0073733293
      %v1351 = vadd.f32 %v1319, -0.0073733293
      %v1352 = vmul.f32 %v1320, %v744
      %v1353 = vmul.f32 %v1321, %v745
      %v1354 = vmul.f32 %v1322, %v746
      %v1355 = vmul.f32 %v1323, %v747
      %v1356 = vmul.f32 %v1324, %v748
      %v1357 = vmul.f32 %v1325, %v749
      %v1358 = vmul.f32 %v1326, %v750
      %v1359 = vmul.f32 %v1327, %v751
      %v1360 = vmul.f32 %v1328, %v752
      %v1361 = vmul.f32 %v1329, %v753
      %v1362 = vmul.f32 %v1330, %v754
      %v1363 = vmul.f32 %v1331, %v755
      %v1364 = vmul.f32 %v1332, %v756
      %v1365 = vmul.f32 %v1333, %v757
      %v1366 = vmul.f32 %v1334, %v758
      %v1367 = vmul.f32 %v1335, %v759
      %v1368 = vmul.f32 %v1336, %v760
      %v1369 = vmul.f32 %v1337, %v761
      %v1370 = vmul.f32 %v1338, %v762
      %v1371 = vmul.f32 %v1339, %v763
      %v1372 = vmul.f32 %v1340, %v764
      %v1373 = vmul.f32 %v1341, %v765
      %v1374 = vmul.f32 %v1342, %v766
      %v1375 = vmul.f32 %v1343, %v767
      %v1376 = vmul.f32 %v1344, %v768
      %v1377 = vmul.f32 %v1345, %v769
      %v1378 = vmul.f32 %v1346, %v770
      %v1379 = vmul.f32 %v1347, %v771
      %v1380 = vmul.f32 %v1348, %v772
      %v1381 = vmul.f32 %v1349, %v773
      %v1382 = vmul.f32 %v1350, %v774
      %v1383 = vmul.f32 %v1351, %v775
      %v1384 = vadd.f32 %v1352, -0.014264739
      %v1385 = vadd.f32 %v1353, -0.014264739
      %v1386 = vadd.f32 %v1354, -0.014264739
      %v1387 = vadd.f32 %v1355, -0.014264739
      %v1388 = vadd.f32 %v1356, -0.014264739
      %v1389 = vadd.f32 %v1357, -0.014264739
      %v1390 = vadd.f32 %v1358, -0.014264739
      %v1391 = vadd.f32 %v1359, -0.014264739
      %v1392 = vadd.f32 %v1360, -0.014264739
      %v1393 = vadd.f32 %v1361, -0.014264739
      %v1394 = vadd.f32 %v1362, -0.014264739
      %v1395 = vadd.f32 %v1363, -0.014264739
      %v1396 = vadd.f32 %v1364, -0.014264739
      %v1397 = vadd.f32 %v1365, -0.014264739
      %v1398 = vadd.f32 %v1366, -0.014264739
      %v1399 = vadd.f32 %v1367, -0.014264739
      %v1400 = vadd.f32 %v1368, -0.014264739
      %v1401 = vadd.f32 %v1369, -0.014264739
      %v1402 = vadd.f32 %v1370, -0.014264739
      %v1403 = vadd.f32 %v1371, -0.014264739
      %v1404 = vadd.f32 %v1372, -0.014264739
      %v1405 = vadd.f32 %v1373, -0.014264739
      %v1406 = vadd.f32 %v1374, -0.014264739
      %v1407 = vadd.f32 %v1375, -0.014264739
      %v1408 = vadd.f32 %v1376, -0.014264739
      %v1409 = vadd.f32 %v1377, -0.014264739
      %v1410 = vadd.f32 %v1378, -0.014264739
      %v1411 = vadd.f32 %v1379, -0.014264739
      %v1412 = vadd.f32 %v1380, -0.014264739
      %v1413 = vadd.f32 %v1381, -0.014264739
      %v1414 = vadd.f32 %v1382, -0.014264739
      %v1415 = vadd.f32 %v1383, -0.014264739
      %v1416 = vmul.f32 %v712, %v1128
      %v1417 = vmul.f32 %v713, %v1129
      %v1418 = vmul.f32 %v714, %v1130
      %v1419 = vmul.f32 %v715, %v1131
      %v1420 = vmul.f32 %v716, %v1132
      %v1421 = vmul.f32 %v717, %v1133
      %v1422 = vmul.f32 %v718, %v1134
      %v1423 = vmul.f32 %v719, %v1135
      %v1424 = vmul.f32 %v720, %v1136
      %v1425 = vmul.f32 %v721, %v1137
      %v1426 = vmul.f32 %v722, %v1138
      %v1427 = vmul.f32 %v723, %v1139
      %v1428 = vmul.f32 %v724, %v1140
      %v1429 = vmul.f32 %v725, %v1141
      %v1430 = vmul.f32 %v726, %v1142
      %v1431 = vmul.f32 %v727, %v1143
      %v1432 = vmul.f32 %v728, %v1144
      %v1433 = vmul.f32 %v729, %v1145
      %v1434 = vmul.f32 %v730, %v1146
      %v1435 = vmul.f32 %v731, %v1147
      %v1436 = vmul.f32 %v732, %v1148
      %v1437 = vmul.f32 %v733, %v1149
      %v1438 = vmul.f32 %v734, %v1150
      %v1439 = vmul.f32 %v735, %v1151
      %v1440 = vmul.f32 %v736, %v1152
      %v1441 = vmul.f32 %v737, %v1153
      %v1442 = vmul.f32 %v738, %v1154
      %v1443 = vmul.f32 %v739, %v1155
      %v1444 = vmul.f32 %v740, %v1156
      %v1445 = vmul.f32 %v741, %v1157
      %v1446 = vmul.f32 %v742, %v1158
      %v1447 = vmul.f32 %v743, %v1159
      %v1448 = vrcp.pop %v1384
      %v1449 = vrcp.pop %v1385
      %v1450 = vrcp.pop %v1386
      %v1451 = vrcp.pop %v1387
      %v1452 = vrcp.pop %v1388
      %v1453 = vrcp.pop %v1389
      %v1454 = vrcp.pop %v1390
      %v1455 = vrcp.pop %v1391
      %v1456 = vrcp.pop %v1392
      %v1457 = vrcp.pop %v1393
      %v1458 = vrcp.pop %v1394
      %v1459 = vrcp.pop %v1395
      %v1460 = vrcp.pop %v1396
      %v1461 = vrcp.pop %v1397
      %v1462 = vrcp.pop %v1398
      %v1463 = vrcp.pop %v1399
      %v1464 = vrcp.pop %v1400
      %v1465 = vrcp.pop %v1401
      %v1466 = vrcp.pop %v1402
      %v1467 = vrcp.pop %v1403
      %v1468 = vrcp.pop %v1404
      %v1469 = vrcp.pop %v1405
      %v1470 = vrcp.pop %v1406
      %v1471 = vrcp.pop %v1407
      %v1472 = vrcp.pop %v1408
      %v1473 = vrcp.pop %v1409
      %v1474 = vrcp.pop %v1410
      %v1475 = vrcp.pop %v1411
      %v1476 = vrcp.pop %v1412
      %v1477 = vrcp.pop %v1413
      %v1478 = vrcp.pop %v1414
      %v1479 = vrcp.pop %v1415
      %v1480 = vmul.f32 %v1384, %v1448
      %v1481 = vmul.f32 %v1385, %v1449
      %v1482 = vmul.f32 %v1386, %v1450
      %v1483 = vmul.f32 %v1387, %v1451
      %v1484 = vmul.f32 %v1388, %v1452
      %v1485 = vmul.f32 %v1389, %v1453
      %v1486 = vmul.f32 %v1390, %v1454
      %v1487 = vmul.f32 %v1391, %v1455
      %v1488 = vmul.f32 %v1392, %v1456
      %v1489 = vmul.f32 %v1393, %v1457
      %v1490 = vmul.f32 %v1394, %v1458
      %v1491 = vmul.f32 %v1395, %v1459
      %v1492 = vmul.f32 %v1396, %v1460
      %v1493 = vmul.f32 %v1397, %v1461
      %v1494 = vmul.f32 %v1398, %v1462
      %v1495 = vmul.f32 %v1399, %v1463
      %v1496 = vmul.f32 %v1400, %v1464
      %v1497 = vmul.f32 %v1401, %v1465
      %v1498 = vmul.f32 %v1402, %v1466
      %v1499 = vmul.f32 %v1403, %v1467
      %v1500 = vmul.f32 %v1404, %v1468
      %v1501 = vmul.f32 %v1405, %v1469
      %v1502 = vmul.f32 %v1406, %v1470
      %v1503 = vmul.f32 %v1407, %v1471
      %v1504 = vmul.f32 %v1408, %v1472
      %v1505 = vmul.f32 %v1409, %v1473
      %v1506 = vmul.f32 %v1410, %v1474
      %v1507 = vmul.f32 %v1411, %v1475
      %v1508 = vmul.f32 %v1412, %v1476
      %v1509 = vmul.f32 %v1413, %v1477
      %v1510 = vmul.f32 %v1414, %v1478
      %v1511 = vmul.f32 %v1415, %v1479
      %v1512 = vsub.f32 2.0, %v1480
      %v1513 = vsub.f32 2.0, %v1481
      %v1514 = vsub.f32 2.0, %v1482
      %v1515 = vsub.f32 2.0, %v1483
      %v1516 = vsub.f32 2.0, %v1484
      %v1517 = vsub.f32 2.0, %v1485
      %v1518 = vsub.f32 2.0, %v1486
      %v1519 = vsub.f32 2.0, %v1487
      %v1520 = vsub.f32 2.0, %v1488
      %v1521 = vsub.f32 2.0, %v1489
      %v1522 = vsub.f32 2.0, %v1490
      %v1523 = vsub.f32 2.0, %v1491
      %v1524 = vsub.f32 2.0, %v1492
      %v1525 = vsub.f32 2.0, %v1493
      %v1526 = vsub.f32 2.0, %v1494
      %v1527 = vsub.f32 2.0, %v1495
      %v1528 = vsub.f32 2.0, %v1496
      %v1529 = vsub.f32 2.0, %v1497
      %v1530 = vsub.f32 2.0, %v1498
      %v1531 = vsub.f32 2.0, %v1499
      %v1532 = vsub.f32 2.0, %v1500
      %v1533 = vsub.f32 2.0, %v1501
      %v1534 = vsub.f32 2.0, %v1502
      %v1535 = vsub.f32 2.0, %v1503
      %v1536 = vsub.f32 2.0, %v1504
      %v1537 = vsub.f32 2.0, %v1505
      %v1538 = vsub.f32 2.0, %v1506
      %v1539 = vsub.f32 2.0, %v1507
      %v1540 = vsub.f32 2.0, %v1508
      %v1541 = vsub.f32 2.0, %v1509
      %v1542 = vsub.f32 2.0, %v1510
      %v1543 = vsub.f32 2.0, %v1511
      %v1544 = vmul.f32 %v1448, %v1512
      %v1545 = vmul.f32 %v1449, %v1513
      %v1546 = vmul.f32 %v1450, %v1514
      %v1547 = vmul.f32 %v1451, %v1515
      %v1548 = vmul.f32 %v1452, %v1516
      %v1549 = vmul.f32 %v1453, %v1517
      %v1550 = vmul.f32 %v1454, %v1518
      %v1551 = vmul.f32 %v1455, %v1519
      %v1552 = vmul.f32 %v1456, %v1520
      %v1553 = vmul.f32 %v1457, %v1521
      %v1554 = vmul.f32 %v1458, %v1522
      %v1555 = vmul.f32 %v1459, %v1523
      %v1556 = vmul.f32 %v1460, %v1524
      %v1557 = vmul.f32 %v1461, %v1525
      %v1558 = vmul.f32 %v1462, %v1526
      %v1559 = vmul.f32 %v1463, %v1527
      %v1560 = vmul.f32 %v1464, %v1528
      %v1561 = vmul.f32 %v1465, %v1529
      %v1562 = vmul.f32 %v1466, %v1530
      %v1563 = vmul.f32 %v1467, %v1531
      %v1564 = vmul.f32 %v1468, %v1532
      %v1565 = vmul.f32 %v1469, %v1533
      %v1566 = vmul.f32 %v1470, %v1534
      %v1567 = vmul.f32 %v1471, %v1535
      %v1568 = vmul.f32 %v1472, %v1536
      %v1569 = vmul.f32 %v1473, %v1537
      %v1570 = vmul.f32 %v1474, %v1538
      %v1571 = vmul.f32 %v1475, %v1539
      %v1572 = vmul.f32 %v1476, %v1540
      %v1573 = vmul.f32 %v1477, %v1541
      %v1574 = vmul.f32 %v1478, %v1542
      %v1575 = vmul.f32 %v1479, %v1543
      %v1576 = vmul.f32 %v1416, %v1544
      %v1577 = vmul.f32 %v1417, %v1545
      %v1578 = vmul.f32 %v1418, %v1546
      %v1579 = vmul.f32 %v1419, %v1547
      %v1580 = vmul.f32 %v1420, %v1548
      %v1581 = vmul.f32 %v1421, %v1549
      %v1582 = vmul.f32 %v1422, %v1550
      %v1583 = vmul.f32 %v1423, %v1551
      %v1584 = vmul.f32 %v1424, %v1552
      %v1585 = vmul.f32 %v1425, %v1553
      %v1586 = vmul.f32 %v1426, %v1554
      %v1587 = vmul.f32 %v1427, %v1555
      %v1588 = vmul.f32 %v1428, %v1556
      %v1589 = vmul.f32 %v1429, %v1557
      %v1590 = vmul.f32 %v1430, %v1558
      %v1591 = vmul.f32 %v1431, %v1559
      %v1592 = vmul.f32 %v1432, %v1560
      %v1593 = vmul.f32 %v1433, %v1561
      %v1594 = vmul.f32 %v1434, %v1562
      %v1595 = vmul.f32 %v1435, %v1563
      %v1596 = vmul.f32 %v1436, %v1564
      %v1597 = vmul.f32 %v1437, %v1565
      %v1598 = vmul.f32 %v1438, %v1566
      %v1599 = vmul.f32 %v1439, %v1567
      %v1600 = vmul.f32 %v1440, %v1568
      %v1601 = vmul.f32 %v1441, %v1569
      %v1602 = vmul.f32 %v1442, %v1570
      %v1603 = vmul.f32 %v1443, %v1571
      %v1604 = vmul.f32 %v1444, %v1572
      %v1605 = vmul.f32 %v1445, %v1573
      %v1606 = vmul.f32 %v1446, %v1574
      %v1607 = vmul.f32 %v1447, %v1575
      %v1608 = vadd.f32 %v1576, 1.0
      %v1609 = vadd.f32 %v1577, 1.0
      %v1610 = vadd.f32 %v1578, 1.0
      %v1611 = vadd.f32 %v1579, 1.0
      %v1612 = vadd.f32 %v1580, 1.0
      %v1613 = vadd.f32 %v1581, 1.0
      %v1614 = vadd.f32 %v1582, 1.0
      %v1615 = vadd.f32 %v1583, 1.0
      %v1616 = vadd.f32 %v1584, 1.0
      %v1617 = vadd.f32 %v1585, 1.0
      %v1618 = vadd.f32 %v1586, 1.0
      %v1619 = vadd.f32 %v1587, 1.0
      %v1620 = vadd.f32 %v1588, 1.0
      %v1621 = vadd.f32 %v1589, 1.0
      %v1622 = vadd.f32 %v1590, 1.0
      %v1623 = vadd.f32 %v1591, 1.0
      %v1624 = vadd.f32 %v1592, 1.0
      %v1625 = vadd.f32 %v1593, 1.0
      %v1626 = vadd.f32 %v1594, 1.0
      %v1627 = vadd.f32 %v1595, 1.0
      %v1628 = vadd.f32 %v1596, 1.0
      %v1629 = vadd.f32 %v1597, 1.0
      %v1630 = vadd.f32 %v1598, 1.0
      %v1631 = vadd.f32 %v1599, 1.0
      %v1632 = vadd.f32 %v1600, 1.0
      %v1633 = vadd.f32 %v1601, 1.0
      %v1634 = vadd.f32 %v1602, 1.0
      %v1635 = vadd.f32 %v1603, 1.0
      %v1636 = vadd.f32 %v1604, 1.0
      %v1637 = vadd.f32 %v1605, 1.0
      %v1638 = vadd.f32 %v1606, 1.0
      %v1639 = vadd.f32 %v1607, 1.0
      %v1640 = vmul.f32 %v616, %v1608
      %v1641 = vmul.f32 %v617, %v1609
      %v1642 = vmul.f32 %v618, %v1610
      %v1643 = vmul.f32 %v619, %v1611
      %v1644 = vmul.f32 %v620, %v1612
      %v1645 = vmul.f32 %v621, %v1613
      %v1646 = vmul.f32 %v622, %v1614
      %v1647 = vmul.f32 %v623, %v1615
      %v1648 = vmul.f32 %v624, %v1616
      %v1649 = vmul.f32 %v625, %v1617
      %v1650 = vmul.f32 %v626, %v1618
      %v1651 = vmul.f32 %v627, %v1619
      %v1652 = vmul.f32 %v628, %v1620
      %v1653 = vmul.f32 %v629, %v1621
      %v1654 = vmul.f32 %v630, %v1622
      %v1655 = vmul.f32 %v631, %v1623
      %v1656 = vmul.f32 %v632, %v1624
      %v1657 = vmul.f32 %v633, %v1625
      %v1658 = vmul.f32 %v634, %v1626
      %v1659 = vmul.f32 %v635, %v1627
      %v1660 = vmul.f32 %v636, %v1628
      %v1661 = vmul.f32 %v637, %v1629
      %v1662 = vmul.f32 %v638, %v1630
      %v1663 = vmul.f32 %v639, %v1631
      %v1664 = vmul.f32 %v640, %v1632
      %v1665 = vmul.f32 %v641, %v1633
      %v1666 = vmul.f32 %v642, %v1634
      %v1667 = vmul.f32 %v643, %v1635
      %v1668 = vmul.f32 %v644, %v1636
      %v1669 = vmul.f32 %v645, %v1637
      %v1670 = vmul.f32 %v646, %v1638
      %v1671 = vmul.f32 %v647, %v1639
      %v1672 = vld [vmem:[%s2] sm:$0xff]
      %v1673 = vld [vmem:[%s2 + $0x8] sm:$0xff]
      %v1674 = vld [vmem:[%s2 + $0x10] sm:$0xff]
      %v1675 = vld [vmem:[%s2 + $0x18] sm:$0xff]
      %v1676 = vld [vmem:[%s2 + $0x20] sm:$0xff]
      %v1677 = vld [vmem:[%s2 + $0x28] sm:$0xff]
      %v1678 = vld [vmem:[%s2 + $0x30] sm:$0xff]
      %v1679 = vld [vmem:[%s2 + $0x38] sm:$0xff]
      %v1680 = vld [vmem:[%s2 + $0x40] sm:$0xff]
      %v1681 = vld [vmem:[%s2 + $0x48] sm:$0xff]
      %v1682 = vld [vmem:[%s2 + $0x50] sm:$0xff]
      %v1683 = vld [vmem:[%s2 + $0x58] sm:$0xff]
      %v1684 = vld [vmem:[%s2 + $0x60] sm:$0xff]
      %v1685 = vld [vmem:[%s2 + $0x68] sm:$0xff]
      %v1686 = vld [vmem:[%s2 + $0x70] sm:$0xff]
      %v1687 = vld [vmem:[%s2 + $0x78] sm:$0xff]
      %v1688 = vld [vmem:[%s3 + $0x1] sm:$0x1]
      %v1689 = vlaneseq
      %v1690 = vshrl.u32 %v1689, 7
      %v1691 = vsub.s32 0, %v1690
      %v1692 = vrot.slane %v1688, %v1691
      %1693 = vmatprep.subr.mxu0 0.0
      %1694 = vmatpush1.msra.mxu0 %v1672
      %1695 = vmatprep.subr.mxu0 0.0
      %1696 = vmatpush1.msra.mxu0 %v1673
      %1697 = vmatprep.subr.mxu0 0.0
      %1698 = vmatpush1.msra.mxu0 %v1674
      %1699 = vmatprep.subr.mxu0 0.0
      %1700 = vmatpush1.msra.mxu0 %v1675
      %1701 = vmatprep.subr.mxu0 0.0
      %1702 = vmatpush1.msra.mxu0 %v1676
      %1703 = vmatprep.subr.mxu0 0.0
      %1704 = vmatpush1.msra.mxu0 %v1677
      %1705 = vmatprep.subr.mxu0 0.0
      %1706 = vmatpush1.msra.mxu0 %v1678
      %1707 = vmatprep.subr.mxu0 0.0
      %1708 = vmatpush1.msra.mxu0 %v1679
      %1709 = vmatprep.subr.mxu0 0.0
      %1710 = vmatpush1.msra.mxu0 %v1680
      %1711 = vmatprep.subr.mxu0 0.0
      %1712 = vmatpush1.msra.mxu0 %v1681
      %1713 = vmatprep.subr.mxu0 0.0
      %1714 = vmatpush1.msra.mxu0 %v1682
      %1715 = vmatprep.subr.mxu0 0.0
      %1716 = vmatpush1.msra.mxu0 %v1683
      %1717 = vmatprep.subr.mxu0 0.0
      %1718 = vmatpush1.msra.mxu0 %v1684
      %1719 = vmatprep.subr.mxu0 0.0
      %1720 = vmatpush1.msra.mxu0 %v1685
      %1721 = vmatprep.subr.mxu0 0.0
      %1722 = vmatpush1.msra.mxu0 %v1686
      %1723 = vmatprep.subr.mxu0 0.0
      %1724 = vmatpush1.msra.mxu0 %v1687
      %1725 = vmatprep.subr.mxu0 0.0
      %1726 = vmatpush1.msra.mxu0 0.0
      %1727 = vmatprep.subr.mxu0 0.0
      %1728 = vmatpush1.msra.mxu0 0.0
      %1729 = vmatprep.subr.mxu0 0.0
      %1730 = vmatpush1.msra.mxu0 0.0
      %1731 = vmatprep.subr.mxu0 0.0
      %1732 = vmatpush1.msra.mxu0 0.0
      %1733 = vmatprep.subr.mxu0 0.0
      %1734 = vmatpush1.msra.mxu0 0.0
      %1735 = vmatprep.subr.mxu0 0.0
      %1736 = vmatpush1.msra.mxu0 0.0
      %1737 = vmatprep.subr.mxu0 0.0
      %1738 = vmatpush1.msra.mxu0 0.0
      %1739 = vmatprep.subr.mxu0 0.0
      %1740 = vmatpush1.msra.mxu0 0.0
      %1741 = vmatprep.subr.mxu0 0.0
      %1742 = vmatpush1.msra.mxu0 0.0
      %1743 = vmatprep.subr.mxu0 0.0
      %1744 = vmatpush1.msra.mxu0 0.0
      %1745 = vmatprep.subr.mxu0 0.0
      %1746 = vmatpush1.msra.mxu0 0.0
      %1747 = vmatprep.subr.mxu0 0.0
      %1748 = vmatpush1.msra.mxu0 0.0
      %1749 = vmatprep.subr.mxu0 0.0
      %1750 = vmatpush1.msra.mxu0 0.0
      %1751 = vmatprep.subr.mxu0 0.0
      %1752 = vmatpush1.msra.mxu0 0.0
      %1753 = vmatprep.subr.mxu0 0.0
      %1754 = vmatpush1.msra.mxu0 0.0
      %1755 = vmatprep.subr.mxu0 0.0
      %1756 = vmatpush1.msra.mxu0 0.0
      %1757 = vmatprep.mubr.f32.mxu0 0.0
      %1758 = vmatmul.mubr.f32.gmra.mrb[0].mxu0 %v1640
      %v1759 = vpop.f32.mrb[0].mxu0
      %v1760 = vadd.f32 %v1692, %v1759
      %v1761 = vpop.f32.mrb[0].mxu0
      %1762 = vmatprep.mubr.f32.mxu0 0.0
      %1763 = vmatmul.mubr.f32.gmra.mrb[0].mxu0 %v1641
      %v1764 = vpop.f32.mrb[0].mxu0
      %v1765 = vadd.f32 %v1692, %v1764
      %v1766 = vpop.f32.mrb[0].mxu0
      %1767 = vmatprep.mubr.f32.mxu0 0.0
      %1768 = vmatmul.mubr.f32.gmra.mrb[0].mxu0 %v1642
      %v1769 = vpop.f32.mrb[0].mxu0
      %v1770 = vadd.f32 %v1692, %v1769
      %v1771 = vpop.f32.mrb[0].mxu0
      %1772 = vmatprep.mubr.f32.mxu0 0.0
      %1773 = vmatmul.mubr.f32.gmra.mrb[0].mxu0 %v1643
      %v1774 = vpop.f32.mrb[0].mxu0
      %v1775 = vadd.f32 %v1692, %v1774
      %v1776 = vpop.f32.mrb[0].mxu0
      %1777 = vmatprep.mubr.f32.mxu0 0.0
      %1778 = vmatmul.mubr.f32.gmra.mrb[0].mxu0 %v1644
      %v1779 = vpop.f32.mrb[0].mxu0
      %v1780 = vadd.f32 %v1692, %v1779
      %v1781 = vpop.f32.mrb[0].mxu0
      %1782 = vmatprep.mubr.f32.mxu0 0.0
      %1783 = vmatmul.mubr.f32.gmra.mrb[0].mxu0 %v1645
      %v1784 = vpop.f32.mrb[0].mxu0
      %v1785 = vadd.f32 %v1692, %v1784
      %v1786 = vpop.f32.mrb[0].mxu0
      %1787 = vmatprep.mubr.f32.mxu0 0.0
      %1788 = vmatmul.mubr.f32.gmra.mrb[0].mxu0 %v1646
      %v1789 = vpop.f32.mrb[0].mxu0
      %v1790 = vadd.f32 %v1692, %v1789
      %v1791 = vpop.f32.mrb[0].mxu0
      %1792 = vmatprep.mubr.f32.mxu0 0.0
      %1793 = vmatmul.mubr.f32.gmra.mrb[0].mxu0 %v1647
      %v1794 = vpop.f32.mrb[0].mxu0
      %v1795 = vadd.f32 %v1692, %v1794
      %v1796 = vpop.f32.mrb[0].mxu0
      %1797 = vmatprep.mubr.f32.mxu0 0.0
      %1798 = vmatmul.mubr.f32.gmra.mrb[0].mxu0 %v1648
      %v1799 = vpop.f32.mrb[0].mxu0
      %v1800 = vadd.f32 %v1692, %v1799
      %v1801 = vpop.f32.mrb[0].mxu0
      %1802 = vmatprep.mubr.f32.mxu0 0.0
      %1803 = vmatmul.mubr.f32.gmra.mrb[0].mxu0 %v1649
      %v1804 = vpop.f32.mrb[0].mxu0
      %v1805 = vadd.f32 %v1692, %v1804
      %v1806 = vpop.f32.mrb[0].mxu0
      %1807 = vmatprep.mubr.f32.mxu0 0.0
      %1808 = vmatmul.mubr.f32.gmra.mrb[0].mxu0 %v1650
      %v1809 = vpop.f32.mrb[0].mxu0
      %v1810 = vadd.f32 %v1692, %v1809
      %v1811 = vpop.f32.mrb[0].mxu0
      %1812 = vmatprep.mubr.f32.mxu0 0.0
      %1813 = vmatmul.mubr.f32.gmra.mrb[0].mxu0 %v1651
      %v1814 = vpop.f32.mrb[0].mxu0
      %v1815 = vadd.f32 %v1692, %v1814
      %v1816 = vpop.f32.mrb[0].mxu0
      %1817 = vmatprep.mubr.f32.mxu0 0.0
      %1818 = vmatmul.mubr.f32.gmra.mrb[0].mxu0 %v1652
      %v1819 = vpop.f32.mrb[0].mxu0
      %v1820 = vadd.f32 %v1692, %v1819
      %v1821 = vpop.f32.mrb[0].mxu0
      %1822 = vmatprep.mubr.f32.mxu0 0.0
      %1823 = vmatmul.mubr.f32.gmra.mrb[0].mxu0 %v1653
      %v1824 = vpop.f32.mrb[0].mxu0
      %v1825 = vadd.f32 %v1692, %v1824
      %v1826 = vpop.f32.mrb[0].mxu0
      %1827 = vmatprep.mubr.f32.mxu0 0.0
      %1828 = vmatmul.mubr.f32.gmra.mrb[0].mxu0 %v1654
      %v1829 = vpop.f32.mrb[0].mxu0
      %v1830 = vadd.f32 %v1692, %v1829
      %v1831 = vpop.f32.mrb[0].mxu0
      %1832 = vmatprep.mubr.f32.mxu0 0.0
      %1833 = vmatmul.mubr.f32.gmra.mrb[0].mxu0 %v1655
      %v1834 = vpop.f32.mrb[0].mxu0
      %v1835 = vadd.f32 %v1692, %v1834
      %v1836 = vpop.f32.mrb[0].mxu0
      %1837 = vmatprep.mubr.f32.mxu0 0.0
      %1838 = vmatmul.mubr.f32.gmra.mrb[0].mxu0 %v1656
      %v1839 = vpop.f32.mrb[0].mxu0
      %v1840 = vadd.f32 %v1692, %v1839
      %v1841 = vpop.f32.mrb[0].mxu0
      %1842 = vmatprep.mubr.f32.mxu0 0.0
      %1843 = vmatmul.mubr.f32.gmra.mrb[0].mxu0 %v1657
      %v1844 = vpop.f32.mrb[0].mxu0
      %v1845 = vadd.f32 %v1692, %v1844
      %v1846 = vpop.f32.mrb[0].mxu0
      %1847 = vmatprep.mubr.f32.mxu0 0.0
      %1848 = vmatmul.mubr.f32.gmra.mrb[0].mxu0 %v1658
      %v1849 = vpop.f32.mrb[0].mxu0
      %v1850 = vadd.f32 %v1692, %v1849
      %v1851 = vpop.f32.mrb[0].mxu0
      %1852 = vmatprep.mubr.f32.mxu0 0.0
      %1853 = vmatmul.mubr.f32.gmra.mrb[0].mxu0 %v1659
      %v1854 = vpop.f32.mrb[0].mxu0
      %v1855 = vadd.f32 %v1692, %v1854
      %v1856 = vpop.f32.mrb[0].mxu0
      %1857 = vmatprep.mubr.f32.mxu0 0.0
      %1858 = vmatmul.mubr.f32.gmra.mrb[0].mxu0 %v1660
      %v1859 = vpop.f32.mrb[0].mxu0
      %v1860 = vadd.f32 %v1692, %v1859
      %v1861 = vpop.f32.mrb[0].mxu0
      %1862 = vmatprep.mubr.f32.mxu0 0.0
      %1863 = vmatmul.mubr.f32.gmra.mrb[0].mxu0 %v1661
      %v1864 = vpop.f32.mrb[0].mxu0
      %v1865 = vadd.f32 %v1692, %v1864
      %v1866 = vpop.f32.mrb[0].mxu0
      %1867 = vmatprep.mubr.f32.mxu0 0.0
      %1868 = vmatmul.mubr.f32.gmra.mrb[0].mxu0 %v1662
      %v1869 = vpop.f32.mrb[0].mxu0
      %v1870 = vadd.f32 %v1692, %v1869
      %v1871 = vpop.f32.mrb[0].mxu0
      %1872 = vmatprep.mubr.f32.mxu0 0.0
      %1873 = vmatmul.mubr.f32.gmra.mrb[0].mxu0 %v1663
      %v1874 = vpop.f32.mrb[0].mxu0
      %v1875 = vadd.f32 %v1692, %v1874
      %v1876 = vpop.f32.mrb[0].mxu0
      %1877 = vmatprep.mubr.f32.mxu0 0.0
      %1878 = vmatmul.mubr.f32.gmra.mrb[0].mxu0 %v1664
      %v1879 = vpop.f32.mrb[0].mxu0
      %v1880 = vadd.f32 %v1692, %v1879
      %v1881 = vpop.f32.mrb[0].mxu0
      %1882 = vmatprep.mubr.f32.mxu0 0.0
      %1883 = vmatmul.mubr.f32.gmra.mrb[0].mxu0 %v1665
      %v1884 = vpop.f32.mrb[0].mxu0
      %v1885 = vadd.f32 %v1692, %v1884
      %v1886 = vpop.f32.mrb[0].mxu0
      %1887 = vmatprep.mubr.f32.mxu0 0.0
      %1888 = vmatmul.mubr.f32.gmra.mrb[0].mxu0 %v1666
      %v1889 = vpop.f32.mrb[0].mxu0
      %v1890 = vadd.f32 %v1692, %v1889
      %v1891 = vpop.f32.mrb[0].mxu0
      %1892 = vmatprep.mubr.f32.mxu0 0.0
      %1893 = vmatmul.mubr.f32.gmra.mrb[0].mxu0 %v1667
      %v1894 = vpop.f32.mrb[0].mxu0
      %v1895 = vadd.f32 %v1692, %v1894
      %v1896 = vpop.f32.mrb[0].mxu0
      %1897 = vmatprep.mubr.f32.mxu0 0.0
      %1898 = vmatmul.mubr.f32.gmra.mrb[0].mxu0 %v1668
      %v1899 = vpop.f32.mrb[0].mxu0
      %v1900 = vadd.f32 %v1692, %v1899
      %v1901 = vpop.f32.mrb[0].mxu0
      %1902 = vmatprep.mubr.f32.mxu0 0.0
      %1903 = vmatmul.mubr.f32.gmra.mrb[0].mxu0 %v1669
      %v1904 = vpop.f32.mrb[0].mxu0
      %v1905 = vadd.f32 %v1692, %v1904
      %v1906 = vpop.f32.mrb[0].mxu0
      %1907 = vmatprep.mubr.f32.mxu0 0.0
      %1908 = vmatmul.mubr.f32.gmra.mrb[0].mxu0 %v1670
      %v1909 = vpop.f32.mrb[0].mxu0
      %v1910 = vadd.f32 %v1692, %v1909
      %v1911 = vpop.f32.mrb[0].mxu0
      %1912 = vmatprep.mubr.f32.mxu0 0.0
      %1913 = vmatmul.mubr.f32.gmra.mrb[0].mxu0 %v1671
      %v1914 = vpop.f32.mrb[0].mxu0
      %v1915 = vadd.f32 %v1692, %v1914
      %v1916 = vpop.f32.mrb[0].mxu0
      %1917 = vdwg.mxu0
      %v1918 = vmul.f32 %v1760, 0.5
      %v1919 = vmul.f32 %v1765, 0.5
      %v1920 = vmul.f32 %v1770, 0.5
      %v1921 = vmul.f32 %v1775, 0.5
      %v1922 = vmul.f32 %v1780, 0.5
      %v1923 = vmul.f32 %v1785, 0.5
      %v1924 = vmul.f32 %v1790, 0.5
      %v1925 = vmul.f32 %v1795, 0.5
      %v1926 = vmul.f32 %v1800, 0.5
      %v1927 = vmul.f32 %v1805, 0.5
      %v1928 = vmul.f32 %v1810, 0.5
      %v1929 = vmul.f32 %v1815, 0.5
      %v1930 = vmul.f32 %v1820, 0.5
      %v1931 = vmul.f32 %v1825, 0.5
      %v1932 = vmul.f32 %v1830, 0.5
      %v1933 = vmul.f32 %v1835, 0.5
      %v1934 = vmul.f32 %v1840, 0.5
      %v1935 = vmul.f32 %v1845, 0.5
      %v1936 = vmul.f32 %v1850, 0.5
      %v1937 = vmul.f32 %v1855, 0.5
      %v1938 = vmul.f32 %v1860, 0.5
      %v1939 = vmul.f32 %v1865, 0.5
      %v1940 = vmul.f32 %v1870, 0.5
      %v1941 = vmul.f32 %v1875, 0.5
      %v1942 = vmul.f32 %v1880, 0.5
      %v1943 = vmul.f32 %v1885, 0.5
      %v1944 = vmul.f32 %v1890, 0.5
      %v1945 = vmul.f32 %v1895, 0.5
      %v1946 = vmul.f32 %v1900, 0.5
      %v1947 = vmul.f32 %v1905, 0.5
      %v1948 = vmul.f32 %v1910, 0.5
      %v1949 = vmul.f32 %v1915, 0.5
      %v1950 = vmul.f32 %v1760, 0.70710677
      %v1951 = vmul.f32 %v1765, 0.70710677
      %v1952 = vmul.f32 %v1770, 0.70710677
      %v1953 = vmul.f32 %v1775, 0.70710677
      %v1954 = vmul.f32 %v1780, 0.70710677
      %v1955 = vmul.f32 %v1785, 0.70710677
      %v1956 = vmul.f32 %v1790, 0.70710677
      %v1957 = vmul.f32 %v1795, 0.70710677
      %v1958 = vmul.f32 %v1800, 0.70710677
      %v1959 = vmul.f32 %v1805, 0.70710677
      %v1960 = vmul.f32 %v1810, 0.70710677
      %v1961 = vmul.f32 %v1815, 0.70710677
      %v1962 = vmul.f32 %v1820, 0.70710677
      %v1963 = vmul.f32 %v1825, 0.70710677
      %v1964 = vmul.f32 %v1830, 0.70710677
      %v1965 = vmul.f32 %v1835, 0.70710677
      %v1966 = vmul.f32 %v1840, 0.70710677
      %v1967 = vmul.f32 %v1845, 0.70710677
      %v1968 = vmul.f32 %v1850, 0.70710677
      %v1969 = vmul.f32 %v1855, 0.70710677
      %v1970 = vmul.f32 %v1860, 0.70710677
      %v1971 = vmul.f32 %v1865, 0.70710677
      %v1972 = vmul.f32 %v1870, 0.70710677
      %v1973 = vmul.f32 %v1875, 0.70710677
      %v1974 = vmul.f32 %v1880, 0.70710677
      %v1975 = vmul.f32 %v1885, 0.70710677
      %v1976 = vmul.f32 %v1890, 0.70710677
      %v1977 = vmul.f32 %v1895, 0.70710677
      %v1978 = vmul.f32 %v1900, 0.70710677
      %v1979 = vmul.f32 %v1905, 0.70710677
      %v1980 = vmul.f32 %v1910, 0.70710677
      %v1981 = vmul.f32 %v1915, 0.70710677
      %v1982 = vmax.f32 %v1950, -3.832507
      %v1983 = vmax.f32 %v1951, -3.832507
      %v1984 = vmax.f32 %v1952, -3.832507
      %v1985 = vmax.f32 %v1953, -3.832507
      %v1986 = vmax.f32 %v1954, -3.832507
      %v1987 = vmax.f32 %v1955, -3.832507
      %v1988 = vmax.f32 %v1956, -3.832507
      %v1989 = vmax.f32 %v1957, -3.832507
      %v1990 = vmax.f32 %v1958, -3.832507
      %v1991 = vmax.f32 %v1959, -3.832507
      %v1992 = vmax.f32 %v1960, -3.832507
      %v1993 = vmax.f32 %v1961, -3.832507
      %v1994 = vmax.f32 %v1962, -3.832507
      %v1995 = vmax.f32 %v1963, -3.832507
      %v1996 = vmax.f32 %v1964, -3.832507
      %v1997 = vmax.f32 %v1965, -3.832507
      %v1998 = vmax.f32 %v1966, -3.832507
      %v1999 = vmax.f32 %v1967, -3.832507
      %v2000 = vmax.f32 %v1968, -3.832507
      %v2001 = vmax.f32 %v1969, -3.832507
      %v2002 = vmax.f32 %v1970, -3.832507
      %v2003 = vmax.f32 %v1971, -3.832507
      %v2004 = vmax.f32 %v1972, -3.832507
      %v2005 = vmax.f32 %v1973, -3.832507
      %v2006 = vmax.f32 %v1974, -3.832507
      %v2007 = vmax.f32 %v1975, -3.832507
      %v2008 = vmax.f32 %v1976, -3.832507
      %v2009 = vmax.f32 %v1977, -3.832507
      %v2010 = vmax.f32 %v1978, -3.832507
      %v2011 = vmax.f32 %v1979, -3.832507
      %v2012 = vmax.f32 %v1980, -3.832507
      %v2013 = vmax.f32 %v1981, -3.832507
      %v2014 = vmin.f32 %v1982, 3.832507
      %v2015 = vmin.f32 %v1983, 3.832507
      %v2016 = vmin.f32 %v1984, 3.832507
      %v2017 = vmin.f32 %v1985, 3.832507
      %v2018 = vmin.f32 %v1986, 3.832507
      %v2019 = vmin.f32 %v1987, 3.832507
      %v2020 = vmin.f32 %v1988, 3.832507
      %v2021 = vmin.f32 %v1989, 3.832507
      %v2022 = vmin.f32 %v1990, 3.832507
      %v2023 = vmin.f32 %v1991, 3.832507
      %v2024 = vmin.f32 %v1992, 3.832507
      %v2025 = vmin.f32 %v1993, 3.832507
      %v2026 = vmin.f32 %v1994, 3.832507
      %v2027 = vmin.f32 %v1995, 3.832507
      %v2028 = vmin.f32 %v1996, 3.832507
      %v2029 = vmin.f32 %v1997, 3.832507
      %v2030 = vmin.f32 %v1998, 3.832507
      %v2031 = vmin.f32 %v1999, 3.832507
      %v2032 = vmin.f32 %v2000, 3.832507
      %v2033 = vmin.f32 %v2001, 3.832507
      %v2034 = vmin.f32 %v2002, 3.832507
      %v2035 = vmin.f32 %v2003, 3.832507
      %v2036 = vmin.f32 %v2004, 3.832507
      %v2037 = vmin.f32 %v2005, 3.832507
      %v2038 = vmin.f32 %v2006, 3.832507
      %v2039 = vmin.f32 %v2007, 3.832507
      %v2040 = vmin.f32 %v2008, 3.832507
      %v2041 = vmin.f32 %v2009, 3.832507
      %v2042 = vmin.f32 %v2010, 3.832507
      %v2043 = vmin.f32 %v2011, 3.832507
      %v2044 = vmin.f32 %v2012, 3.832507
      %v2045 = vmin.f32 %v2013, 3.832507
      %v2046 = vmul.f32 %v2014, %v2014
      %v2047 = vmul.f32 %v2015, %v2015
      %v2048 = vmul.f32 %v2016, %v2016
      %v2049 = vmul.f32 %v2017, %v2017
      %v2050 = vmul.f32 %v2018, %v2018
      %v2051 = vmul.f32 %v2019, %v2019
      %v2052 = vmul.f32 %v2020, %v2020
      %v2053 = vmul.f32 %v2021, %v2021
      %v2054 = vmul.f32 %v2022, %v2022
      %v2055 = vmul.f32 %v2023, %v2023
      %v2056 = vmul.f32 %v2024, %v2024
      %v2057 = vmul.f32 %v2025, %v2025
      %v2058 = vmul.f32 %v2026, %v2026
      %v2059 = vmul.f32 %v2027, %v2027
      %v2060 = vmul.f32 %v2028, %v2028
      %v2061 = vmul.f32 %v2029, %v2029
      %v2062 = vmul.f32 %v2030, %v2030
      %v2063 = vmul.f32 %v2031, %v2031
      %v2064 = vmul.f32 %v2032, %v2032
      %v2065 = vmul.f32 %v2033, %v2033
      %v2066 = vmul.f32 %v2034, %v2034
      %v2067 = vmul.f32 %v2035, %v2035
      %v2068 = vmul.f32 %v2036, %v2036
      %v2069 = vmul.f32 %v2037, %v2037
      %v2070 = vmul.f32 %v2038, %v2038
      %v2071 = vmul.f32 %v2039, %v2039
      %v2072 = vmul.f32 %v2040, %v2040
      %v2073 = vmul.f32 %v2041, %v2041
      %v2074 = vmul.f32 %v2042, %v2042
      %v2075 = vmul.f32 %v2043, %v2043
      %v2076 = vmul.f32 %v2044, %v2044
      %v2077 = vmul.f32 %v2045, %v2045
      %v2078 = vmul.f32 %v2046, -2.7261424e-10
      %v2079 = vmul.f32 %v2047, -2.7261424e-10
      %v2080 = vmul.f32 %v2048, -2.7261424e-10
      %v2081 = vmul.f32 %v2049, -2.7261424e-10
      %v2082 = vmul.f32 %v2050, -2.7261424e-10
      %v2083 = vmul.f32 %v2051, -2.7261424e-10
      %v2084 = vmul.f32 %v2052, -2.7261424e-10
      %v2085 = vmul.f32 %v2053, -2.7261424e-10
      %v2086 = vmul.f32 %v2054, -2.7261424e-10
      %v2087 = vmul.f32 %v2055, -2.7261424e-10
      %v2088 = vmul.f32 %v2056, -2.7261424e-10
      %v2089 = vmul.f32 %v2057, -2.7261424e-10
      %v2090 = vmul.f32 %v2058, -2.7261424e-10
      %v2091 = vmul.f32 %v2059, -2.7261424e-10
      %v2092 = vmul.f32 %v2060, -2.7261424e-10
      %v2093 = vmul.f32 %v2061, -2.7261424e-10
      %v2094 = vmul.f32 %v2062, -2.7261424e-10
      %v2095 = vmul.f32 %v2063, -2.7261424e-10
      %v2096 = vmul.f32 %v2064, -2.7261424e-10
      %v2097 = vmul.f32 %v2065, -2.7261424e-10
      %v2098 = vmul.f32 %v2066, -2.7261424e-10
      %v2099 = vmul.f32 %v2067, -2.7261424e-10
      %v2100 = vmul.f32 %v2068, -2.7261424e-10
      %v2101 = vmul.f32 %v2069, -2.7261424e-10
      %v2102 = vmul.f32 %v2070, -2.7261424e-10
      %v2103 = vmul.f32 %v2071, -2.7261424e-10
      %v2104 = vmul.f32 %v2072, -2.7261424e-10
      %v2105 = vmul.f32 %v2073, -2.7261424e-10
      %v2106 = vmul.f32 %v2074, -2.7261424e-10
      %v2107 = vmul.f32 %v2075, -2.7261424e-10
      %v2108 = vmul.f32 %v2076, -2.7261424e-10
      %v2109 = vmul.f32 %v2077, -2.7261424e-10
      %v2110 = vadd.f32 %v2078, 2.7706815e-08
      %v2111 = vadd.f32 %v2079, 2.7706815e-08
      %v2112 = vadd.f32 %v2080, 2.7706815e-08
      %v2113 = vadd.f32 %v2081, 2.7706815e-08
      %v2114 = vadd.f32 %v2082, 2.7706815e-08
      %v2115 = vadd.f32 %v2083, 2.7706815e-08
      %v2116 = vadd.f32 %v2084, 2.7706815e-08
      %v2117 = vadd.f32 %v2085, 2.7706815e-08
      %v2118 = vadd.f32 %v2086, 2.7706815e-08
      %v2119 = vadd.f32 %v2087, 2.7706815e-08
      %v2120 = vadd.f32 %v2088, 2.7706815e-08
      %v2121 = vadd.f32 %v2089, 2.7706815e-08
      %v2122 = vadd.f32 %v2090, 2.7706815e-08
      %v2123 = vadd.f32 %v2091, 2.7706815e-08
      %v2124 = vadd.f32 %v2092, 2.7706815e-08
      %v2125 = vadd.f32 %v2093, 2.7706815e-08
      %v2126 = vadd.f32 %v2094, 2.7706815e-08
      %v2127 = vadd.f32 %v2095, 2.7706815e-08
      %v2128 = vadd.f32 %v2096, 2.7706815e-08
      %v2129 = vadd.f32 %v2097, 2.7706815e-08
      %v2130 = vadd.f32 %v2098, 2.7706815e-08
      %v2131 = vadd.f32 %v2099, 2.7706815e-08
      %v2132 = vadd.f32 %v2100, 2.7706815e-08
      %v2133 = vadd.f32 %v2101, 2.7706815e-08
      %v2134 = vadd.f32 %v2102, 2.7706815e-08
      %v2135 = vadd.f32 %v2103, 2.7706815e-08
      %v2136 = vadd.f32 %v2104, 2.7706815e-08
      %v2137 = vadd.f32 %v2105, 2.7706815e-08
      %v2138 = vadd.f32 %v2106, 2.7706815e-08
      %v2139 = vadd.f32 %v2107, 2.7706815e-08
      %v2140 = vadd.f32 %v2108, 2.7706815e-08
      %v2141 = vadd.f32 %v2109, 2.7706815e-08
      %v2142 = vmul.f32 %v2110, %v2046
      %v2143 = vmul.f32 %v2111, %v2047
      %v2144 = vmul.f32 %v2112, %v2048
      %v2145 = vmul.f32 %v2113, %v2049
      %v2146 = vmul.f32 %v2114, %v2050
      %v2147 = vmul.f32 %v2115, %v2051
      %v2148 = vmul.f32 %v2116, %v2052
      %v2149 = vmul.f32 %v2117, %v2053
      %v2150 = vmul.f32 %v2118, %v2054
      %v2151 = vmul.f32 %v2119, %v2055
      %v2152 = vmul.f32 %v2120, %v2056
      %v2153 = vmul.f32 %v2121, %v2057
      %v2154 = vmul.f32 %v2122, %v2058
      %v2155 = vmul.f32 %v2123, %v2059
      %v2156 = vmul.f32 %v2124, %v2060
      %v2157 = vmul.f32 %v2125, %v2061
      %v2158 = vmul.f32 %v2126, %v2062
      %v2159 = vmul.f32 %v2127, %v2063
      %v2160 = vmul.f32 %v2128, %v2064
      %v2161 = vmul.f32 %v2129, %v2065
      %v2162 = vmul.f32 %v2130, %v2066
      %v2163 = vmul.f32 %v2131, %v2067
      %v2164 = vmul.f32 %v2132, %v2068
      %v2165 = vmul.f32 %v2133, %v2069
      %v2166 = vmul.f32 %v2134, %v2070
      %v2167 = vmul.f32 %v2135, %v2071
      %v2168 = vmul.f32 %v2136, %v2072
      %v2169 = vmul.f32 %v2137, %v2073
      %v2170 = vmul.f32 %v2138, %v2074
      %v2171 = vmul.f32 %v2139, %v2075
      %v2172 = vmul.f32 %v2140, %v2076
      %v2173 = vmul.f32 %v2141, %v2077
      %v2174 = vadd.f32 %v2142, -2.101024e-06
      %v2175 = vadd.f32 %v2143, -2.101024e-06
      %v2176 = vadd.f32 %v2144, -2.101024e-06
      %v2177 = vadd.f32 %v2145, -2.101024e-06
      %v2178 = vadd.f32 %v2146, -2.101024e-06
      %v2179 = vadd.f32 %v2147, -2.101024e-06
      %v2180 = vadd.f32 %v2148, -2.101024e-06
      %v2181 = vadd.f32 %v2149, -2.101024e-06
      %v2182 = vadd.f32 %v2150, -2.101024e-06
      %v2183 = vadd.f32 %v2151, -2.101024e-06
      %v2184 = vadd.f32 %v2152, -2.101024e-06
      %v2185 = vadd.f32 %v2153, -2.101024e-06
      %v2186 = vadd.f32 %v2154, -2.101024e-06
      %v2187 = vadd.f32 %v2155, -2.101024e-06
      %v2188 = vadd.f32 %v2156, -2.101024e-06
      %v2189 = vadd.f32 %v2157, -2.101024e-06
      %v2190 = vadd.f32 %v2158, -2.101024e-06
      %v2191 = vadd.f32 %v2159, -2.101024e-06
      %v2192 = vadd.f32 %v2160, -2.101024e-06
      %v2193 = vadd.f32 %v2161, -2.101024e-06
      %v2194 = vadd.f32 %v2162, -2.101024e-06
      %v2195 = vadd.f32 %v2163, -2.101024e-06
      %v2196 = vadd.f32 %v2164, -2.101024e-06
      %v2197 = vadd.f32 %v2165, -2.101024e-06
      %v2198 = vadd.f32 %v2166, -2.101024e-06
      %v2199 = vadd.f32 %v2167, -2.101024e-06
      %v2200 = vadd.f32 %v2168, -2.101024e-06
      %v2201 = vadd.f32 %v2169, -2.101024e-06
      %v2202 = vadd.f32 %v2170, -2.101024e-06
      %v2203 = vadd.f32 %v2171, -2.101024e-06
      %v2204 = vadd.f32 %v2172, -2.101024e-06
      %v2205 = vadd.f32 %v2173, -2.101024e-06
      %v2206 = vmul.f32 %v2174, %v2046
      %v2207 = vmul.f32 %v2175, %v2047
      %v2208 = vmul.f32 %v2176, %v2048
      %v2209 = vmul.f32 %v2177, %v2049
      %v2210 = vmul.f32 %v2178, %v2050
      %v2211 = vmul.f32 %v2179, %v2051
      %v2212 = vmul.f32 %v2180, %v2052
      %v2213 = vmul.f32 %v2181, %v2053
      %v2214 = vmul.f32 %v2182, %v2054
      %v2215 = vmul.f32 %v2183, %v2055
      %v2216 = vmul.f32 %v2184, %v2056
      %v2217 = vmul.f32 %v2185, %v2057
      %v2218 = vmul.f32 %v2186, %v2058
      %v2219 = vmul.f32 %v2187, %v2059
      %v2220 = vmul.f32 %v2188, %v2060
      %v2221 = vmul.f32 %v2189, %v2061
      %v2222 = vmul.f32 %v2190, %v2062
      %v2223 = vmul.f32 %v2191, %v2063
      %v2224 = vmul.f32 %v2192, %v2064
      %v2225 = vmul.f32 %v2193, %v2065
      %v2226 = vmul.f32 %v2194, %v2066
      %v2227 = vmul.f32 %v2195, %v2067
      %v2228 = vmul.f32 %v2196, %v2068
      %v2229 = vmul.f32 %v2197, %v2069
      %v2230 = vmul.f32 %v2198, %v2070
      %v2231 = vmul.f32 %v2199, %v2071
      %v2232 = vmul.f32 %v2200, %v2072
      %v2233 = vmul.f32 %v2201, %v2073
      %v2234 = vmul.f32 %v2202, %v2074
      %v2235 = vmul.f32 %v2203, %v2075
      %v2236 = vmul.f32 %v2204, %v2076
      %v2237 = vmul.f32 %v2205, %v2077
      %v2238 = vadd.f32 %v2206, -5.6925062e-05
      %v2239 = vadd.f32 %v2207, -5.6925062e-05
      %v2240 = vadd.f32 %v2208, -5.6925062e-05
      %v2241 = vadd.f32 %v2209, -5.6925062e-05
      %v2242 = vadd.f32 %v2210, -5.6925062e-05
      %v2243 = vadd.f32 %v2211, -5.6925062e-05
      %v2244 = vadd.f32 %v2212, -5.6925062e-05
      %v2245 = vadd.f32 %v2213, -5.6925062e-05
      %v2246 = vadd.f32 %v2214, -5.6925062e-05
      %v2247 = vadd.f32 %v2215, -5.6925062e-05
      %v2248 = vadd.f32 %v2216, -5.6925062e-05
      %v2249 = vadd.f32 %v2217, -5.6925062e-05
      %v2250 = vadd.f32 %v2218, -5.6925062e-05
      %v2251 = vadd.f32 %v2219, -5.6925062e-05
      %v2252 = vadd.f32 %v2220, -5.6925062e-05
      %v2253 = vadd.f32 %v2221, -5.6925062e-05
      %v2254 = vadd.f32 %v2222, -5.6925062e-05
      %v2255 = vadd.f32 %v2223, -5.6925062e-05
      %v2256 = vadd.f32 %v2224, -5.6925062e-05
      %v2257 = vadd.f32 %v2225, -5.6925062e-05
      %v2258 = vadd.f32 %v2226, -5.6925062e-05
      %v2259 = vadd.f32 %v2227, -5.6925062e-05
      %v2260 = vadd.f32 %v2228, -5.6925062e-05
      %v2261 = vadd.f32 %v2229, -5.6925062e-05
      %v2262 = vadd.f32 %v2230, -5.6925062e-05
      %v2263 = vadd.f32 %v2231, -5.6925062e-05
      %v2264 = vadd.f32 %v2232, -5.6925062e-05
      %v2265 = vadd.f32 %v2233, -5.6925062e-05
      %v2266 = vadd.f32 %v2234, -5.6925062e-05
      %v2267 = vadd.f32 %v2235, -5.6925062e-05
      %v2268 = vadd.f32 %v2236, -5.6925062e-05
      %v2269 = vadd.f32 %v2237, -5.6925062e-05
      %v2270 = vmul.f32 %v2238, %v2046
      %v2271 = vmul.f32 %v2239, %v2047
      %v2272 = vmul.f32 %v2240, %v2048
      %v2273 = vmul.f32 %v2241, %v2049
      %v2274 = vmul.f32 %v2242, %v2050
      %v2275 = vmul.f32 %v2243, %v2051
      %v2276 = vmul.f32 %v2244, %v2052
      %v2277 = vmul.f32 %v2245, %v2053
      %v2278 = vmul.f32 %v2246, %v2054
      %v2279 = vmul.f32 %v2247, %v2055
      %v2280 = vmul.f32 %v2248, %v2056
      %v2281 = vmul.f32 %v2249, %v2057
      %v2282 = vmul.f32 %v2250, %v2058
      %v2283 = vmul.f32 %v2251, %v2059
      %v2284 = vmul.f32 %v2252, %v2060
      %v2285 = vmul.f32 %v2253, %v2061
      %v2286 = vmul.f32 %v2254, %v2062
      %v2287 = vmul.f32 %v2255, %v2063
      %v2288 = vmul.f32 %v2256, %v2064
      %v2289 = vmul.f32 %v2257, %v2065
      %v2290 = vmul.f32 %v2258, %v2066
      %v2291 = vmul.f32 %v2259, %v2067
      %v2292 = vmul.f32 %v2260, %v2068
      %v2293 = vmul.f32 %v2261, %v2069
      %v2294 = vmul.f32 %v2262, %v2070
      %v2295 = vmul.f32 %v2263, %v2071
      %v2296 = vmul.f32 %v2264, %v2072
      %v2297 = vmul.f32 %v2265, %v2073
      %v2298 = vmul.f32 %v2266, %v2074
      %v2299 = vmul.f32 %v2267, %v2075
      %v2300 = vmul.f32 %v2268, %v2076
      %v2301 = vmul.f32 %v2269, %v2077
      %v2302 = vadd.f32 %v2270, -0.00073499064
      %v2303 = vadd.f32 %v2271, -0.00073499064
      %v2304 = vadd.f32 %v2272, -0.00073499064
      %v2305 = vadd.f32 %v2273, -0.00073499064
      %v2306 = vadd.f32 %v2274, -0.00073499064
      %v2307 = vadd.f32 %v2275, -0.00073499064
      %v2308 = vadd.f32 %v2276, -0.00073499064
      %v2309 = vadd.f32 %v2277, -0.00073499064
      %v2310 = vadd.f32 %v2278, -0.00073499064
      %v2311 = vadd.f32 %v2279, -0.00073499064
      %v2312 = vadd.f32 %v2280, -0.00073499064
      %v2313 = vadd.f32 %v2281, -0.00073499064
      %v2314 = vadd.f32 %v2282, -0.00073499064
      %v2315 = vadd.f32 %v2283, -0.00073499064
      %v2316 = vadd.f32 %v2284, -0.00073499064
      %v2317 = vadd.f32 %v2285, -0.00073499064
      %v2318 = vadd.f32 %v2286, -0.00073499064
      %v2319 = vadd.f32 %v2287, -0.00073499064
      %v2320 = vadd.f32 %v2288, -0.00073499064
      %v2321 = vadd.f32 %v2289, -0.00073499064
      %v2322 = vadd.f32 %v2290, -0.00073499064
      %v2323 = vadd.f32 %v2291, -0.00073499064
      %v2324 = vadd.f32 %v2292, -0.00073499064
      %v2325 = vadd.f32 %v2293, -0.00073499064
      %v2326 = vadd.f32 %v2294, -0.00073499064
      %v2327 = vadd.f32 %v2295, -0.00073499064
      %v2328 = vadd.f32 %v2296, -0.00073499064
      %v2329 = vadd.f32 %v2297, -0.00073499064
      %v2330 = vadd.f32 %v2298, -0.00073499064
      %v2331 = vadd.f32 %v2299, -0.00073499064
      %v2332 = vadd.f32 %v2300, -0.00073499064
      %v2333 = vadd.f32 %v2301, -0.00073499064
      %v2334 = vmul.f32 %v2302, %v2046
      %v2335 = vmul.f32 %v2303, %v2047
      %v2336 = vmul.f32 %v2304, %v2048
      %v2337 = vmul.f32 %v2305, %v2049
      %v2338 = vmul.f32 %v2306, %v2050
      %v2339 = vmul.f32 %v2307, %v2051
      %v2340 = vmul.f32 %v2308, %v2052
      %v2341 = vmul.f32 %v2309, %v2053
      %v2342 = vmul.f32 %v2310, %v2054
      %v2343 = vmul.f32 %v2311, %v2055
      %v2344 = vmul.f32 %v2312, %v2056
      %v2345 = vmul.f32 %v2313, %v2057
      %v2346 = vmul.f32 %v2314, %v2058
      %v2347 = vmul.f32 %v2315, %v2059
      %v2348 = vmul.f32 %v2316, %v2060
      %v2349 = vmul.f32 %v2317, %v2061
      %v2350 = vmul.f32 %v2318, %v2062
      %v2351 = vmul.f32 %v2319, %v2063
      %v2352 = vmul.f32 %v2320, %v2064
      %v2353 = vmul.f32 %v2321, %v2065
      %v2354 = vmul.f32 %v2322, %v2066
      %v2355 = vmul.f32 %v2323, %v2067
      %v2356 = vmul.f32 %v2324, %v2068
      %v2357 = vmul.f32 %v2325, %v2069
      %v2358 = vmul.f32 %v2326, %v2070
      %v2359 = vmul.f32 %v2327, %v2071
      %v2360 = vmul.f32 %v2328, %v2072
      %v2361 = vmul.f32 %v2329, %v2073
      %v2362 = vmul.f32 %v2330, %v2074
      %v2363 = vmul.f32 %v2331, %v2075
      %v2364 = vmul.f32 %v2332, %v2076
      %v2365 = vmul.f32 %v2333, %v2077
      %v2366 = vadd.f32 %v2334, -0.0029546
      %v2367 = vadd.f32 %v2335, -0.0029546
      %v2368 = vadd.f32 %v2336, -0.0029546
      %v2369 = vadd.f32 %v2337, -0.0029546
      %v2370 = vadd.f32 %v2338, -0.0029546
      %v2371 = vadd.f32 %v2339, -0.0029546
      %v2372 = vadd.f32 %v2340, -0.0029546
      %v2373 = vadd.f32 %v2341, -0.0029546
      %v2374 = vadd.f32 %v2342, -0.0029546
      %v2375 = vadd.f32 %v2343, -0.0029546
      %v2376 = vadd.f32 %v2344, -0.0029546
      %v2377 = vadd.f32 %v2345, -0.0029546
      %v2378 = vadd.f32 %v2346, -0.0029546
      %v2379 = vadd.f32 %v2347, -0.0029546
      %v2380 = vadd.f32 %v2348, -0.0029546
      %v2381 = vadd.f32 %v2349, -0.0029546
      %v2382 = vadd.f32 %v2350, -0.0029546
      %v2383 = vadd.f32 %v2351, -0.0029546
      %v2384 = vadd.f32 %v2352, -0.0029546
      %v2385 = vadd.f32 %v2353, -0.0029546
      %v2386 = vadd.f32 %v2354, -0.0029546
      %v2387 = vadd.f32 %v2355, -0.0029546
      %v2388 = vadd.f32 %v2356, -0.0029546
      %v2389 = vadd.f32 %v2357, -0.0029546
      %v2390 = vadd.f32 %v2358, -0.0029546
      %v2391 = vadd.f32 %v2359, -0.0029546
      %v2392 = vadd.f32 %v2360, -0.0029546
      %v2393 = vadd.f32 %v2361, -0.0029546
      %v2394 = vadd.f32 %v2362, -0.0029546
      %v2395 = vadd.f32 %v2363, -0.0029546
      %v2396 = vadd.f32 %v2364, -0.0029546
      %v2397 = vadd.f32 %v2365, -0.0029546
      %v2398 = vmul.f32 %v2366, %v2046
      %v2399 = vmul.f32 %v2367, %v2047
      %v2400 = vmul.f32 %v2368, %v2048
      %v2401 = vmul.f32 %v2369, %v2049
      %v2402 = vmul.f32 %v2370, %v2050
      %v2403 = vmul.f32 %v2371, %v2051
      %v2404 = vmul.f32 %v2372, %v2052
      %v2405 = vmul.f32 %v2373, %v2053
      %v2406 = vmul.f32 %v2374, %v2054
      %v2407 = vmul.f32 %v2375, %v2055
      %v2408 = vmul.f32 %v2376, %v2056
      %v2409 = vmul.f32 %v2377, %v2057
      %v2410 = vmul.f32 %v2378, %v2058
      %v2411 = vmul.f32 %v2379, %v2059
      %v2412 = vmul.f32 %v2380, %v2060
      %v2413 = vmul.f32 %v2381, %v2061
      %v2414 = vmul.f32 %v2382, %v2062
      %v2415 = vmul.f32 %v2383, %v2063
      %v2416 = vmul.f32 %v2384, %v2064
      %v2417 = vmul.f32 %v2385, %v2065
      %v2418 = vmul.f32 %v2386, %v2066
      %v2419 = vmul.f32 %v2387, %v2067
      %v2420 = vmul.f32 %v2388, %v2068
      %v2421 = vmul.f32 %v2389, %v2069
      %v2422 = vmul.f32 %v2390, %v2070
      %v2423 = vmul.f32 %v2391, %v2071
      %v2424 = vmul.f32 %v2392, %v2072
      %v2425 = vmul.f32 %v2393, %v2073
      %v2426 = vmul.f32 %v2394, %v2074
      %v2427 = vmul.f32 %v2395, %v2075
      %v2428 = vmul.f32 %v2396, %v2076
      %v2429 = vmul.f32 %v2397, %v2077
      %v2430 = vadd.f32 %v2398, -0.016096033
      %v2431 = vadd.f32 %v2399, -0.016096033
      %v2432 = vadd.f32 %v2400, -0.016096033
      %v2433 = vadd.f32 %v2401, -0.016096033
      %v2434 = vadd.f32 %v2402, -0.016096033
      %v2435 = vadd.f32 %v2403, -0.016096033
      %v2436 = vadd.f32 %v2404, -0.016096033
      %v2437 = vadd.f32 %v2405, -0.016096033
      %v2438 = vadd.f32 %v2406, -0.016096033
      %v2439 = vadd.f32 %v2407, -0.016096033
      %v2440 = vadd.f32 %v2408, -0.016096033
      %v2441 = vadd.f32 %v2409, -0.016096033
      %v2442 = vadd.f32 %v2410, -0.016096033
      %v2443 = vadd.f32 %v2411, -0.016096033
      %v2444 = vadd.f32 %v2412, -0.016096033
      %v2445 = vadd.f32 %v2413, -0.016096033
      %v2446 = vadd.f32 %v2414, -0.016096033
      %v2447 = vadd.f32 %v2415, -0.016096033
      %v2448 = vadd.f32 %v2416, -0.016096033
      %v2449 = vadd.f32 %v2417, -0.016096033
      %v2450 = vadd.f32 %v2418, -0.016096033
      %v2451 = vadd.f32 %v2419, -0.016096033
      %v2452 = vadd.f32 %v2420, -0.016096033
      %v2453 = vadd.f32 %v2421, -0.016096033
      %v2454 = vadd.f32 %v2422, -0.016096033
      %v2455 = vadd.f32 %v2423, -0.016096033
      %v2456 = vadd.f32 %v2424, -0.016096033
      %v2457 = vadd.f32 %v2425, -0.016096033
      %v2458 = vadd.f32 %v2426, -0.016096033
      %v2459 = vadd.f32 %v2427, -0.016096033
      %v2460 = vadd.f32 %v2428, -0.016096033
      %v2461 = vadd.f32 %v2429, -0.016096033
      %v2462 = vmul.f32 %v2046, -1.45660715e-05
      %v2463 = vmul.f32 %v2047, -1.45660715e-05
      %v2464 = vmul.f32 %v2048, -1.45660715e-05
      %v2465 = vmul.f32 %v2049, -1.45660715e-05
      %v2466 = vmul.f32 %v2050, -1.45660715e-05
      %v2467 = vmul.f32 %v2051, -1.45660715e-05
      %v2468 = vmul.f32 %v2052, -1.45660715e-05
      %v2469 = vmul.f32 %v2053, -1.45660715e-05
      %v2470 = vmul.f32 %v2054, -1.45660715e-05
      %v2471 = vmul.f32 %v2055, -1.45660715e-05
      %v2472 = vmul.f32 %v2056, -1.45660715e-05
      %v2473 = vmul.f32 %v2057, -1.45660715e-05
      %v2474 = vmul.f32 %v2058, -1.45660715e-05
      %v2475 = vmul.f32 %v2059, -1.45660715e-05
      %v2476 = vmul.f32 %v2060, -1.45660715e-05
      %v2477 = vmul.f32 %v2061, -1.45660715e-05
      %v2478 = vmul.f32 %v2062, -1.45660715e-05
      %v2479 = vmul.f32 %v2063, -1.45660715e-05
      %v2480 = vmul.f32 %v2064, -1.45660715e-05
      %v2481 = vmul.f32 %v2065, -1.45660715e-05
      %v2482 = vmul.f32 %v2066, -1.45660715e-05
      %v2483 = vmul.f32 %v2067, -1.45660715e-05
      %v2484 = vmul.f32 %v2068, -1.45660715e-05
      %v2485 = vmul.f32 %v2069, -1.45660715e-05
      %v2486 = vmul.f32 %v2070, -1.45660715e-05
      %v2487 = vmul.f32 %v2071, -1.45660715e-05
      %v2488 = vmul.f32 %v2072, -1.45660715e-05
      %v2489 = vmul.f32 %v2073, -1.45660715e-05
      %v2490 = vmul.f32 %v2074, -1.45660715e-05
      %v2491 = vmul.f32 %v2075, -1.45660715e-05
      %v2492 = vmul.f32 %v2076, -1.45660715e-05
      %v2493 = vmul.f32 %v2077, -1.45660715e-05
      %v2494 = vadd.f32 %v2462, -0.00021337405
      %v2495 = vadd.f32 %v2463, -0.00021337405
      %v2496 = vadd.f32 %v2464, -0.00021337405
      %v2497 = vadd.f32 %v2465, -0.00021337405
      %v2498 = vadd.f32 %v2466, -0.00021337405
      %v2499 = vadd.f32 %v2467, -0.00021337405
      %v2500 = vadd.f32 %v2468, -0.00021337405
      %v2501 = vadd.f32 %v2469, -0.00021337405
      %v2502 = vadd.f32 %v2470, -0.00021337405
      %v2503 = vadd.f32 %v2471, -0.00021337405
      %v2504 = vadd.f32 %v2472, -0.00021337405
      %v2505 = vadd.f32 %v2473, -0.00021337405
      %v2506 = vadd.f32 %v2474, -0.00021337405
      %v2507 = vadd.f32 %v2475, -0.00021337405
      %v2508 = vadd.f32 %v2476, -0.00021337405
      %v2509 = vadd.f32 %v2477, -0.00021337405
      %v2510 = vadd.f32 %v2478, -0.00021337405
      %v2511 = vadd.f32 %v2479, -0.00021337405
      %v2512 = vadd.f32 %v2480, -0.00021337405
      %v2513 = vadd.f32 %v2481, -0.00021337405
      %v2514 = vadd.f32 %v2482, -0.00021337405
      %v2515 = vadd.f32 %v2483, -0.00021337405
      %v2516 = vadd.f32 %v2484, -0.00021337405
      %v2517 = vadd.f32 %v2485, -0.00021337405
      %v2518 = vadd.f32 %v2486, -0.00021337405
      %v2519 = vadd.f32 %v2487, -0.00021337405
      %v2520 = vadd.f32 %v2488, -0.00021337405
      %v2521 = vadd.f32 %v2489, -0.00021337405
      %v2522 = vadd.f32 %v2490, -0.00021337405
      %v2523 = vadd.f32 %v2491, -0.00021337405
      %v2524 = vadd.f32 %v2492, -0.00021337405
      %v2525 = vadd.f32 %v2493, -0.00021337405
      %v2526 = vmul.f32 %v2494, %v2046
      %v2527 = vmul.f32 %v2495, %v2047
      %v2528 = vmul.f32 %v2496, %v2048
      %v2529 = vmul.f32 %v2497, %v2049
      %v2530 = vmul.f32 %v2498, %v2050
      %v2531 = vmul.f32 %v2499, %v2051
      %v2532 = vmul.f32 %v2500, %v2052
      %v2533 = vmul.f32 %v2501, %v2053
      %v2534 = vmul.f32 %v2502, %v2054
      %v2535 = vmul.f32 %v2503, %v2055
      %v2536 = vmul.f32 %v2504, %v2056
      %v2537 = vmul.f32 %v2505, %v2057
      %v2538 = vmul.f32 %v2506, %v2058
      %v2539 = vmul.f32 %v2507, %v2059
      %v2540 = vmul.f32 %v2508, %v2060
      %v2541 = vmul.f32 %v2509, %v2061
      %v2542 = vmul.f32 %v2510, %v2062
      %v2543 = vmul.f32 %v2511, %v2063
      %v2544 = vmul.f32 %v2512, %v2064
      %v2545 = vmul.f32 %v2513, %v2065
      %v2546 = vmul.f32 %v2514, %v2066
      %v2547 = vmul.f32 %v2515, %v2067
      %v2548 = vmul.f32 %v2516, %v2068
      %v2549 = vmul.f32 %v2517, %v2069
      %v2550 = vmul.f32 %v2518, %v2070
      %v2551 = vmul.f32 %v2519, %v2071
      %v2552 = vmul.f32 %v2520, %v2072
      %v2553 = vmul.f32 %v2521, %v2073
      %v2554 = vmul.f32 %v2522, %v2074
      %v2555 = vmul.f32 %v2523, %v2075
      %v2556 = vmul.f32 %v2524, %v2076
      %v2557 = vmul.f32 %v2525, %v2077
      %v2558 = vadd.f32 %v2526, -0.001682827
      %v2559 = vadd.f32 %v2527, -0.001682827
      %v2560 = vadd.f32 %v2528, -0.001682827
      %v2561 = vadd.f32 %v2529, -0.001682827
      %v2562 = vadd.f32 %v2530, -0.001682827
      %v2563 = vadd.f32 %v2531, -0.001682827
      %v2564 = vadd.f32 %v2532, -0.001682827
      %v2565 = vadd.f32 %v2533, -0.001682827
      %v2566 = vadd.f32 %v2534, -0.001682827
      %v2567 = vadd.f32 %v2535, -0.001682827
      %v2568 = vadd.f32 %v2536, -0.001682827
      %v2569 = vadd.f32 %v2537, -0.001682827
      %v2570 = vadd.f32 %v2538, -0.001682827
      %v2571 = vadd.f32 %v2539, -0.001682827
      %v2572 = vadd.f32 %v2540, -0.001682827
      %v2573 = vadd.f32 %v2541, -0.001682827
      %v2574 = vadd.f32 %v2542, -0.001682827
      %v2575 = vadd.f32 %v2543, -0.001682827
      %v2576 = vadd.f32 %v2544, -0.001682827
      %v2577 = vadd.f32 %v2545, -0.001682827
      %v2578 = vadd.f32 %v2546, -0.001682827
      %v2579 = vadd.f32 %v2547, -0.001682827
      %v2580 = vadd.f32 %v2548, -0.001682827
      %v2581 = vadd.f32 %v2549, -0.001682827
      %v2582 = vadd.f32 %v2550, -0.001682827
      %v2583 = vadd.f32 %v2551, -0.001682827
      %v2584 = vadd.f32 %v2552, -0.001682827
      %v2585 = vadd.f32 %v2553, -0.001682827
      %v2586 = vadd.f32 %v2554, -0.001682827
      %v2587 = vadd.f32 %v2555, -0.001682827
      %v2588 = vadd.f32 %v2556, -0.001682827
      %v2589 = vadd.f32 %v2557, -0.001682827
      %v2590 = vmul.f32 %v2558, %v2046
      %v2591 = vmul.f32 %v2559, %v2047
      %v2592 = vmul.f32 %v2560, %v2048
      %v2593 = vmul.f32 %v2561, %v2049
      %v2594 = vmul.f32 %v2562, %v2050
      %v2595 = vmul.f32 %v2563, %v2051
      %v2596 = vmul.f32 %v2564, %v2052
      %v2597 = vmul.f32 %v2565, %v2053
      %v2598 = vmul.f32 %v2566, %v2054
      %v2599 = vmul.f32 %v2567, %v2055
      %v2600 = vmul.f32 %v2568, %v2056
      %v2601 = vmul.f32 %v2569, %v2057
      %v2602 = vmul.f32 %v2570, %v2058
      %v2603 = vmul.f32 %v2571, %v2059
      %v2604 = vmul.f32 %v2572, %v2060
      %v2605 = vmul.f32 %v2573, %v2061
      %v2606 = vmul.f32 %v2574, %v2062
      %v2607 = vmul.f32 %v2575, %v2063
      %v2608 = vmul.f32 %v2576, %v2064
      %v2609 = vmul.f32 %v2577, %v2065
      %v2610 = vmul.f32 %v2578, %v2066
      %v2611 = vmul.f32 %v2579, %v2067
      %v2612 = vmul.f32 %v2580, %v2068
      %v2613 = vmul.f32 %v2581, %v2069
      %v2614 = vmul.f32 %v2582, %v2070
      %v2615 = vmul.f32 %v2583, %v2071
      %v2616 = vmul.f32 %v2584, %v2072
      %v2617 = vmul.f32 %v2585, %v2073
      %v2618 = vmul.f32 %v2586, %v2074
      %v2619 = vmul.f32 %v2587, %v2075
      %v2620 = vmul.f32 %v2588, %v2076
      %v2621 = vmul.f32 %v2589, %v2077
      %v2622 = vadd.f32 %v2590, -0.0073733293
      %v2623 = vadd.f32 %v2591, -0.0073733293
      %v2624 = vadd.f32 %v2592, -0.0073733293
      %v2625 = vadd.f32 %v2593, -0.0073733293
      %v2626 = vadd.f32 %v2594, -0.0073733293
      %v2627 = vadd.f32 %v2595, -0.0073733293
      %v2628 = vadd.f32 %v2596, -0.0073733293
      %v2629 = vadd.f32 %v2597, -0.0073733293
      %v2630 = vadd.f32 %v2598, -0.0073733293
      %v2631 = vadd.f32 %v2599, -0.0073733293
      %v2632 = vadd.f32 %v2600, -0.0073733293
      %v2633 = vadd.f32 %v2601, -0.0073733293
      %v2634 = vadd.f32 %v2602, -0.0073733293
      %v2635 = vadd.f32 %v2603, -0.0073733293
      %v2636 = vadd.f32 %v2604, -0.0073733293
      %v2637 = vadd.f32 %v2605, -0.0073733293
      %v2638 = vadd.f32 %v2606, -0.0073733293
      %v2639 = vadd.f32 %v2607, -0.0073733293
      %v2640 = vadd.f32 %v2608, -0.0073733293
      %v2641 = vadd.f32 %v2609, -0.0073733293
      %v2642 = vadd.f32 %v2610, -0.0073733293
      %v2643 = vadd.f32 %v2611, -0.0073733293
      %v2644 = vadd.f32 %v2612, -0.0073733293
      %v2645 = vadd.f32 %v2613, -0.0073733293
      %v2646 = vadd.f32 %v2614, -0.0073733293
      %v2647 = vadd.f32 %v2615, -0.0073733293
      %v2648 = vadd.f32 %v2616, -0.0073733293
      %v2649 = vadd.f32 %v2617, -0.0073733293
      %v2650 = vadd.f32 %v2618, -0.0073733293
      %v2651 = vadd.f32 %v2619, -0.0073733293
      %v2652 = vadd.f32 %v2620, -0.0073733293
      %v2653 = vadd.f32 %v2621, -0.0073733293
      %v2654 = vmul.f32 %v2622, %v2046
      %v2655 = vmul.f32 %v2623, %v2047
      %v2656 = vmul.f32 %v2624, %v2048
      %v2657 = vmul.f32 %v2625, %v2049
      %v2658 = vmul.f32 %v2626, %v2050
      %v2659 = vmul.f32 %v2627, %v2051
      %v2660 = vmul.f32 %v2628, %v2052
      %v2661 = vmul.f32 %v2629, %v2053
      %v2662 = vmul.f32 %v2630, %v2054
      %v2663 = vmul.f32 %v2631, %v2055
      %v2664 = vmul.f32 %v2632, %v2056
      %v2665 = vmul.f32 %v2633, %v2057
      %v2666 = vmul.f32 %v2634, %v2058
      %v2667 = vmul.f32 %v2635, %v2059
      %v2668 = vmul.f32 %v2636, %v2060
      %v2669 = vmul.f32 %v2637, %v2061
      %v2670 = vmul.f32 %v2638, %v2062
      %v2671 = vmul.f32 %v2639, %v2063
      %v2672 = vmul.f32 %v2640, %v2064
      %v2673 = vmul.f32 %v2641, %v2065
      %v2674 = vmul.f32 %v2642, %v2066
      %v2675 = vmul.f32 %v2643, %v2067
      %v2676 = vmul.f32 %v2644, %v2068
      %v2677 = vmul.f32 %v2645, %v2069
      %v2678 = vmul.f32 %v2646, %v2070
      %v2679 = vmul.f32 %v2647, %v2071
      %v2680 = vmul.f32 %v2648, %v2072
      %v2681 = vmul.f32 %v2649, %v2073
      %v2682 = vmul.f32 %v2650, %v2074
      %v2683 = vmul.f32 %v2651, %v2075
      %v2684 = vmul.f32 %v2652, %v2076
      %v2685 = vmul.f32 %v2653, %v2077
      %v2686 = vadd.f32 %v2654, -0.014264739
      %v2687 = vadd.f32 %v2655, -0.014264739
      %v2688 = vadd.f32 %v2656, -0.014264739
      %v2689 = vadd.f32 %v2657, -0.014264739
      %v2690 = vadd.f32 %v2658, -0.014264739
      %v2691 = vadd.f32 %v2659, -0.014264739
      %v2692 = vadd.f32 %v2660, -0.014264739
      %v2693 = vadd.f32 %v2661, -0.014264739
      %v2694 = vadd.f32 %v2662, -0.014264739
      %v2695 = vadd.f32 %v2663, -0.014264739
      %v2696 = vadd.f32 %v2664, -0.014264739
      %v2697 = vadd.f32 %v2665, -0.014264739
      %v2698 = vadd.f32 %v2666, -0.014264739
      %v2699 = vadd.f32 %v2667, -0.014264739
      %v2700 = vadd.f32 %v2668, -0.014264739
      %v2701 = vadd.f32 %v2669, -0.014264739
      %v2702 = vadd.f32 %v2670, -0.014264739
      %v2703 = vadd.f32 %v2671, -0.014264739
      %v2704 = vadd.f32 %v2672, -0.014264739
      %v2705 = vadd.f32 %v2673, -0.014264739
      %v2706 = vadd.f32 %v2674, -0.014264739
      %v2707 = vadd.f32 %v2675, -0.014264739
      %v2708 = vadd.f32 %v2676, -0.014264739
      %v2709 = vadd.f32 %v2677, -0.014264739
      %v2710 = vadd.f32 %v2678, -0.014264739
      %v2711 = vadd.f32 %v2679, -0.014264739
      %v2712 = vadd.f32 %v2680, -0.014264739
      %v2713 = vadd.f32 %v2681, -0.014264739
      %v2714 = vadd.f32 %v2682, -0.014264739
      %v2715 = vadd.f32 %v2683, -0.014264739
      %v2716 = vadd.f32 %v2684, -0.014264739
      %v2717 = vadd.f32 %v2685, -0.014264739
      %v2718 = vmul.f32 %v2014, %v2430
      %v2719 = vmul.f32 %v2015, %v2431
      %v2720 = vmul.f32 %v2016, %v2432
      %v2721 = vmul.f32 %v2017, %v2433
      %v2722 = vmul.f32 %v2018, %v2434
      %v2723 = vmul.f32 %v2019, %v2435
      %v2724 = vmul.f32 %v2020, %v2436
      %v2725 = vmul.f32 %v2021, %v2437
      %v2726 = vmul.f32 %v2022, %v2438
      %v2727 = vmul.f32 %v2023, %v2439
      %v2728 = vmul.f32 %v2024, %v2440
      %v2729 = vmul.f32 %v2025, %v2441
      %v2730 = vmul.f32 %v2026, %v2442
      %v2731 = vmul.f32 %v2027, %v2443
      %v2732 = vmul.f32 %v2028, %v2444
      %v2733 = vmul.f32 %v2029, %v2445
      %v2734 = vmul.f32 %v2030, %v2446
      %v2735 = vmul.f32 %v2031, %v2447
      %v2736 = vmul.f32 %v2032, %v2448
      %v2737 = vmul.f32 %v2033, %v2449
      %v2738 = vmul.f32 %v2034, %v2450
      %v2739 = vmul.f32 %v2035, %v2451
      %v2740 = vmul.f32 %v2036, %v2452
      %v2741 = vmul.f32 %v2037, %v2453
      %v2742 = vmul.f32 %v2038, %v2454
      %v2743 = vmul.f32 %v2039, %v2455
      %v2744 = vmul.f32 %v2040, %v2456
      %v2745 = vmul.f32 %v2041, %v2457
      %v2746 = vmul.f32 %v2042, %v2458
      %v2747 = vmul.f32 %v2043, %v2459
      %v2748 = vmul.f32 %v2044, %v2460
      %v2749 = vmul.f32 %v2045, %v2461
      %v2750 = vrcp.pop %v2686
      %v2751 = vrcp.pop %v2687
      %v2752 = vrcp.pop %v2688
      %v2753 = vrcp.pop %v2689
      %v2754 = vrcp.pop %v2690
      %v2755 = vrcp.pop %v2691
      %v2756 = vrcp.pop %v2692
      %v2757 = vrcp.pop %v2693
      %v2758 = vrcp.pop %v2694
      %v2759 = vrcp.pop %v2695
      %v2760 = vrcp.pop %v2696
      %v2761 = vrcp.pop %v2697
      %v2762 = vrcp.pop %v2698
      %v2763 = vrcp.pop %v2699
      %v2764 = vrcp.pop %v2700
      %v2765 = vrcp.pop %v2701
      %v2766 = vrcp.pop %v2702
      %v2767 = vrcp.pop %v2703
      %v2768 = vrcp.pop %v2704
      %v2769 = vrcp.pop %v2705
      %v2770 = vrcp.pop %v2706
      %v2771 = vrcp.pop %v2707
      %v2772 = vrcp.pop %v2708
      %v2773 = vrcp.pop %v2709
      %v2774 = vrcp.pop %v2710
      %v2775 = vrcp.pop %v2711
      %v2776 = vrcp.pop %v2712
      %v2777 = vrcp.pop %v2713
      %v2778 = vrcp.pop %v2714
      %v2779 = vrcp.pop %v2715
      %v2780 = vrcp.pop %v2716
      %v2781 = vrcp.pop %v2717
      %v2782 = vmul.f32 %v2686, %v2750
      %v2783 = vmul.f32 %v2687, %v2751
      %v2784 = vmul.f32 %v2688, %v2752
      %v2785 = vmul.f32 %v2689, %v2753
      %v2786 = vmul.f32 %v2690, %v2754
      %v2787 = vmul.f32 %v2691, %v2755
      %v2788 = vmul.f32 %v2692, %v2756
      %v2789 = vmul.f32 %v2693, %v2757
      %v2790 = vmul.f32 %v2694, %v2758
      %v2791 = vmul.f32 %v2695, %v2759
      %v2792 = vmul.f32 %v2696, %v2760
      %v2793 = vmul.f32 %v2697, %v2761
      %v2794 = vmul.f32 %v2698, %v2762
      %v2795 = vmul.f32 %v2699, %v2763
      %v2796 = vmul.f32 %v2700, %v2764
      %v2797 = vmul.f32 %v2701, %v2765
      %v2798 = vmul.f32 %v2702, %v2766
      %v2799 = vmul.f32 %v2703, %v2767
      %v2800 = vmul.f32 %v2704, %v2768
      %v2801 = vmul.f32 %v2705, %v2769
      %v2802 = vmul.f32 %v2706, %v2770
      %v2803 = vmul.f32 %v2707, %v2771
      %v2804 = vmul.f32 %v2708, %v2772
      %v2805 = vmul.f32 %v2709, %v2773
      %v2806 = vmul.f32 %v2710, %v2774
      %v2807 = vmul.f32 %v2711, %v2775
      %v2808 = vmul.f32 %v2712, %v2776
      %v2809 = vmul.f32 %v2713, %v2777
      %v2810 = vmul.f32 %v2714, %v2778
      %v2811 = vmul.f32 %v2715, %v2779
      %v2812 = vmul.f32 %v2716, %v2780
      %v2813 = vmul.f32 %v2717, %v2781
      %v2814 = vsub.f32 2.0, %v2782
      %v2815 = vsub.f32 2.0, %v2783
      %v2816 = vsub.f32 2.0, %v2784
      %v2817 = vsub.f32 2.0, %v2785
      %v2818 = vsub.f32 2.0, %v2786
      %v2819 = vsub.f32 2.0, %v2787
      %v2820 = vsub.f32 2.0, %v2788
      %v2821 = vsub.f32 2.0, %v2789
      %v2822 = vsub.f32 2.0, %v2790
      %v2823 = vsub.f32 2.0, %v2791
      %v2824 = vsub.f32 2.0, %v2792
      %v2825 = vsub.f32 2.0, %v2793
      %v2826 = vsub.f32 2.0, %v2794
      %v2827 = vsub.f32 2.0, %v2795
      %v2828 = vsub.f32 2.0, %v2796
      %v2829 = vsub.f32 2.0, %v2797
      %v2830 = vsub.f32 2.0, %v2798
      %v2831 = vsub.f32 2.0, %v2799
      %v2832 = vsub.f32 2.0, %v2800
      %v2833 = vsub.f32 2.0, %v2801
      %v2834 = vsub.f32 2.0, %v2802
      %v2835 = vsub.f32 2.0, %v2803
      %v2836 = vsub.f32 2.0, %v2804
      %v2837 = vsub.f32 2.0, %v2805
      %v2838 = vsub.f32 2.0, %v2806
      %v2839 = vsub.f32 2.0, %v2807
      %v2840 = vsub.f32 2.0, %v2808
      %v2841 = vsub.f32 2.0, %v2809
      %v2842 = vsub.f32 2.0, %v2810
      %v2843 = vsub.f32 2.0, %v2811
      %v2844 = vsub.f32 2.0, %v2812
      %v2845 = vsub.f32 2.0, %v2813
      %v2846 = vmul.f32 %v2750, %v2814
      %v2847 = vmul.f32 %v2751, %v2815
      %v2848 = vmul.f32 %v2752, %v2816
      %v2849 = vmul.f32 %v2753, %v2817
      %v2850 = vmul.f32 %v2754, %v2818
      %v2851 = vmul.f32 %v2755, %v2819
      %v2852 = vmul.f32 %v2756, %v2820
      %v2853 = vmul.f32 %v2757, %v2821
      %v2854 = vmul.f32 %v2758, %v2822
      %v2855 = vmul.f32 %v2759, %v2823
      %v2856 = vmul.f32 %v2760, %v2824
      %v2857 = vmul.f32 %v2761, %v2825
      %v2858 = vmul.f32 %v2762, %v2826
      %v2859 = vmul.f32 %v2763, %v2827
      %v2860 = vmul.f32 %v2764, %v2828
      %v2861 = vmul.f32 %v2765, %v2829
      %v2862 = vmul.f32 %v2766, %v2830
      %v2863 = vmul.f32 %v2767, %v2831
      %v2864 = vmul.f32 %v2768, %v2832
      %v2865 = vmul.f32 %v2769, %v2833
      %v2866 = vmul.f32 %v2770, %v2834
      %v2867 = vmul.f32 %v2771, %v2835
      %v2868 = vmul.f32 %v2772, %v2836
      %v2869 = vmul.f32 %v2773, %v2837
      %v2870 = vmul.f32 %v2774, %v2838
      %v2871 = vmul.f32 %v2775, %v2839
      %v2872 = vmul.f32 %v2776, %v2840
      %v2873 = vmul.f32 %v2777, %v2841
      %v2874 = vmul.f32 %v2778, %v2842
      %v2875 = vmul.f32 %v2779, %v2843
      %v2876 = vmul.f32 %v2780, %v2844
      %v2877 = vmul.f32 %v2781, %v2845
      %v2878 = vmul.f32 %v2718, %v2846
      %v2879 = vmul.f32 %v2719, %v2847
      %v2880 = vmul.f32 %v2720, %v2848
      %v2881 = vmul.f32 %v2721, %v2849
      %v2882 = vmul.f32 %v2722, %v2850
      %v2883 = vmul.f32 %v2723, %v2851
      %v2884 = vmul.f32 %v2724, %v2852
      %v2885 = vmul.f32 %v2725, %v2853
      %v2886 = vmul.f32 %v2726, %v2854
      %v2887 = vmul.f32 %v2727, %v2855
      %v2888 = vmul.f32 %v2728, %v2856
      %v2889 = vmul.f32 %v2729, %v2857
      %v2890 = vmul.f32 %v2730, %v2858
      %v2891 = vmul.f32 %v2731, %v2859
      %v2892 = vmul.f32 %v2732, %v2860
      %v2893 = vmul.f32 %v2733, %v2861
      %v2894 = vmul.f32 %v2734, %v2862
      %v2895 = vmul.f32 %v2735, %v2863
      %v2896 = vmul.f32 %v2736, %v2864
      %v2897 = vmul.f32 %v2737, %v2865
      %v2898 = vmul.f32 %v2738, %v2866
      %v2899 = vmul.f32 %v2739, %v2867
      %v2900 = vmul.f32 %v2740, %v2868
      %v2901 = vmul.f32 %v2741, %v2869
      %v2902 = vmul.f32 %v2742, %v2870
      %v2903 = vmul.f32 %v2743, %v2871
      %v2904 = vmul.f32 %v2744, %v2872
      %v2905 = vmul.f32 %v2745, %v2873
      %v2906 = vmul.f32 %v2746, %v2874
      %v2907 = vmul.f32 %v2747, %v2875
      %v2908 = vmul.f32 %v2748, %v2876
      %v2909 = vmul.f32 %v2749, %v2877
      %v2910 = vadd.f32 %v2878, 1.0
      %v2911 = vadd.f32 %v2879, 1.0
      %v2912 = vadd.f32 %v2880, 1.0
      %v2913 = vadd.f32 %v2881, 1.0
      %v2914 = vadd.f32 %v2882, 1.0
      %v2915 = vadd.f32 %v2883, 1.0
      %v2916 = vadd.f32 %v2884, 1.0
      %v2917 = vadd.f32 %v2885, 1.0
      %v2918 = vadd.f32 %v2886, 1.0
      %v2919 = vadd.f32 %v2887, 1.0
      %v2920 = vadd.f32 %v2888, 1.0
      %v2921 = vadd.f32 %v2889, 1.0
      %v2922 = vadd.f32 %v2890, 1.0
      %v2923 = vadd.f32 %v2891, 1.0
      %v2924 = vadd.f32 %v2892, 1.0
      %v2925 = vadd.f32 %v2893, 1.0
      %v2926 = vadd.f32 %v2894, 1.0
      %v2927 = vadd.f32 %v2895, 1.0
      %v2928 = vadd.f32 %v2896, 1.0
      %v2929 = vadd.f32 %v2897, 1.0
      %v2930 = vadd.f32 %v2898, 1.0
      %v2931 = vadd.f32 %v2899, 1.0
      %v2932 = vadd.f32 %v2900, 1.0
      %v2933 = vadd.f32 %v2901, 1.0
      %v2934 = vadd.f32 %v2902, 1.0
      %v2935 = vadd.f32 %v2903, 1.0
      %v2936 = vadd.f32 %v2904, 1.0
      %v2937 = vadd.f32 %v2905, 1.0
      %v2938 = vadd.f32 %v2906, 1.0
      %v2939 = vadd.f32 %v2907, 1.0
      %v2940 = vadd.f32 %v2908, 1.0
      %v2941 = vadd.f32 %v2909, 1.0
      %v2942 = vmul.f32 %v1918, %v2910
      %v2943 = vmul.f32 %v1919, %v2911
      %v2944 = vmul.f32 %v1920, %v2912
      %v2945 = vmul.f32 %v1921, %v2913
      %v2946 = vmul.f32 %v1922, %v2914
      %v2947 = vmul.f32 %v1923, %v2915
      %v2948 = vmul.f32 %v1924, %v2916
      %v2949 = vmul.f32 %v1925, %v2917
      %v2950 = vmul.f32 %v1926, %v2918
      %v2951 = vmul.f32 %v1927, %v2919
      %v2952 = vmul.f32 %v1928, %v2920
      %v2953 = vmul.f32 %v1929, %v2921
      %v2954 = vmul.f32 %v1930, %v2922
      %v2955 = vmul.f32 %v1931, %v2923
      %v2956 = vmul.f32 %v1932, %v2924
      %v2957 = vmul.f32 %v1933, %v2925
      %v2958 = vmul.f32 %v1934, %v2926
      %v2959 = vmul.f32 %v1935, %v2927
      %v2960 = vmul.f32 %v1936, %v2928
      %v2961 = vmul.f32 %v1937, %v2929
      %v2962 = vmul.f32 %v1938, %v2930
      %v2963 = vmul.f32 %v1939, %v2931
      %v2964 = vmul.f32 %v1940, %v2932
      %v2965 = vmul.f32 %v1941, %v2933
      %v2966 = vmul.f32 %v1942, %v2934
      %v2967 = vmul.f32 %v1943, %v2935
      %v2968 = vmul.f32 %v1944, %v2936
      %v2969 = vmul.f32 %v1945, %v2937
      %v2970 = vmul.f32 %v1946, %v2938
      %v2971 = vmul.f32 %v1947, %v2939
      %v2972 = vmul.f32 %v1948, %v2940
      %v2973 = vmul.f32 %v1949, %v2941
      %s2974 = scalar_lea.vmem %s2, 128
      %v2975 = vld [vmem:[%s2974] sm:$0xff]
      %v2976 = vld [vmem:[%s2974 + $0x8] sm:$0xff]
      %v2977 = vld [vmem:[%s2974 + $0x10] sm:$0xff]
      %v2978 = vld [vmem:[%s2974 + $0x18] sm:$0xff]
      %v2979 = vld [vmem:[%s2974 + $0x20] sm:$0xff]
      %v2980 = vld [vmem:[%s2974 + $0x28] sm:$0xff]
      %v2981 = vld [vmem:[%s2974 + $0x30] sm:$0xff]
      %v2982 = vld [vmem:[%s2974 + $0x38] sm:$0xff]
      %v2983 = vld [vmem:[%s2974 + $0x40] sm:$0xff]
      %v2984 = vld [vmem:[%s2974 + $0x48] sm:$0xff]
      %v2985 = vld [vmem:[%s2974 + $0x50] sm:$0xff]
      %v2986 = vld [vmem:[%s2974 + $0x58] sm:$0xff]
      %v2987 = vld [vmem:[%s2974 + $0x60] sm:$0xff]
      %v2988 = vld [vmem:[%s2974 + $0x68] sm:$0xff]
      %v2989 = vld [vmem:[%s2974 + $0x70] sm:$0xff]
      %v2990 = vld [vmem:[%s2974 + $0x78] sm:$0xff]
      %v2991 = vld [vmem:[%s3 + $0x2] sm:$0x1]
      %v2992 = vlaneseq
      %v2993 = vshrl.u32 %v2992, 7
      %v2994 = vsub.s32 0, %v2993
      %v2995 = vrot.slane %v2991, %v2994
      %2996 = vmatprep.subr.mxu0 0.0
      %2997 = vmatpush1.msra.mxu0 %v2975
      %2998 = vmatprep.subr.mxu0 0.0
      %2999 = vmatpush1.msra.mxu0 %v2976
      %3000 = vmatprep.subr.mxu0 0.0
      %3001 = vmatpush1.msra.mxu0 %v2977
      %3002 = vmatprep.subr.mxu0 0.0
      %3003 = vmatpush1.msra.mxu0 %v2978
      %3004 = vmatprep.subr.mxu0 0.0
      %3005 = vmatpush1.msra.mxu0 %v2979
      %3006 = vmatprep.subr.mxu0 0.0
      %3007 = vmatpush1.msra.mxu0 %v2980
      %3008 = vmatprep.subr.mxu0 0.0
      %3009 = vmatpush1.msra.mxu0 %v2981
      %3010 = vmatprep.subr.mxu0 0.0
      %3011 = vmatpush1.msra.mxu0 %v2982
      %3012 = vmatprep.subr.mxu0 0.0
      %3013 = vmatpush1.msra.mxu0 %v2983
      %3014 = vmatprep.subr.mxu0 0.0
      %3015 = vmatpush1.msra.mxu0 %v2984
      %3016 = vmatprep.subr.mxu0 0.0
      %3017 = vmatpush1.msra.mxu0 %v2985
      %3018 = vmatprep.subr.mxu0 0.0
      %3019 = vmatpush1.msra.mxu0 %v2986
      %3020 = vmatprep.subr.mxu0 0.0
      %3021 = vmatpush1.msra.mxu0 %v2987
      %3022 = vmatprep.subr.mxu0 0.0
      %3023 = vmatpush1.msra.mxu0 %v2988
      %3024 = vmatprep.subr.mxu0 0.0
      %3025 = vmatpush1.msra.mxu0 %v2989
      %3026 = vmatprep.subr.mxu0 0.0
      %3027 = vmatpush1.msra.mxu0 %v2990
      %3028 = vmatprep.subr.mxu0 0.0
      %3029 = vmatpush1.msra.mxu0 0.0
      %3030 = vmatprep.subr.mxu0 0.0
      %3031 = vmatpush1.msra.mxu0 0.0
      %3032 = vmatprep.subr.mxu0 0.0
      %3033 = vmatpush1.msra.mxu0 0.0
      %3034 = vmatprep.subr.mxu0 0.0
      %3035 = vmatpush1.msra.mxu0 0.0
      %3036 = vmatprep.subr.mxu0 0.0
      %3037 = vmatpush1.msra.mxu0 0.0
      %3038 = vmatprep.subr.mxu0 0.0
      %3039 = vmatpush1.msra.mxu0 0.0
      %3040 = vmatprep.subr.mxu0 0.0
      %3041 = vmatpush1.msra.mxu0 0.0
      %3042 = vmatprep.subr.mxu0 0.0
      %3043 = vmatpush1.msra.mxu0 0.0
      %3044 = vmatprep.subr.mxu0 0.0
      %3045 = vmatpush1.msra.mxu0 0.0
      %3046 = vmatprep.subr.mxu0 0.0
      %3047 = vmatpush1.msra.mxu0 0.0
      %3048 = vmatprep.subr.mxu0 0.0
      %3049 = vmatpush1.msra.mxu0 0.0
      %3050 = vmatprep.subr.mxu0 0.0
      %3051 = vmatpush1.msra.mxu0 0.0
      %3052 = vmatprep.subr.mxu0 0.0
      %3053 = vmatpush1.msra.mxu0 0.0
      %3054 = vmatprep.subr.mxu0 0.0
      %3055 = vmatpush1.msra.mxu0 0.0
      %3056 = vmatprep.subr.mxu0 0.0
      %3057 = vmatpush1.msra.mxu0 0.0
      %3058 = vmatprep.subr.mxu0 0.0
      %3059 = vmatpush1.msra.mxu0 0.0
      %3060 = vmatprep.mubr.f32.mxu0 0.0
      %3061 = vmatmul.mubr.f32.gmra.mrb[0].mxu0 %v2942
      %v3062 = vpop.f32.mrb[0].mxu0
      %v3063 = vadd.f32 %v2995, %v3062
      %v3064 = vpop.f32.mrb[0].mxu0
      %3065 = vmatprep.mubr.f32.mxu0 0.0
      %3066 = vmatmul.mubr.f32.gmra.mrb[0].mxu0 %v2943
      %v3067 = vpop.f32.mrb[0].mxu0
      %v3068 = vadd.f32 %v2995, %v3067
      %v3069 = vpop.f32.mrb[0].mxu0
      %3070 = vmatprep.mubr.f32.mxu0 0.0
      %3071 = vmatmul.mubr.f32.gmra.mrb[0].mxu0 %v2944
      %v3072 = vpop.f32.mrb[0].mxu0
      %v3073 = vadd.f32 %v2995, %v3072
      %v3074 = vpop.f32.mrb[0].mxu0
      %3075 = vmatprep.mubr.f32.mxu0 0.0
      %3076 = vmatmul.mubr.f32.gmra.mrb[0].mxu0 %v2945
      %v3077 = vpop.f32.mrb[0].mxu0
      %v3078 = vadd.f32 %v2995, %v3077
      %v3079 = vpop.f32.mrb[0].mxu0
      %3080 = vmatprep.mubr.f32.mxu0 0.0
      %3081 = vmatmul.mubr.f32.gmra.mrb[0].mxu0 %v2946
      %v3082 = vpop.f32.mrb[0].mxu0
      %v3083 = vadd.f32 %v2995, %v3082
      %v3084 = vpop.f32.mrb[0].mxu0
      %3085 = vmatprep.mubr.f32.mxu0 0.0
      %3086 = vmatmul.mubr.f32.gmra.mrb[0].mxu0 %v2947
      %v3087 = vpop.f32.mrb[0].mxu0
      %v3088 = vadd.f32 %v2995, %v3087
      %v3089 = vpop.f32.mrb[0].mxu0
      %3090 = vmatprep.mubr.f32.mxu0 0.0
      %3091 = vmatmul.mubr.f32.gmra.mrb[0].mxu0 %v2948
      %v3092 = vpop.f32.mrb[0].mxu0
      %v3093 = vadd.f32 %v2995, %v3092
      %v3094 = vpop.f32.mrb[0].mxu0
      %3095 = vmatprep.mubr.f32.mxu0 0.0
      %3096 = vmatmul.mubr.f32.gmra.mrb[0].mxu0 %v2949
      %v3097 = vpop.f32.mrb[0].mxu0
      %v3098 = vadd.f32 %v2995, %v3097
      %v3099 = vpop.f32.mrb[0].mxu0
      %3100 = vmatprep.mubr.f32.mxu0 0.0
      %3101 = vmatmul.mubr.f32.gmra.mrb[0].mxu0 %v2950
      %v3102 = vpop.f32.mrb[0].mxu0
      %v3103 = vadd.f32 %v2995, %v3102
      %v3104 = vpop.f32.mrb[0].mxu0
      %3105 = vmatprep.mubr.f32.mxu0 0.0
      %3106 = vmatmul.mubr.f32.gmra.mrb[0].mxu0 %v2951
      %v3107 = vpop.f32.mrb[0].mxu0
      %v3108 = vadd.f32 %v2995, %v3107
      %v3109 = vpop.f32.mrb[0].mxu0
      %3110 = vmatprep.mubr.f32.mxu0 0.0
      %3111 = vmatmul.mubr.f32.gmra.mrb[0].mxu0 %v2952
      %v3112 = vpop.f32.mrb[0].mxu0
      %v3113 = vadd.f32 %v2995, %v3112
      %v3114 = vpop.f32.mrb[0].mxu0
      %3115 = vmatprep.mubr.f32.mxu0 0.0
      %3116 = vmatmul.mubr.f32.gmra.mrb[0].mxu0 %v2953
      %v3117 = vpop.f32.mrb[0].mxu0
      %v3118 = vadd.f32 %v2995, %v3117
      %v3119 = vpop.f32.mrb[0].mxu0
      %3120 = vmatprep.mubr.f32.mxu0 0.0
      %3121 = vmatmul.mubr.f32.gmra.mrb[0].mxu0 %v2954
      %v3122 = vpop.f32.mrb[0].mxu0
      %v3123 = vadd.f32 %v2995, %v3122
      %v3124 = vpop.f32.mrb[0].mxu0
      %3125 = vmatprep.mubr.f32.mxu0 0.0
      %3126 = vmatmul.mubr.f32.gmra.mrb[0].mxu0 %v2955
      %v3127 = vpop.f32.mrb[0].mxu0
      %v3128 = vadd.f32 %v2995, %v3127
      %v3129 = vpop.f32.mrb[0].mxu0
      %3130 = vmatprep.mubr.f32.mxu0 0.0
      %3131 = vmatmul.mubr.f32.gmra.mrb[0].mxu0 %v2956
      %v3132 = vpop.f32.mrb[0].mxu0
      %v3133 = vadd.f32 %v2995, %v3132
      %v3134 = vpop.f32.mrb[0].mxu0
      %3135 = vmatprep.mubr.f32.mxu0 0.0
      %3136 = vmatmul.mubr.f32.gmra.mrb[0].mxu0 %v2957
      %v3137 = vpop.f32.mrb[0].mxu0
      %v3138 = vadd.f32 %v2995, %v3137
      %v3139 = vpop.f32.mrb[0].mxu0
      %3140 = vmatprep.mubr.f32.mxu0 0.0
      %3141 = vmatmul.mubr.f32.gmra.mrb[0].mxu0 %v2958
      %v3142 = vpop.f32.mrb[0].mxu0
      %v3143 = vadd.f32 %v2995, %v3142
      %v3144 = vpop.f32.mrb[0].mxu0
      %3145 = vmatprep.mubr.f32.mxu0 0.0
      %3146 = vmatmul.mubr.f32.gmra.mrb[0].mxu0 %v2959
      %v3147 = vpop.f32.mrb[0].mxu0
      %v3148 = vadd.f32 %v2995, %v3147
      %v3149 = vpop.f32.mrb[0].mxu0
      %3150 = vmatprep.mubr.f32.mxu0 0.0
      %3151 = vmatmul.mubr.f32.gmra.mrb[0].mxu0 %v2960
      %v3152 = vpop.f32.mrb[0].mxu0
      %v3153 = vadd.f32 %v2995, %v3152
      %v3154 = vpop.f32.mrb[0].mxu0
      %3155 = vmatprep.mubr.f32.mxu0 0.0
      %3156 = vmatmul.mubr.f32.gmra.mrb[0].mxu0 %v2961
      %v3157 = vpop.f32.mrb[0].mxu0
      %v3158 = vadd.f32 %v2995, %v3157
      %v3159 = vpop.f32.mrb[0].mxu0
      %3160 = vmatprep.mubr.f32.mxu0 0.0
      %3161 = vmatmul.mubr.f32.gmra.mrb[0].mxu0 %v2962
      %v3162 = vpop.f32.mrb[0].mxu0
      %v3163 = vadd.f32 %v2995, %v3162
      %v3164 = vpop.f32.mrb[0].mxu0
      %3165 = vmatprep.mubr.f32.mxu0 0.0
      %3166 = vmatmul.mubr.f32.gmra.mrb[0].mxu0 %v2963
      %v3167 = vpop.f32.mrb[0].mxu0
      %v3168 = vadd.f32 %v2995, %v3167
      %v3169 = vpop.f32.mrb[0].mxu0
      %3170 = vmatprep.mubr.f32.mxu0 0.0
      %3171 = vmatmul.mubr.f32.gmra.mrb[0].mxu0 %v2964
      %v3172 = vpop.f32.mrb[0].mxu0
      %v3173 = vadd.f32 %v2995, %v3172
      %v3174 = vpop.f32.mrb[0].mxu0
      %3175 = vmatprep.mubr.f32.mxu0 0.0
      %3176 = vmatmul.mubr.f32.gmra.mrb[0].mxu0 %v2965
      %v3177 = vpop.f32.mrb[0].mxu0
      %v3178 = vadd.f32 %v2995, %v3177
      %v3179 = vpop.f32.mrb[0].mxu0
      %3180 = vmatprep.mubr.f32.mxu0 0.0
      %3181 = vmatmul.mubr.f32.gmra.mrb[0].mxu0 %v2966
      %v3182 = vpop.f32.mrb[0].mxu0
      %v3183 = vadd.f32 %v2995, %v3182
      %v3184 = vpop.f32.mrb[0].mxu0
      %3185 = vmatprep.mubr.f32.mxu0 0.0
      %3186 = vmatmul.mubr.f32.gmra.mrb[0].mxu0 %v2967
      %v3187 = vpop.f32.mrb[0].mxu0
      %v3188 = vadd.f32 %v2995, %v3187
      %v3189 = vpop.f32.mrb[0].mxu0
      %3190 = vmatprep.mubr.f32.mxu0 0.0
      %3191 = vmatmul.mubr.f32.gmra.mrb[0].mxu0 %v2968
      %v3192 = vpop.f32.mrb[0].mxu0
      %v3193 = vadd.f32 %v2995, %v3192
      %v3194 = vpop.f32.mrb[0].mxu0
      %3195 = vmatprep.mubr.f32.mxu0 0.0
      %3196 = vmatmul.mubr.f32.gmra.mrb[0].mxu0 %v2969
      %v3197 = vpop.f32.mrb[0].mxu0
      %v3198 = vadd.f32 %v2995, %v3197
      %v3199 = vpop.f32.mrb[0].mxu0
      %3200 = vmatprep.mubr.f32.mxu0 0.0
      %3201 = vmatmul.mubr.f32.gmra.mrb[0].mxu0 %v2970
      %v3202 = vpop.f32.mrb[0].mxu0
      %v3203 = vadd.f32 %v2995, %v3202
      %v3204 = vpop.f32.mrb[0].mxu0
      %3205 = vmatprep.mubr.f32.mxu0 0.0
      %3206 = vmatmul.mubr.f32.gmra.mrb[0].mxu0 %v2971
      %v3207 = vpop.f32.mrb[0].mxu0
      %v3208 = vadd.f32 %v2995, %v3207
      %v3209 = vpop.f32.mrb[0].mxu0
      %3210 = vmatprep.mubr.f32.mxu0 0.0
      %3211 = vmatmul.mubr.f32.gmra.mrb[0].mxu0 %v2972
      %v3212 = vpop.f32.mrb[0].mxu0
      %v3213 = vadd.f32 %v2995, %v3212
      %v3214 = vpop.f32.mrb[0].mxu0
      %3215 = vmatprep.mubr.f32.mxu0 0.0
      %3216 = vmatmul.mubr.f32.gmra.mrb[0].mxu0 %v2973
      %v3217 = vpop.f32.mrb[0].mxu0
      %v3218 = vadd.f32 %v2995, %v3217
      %v3219 = vpop.f32.mrb[0].mxu0
      %3220 = vdwg.mxu0
      %v3221 = vmul.f32 %v3063, 0.5
      %v3222 = vmul.f32 %v3068, 0.5
      %v3223 = vmul.f32 %v3073, 0.5
      %v3224 = vmul.f32 %v3078, 0.5
      %v3225 = vmul.f32 %v3083, 0.5
      %v3226 = vmul.f32 %v3088, 0.5
      %v3227 = vmul.f32 %v3093, 0.5
      %v3228 = vmul.f32 %v3098, 0.5
      %v3229 = vmul.f32 %v3103, 0.5
      %v3230 = vmul.f32 %v3108, 0.5
      %v3231 = vmul.f32 %v3113, 0.5
      %v3232 = vmul.f32 %v3118, 0.5
      %v3233 = vmul.f32 %v3123, 0.5
      %v3234 = vmul.f32 %v3128, 0.5
      %v3235 = vmul.f32 %v3133, 0.5
      %v3236 = vmul.f32 %v3138, 0.5
      %v3237 = vmul.f32 %v3143, 0.5
      %v3238 = vmul.f32 %v3148, 0.5
      %v3239 = vmul.f32 %v3153, 0.5
      %v3240 = vmul.f32 %v3158, 0.5
      %v3241 = vmul.f32 %v3163, 0.5
      %v3242 = vmul.f32 %v3168, 0.5
      %v3243 = vmul.f32 %v3173, 0.5
      %v3244 = vmul.f32 %v3178, 0.5
      %v3245 = vmul.f32 %v3183, 0.5
      %v3246 = vmul.f32 %v3188, 0.5
      %v3247 = vmul.f32 %v3193, 0.5
      %v3248 = vmul.f32 %v3198, 0.5
      %v3249 = vmul.f32 %v3203, 0.5
      %v3250 = vmul.f32 %v3208, 0.5
      %v3251 = vmul.f32 %v3213, 0.5
      %v3252 = vmul.f32 %v3218, 0.5
      %v3253 = vmul.f32 %v3063, 0.70710677
      %v3254 = vmul.f32 %v3068, 0.70710677
      %v3255 = vmul.f32 %v3073, 0.70710677
      %v3256 = vmul.f32 %v3078, 0.70710677
      %v3257 = vmul.f32 %v3083, 0.70710677
      %v3258 = vmul.f32 %v3088, 0.70710677
      %v3259 = vmul.f32 %v3093, 0.70710677
      %v3260 = vmul.f32 %v3098, 0.70710677
      %v3261 = vmul.f32 %v3103, 0.70710677
      %v3262 = vmul.f32 %v3108, 0.70710677
      %v3263 = vmul.f32 %v3113, 0.70710677
      %v3264 = vmul.f32 %v3118, 0.70710677
      %v3265 = vmul.f32 %v3123, 0.70710677
      %v3266 = vmul.f32 %v3128, 0.70710677
      %v3267 = vmul.f32 %v3133, 0.70710677
      %v3268 = vmul.f32 %v3138, 0.70710677
      %v3269 = vmul.f32 %v3143, 0.70710677
      %v3270 = vmul.f32 %v3148, 0.70710677
      %v3271 = vmul.f32 %v3153, 0.70710677
      %v3272 = vmul.f32 %v3158, 0.70710677
      %v3273 = vmul.f32 %v3163, 0.70710677
      %v3274 = vmul.f32 %v3168, 0.70710677
      %v3275 = vmul.f32 %v3173, 0.70710677
      %v3276 = vmul.f32 %v3178, 0.70710677
      %v3277 = vmul.f32 %v3183, 0.70710677
      %v3278 = vmul.f32 %v3188, 0.70710677
      %v3279 = vmul.f32 %v3193, 0.70710677
      %v3280 = vmul.f32 %v3198, 0.70710677
      %v3281 = vmul.f32 %v3203, 0.70710677
      %v3282 = vmul.f32 %v3208, 0.70710677
      %v3283 = vmul.f32 %v3213, 0.70710677
      %v3284 = vmul.f32 %v3218, 0.70710677
      %v3285 = vmax.f32 %v3253, -3.832507
      %v3286 = vmax.f32 %v3254, -3.832507
      %v3287 = vmax.f32 %v3255, -3.832507
      %v3288 = vmax.f32 %v3256, -3.832507
      %v3289 = vmax.f32 %v3257, -3.832507
      %v3290 = vmax.f32 %v3258, -3.832507
      %v3291 = vmax.f32 %v3259, -3.832507
      %v3292 = vmax.f32 %v3260, -3.832507
      %v3293 = vmax.f32 %v3261, -3.832507
      %v3294 = vmax.f32 %v3262, -3.832507
      %v3295 = vmax.f32 %v3263, -3.832507
      %v3296 = vmax.f32 %v3264, -3.832507
      %v3297 = vmax.f32 %v3265, -3.832507
      %v3298 = vmax.f32 %v3266, -3.832507
      %v3299 = vmax.f32 %v3267, -3.832507
      %v3300 = vmax.f32 %v3268, -3.832507
      %v3301 = vmax.f32 %v3269, -3.832507
      %v3302 = vmax.f32 %v3270, -3.832507
      %v3303 = vmax.f32 %v3271, -3.832507
      %v3304 = vmax.f32 %v3272, -3.832507
      %v3305 = vmax.f32 %v3273, -3.832507
      %v3306 = vmax.f32 %v3274, -3.832507
      %v3307 = vmax.f32 %v3275, -3.832507
      %v3308 = vmax.f32 %v3276, -3.832507
      %v3309 = vmax.f32 %v3277, -3.832507
      %v3310 = vmax.f32 %v3278, -3.832507
      %v3311 = vmax.f32 %v3279, -3.832507
      %v3312 = vmax.f32 %v3280, -3.832507
      %v3313 = vmax.f32 %v3281, -3.832507
      %v3314 = vmax.f32 %v3282, -3.832507
      %v3315 = vmax.f32 %v3283, -3.832507
      %v3316 = vmax.f32 %v3284, -3.832507
      %v3317 = vmin.f32 %v3285, 3.832507
      %v3318 = vmin.f32 %v3286, 3.832507
      %v3319 = vmin.f32 %v3287, 3.832507
      %v3320 = vmin.f32 %v3288, 3.832507
      %v3321 = vmin.f32 %v3289, 3.832507
      %v3322 = vmin.f32 %v3290, 3.832507
      %v3323 = vmin.f32 %v3291, 3.832507
      %v3324 = vmin.f32 %v3292, 3.832507
      %v3325 = vmin.f32 %v3293, 3.832507
      %v3326 = vmin.f32 %v3294, 3.832507
      %v3327 = vmin.f32 %v3295, 3.832507
      %v3328 = vmin.f32 %v3296, 3.832507
      %v3329 = vmin.f32 %v3297, 3.832507
      %v3330 = vmin.f32 %v3298, 3.832507
      %v3331 = vmin.f32 %v3299, 3.832507
      %v3332 = vmin.f32 %v3300, 3.832507
      %v3333 = vmin.f32 %v3301, 3.832507
      %v3334 = vmin.f32 %v3302, 3.832507
      %v3335 = vmin.f32 %v3303, 3.832507
      %v3336 = vmin.f32 %v3304, 3.832507
      %v3337 = vmin.f32 %v3305, 3.832507
      %v3338 = vmin.f32 %v3306, 3.832507
      %v3339 = vmin.f32 %v3307, 3.832507
      %v3340 = vmin.f32 %v3308, 3.832507
      %v3341 = vmin.f32 %v3309, 3.832507
      %v3342 = vmin.f32 %v3310, 3.832507
      %v3343 = vmin.f32 %v3311, 3.832507
      %v3344 = vmin.f32 %v3312, 3.832507
      %v3345 = vmin.f32 %v3313, 3.832507
      %v3346 = vmin.f32 %v3314, 3.832507
      %v3347 = vmin.f32 %v3315, 3.832507
      %v3348 = vmin.f32 %v3316, 3.832507
      %v3349 = vmul.f32 %v3317, %v3317
      %v3350 = vmul.f32 %v3318, %v3318
      %v3351 = vmul.f32 %v3319, %v3319
      %v3352 = vmul.f32 %v3320, %v3320
      %v3353 = vmul.f32 %v3321, %v3321
      %v3354 = vmul.f32 %v3322, %v3322
      %v3355 = vmul.f32 %v3323, %v3323
      %v3356 = vmul.f32 %v3324, %v3324
      %v3357 = vmul.f32 %v3325, %v3325
      %v3358 = vmul.f32 %v3326, %v3326
      %v3359 = vmul.f32 %v3327, %v3327
      %v3360 = vmul.f32 %v3328, %v3328
      %v3361 = vmul.f32 %v3329, %v3329
      %v3362 = vmul.f32 %v3330, %v3330
      %v3363 = vmul.f32 %v3331, %v3331
      %v3364 = vmul.f32 %v3332, %v3332
      %v3365 = vmul.f32 %v3333, %v3333
      %v3366 = vmul.f32 %v3334, %v3334
      %v3367 = vmul.f32 %v3335, %v3335
      %v3368 = vmul.f32 %v3336, %v3336
      %v3369 = vmul.f32 %v3337, %v3337
      %v3370 = vmul.f32 %v3338, %v3338
      %v3371 = vmul.f32 %v3339, %v3339
      %v3372 = vmul.f32 %v3340, %v3340
      %v3373 = vmul.f32 %v3341, %v3341
      %v3374 = vmul.f32 %v3342, %v3342
      %v3375 = vmul.f32 %v3343, %v3343
      %v3376 = vmul.f32 %v3344, %v3344
      %v3377 = vmul.f32 %v3345, %v3345
      %v3378 = vmul.f32 %v3346, %v3346
      %v3379 = vmul.f32 %v3347, %v3347
      %v3380 = vmul.f32 %v3348, %v3348
      %v3381 = vmul.f32 %v3349, -2.7261424e-10
      %v3382 = vmul.f32 %v3350, -2.7261424e-10
      %v3383 = vmul.f32 %v3351, -2.7261424e-10
      %v3384 = vmul.f32 %v3352, -2.7261424e-10
      %v3385 = vmul.f32 %v3353, -2.7261424e-10
      %v3386 = vmul.f32 %v3354, -2.7261424e-10
      %v3387 = vmul.f32 %v3355, -2.7261424e-10
      %v3388 = vmul.f32 %v3356, -2.7261424e-10
      %v3389 = vmul.f32 %v3357, -2.7261424e-10
      %v3390 = vmul.f32 %v3358, -2.7261424e-10
      %v3391 = vmul.f32 %v3359, -2.7261424e-10
      %v3392 = vmul.f32 %v3360, -2.7261424e-10
      %v3393 = vmul.f32 %v3361, -2.7261424e-10
      %v3394 = vmul.f32 %v3362, -2.7261424e-10
      %v3395 = vmul.f32 %v3363, -2.7261424e-10
      %v3396 = vmul.f32 %v3364, -2.7261424e-10
      %v3397 = vmul.f32 %v3365, -2.7261424e-10
      %v3398 = vmul.f32 %v3366, -2.7261424e-10
      %v3399 = vmul.f32 %v3367, -2.7261424e-10
      %v3400 = vmul.f32 %v3368, -2.7261424e-10
      %v3401 = vmul.f32 %v3369, -2.7261424e-10
      %v3402 = vmul.f32 %v3370, -2.7261424e-10
      %v3403 = vmul.f32 %v3371, -2.7261424e-10
      %v3404 = vmul.f32 %v3372, -2.7261424e-10
      %v3405 = vmul.f32 %v3373, -2.7261424e-10
      %v3406 = vmul.f32 %v3374, -2.7261424e-10
      %v3407 = vmul.f32 %v3375, -2.7261424e-10
      %v3408 = vmul.f32 %v3376, -2.7261424e-10
      %v3409 = vmul.f32 %v3377, -2.7261424e-10
      %v3410 = vmul.f32 %v3378, -2.7261424e-10
      %v3411 = vmul.f32 %v3379, -2.7261424e-10
      %v3412 = vmul.f32 %v3380, -2.7261424e-10
      %v3413 = vadd.f32 %v3381, 2.7706815e-08
      %v3414 = vadd.f32 %v3382, 2.7706815e-08
      %v3415 = vadd.f32 %v3383, 2.7706815e-08
      %v3416 = vadd.f32 %v3384, 2.7706815e-08
      %v3417 = vadd.f32 %v3385, 2.7706815e-08
      %v3418 = vadd.f32 %v3386, 2.7706815e-08
      %v3419 = vadd.f32 %v3387, 2.7706815e-08
      %v3420 = vadd.f32 %v3388, 2.7706815e-08
      %v3421 = vadd.f32 %v3389, 2.7706815e-08
      %v3422 = vadd.f32 %v3390, 2.7706815e-08
      %v3423 = vadd.f32 %v3391, 2.7706815e-08
      %v3424 = vadd.f32 %v3392, 2.7706815e-08
      %v3425 = vadd.f32 %v3393, 2.7706815e-08
      %v3426 = vadd.f32 %v3394, 2.7706815e-08
      %v3427 = vadd.f32 %v3395, 2.7706815e-08
      %v3428 = vadd.f32 %v3396, 2.7706815e-08
      %v3429 = vadd.f32 %v3397, 2.7706815e-08
      %v3430 = vadd.f32 %v3398, 2.7706815e-08
      %v3431 = vadd.f32 %v3399, 2.7706815e-08
      %v3432 = vadd.f32 %v3400, 2.7706815e-08
      %v3433 = vadd.f32 %v3401, 2.7706815e-08
      %v3434 = vadd.f32 %v3402, 2.7706815e-08
      %v3435 = vadd.f32 %v3403, 2.7706815e-08
      %v3436 = vadd.f32 %v3404, 2.7706815e-08
      %v3437 = vadd.f32 %v3405, 2.7706815e-08
      %v3438 = vadd.f32 %v3406, 2.7706815e-08
      %v3439 = vadd.f32 %v3407, 2.7706815e-08
      %v3440 = vadd.f32 %v3408, 2.7706815e-08
      %v3441 = vadd.f32 %v3409, 2.7706815e-08
      %v3442 = vadd.f32 %v3410, 2.7706815e-08
      %v3443 = vadd.f32 %v3411, 2.7706815e-08
      %v3444 = vadd.f32 %v3412, 2.7706815e-08
      %v3445 = vmul.f32 %v3413, %v3349
      %v3446 = vmul.f32 %v3414, %v3350
      %v3447 = vmul.f32 %v3415, %v3351
      %v3448 = vmul.f32 %v3416, %v3352
      %v3449 = vmul.f32 %v3417, %v3353
      %v3450 = vmul.f32 %v3418, %v3354
      %v3451 = vmul.f32 %v3419, %v3355
      %v3452 = vmul.f32 %v3420, %v3356
      %v3453 = vmul.f32 %v3421, %v3357
      %v3454 = vmul.f32 %v3422, %v3358
      %v3455 = vmul.f32 %v3423, %v3359
      %v3456 = vmul.f32 %v3424, %v3360
      %v3457 = vmul.f32 %v3425, %v3361
      %v3458 = vmul.f32 %v3426, %v3362
      %v3459 = vmul.f32 %v3427, %v3363
      %v3460 = vmul.f32 %v3428, %v3364
      %v3461 = vmul.f32 %v3429, %v3365
      %v3462 = vmul.f32 %v3430, %v3366
      %v3463 = vmul.f32 %v3431, %v3367
      %v3464 = vmul.f32 %v3432, %v3368
      %v3465 = vmul.f32 %v3433, %v3369
      %v3466 = vmul.f32 %v3434, %v3370
      %v3467 = vmul.f32 %v3435, %v3371
      %v3468 = vmul.f32 %v3436, %v3372
      %v3469 = vmul.f32 %v3437, %v3373
      %v3470 = vmul.f32 %v3438, %v3374
      %v3471 = vmul.f32 %v3439, %v3375
      %v3472 = vmul.f32 %v3440, %v3376
      %v3473 = vmul.f32 %v3441, %v3377
      %v3474 = vmul.f32 %v3442, %v3378
      %v3475 = vmul.f32 %v3443, %v3379
      %v3476 = vmul.f32 %v3444, %v3380
      %v3477 = vadd.f32 %v3445, -2.101024e-06
      %v3478 = vadd.f32 %v3446, -2.101024e-06
      %v3479 = vadd.f32 %v3447, -2.101024e-06
      %v3480 = vadd.f32 %v3448, -2.101024e-06
      %v3481 = vadd.f32 %v3449, -2.101024e-06
      %v3482 = vadd.f32 %v3450, -2.101024e-06
      %v3483 = vadd.f32 %v3451, -2.101024e-06
      %v3484 = vadd.f32 %v3452, -2.101024e-06
      %v3485 = vadd.f32 %v3453, -2.101024e-06
      %v3486 = vadd.f32 %v3454, -2.101024e-06
      %v3487 = vadd.f32 %v3455, -2.101024e-06
      %v3488 = vadd.f32 %v3456, -2.101024e-06
      %v3489 = vadd.f32 %v3457, -2.101024e-06
      %v3490 = vadd.f32 %v3458, -2.101024e-06
      %v3491 = vadd.f32 %v3459, -2.101024e-06
      %v3492 = vadd.f32 %v3460, -2.101024e-06
      %v3493 = vadd.f32 %v3461, -2.101024e-06
      %v3494 = vadd.f32 %v3462, -2.101024e-06
      %v3495 = vadd.f32 %v3463, -2.101024e-06
      %v3496 = vadd.f32 %v3464, -2.101024e-06
      %v3497 = vadd.f32 %v3465, -2.101024e-06
      %v3498 = vadd.f32 %v3466, -2.101024e-06
      %v3499 = vadd.f32 %v3467, -2.101024e-06
      %v3500 = vadd.f32 %v3468, -2.101024e-06
      %v3501 = vadd.f32 %v3469, -2.101024e-06
      %v3502 = vadd.f32 %v3470, -2.101024e-06
      %v3503 = vadd.f32 %v3471, -2.101024e-06
      %v3504 = vadd.f32 %v3472, -2.101024e-06
      %v3505 = vadd.f32 %v3473, -2.101024e-06
      %v3506 = vadd.f32 %v3474, -2.101024e-06
      %v3507 = vadd.f32 %v3475, -2.101024e-06
      %v3508 = vadd.f32 %v3476, -2.101024e-06
      %v3509 = vmul.f32 %v3477, %v3349
      %v3510 = vmul.f32 %v3478, %v3350
      %v3511 = vmul.f32 %v3479, %v3351
      %v3512 = vmul.f32 %v3480, %v3352
      %v3513 = vmul.f32 %v3481, %v3353
      %v3514 = vmul.f32 %v3482, %v3354
      %v3515 = vmul.f32 %v3483, %v3355
      %v3516 = vmul.f32 %v3484, %v3356
      %v3517 = vmul.f32 %v3485, %v3357
      %v3518 = vmul.f32 %v3486, %v3358
      %v3519 = vmul.f32 %v3487, %v3359
      %v3520 = vmul.f32 %v3488, %v3360
      %v3521 = vmul.f32 %v3489, %v3361
      %v3522 = vmul.f32 %v3490, %v3362
      %v3523 = vmul.f32 %v3491, %v3363
      %v3524 = vmul.f32 %v3492, %v3364
      %v3525 = vmul.f32 %v3493, %v3365
      %v3526 = vmul.f32 %v3494, %v3366
      %v3527 = vmul.f32 %v3495, %v3367
      %v3528 = vmul.f32 %v3496, %v3368
      %v3529 = vmul.f32 %v3497, %v3369
      %v3530 = vmul.f32 %v3498, %v3370
      %v3531 = vmul.f32 %v3499, %v3371
      %v3532 = vmul.f32 %v3500, %v3372
      %v3533 = vmul.f32 %v3501, %v3373
      %v3534 = vmul.f32 %v3502, %v3374
      %v3535 = vmul.f32 %v3503, %v3375
      %v3536 = vmul.f32 %v3504, %v3376
      %v3537 = vmul.f32 %v3505, %v3377
      %v3538 = vmul.f32 %v3506, %v3378
      %v3539 = vmul.f32 %v3507, %v3379
      %v3540 = vmul.f32 %v3508, %v3380
      %v3541 = vadd.f32 %v3509, -5.6925062e-05
      %v3542 = vadd.f32 %v3510, -5.6925062e-05
      %v3543 = vadd.f32 %v3511, -5.6925062e-05
      %v3544 = vadd.f32 %v3512, -5.6925062e-05
      %v3545 = vadd.f32 %v3513, -5.6925062e-05
      %v3546 = vadd.f32 %v3514, -5.6925062e-05
      %v3547 = vadd.f32 %v3515, -5.6925062e-05
      %v3548 = vadd.f32 %v3516, -5.6925062e-05
      %v3549 = vadd.f32 %v3517, -5.6925062e-05
      %v3550 = vadd.f32 %v3518, -5.6925062e-05
      %v3551 = vadd.f32 %v3519, -5.6925062e-05
      %v3552 = vadd.f32 %v3520, -5.6925062e-05
      %v3553 = vadd.f32 %v3521, -5.6925062e-05
      %v3554 = vadd.f32 %v3522, -5.6925062e-05
      %v3555 = vadd.f32 %v3523, -5.6925062e-05
      %v3556 = vadd.f32 %v3524, -5.6925062e-05
      %v3557 = vadd.f32 %v3525, -5.6925062e-05
      %v3558 = vadd.f32 %v3526, -5.6925062e-05
      %v3559 = vadd.f32 %v3527, -5.6925062e-05
      %v3560 = vadd.f32 %v3528, -5.6925062e-05
      %v3561 = vadd.f32 %v3529, -5.6925062e-05
      %v3562 = vadd.f32 %v3530, -5.6925062e-05
      %v3563 = vadd.f32 %v3531, -5.6925062e-05
      %v3564 = vadd.f32 %v3532, -5.6925062e-05
      %v3565 = vadd.f32 %v3533, -5.6925062e-05
      %v3566 = vadd.f32 %v3534, -5.6925062e-05
      %v3567 = vadd.f32 %v3535, -5.6925062e-05
      %v3568 = vadd.f32 %v3536, -5.6925062e-05
      %v3569 = vadd.f32 %v3537, -5.6925062e-05
      %v3570 = vadd.f32 %v3538, -5.6925062e-05
      %v3571 = vadd.f32 %v3539, -5.6925062e-05
      %v3572 = vadd.f32 %v3540, -5.6925062e-05
      %v3573 = vmul.f32 %v3541, %v3349
      %v3574 = vmul.f32 %v3542, %v3350
      %v3575 = vmul.f32 %v3543, %v3351
      %v3576 = vmul.f32 %v3544, %v3352
      %v3577 = vmul.f32 %v3545, %v3353
      %v3578 = vmul.f32 %v3546, %v3354
      %v3579 = vmul.f32 %v3547, %v3355
      %v3580 = vmul.f32 %v3548, %v3356
      %v3581 = vmul.f32 %v3549, %v3357
      %v3582 = vmul.f32 %v3550, %v3358
      %v3583 = vmul.f32 %v3551, %v3359
      %v3584 = vmul.f32 %v3552, %v3360
      %v3585 = vmul.f32 %v3553, %v3361
      %v3586 = vmul.f32 %v3554, %v3362
      %v3587 = vmul.f32 %v3555, %v3363
      %v3588 = vmul.f32 %v3556, %v3364
      %v3589 = vmul.f32 %v3557, %v3365
      %v3590 = vmul.f32 %v3558, %v3366
      %v3591 = vmul.f32 %v3559, %v3367
      %v3592 = vmul.f32 %v3560, %v3368
      %v3593 = vmul.f32 %v3561, %v3369
      %v3594 = vmul.f32 %v3562, %v3370
      %v3595 = vmul.f32 %v3563, %v3371
      %v3596 = vmul.f32 %v3564, %v3372
      %v3597 = vmul.f32 %v3565, %v3373
      %v3598 = vmul.f32 %v3566, %v3374
      %v3599 = vmul.f32 %v3567, %v3375
      %v3600 = vmul.f32 %v3568, %v3376
      %v3601 = vmul.f32 %v3569, %v3377
      %v3602 = vmul.f32 %v3570, %v3378
      %v3603 = vmul.f32 %v3571, %v3379
      %v3604 = vmul.f32 %v3572, %v3380
      %v3605 = vadd.f32 %v3573, -0.00073499064
      %v3606 = vadd.f32 %v3574, -0.00073499064
      %v3607 = vadd.f32 %v3575, -0.00073499064
      %v3608 = vadd.f32 %v3576, -0.00073499064
      %v3609 = vadd.f32 %v3577, -0.00073499064
      %v3610 = vadd.f32 %v3578, -0.00073499064
      %v3611 = vadd.f32 %v3579, -0.00073499064
      %v3612 = vadd.f32 %v3580, -0.00073499064
      %v3613 = vadd.f32 %v3581, -0.00073499064
      %v3614 = vadd.f32 %v3582, -0.00073499064
      %v3615 = vadd.f32 %v3583, -0.00073499064
      %v3616 = vadd.f32 %v3584, -0.00073499064
      %v3617 = vadd.f32 %v3585, -0.00073499064
      %v3618 = vadd.f32 %v3586, -0.00073499064
      %v3619 = vadd.f32 %v3587, -0.00073499064
      %v3620 = vadd.f32 %v3588, -0.00073499064
      %v3621 = vadd.f32 %v3589, -0.00073499064
      %v3622 = vadd.f32 %v3590, -0.00073499064
      %v3623 = vadd.f32 %v3591, -0.00073499064
      %v3624 = vadd.f32 %v3592, -0.00073499064
      %v3625 = vadd.f32 %v3593, -0.00073499064
      %v3626 = vadd.f32 %v3594, -0.00073499064
      %v3627 = vadd.f32 %v3595, -0.00073499064
      %v3628 = vadd.f32 %v3596, -0.00073499064
      %v3629 = vadd.f32 %v3597, -0.00073499064
      %v3630 = vadd.f32 %v3598, -0.00073499064
      %v3631 = vadd.f32 %v3599, -0.00073499064
      %v3632 = vadd.f32 %v3600, -0.00073499064
      %v3633 = vadd.f32 %v3601, -0.00073499064
      %v3634 = vadd.f32 %v3602, -0.00073499064
      %v3635 = vadd.f32 %v3603, -0.00073499064
      %v3636 = vadd.f32 %v3604, -0.00073499064
      %v3637 = vmul.f32 %v3605, %v3349
      %v3638 = vmul.f32 %v3606, %v3350
      %v3639 = vmul.f32 %v3607, %v3351
      %v3640 = vmul.f32 %v3608, %v3352
      %v3641 = vmul.f32 %v3609, %v3353
      %v3642 = vmul.f32 %v3610, %v3354
      %v3643 = vmul.f32 %v3611, %v3355
      %v3644 = vmul.f32 %v3612, %v3356
      %v3645 = vmul.f32 %v3613, %v3357
      %v3646 = vmul.f32 %v3614, %v3358
      %v3647 = vmul.f32 %v3615, %v3359
      %v3648 = vmul.f32 %v3616, %v3360
      %v3649 = vmul.f32 %v3617, %v3361
      %v3650 = vmul.f32 %v3618, %v3362
      %v3651 = vmul.f32 %v3619, %v3363
      %v3652 = vmul.f32 %v3620, %v3364
      %v3653 = vmul.f32 %v3621, %v3365
      %v3654 = vmul.f32 %v3622, %v3366
      %v3655 = vmul.f32 %v3623, %v3367
      %v3656 = vmul.f32 %v3624, %v3368
      %v3657 = vmul.f32 %v3625, %v3369
      %v3658 = vmul.f32 %v3626, %v3370
      %v3659 = vmul.f32 %v3627, %v3371
      %v3660 = vmul.f32 %v3628, %v3372
      %v3661 = vmul.f32 %v3629, %v3373
      %v3662 = vmul.f32 %v3630, %v3374
      %v3663 = vmul.f32 %v3631, %v3375
      %v3664 = vmul.f32 %v3632, %v3376
      %v3665 = vmul.f32 %v3633, %v3377
      %v3666 = vmul.f32 %v3634, %v3378
      %v3667 = vmul.f32 %v3635, %v3379
      %v3668 = vmul.f32 %v3636, %v3380
      %v3669 = vadd.f32 %v3637, -0.0029546
      %v3670 = vadd.f32 %v3638, -0.0029546
      %v3671 = vadd.f32 %v3639, -0.0029546
      %v3672 = vadd.f32 %v3640, -0.0029546
      %v3673 = vadd.f32 %v3641, -0.0029546
      %v3674 = vadd.f32 %v3642, -0.0029546
      %v3675 = vadd.f32 %v3643, -0.0029546
      %v3676 = vadd.f32 %v3644, -0.0029546
      %v3677 = vadd.f32 %v3645, -0.0029546
      %v3678 = vadd.f32 %v3646, -0.0029546
      %v3679 = vadd.f32 %v3647, -0.0029546
      %v3680 = vadd.f32 %v3648, -0.0029546
      %v3681 = vadd.f32 %v3649, -0.0029546
      %v3682 = vadd.f32 %v3650, -0.0029546
      %v3683 = vadd.f32 %v3651, -0.0029546
      %v3684 = vadd.f32 %v3652, -0.0029546
      %v3685 = vadd.f32 %v3653, -0.0029546
      %v3686 = vadd.f32 %v3654, -0.0029546
      %v3687 = vadd.f32 %v3655, -0.0029546
      %v3688 = vadd.f32 %v3656, -0.0029546
      %v3689 = vadd.f32 %v3657, -0.0029546
      %v3690 = vadd.f32 %v3658, -0.0029546
      %v3691 = vadd.f32 %v3659, -0.0029546
      %v3692 = vadd.f32 %v3660, -0.0029546
      %v3693 = vadd.f32 %v3661, -0.0029546
      %v3694 = vadd.f32 %v3662, -0.0029546
      %v3695 = vadd.f32 %v3663, -0.0029546
      %v3696 = vadd.f32 %v3664, -0.0029546
      %v3697 = vadd.f32 %v3665, -0.0029546
      %v3698 = vadd.f32 %v3666, -0.0029546
      %v3699 = vadd.f32 %v3667, -0.0029546
      %v3700 = vadd.f32 %v3668, -0.0029546
      %v3701 = vmul.f32 %v3669, %v3349
      %v3702 = vmul.f32 %v3670, %v3350
      %v3703 = vmul.f32 %v3671, %v3351
      %v3704 = vmul.f32 %v3672, %v3352
      %v3705 = vmul.f32 %v3673, %v3353
      %v3706 = vmul.f32 %v3674, %v3354
      %v3707 = vmul.f32 %v3675, %v3355
      %v3708 = vmul.f32 %v3676, %v3356
      %v3709 = vmul.f32 %v3677, %v3357
      %v3710 = vmul.f32 %v3678, %v3358
      %v3711 = vmul.f32 %v3679, %v3359
      %v3712 = vmul.f32 %v3680, %v3360
      %v3713 = vmul.f32 %v3681, %v3361
      %v3714 = vmul.f32 %v3682, %v3362
      %v3715 = vmul.f32 %v3683, %v3363
      %v3716 = vmul.f32 %v3684, %v3364
      %v3717 = vmul.f32 %v3685, %v3365
      %v3718 = vmul.f32 %v3686, %v3366
      %v3719 = vmul.f32 %v3687, %v3367
      %v3720 = vmul.f32 %v3688, %v3368
      %v3721 = vmul.f32 %v3689, %v3369
      %v3722 = vmul.f32 %v3690, %v3370
      %v3723 = vmul.f32 %v3691, %v3371
      %v3724 = vmul.f32 %v3692, %v3372
      %v3725 = vmul.f32 %v3693, %v3373
      %v3726 = vmul.f32 %v3694, %v3374
      %v3727 = vmul.f32 %v3695, %v3375
      %v3728 = vmul.f32 %v3696, %v3376
      %v3729 = vmul.f32 %v3697, %v3377
      %v3730 = vmul.f32 %v3698, %v3378
      %v3731 = vmul.f32 %v3699, %v3379
      %v3732 = vmul.f32 %v3700, %v3380
      %v3733 = vadd.f32 %v3701, -0.016096033
      %v3734 = vadd.f32 %v3702, -0.016096033
      %v3735 = vadd.f32 %v3703, -0.016096033
      %v3736 = vadd.f32 %v3704, -0.016096033
      %v3737 = vadd.f32 %v3705, -0.016096033
      %v3738 = vadd.f32 %v3706, -0.016096033
      %v3739 = vadd.f32 %v3707, -0.016096033
      %v3740 = vadd.f32 %v3708, -0.016096033
      %v3741 = vadd.f32 %v3709, -0.016096033
      %v3742 = vadd.f32 %v3710, -0.016096033
      %v3743 = vadd.f32 %v3711, -0.016096033
      %v3744 = vadd.f32 %v3712, -0.016096033
      %v3745 = vadd.f32 %v3713, -0.016096033
      %v3746 = vadd.f32 %v3714, -0.016096033
      %v3747 = vadd.f32 %v3715, -0.016096033
      %v3748 = vadd.f32 %v3716, -0.016096033
      %v3749 = vadd.f32 %v3717, -0.016096033
      %v3750 = vadd.f32 %v3718, -0.016096033
      %v3751 = vadd.f32 %v3719, -0.016096033
      %v3752 = vadd.f32 %v3720, -0.016096033
      %v3753 = vadd.f32 %v3721, -0.016096033
      %v3754 = vadd.f32 %v3722, -0.016096033
      %v3755 = vadd.f32 %v3723, -0.016096033
      %v3756 = vadd.f32 %v3724, -0.016096033
      %v3757 = vadd.f32 %v3725, -0.016096033
      %v3758 = vadd.f32 %v3726, -0.016096033
      %v3759 = vadd.f32 %v3727, -0.016096033
      %v3760 = vadd.f32 %v3728, -0.016096033
      %v3761 = vadd.f32 %v3729, -0.016096033
      %v3762 = vadd.f32 %v3730, -0.016096033
      %v3763 = vadd.f32 %v3731, -0.016096033
      %v3764 = vadd.f32 %v3732, -0.016096033
      %v3765 = vmul.f32 %v3349, -1.45660715e-05
      %v3766 = vmul.f32 %v3350, -1.45660715e-05
      %v3767 = vmul.f32 %v3351, -1.45660715e-05
      %v3768 = vmul.f32 %v3352, -1.45660715e-05
      %v3769 = vmul.f32 %v3353, -1.45660715e-05
      %v3770 = vmul.f32 %v3354, -1.45660715e-05
      %v3771 = vmul.f32 %v3355, -1.45660715e-05
      %v3772 = vmul.f32 %v3356, -1.45660715e-05
      %v3773 = vmul.f32 %v3357, -1.45660715e-05
      %v3774 = vmul.f32 %v3358, -1.45660715e-05
      %v3775 = vmul.f32 %v3359, -1.45660715e-05
      %v3776 = vmul.f32 %v3360, -1.45660715e-05
      %v3777 = vmul.f32 %v3361, -1.45660715e-05
      %v3778 = vmul.f32 %v3362, -1.45660715e-05
      %v3779 = vmul.f32 %v3363, -1.45660715e-05
      %v3780 = vmul.f32 %v3364, -1.45660715e-05
      %v3781 = vmul.f32 %v3365, -1.45660715e-05
      %v3782 = vmul.f32 %v3366, -1.45660715e-05
      %v3783 = vmul.f32 %v3367, -1.45660715e-05
      %v3784 = vmul.f32 %v3368, -1.45660715e-05
      %v3785 = vmul.f32 %v3369, -1.45660715e-05
      %v3786 = vmul.f32 %v3370, -1.45660715e-05
      %v3787 = vmul.f32 %v3371, -1.45660715e-05
      %v3788 = vmul.f32 %v3372, -1.45660715e-05
      %v3789 = vmul.f32 %v3373, -1.45660715e-05
      %v3790 = vmul.f32 %v3374, -1.45660715e-05
      %v3791 = vmul.f32 %v3375, -1.45660715e-05
      %v3792 = vmul.f32 %v3376, -1.45660715e-05
      %v3793 = vmul.f32 %v3377, -1.45660715e-05
      %v3794 = vmul.f32 %v3378, -1.45660715e-05
      %v3795 = vmul.f32 %v3379, -1.45660715e-05
      %v3796 = vmul.f32 %v3380, -1.45660715e-05
      %v3797 = vadd.f32 %v3765, -0.00021337405
      %v3798 = vadd.f32 %v3766, -0.00021337405
      %v3799 = vadd.f32 %v3767, -0.00021337405
      %v3800 = vadd.f32 %v3768, -0.00021337405
      %v3801 = vadd.f32 %v3769, -0.00021337405
      %v3802 = vadd.f32 %v3770, -0.00021337405
      %v3803 = vadd.f32 %v3771, -0.00021337405
      %v3804 = vadd.f32 %v3772, -0.00021337405
      %v3805 = vadd.f32 %v3773, -0.00021337405
      %v3806 = vadd.f32 %v3774, -0.00021337405
      %v3807 = vadd.f32 %v3775, -0.00021337405
      %v3808 = vadd.f32 %v3776, -0.00021337405
      %v3809 = vadd.f32 %v3777, -0.00021337405
      %v3810 = vadd.f32 %v3778, -0.00021337405
      %v3811 = vadd.f32 %v3779, -0.00021337405
      %v3812 = vadd.f32 %v3780, -0.00021337405
      %v3813 = vadd.f32 %v3781, -0.00021337405
      %v3814 = vadd.f32 %v3782, -0.00021337405
      %v3815 = vadd.f32 %v3783, -0.00021337405
      %v3816 = vadd.f32 %v3784, -0.00021337405
      %v3817 = vadd.f32 %v3785, -0.00021337405
      %v3818 = vadd.f32 %v3786, -0.00021337405
      %v3819 = vadd.f32 %v3787, -0.00021337405
      %v3820 = vadd.f32 %v3788, -0.00021337405
      %v3821 = vadd.f32 %v3789, -0.00021337405
      %v3822 = vadd.f32 %v3790, -0.00021337405
      %v3823 = vadd.f32 %v3791, -0.00021337405
      %v3824 = vadd.f32 %v3792, -0.00021337405
      %v3825 = vadd.f32 %v3793, -0.00021337405
      %v3826 = vadd.f32 %v3794, -0.00021337405
      %v3827 = vadd.f32 %v3795, -0.00021337405
      %v3828 = vadd.f32 %v3796, -0.00021337405
      %v3829 = vmul.f32 %v3797, %v3349
      %v3830 = vmul.f32 %v3798, %v3350
      %v3831 = vmul.f32 %v3799, %v3351
      %v3832 = vmul.f32 %v3800, %v3352
      %v3833 = vmul.f32 %v3801, %v3353
      %v3834 = vmul.f32 %v3802, %v3354
      %v3835 = vmul.f32 %v3803, %v3355
      %v3836 = vmul.f32 %v3804, %v3356
      %v3837 = vmul.f32 %v3805, %v3357
      %v3838 = vmul.f32 %v3806, %v3358
      %v3839 = vmul.f32 %v3807, %v3359
      %v3840 = vmul.f32 %v3808, %v3360
      %v3841 = vmul.f32 %v3809, %v3361
      %v3842 = vmul.f32 %v3810, %v3362
      %v3843 = vmul.f32 %v3811, %v3363
      %v3844 = vmul.f32 %v3812, %v3364
      %v3845 = vmul.f32 %v3813, %v3365
      %v3846 = vmul.f32 %v3814, %v3366
      %v3847 = vmul.f32 %v3815, %v3367
      %v3848 = vmul.f32 %v3816, %v3368
      %v3849 = vmul.f32 %v3817, %v3369
      %v3850 = vmul.f32 %v3818, %v3370
      %v3851 = vmul.f32 %v3819, %v3371
      %v3852 = vmul.f32 %v3820, %v3372
      %v3853 = vmul.f32 %v3821, %v3373
      %v3854 = vmul.f32 %v3822, %v3374
      %v3855 = vmul.f32 %v3823, %v3375
      %v3856 = vmul.f32 %v3824, %v3376
      %v3857 = vmul.f32 %v3825, %v3377
      %v3858 = vmul.f32 %v3826, %v3378
      %v3859 = vmul.f32 %v3827, %v3379
      %v3860 = vmul.f32 %v3828, %v3380
      %v3861 = vadd.f32 %v3829, -0.001682827
      %v3862 = vadd.f32 %v3830, -0.001682827
      %v3863 = vadd.f32 %v3831, -0.001682827
      %v3864 = vadd.f32 %v3832, -0.001682827
      %v3865 = vadd.f32 %v3833, -0.001682827
      %v3866 = vadd.f32 %v3834, -0.001682827
      %v3867 = vadd.f32 %v3835, -0.001682827
      %v3868 = vadd.f32 %v3836, -0.001682827
      %v3869 = vadd.f32 %v3837, -0.001682827
      %v3870 = vadd.f32 %v3838, -0.001682827
      %v3871 = vadd.f32 %v3839, -0.001682827
      %v3872 = vadd.f32 %v3840, -0.001682827
      %v3873 = vadd.f32 %v3841, -0.001682827
      %v3874 = vadd.f32 %v3842, -0.001682827
      %v3875 = vadd.f32 %v3843, -0.001682827
      %v3876 = vadd.f32 %v3844, -0.001682827
      %v3877 = vadd.f32 %v3845, -0.001682827
      %v3878 = vadd.f32 %v3846, -0.001682827
      %v3879 = vadd.f32 %v3847, -0.001682827
      %v3880 = vadd.f32 %v3848, -0.001682827
      %v3881 = vadd.f32 %v3849, -0.001682827
      %v3882 = vadd.f32 %v3850, -0.001682827
      %v3883 = vadd.f32 %v3851, -0.001682827
      %v3884 = vadd.f32 %v3852, -0.001682827
      %v3885 = vadd.f32 %v3853, -0.001682827
      %v3886 = vadd.f32 %v3854, -0.001682827
      %v3887 = vadd.f32 %v3855, -0.001682827
      %v3888 = vadd.f32 %v3856, -0.001682827
      %v3889 = vadd.f32 %v3857, -0.001682827
      %v3890 = vadd.f32 %v3858, -0.001682827
      %v3891 = vadd.f32 %v3859, -0.001682827
      %v3892 = vadd.f32 %v3860, -0.001682827
      %v3893 = vmul.f32 %v3861, %v3349
      %v3894 = vmul.f32 %v3862, %v3350
      %v3895 = vmul.f32 %v3863, %v3351
      %v3896 = vmul.f32 %v3864, %v3352
      %v3897 = vmul.f32 %v3865, %v3353
      %v3898 = vmul.f32 %v3866, %v3354
      %v3899 = vmul.f32 %v3867, %v3355
      %v3900 = vmul.f32 %v3868, %v3356
      %v3901 = vmul.f32 %v3869, %v3357
      %v3902 = vmul.f32 %v3870, %v3358
      %v3903 = vmul.f32 %v3871, %v3359
      %v3904 = vmul.f32 %v3872, %v3360
      %v3905 = vmul.f32 %v3873, %v3361
      %v3906 = vmul.f32 %v3874, %v3362
      %v3907 = vmul.f32 %v3875, %v3363
      %v3908 = vmul.f32 %v3876, %v3364
      %v3909 = vmul.f32 %v3877, %v3365
      %v3910 = vmul.f32 %v3878, %v3366
      %v3911 = vmul.f32 %v3879, %v3367
      %v3912 = vmul.f32 %v3880, %v3368
      %v3913 = vmul.f32 %v3881, %v3369
      %v3914 = vmul.f32 %v3882, %v3370
      %v3915 = vmul.f32 %v3883, %v3371
      %v3916 = vmul.f32 %v3884, %v3372
      %v3917 = vmul.f32 %v3885, %v3373
      %v3918 = vmul.f32 %v3886, %v3374
      %v3919 = vmul.f32 %v3887, %v3375
      %v3920 = vmul.f32 %v3888, %v3376
      %v3921 = vmul.f32 %v3889, %v3377
      %v3922 = vmul.f32 %v3890, %v3378
      %v3923 = vmul.f32 %v3891, %v3379
      %v3924 = vmul.f32 %v3892, %v3380
      %v3925 = vadd.f32 %v3893, -0.0073733293
      %v3926 = vadd.f32 %v3894, -0.0073733293
      %v3927 = vadd.f32 %v3895, -0.0073733293
      %v3928 = vadd.f32 %v3896, -0.0073733293
      %v3929 = vadd.f32 %v3897, -0.0073733293
      %v3930 = vadd.f32 %v3898, -0.0073733293
      %v3931 = vadd.f32 %v3899, -0.0073733293
      %v3932 = vadd.f32 %v3900, -0.0073733293
      %v3933 = vadd.f32 %v3901, -0.0073733293
      %v3934 = vadd.f32 %v3902, -0.0073733293
      %v3935 = vadd.f32 %v3903, -0.0073733293
      %v3936 = vadd.f32 %v3904, -0.0073733293
      %v3937 = vadd.f32 %v3905, -0.0073733293
      %v3938 = vadd.f32 %v3906, -0.0073733293
      %v3939 = vadd.f32 %v3907, -0.0073733293
      %v3940 = vadd.f32 %v3908, -0.0073733293
      %v3941 = vadd.f32 %v3909, -0.0073733293
      %v3942 = vadd.f32 %v3910, -0.0073733293
      %v3943 = vadd.f32 %v3911, -0.0073733293
      %v3944 = vadd.f32 %v3912, -0.0073733293
      %v3945 = vadd.f32 %v3913, -0.0073733293
      %v3946 = vadd.f32 %v3914, -0.0073733293
      %v3947 = vadd.f32 %v3915, -0.0073733293
      %v3948 = vadd.f32 %v3916, -0.0073733293
      %v3949 = vadd.f32 %v3917, -0.0073733293
      %v3950 = vadd.f32 %v3918, -0.0073733293
      %v3951 = vadd.f32 %v3919, -0.0073733293
      %v3952 = vadd.f32 %v3920, -0.0073733293
      %v3953 = vadd.f32 %v3921, -0.0073733293
      %v3954 = vadd.f32 %v3922, -0.0073733293
      %v3955 = vadd.f32 %v3923, -0.0073733293
      %v3956 = vadd.f32 %v3924, -0.0073733293
      %v3957 = vmul.f32 %v3925, %v3349
      %v3958 = vmul.f32 %v3926, %v3350
      %v3959 = vmul.f32 %v3927, %v3351
      %v3960 = vmul.f32 %v3928, %v3352
      %v3961 = vmul.f32 %v3929, %v3353
      %v3962 = vmul.f32 %v3930, %v3354
      %v3963 = vmul.f32 %v3931, %v3355
      %v3964 = vmul.f32 %v3932, %v3356
      %v3965 = vmul.f32 %v3933, %v3357
      %v3966 = vmul.f32 %v3934, %v3358
      %v3967 = vmul.f32 %v3935, %v3359
      %v3968 = vmul.f32 %v3936, %v3360
      %v3969 = vmul.f32 %v3937, %v3361
      %v3970 = vmul.f32 %v3938, %v3362
      %v3971 = vmul.f32 %v3939, %v3363
      %v3972 = vmul.f32 %v3940, %v3364
      %v3973 = vmul.f32 %v3941, %v3365
      %v3974 = vmul.f32 %v3942, %v3366
      %v3975 = vmul.f32 %v3943, %v3367
      %v3976 = vmul.f32 %v3944, %v3368
      %v3977 = vmul.f32 %v3945, %v3369
      %v3978 = vmul.f32 %v3946, %v3370
      %v3979 = vmul.f32 %v3947, %v3371
      %v3980 = vmul.f32 %v3948, %v3372
      %v3981 = vmul.f32 %v3949, %v3373
      %v3982 = vmul.f32 %v3950, %v3374
      %v3983 = vmul.f32 %v3951, %v3375
      %v3984 = vmul.f32 %v3952, %v3376
      %v3985 = vmul.f32 %v3953, %v3377
      %v3986 = vmul.f32 %v3954, %v3378
      %v3987 = vmul.f32 %v3955, %v3379
      %v3988 = vmul.f32 %v3956, %v3380
      %v3989 = vadd.f32 %v3957, -0.014264739
      %v3990 = vadd.f32 %v3958, -0.014264739
      %v3991 = vadd.f32 %v3959, -0.014264739
      %v3992 = vadd.f32 %v3960, -0.014264739
      %v3993 = vadd.f32 %v3961, -0.014264739
      %v3994 = vadd.f32 %v3962, -0.014264739
      %v3995 = vadd.f32 %v3963, -0.014264739
      %v3996 = vadd.f32 %v3964, -0.014264739
      %v3997 = vadd.f32 %v3965, -0.014264739
      %v3998 = vadd.f32 %v3966, -0.014264739
      %v3999 = vadd.f32 %v3967, -0.014264739
      %v4000 = vadd.f32 %v3968, -0.014264739
      %v4001 = vadd.f32 %v3969, -0.014264739
      %v4002 = vadd.f32 %v3970, -0.014264739
      %v4003 = vadd.f32 %v3971, -0.014264739
      %v4004 = vadd.f32 %v3972, -0.014264739
      %v4005 = vadd.f32 %v3973, -0.014264739
      %v4006 = vadd.f32 %v3974, -0.014264739
      %v4007 = vadd.f32 %v3975, -0.014264739
      %v4008 = vadd.f32 %v3976, -0.014264739
      %v4009 = vadd.f32 %v3977, -0.014264739
      %v4010 = vadd.f32 %v3978, -0.014264739
      %v4011 = vadd.f32 %v3979, -0.014264739
      %v4012 = vadd.f32 %v3980, -0.014264739
      %v4013 = vadd.f32 %v3981, -0.014264739
      %v4014 = vadd.f32 %v3982, -0.014264739
      %v4015 = vadd.f32 %v3983, -0.014264739
      %v4016 = vadd.f32 %v3984, -0.014264739
      %v4017 = vadd.f32 %v3985, -0.014264739
      %v4018 = vadd.f32 %v3986, -0.014264739
      %v4019 = vadd.f32 %v3987, -0.014264739
      %v4020 = vadd.f32 %v3988, -0.014264739
      %v4021 = vmul.f32 %v3317, %v3733
      %v4022 = vmul.f32 %v3318, %v3734
      %v4023 = vmul.f32 %v3319, %v3735
      %v4024 = vmul.f32 %v3320, %v3736
      %v4025 = vmul.f32 %v3321, %v3737
      %v4026 = vmul.f32 %v3322, %v3738
      %v4027 = vmul.f32 %v3323, %v3739
      %v4028 = vmul.f32 %v3324, %v3740
      %v4029 = vmul.f32 %v3325, %v3741
      %v4030 = vmul.f32 %v3326, %v3742
      %v4031 = vmul.f32 %v3327, %v3743
      %v4032 = vmul.f32 %v3328, %v3744
      %v4033 = vmul.f32 %v3329, %v3745
      %v4034 = vmul.f32 %v3330, %v3746
      %v4035 = vmul.f32 %v3331, %v3747
      %v4036 = vmul.f32 %v3332, %v3748
      %v4037 = vmul.f32 %v3333, %v3749
      %v4038 = vmul.f32 %v3334, %v3750
      %v4039 = vmul.f32 %v3335, %v3751
      %v4040 = vmul.f32 %v3336, %v3752
      %v4041 = vmul.f32 %v3337, %v3753
      %v4042 = vmul.f32 %v3338, %v3754
      %v4043 = vmul.f32 %v3339, %v3755
      %v4044 = vmul.f32 %v3340, %v3756
      %v4045 = vmul.f32 %v3341, %v3757
      %v4046 = vmul.f32 %v3342, %v3758
      %v4047 = vmul.f32 %v3343, %v3759
      %v4048 = vmul.f32 %v3344, %v3760
      %v4049 = vmul.f32 %v3345, %v3761
      %v4050 = vmul.f32 %v3346, %v3762
      %v4051 = vmul.f32 %v3347, %v3763
      %v4052 = vmul.f32 %v3348, %v3764
      %v4053 = vrcp.pop %v3989
      %v4054 = vrcp.pop %v3990
      %v4055 = vrcp.pop %v3991
      %v4056 = vrcp.pop %v3992
      %v4057 = vrcp.pop %v3993
      %v4058 = vrcp.pop %v3994
      %v4059 = vrcp.pop %v3995
      %v4060 = vrcp.pop %v3996
      %v4061 = vrcp.pop %v3997
      %v4062 = vrcp.pop %v3998
      %v4063 = vrcp.pop %v3999
      %v4064 = vrcp.pop %v4000
      %v4065 = vrcp.pop %v4001
      %v4066 = vrcp.pop %v4002
      %v4067 = vrcp.pop %v4003
      %v4068 = vrcp.pop %v4004
      %v4069 = vrcp.pop %v4005
      %v4070 = vrcp.pop %v4006
      %v4071 = vrcp.pop %v4007
      %v4072 = vrcp.pop %v4008
      %v4073 = vrcp.pop %v4009
      %v4074 = vrcp.pop %v4010
      %v4075 = vrcp.pop %v4011
      %v4076 = vrcp.pop %v4012
      %v4077 = vrcp.pop %v4013
      %v4078 = vrcp.pop %v4014
      %v4079 = vrcp.pop %v4015
      %v4080 = vrcp.pop %v4016
      %v4081 = vrcp.pop %v4017
      %v4082 = vrcp.pop %v4018
      %v4083 = vrcp.pop %v4019
      %v4084 = vrcp.pop %v4020
      %v4085 = vmul.f32 %v3989, %v4053
      %v4086 = vmul.f32 %v3990, %v4054
      %v4087 = vmul.f32 %v3991, %v4055
      %v4088 = vmul.f32 %v3992, %v4056
      %v4089 = vmul.f32 %v3993, %v4057
      %v4090 = vmul.f32 %v3994, %v4058
      %v4091 = vmul.f32 %v3995, %v4059
      %v4092 = vmul.f32 %v3996, %v4060
      %v4093 = vmul.f32 %v3997, %v4061
      %v4094 = vmul.f32 %v3998, %v4062
      %v4095 = vmul.f32 %v3999, %v4063
      %v4096 = vmul.f32 %v4000, %v4064
      %v4097 = vmul.f32 %v4001, %v4065
      %v4098 = vmul.f32 %v4002, %v4066
      %v4099 = vmul.f32 %v4003, %v4067
      %v4100 = vmul.f32 %v4004, %v4068
      %v4101 = vmul.f32 %v4005, %v4069
      %v4102 = vmul.f32 %v4006, %v4070
      %v4103 = vmul.f32 %v4007, %v4071
      %v4104 = vmul.f32 %v4008, %v4072
      %v4105 = vmul.f32 %v4009, %v4073
      %v4106 = vmul.f32 %v4010, %v4074
      %v4107 = vmul.f32 %v4011, %v4075
      %v4108 = vmul.f32 %v4012, %v4076
      %v4109 = vmul.f32 %v4013, %v4077
      %v4110 = vmul.f32 %v4014, %v4078
      %v4111 = vmul.f32 %v4015, %v4079
      %v4112 = vmul.f32 %v4016, %v4080
      %v4113 = vmul.f32 %v4017, %v4081
      %v4114 = vmul.f32 %v4018, %v4082
      %v4115 = vmul.f32 %v4019, %v4083
      %v4116 = vmul.f32 %v4020, %v4084
      %v4117 = vsub.f32 2.0, %v4085
      %v4118 = vsub.f32 2.0, %v4086
      %v4119 = vsub.f32 2.0, %v4087
      %v4120 = vsub.f32 2.0, %v4088
      %v4121 = vsub.f32 2.0, %v4089
      %v4122 = vsub.f32 2.0, %v4090
      %v4123 = vsub.f32 2.0, %v4091
      %v4124 = vsub.f32 2.0, %v4092
      %v4125 = vsub.f32 2.0, %v4093
      %v4126 = vsub.f32 2.0, %v4094
      %v4127 = vsub.f32 2.0, %v4095
      %v4128 = vsub.f32 2.0, %v4096
      %v4129 = vsub.f32 2.0, %v4097
      %v4130 = vsub.f32 2.0, %v4098
      %v4131 = vsub.f32 2.0, %v4099
      %v4132 = vsub.f32 2.0, %v4100
      %v4133 = vsub.f32 2.0, %v4101
      %v4134 = vsub.f32 2.0, %v4102
      %v4135 = vsub.f32 2.0, %v4103
      %v4136 = vsub.f32 2.0, %v4104
      %v4137 = vsub.f32 2.0, %v4105
      %v4138 = vsub.f32 2.0, %v4106
      %v4139 = vsub.f32 2.0, %v4107
      %v4140 = vsub.f32 2.0, %v4108
      %v4141 = vsub.f32 2.0, %v4109
      %v4142 = vsub.f32 2.0, %v4110
      %v4143 = vsub.f32 2.0, %v4111
      %v4144 = vsub.f32 2.0, %v4112
      %v4145 = vsub.f32 2.0, %v4113
      %v4146 = vsub.f32 2.0, %v4114
      %v4147 = vsub.f32 2.0, %v4115
      %v4148 = vsub.f32 2.0, %v4116
      %v4149 = vmul.f32 %v4053, %v4117
      %v4150 = vmul.f32 %v4054, %v4118
      %v4151 = vmul.f32 %v4055, %v4119
      %v4152 = vmul.f32 %v4056, %v4120
      %v4153 = vmul.f32 %v4057, %v4121
      %v4154 = vmul.f32 %v4058, %v4122
      %v4155 = vmul.f32 %v4059, %v4123
      %v4156 = vmul.f32 %v4060, %v4124
      %v4157 = vmul.f32 %v4061, %v4125
      %v4158 = vmul.f32 %v4062, %v4126
      %v4159 = vmul.f32 %v4063, %v4127
      %v4160 = vmul.f32 %v4064, %v4128
      %v4161 = vmul.f32 %v4065, %v4129
      %v4162 = vmul.f32 %v4066, %v4130
      %v4163 = vmul.f32 %v4067, %v4131
      %v4164 = vmul.f32 %v4068, %v4132
      %v4165 = vmul.f32 %v4069, %v4133
      %v4166 = vmul.f32 %v4070, %v4134
      %v4167 = vmul.f32 %v4071, %v4135
      %v4168 = vmul.f32 %v4072, %v4136
      %v4169 = vmul.f32 %v4073, %v4137
      %v4170 = vmul.f32 %v4074, %v4138
      %v4171 = vmul.f32 %v4075, %v4139
      %v4172 = vmul.f32 %v4076, %v4140
      %v4173 = vmul.f32 %v4077, %v4141
      %v4174 = vmul.f32 %v4078, %v4142
      %v4175 = vmul.f32 %v4079, %v4143
      %v4176 = vmul.f32 %v4080, %v4144
      %v4177 = vmul.f32 %v4081, %v4145
      %v4178 = vmul.f32 %v4082, %v4146
      %v4179 = vmul.f32 %v4083, %v4147
      %v4180 = vmul.f32 %v4084, %v4148
      %v4181 = vmul.f32 %v4021, %v4149
      %v4182 = vmul.f32 %v4022, %v4150
      %v4183 = vmul.f32 %v4023, %v4151
      %v4184 = vmul.f32 %v4024, %v4152
      %v4185 = vmul.f32 %v4025, %v4153
      %v4186 = vmul.f32 %v4026, %v4154
      %v4187 = vmul.f32 %v4027, %v4155
      %v4188 = vmul.f32 %v4028, %v4156
      %v4189 = vmul.f32 %v4029, %v4157
      %v4190 = vmul.f32 %v4030, %v4158
      %v4191 = vmul.f32 %v4031, %v4159
      %v4192 = vmul.f32 %v4032, %v4160
      %v4193 = vmul.f32 %v4033, %v4161
      %v4194 = vmul.f32 %v4034, %v4162
      %v4195 = vmul.f32 %v4035, %v4163
      %v4196 = vmul.f32 %v4036, %v4164
      %v4197 = vmul.f32 %v4037, %v4165
      %v4198 = vmul.f32 %v4038, %v4166
      %v4199 = vmul.f32 %v4039, %v4167
      %v4200 = vmul.f32 %v4040, %v4168
      %v4201 = vmul.f32 %v4041, %v4169
      %v4202 = vmul.f32 %v4042, %v4170
      %v4203 = vmul.f32 %v4043, %v4171
      %v4204 = vmul.f32 %v4044, %v4172
      %v4205 = vmul.f32 %v4045, %v4173
      %v4206 = vmul.f32 %v4046, %v4174
      %v4207 = vmul.f32 %v4047, %v4175
      %v4208 = vmul.f32 %v4048, %v4176
      %v4209 = vmul.f32 %v4049, %v4177
      %v4210 = vmul.f32 %v4050, %v4178
      %v4211 = vmul.f32 %v4051, %v4179
      %v4212 = vmul.f32 %v4052, %v4180
      %v4213 = vadd.f32 %v4181, 1.0
      %v4214 = vadd.f32 %v4182, 1.0
      %v4215 = vadd.f32 %v4183, 1.0
      %v4216 = vadd.f32 %v4184, 1.0
      %v4217 = vadd.f32 %v4185, 1.0
      %v4218 = vadd.f32 %v4186, 1.0
      %v4219 = vadd.f32 %v4187, 1.0
      %v4220 = vadd.f32 %v4188, 1.0
      %v4221 = vadd.f32 %v4189, 1.0
      %v4222 = vadd.f32 %v4190, 1.0
      %v4223 = vadd.f32 %v4191, 1.0
      %v4224 = vadd.f32 %v4192, 1.0
      %v4225 = vadd.f32 %v4193, 1.0
      %v4226 = vadd.f32 %v4194, 1.0
      %v4227 = vadd.f32 %v4195, 1.0
      %v4228 = vadd.f32 %v4196, 1.0
      %v4229 = vadd.f32 %v4197, 1.0
      %v4230 = vadd.f32 %v4198, 1.0
      %v4231 = vadd.f32 %v4199, 1.0
      %v4232 = vadd.f32 %v4200, 1.0
      %v4233 = vadd.f32 %v4201, 1.0
      %v4234 = vadd.f32 %v4202, 1.0
      %v4235 = vadd.f32 %v4203, 1.0
      %v4236 = vadd.f32 %v4204, 1.0
      %v4237 = vadd.f32 %v4205, 1.0
      %v4238 = vadd.f32 %v4206, 1.0
      %v4239 = vadd.f32 %v4207, 1.0
      %v4240 = vadd.f32 %v4208, 1.0
      %v4241 = vadd.f32 %v4209, 1.0
      %v4242 = vadd.f32 %v4210, 1.0
      %v4243 = vadd.f32 %v4211, 1.0
      %v4244 = vadd.f32 %v4212, 1.0
      %v4245 = vmul.f32 %v3221, %v4213
      %v4246 = vmul.f32 %v3222, %v4214
      %v4247 = vmul.f32 %v3223, %v4215
      %v4248 = vmul.f32 %v3224, %v4216
      %v4249 = vmul.f32 %v3225, %v4217
      %v4250 = vmul.f32 %v3226, %v4218
      %v4251 = vmul.f32 %v3227, %v4219
      %v4252 = vmul.f32 %v3228, %v4220
      %v4253 = vmul.f32 %v3229, %v4221
      %v4254 = vmul.f32 %v3230, %v4222
      %v4255 = vmul.f32 %v3231, %v4223
      %v4256 = vmul.f32 %v3232, %v4224
      %v4257 = vmul.f32 %v3233, %v4225
      %v4258 = vmul.f32 %v3234, %v4226
      %v4259 = vmul.f32 %v3235, %v4227
      %v4260 = vmul.f32 %v3236, %v4228
      %v4261 = vmul.f32 %v3237, %v4229
      %v4262 = vmul.f32 %v3238, %v4230
      %v4263 = vmul.f32 %v3239, %v4231
      %v4264 = vmul.f32 %v3240, %v4232
      %v4265 = vmul.f32 %v3241, %v4233
      %v4266 = vmul.f32 %v3242, %v4234
      %v4267 = vmul.f32 %v3243, %v4235
      %v4268 = vmul.f32 %v3244, %v4236
      %v4269 = vmul.f32 %v3245, %v4237
      %v4270 = vmul.f32 %v3246, %v4238
      %v4271 = vmul.f32 %v3247, %v4239
      %v4272 = vmul.f32 %v3248, %v4240
      %v4273 = vmul.f32 %v3249, %v4241
      %v4274 = vmul.f32 %v3250, %v4242
      %v4275 = vmul.f32 %v3251, %v4243
      %v4276 = vmul.f32 %v3252, %v4244
      %s4277 = scalar_lea.vmem %s2, 256
      %v4278 = vld [vmem:[%s4277] sm:$0xff]
      %v4279 = vld [vmem:[%s4277 + $0x8] sm:$0xff]
      %v4280 = vld [vmem:[%s4277 + $0x10] sm:$0xff]
      %v4281 = vld [vmem:[%s4277 + $0x18] sm:$0xff]
      %v4282 = vld [vmem:[%s4277 + $0x20] sm:$0xff]
      %v4283 = vld [vmem:[%s4277 + $0x28] sm:$0xff]
      %v4284 = vld [vmem:[%s4277 + $0x30] sm:$0xff]
      %v4285 = vld [vmem:[%s4277 + $0x38] sm:$0xff]
      %v4286 = vld [vmem:[%s4277 + $0x40] sm:$0xff]
      %v4287 = vld [vmem:[%s4277 + $0x48] sm:$0xff]
      %v4288 = vld [vmem:[%s4277 + $0x50] sm:$0xff]
      %v4289 = vld [vmem:[%s4277 + $0x58] sm:$0xff]
      %v4290 = vld [vmem:[%s4277 + $0x60] sm:$0xff]
      %v4291 = vld [vmem:[%s4277 + $0x68] sm:$0xff]
      %v4292 = vld [vmem:[%s4277 + $0x70] sm:$0xff]
      %v4293 = vld [vmem:[%s4277 + $0x78] sm:$0xff]
      %v4294 = vld [vmem:[%s3 + $0x3] sm:$0x1]
      %v4295 = vlaneseq
      %v4296 = vshrl.u32 %v4295, 7
      %v4297 = vsub.s32 0, %v4296
      %v4298 = vrot.slane %v4294, %v4297
      %4299 = vmatprep.subr.mxu0 0.0
      %4300 = vmatpush1.msra.mxu0 %v4278
      %4301 = vmatprep.subr.mxu0 0.0
      %4302 = vmatpush1.msra.mxu0 %v4279
      %4303 = vmatprep.subr.mxu0 0.0
      %4304 = vmatpush1.msra.mxu0 %v4280
      %4305 = vmatprep.subr.mxu0 0.0
      %4306 = vmatpush1.msra.mxu0 %v4281
      %4307 = vmatprep.subr.mxu0 0.0
      %4308 = vmatpush1.msra.mxu0 %v4282
      %4309 = vmatprep.subr.mxu0 0.0
      %4310 = vmatpush1.msra.mxu0 %v4283
      %4311 = vmatprep.subr.mxu0 0.0
      %4312 = vmatpush1.msra.mxu0 %v4284
      %4313 = vmatprep.subr.mxu0 0.0
      %4314 = vmatpush1.msra.mxu0 %v4285
      %4315 = vmatprep.subr.mxu0 0.0
      %4316 = vmatpush1.msra.mxu0 %v4286
      %4317 = vmatprep.subr.mxu0 0.0
      %4318 = vmatpush1.msra.mxu0 %v4287
      %4319 = vmatprep.subr.mxu0 0.0
      %4320 = vmatpush1.msra.mxu0 %v4288
      %4321 = vmatprep.subr.mxu0 0.0
      %4322 = vmatpush1.msra.mxu0 %v4289
      %4323 = vmatprep.subr.mxu0 0.0
      %4324 = vmatpush1.msra.mxu0 %v4290
      %4325 = vmatprep.subr.mxu0 0.0
      %4326 = vmatpush1.msra.mxu0 %v4291
      %4327 = vmatprep.subr.mxu0 0.0
      %4328 = vmatpush1.msra.mxu0 %v4292
      %4329 = vmatprep.subr.mxu0 0.0
      %4330 = vmatpush1.msra.mxu0 %v4293
      %4331 = vmatprep.subr.mxu0 0.0
      %4332 = vmatpush1.msra.mxu0 0.0
      %4333 = vmatprep.subr.mxu0 0.0
      %4334 = vmatpush1.msra.mxu0 0.0
      %4335 = vmatprep.subr.mxu0 0.0
      %4336 = vmatpush1.msra.mxu0 0.0
      %4337 = vmatprep.subr.mxu0 0.0
      %4338 = vmatpush1.msra.mxu0 0.0
      %4339 = vmatprep.subr.mxu0 0.0
      %4340 = vmatpush1.msra.mxu0 0.0
      %4341 = vmatprep.subr.mxu0 0.0
      %4342 = vmatpush1.msra.mxu0 0.0
      %4343 = vmatprep.subr.mxu0 0.0
      %4344 = vmatpush1.msra.mxu0 0.0
      %4345 = vmatprep.subr.mxu0 0.0
      %4346 = vmatpush1.msra.mxu0 0.0
      %4347 = vmatprep.subr.mxu0 0.0
      %4348 = vmatpush1.msra.mxu0 0.0
      %4349 = vmatprep.subr.mxu0 0.0
      %4350 = vmatpush1.msra.mxu0 0.0
      %4351 = vmatprep.subr.mxu0 0.0
      %4352 = vmatpush1.msra.mxu0 0.0
      %4353 = vmatprep.subr.mxu0 0.0
      %4354 = vmatpush1.msra.mxu0 0.0
      %4355 = vmatprep.subr.mxu0 0.0
      %4356 = vmatpush1.msra.mxu0 0.0
      %4357 = vmatprep.subr.mxu0 0.0
      %4358 = vmatpush1.msra.mxu0 0.0
      %4359 = vmatprep.subr.mxu0 0.0
      %4360 = vmatpush1.msra.mxu0 0.0
      %4361 = vmatprep.subr.mxu0 0.0
      %4362 = vmatpush1.msra.mxu0 0.0
      %4363 = vmatprep.mubr.f32.mxu0 0.0
      %4364 = vmatmul.mubr.f32.gmra.mrb[0].mxu0 %v4245
      %v4365 = vpop.f32.mrb[0].mxu0
      %v4366 = vadd.f32 %v4298, %v4365
      %v4367 = vpop.f32.mrb[0].mxu0
      %4368 = vmatprep.mubr.f32.mxu0 0.0
      %4369 = vmatmul.mubr.f32.gmra.mrb[0].mxu0 %v4246
      %v4370 = vpop.f32.mrb[0].mxu0
      %v4371 = vadd.f32 %v4298, %v4370
      %v4372 = vpop.f32.mrb[0].mxu0
      %4373 = vmatprep.mubr.f32.mxu0 0.0
      %4374 = vmatmul.mubr.f32.gmra.mrb[0].mxu0 %v4247
      %v4375 = vpop.f32.mrb[0].mxu0
      %v4376 = vadd.f32 %v4298, %v4375
      %v4377 = vpop.f32.mrb[0].mxu0
      %4378 = vmatprep.mubr.f32.mxu0 0.0
      %4379 = vmatmul.mubr.f32.gmra.mrb[0].mxu0 %v4248
      %v4380 = vpop.f32.mrb[0].mxu0
      %v4381 = vadd.f32 %v4298, %v4380
      %v4382 = vpop.f32.mrb[0].mxu0
      %4383 = vmatprep.mubr.f32.mxu0 0.0
      %4384 = vmatmul.mubr.f32.gmra.mrb[0].mxu0 %v4249
      %v4385 = vpop.f32.mrb[0].mxu0
      %v4386 = vadd.f32 %v4298, %v4385
      %v4387 = vpop.f32.mrb[0].mxu0
      %4388 = vmatprep.mubr.f32.mxu0 0.0
      %4389 = vmatmul.mubr.f32.gmra.mrb[0].mxu0 %v4250
      %v4390 = vpop.f32.mrb[0].mxu0
      %v4391 = vadd.f32 %v4298, %v4390
      %v4392 = vpop.f32.mrb[0].mxu0
      %4393 = vmatprep.mubr.f32.mxu0 0.0
      %4394 = vmatmul.mubr.f32.gmra.mrb[0].mxu0 %v4251
      %v4395 = vpop.f32.mrb[0].mxu0
      %v4396 = vadd.f32 %v4298, %v4395
      %v4397 = vpop.f32.mrb[0].mxu0
      %4398 = vmatprep.mubr.f32.mxu0 0.0
      %4399 = vmatmul.mubr.f32.gmra.mrb[0].mxu0 %v4252
      %v4400 = vpop.f32.mrb[0].mxu0
      %v4401 = vadd.f32 %v4298, %v4400
      %v4402 = vpop.f32.mrb[0].mxu0
      %4403 = vmatprep.mubr.f32.mxu0 0.0
      %4404 = vmatmul.mubr.f32.gmra.mrb[0].mxu0 %v4253
      %v4405 = vpop.f32.mrb[0].mxu0
      %v4406 = vadd.f32 %v4298, %v4405
      %v4407 = vpop.f32.mrb[0].mxu0
      %4408 = vmatprep.mubr.f32.mxu0 0.0
      %4409 = vmatmul.mubr.f32.gmra.mrb[0].mxu0 %v4254
      %v4410 = vpop.f32.mrb[0].mxu0
      %v4411 = vadd.f32 %v4298, %v4410
      %v4412 = vpop.f32.mrb[0].mxu0
      %4413 = vmatprep.mubr.f32.mxu0 0.0
      %4414 = vmatmul.mubr.f32.gmra.mrb[0].mxu0 %v4255
      %v4415 = vpop.f32.mrb[0].mxu0
      %v4416 = vadd.f32 %v4298, %v4415
      %v4417 = vpop.f32.mrb[0].mxu0
      %4418 = vmatprep.mubr.f32.mxu0 0.0
      %4419 = vmatmul.mubr.f32.gmra.mrb[0].mxu0 %v4256
      %v4420 = vpop.f32.mrb[0].mxu0
      %v4421 = vadd.f32 %v4298, %v4420
      %v4422 = vpop.f32.mrb[0].mxu0
      %4423 = vmatprep.mubr.f32.mxu0 0.0
      %4424 = vmatmul.mubr.f32.gmra.mrb[0].mxu0 %v4257
      %v4425 = vpop.f32.mrb[0].mxu0
      %v4426 = vadd.f32 %v4298, %v4425
      %v4427 = vpop.f32.mrb[0].mxu0
      %4428 = vmatprep.mubr.f32.mxu0 0.0
      %4429 = vmatmul.mubr.f32.gmra.mrb[0].mxu0 %v4258
      %v4430 = vpop.f32.mrb[0].mxu0
      %v4431 = vadd.f32 %v4298, %v4430
      %v4432 = vpop.f32.mrb[0].mxu0
      %4433 = vmatprep.mubr.f32.mxu0 0.0
      %4434 = vmatmul.mubr.f32.gmra.mrb[0].mxu0 %v4259
      %v4435 = vpop.f32.mrb[0].mxu0
      %v4436 = vadd.f32 %v4298, %v4435
      %v4437 = vpop.f32.mrb[0].mxu0
      %4438 = vmatprep.mubr.f32.mxu0 0.0
      %4439 = vmatmul.mubr.f32.gmra.mrb[0].mxu0 %v4260
      %v4440 = vpop.f32.mrb[0].mxu0
      %v4441 = vadd.f32 %v4298, %v4440
      %v4442 = vpop.f32.mrb[0].mxu0
      %4443 = vmatprep.mubr.f32.mxu0 0.0
      %4444 = vmatmul.mubr.f32.gmra.mrb[0].mxu0 %v4261
      %v4445 = vpop.f32.mrb[0].mxu0
      %v4446 = vadd.f32 %v4298, %v4445
      %v4447 = vpop.f32.mrb[0].mxu0
      %4448 = vmatprep.mubr.f32.mxu0 0.0
      %4449 = vmatmul.mubr.f32.gmra.mrb[0].mxu0 %v4262
      %v4450 = vpop.f32.mrb[0].mxu0
      %v4451 = vadd.f32 %v4298, %v4450
      %v4452 = vpop.f32.mrb[0].mxu0
      %4453 = vmatprep.mubr.f32.mxu0 0.0
      %4454 = vmatmul.mubr.f32.gmra.mrb[0].mxu0 %v4263
      %v4455 = vpop.f32.mrb[0].mxu0
      %v4456 = vadd.f32 %v4298, %v4455
      %v4457 = vpop.f32.mrb[0].mxu0
      %4458 = vmatprep.mubr.f32.mxu0 0.0
      %4459 = vmatmul.mubr.f32.gmra.mrb[0].mxu0 %v4264
      %v4460 = vpop.f32.mrb[0].mxu0
      %v4461 = vadd.f32 %v4298, %v4460
      %v4462 = vpop.f32.mrb[0].mxu0
      %4463 = vmatprep.mubr.f32.mxu0 0.0
      %4464 = vmatmul.mubr.f32.gmra.mrb[0].mxu0 %v4265
      %v4465 = vpop.f32.mrb[0].mxu0
      %v4466 = vadd.f32 %v4298, %v4465
      %v4467 = vpop.f32.mrb[0].mxu0
      %4468 = vmatprep.mubr.f32.mxu0 0.0
      %4469 = vmatmul.mubr.f32.gmra.mrb[0].mxu0 %v4266
      %v4470 = vpop.f32.mrb[0].mxu0
      %v4471 = vadd.f32 %v4298, %v4470
      %v4472 = vpop.f32.mrb[0].mxu0
      %4473 = vmatprep.mubr.f32.mxu0 0.0
      %4474 = vmatmul.mubr.f32.gmra.mrb[0].mxu0 %v4267
      %v4475 = vpop.f32.mrb[0].mxu0
      %v4476 = vadd.f32 %v4298, %v4475
      %v4477 = vpop.f32.mrb[0].mxu0
      %4478 = vmatprep.mubr.f32.mxu0 0.0
      %4479 = vmatmul.mubr.f32.gmra.mrb[0].mxu0 %v4268
      %v4480 = vpop.f32.mrb[0].mxu0
      %v4481 = vadd.f32 %v4298, %v4480
      %v4482 = vpop.f32.mrb[0].mxu0
      %4483 = vmatprep.mubr.f32.mxu0 0.0
      %4484 = vmatmul.mubr.f32.gmra.mrb[0].mxu0 %v4269
      %v4485 = vpop.f32.mrb[0].mxu0
      %v4486 = vadd.f32 %v4298, %v4485
      %v4487 = vpop.f32.mrb[0].mxu0
      %4488 = vmatprep.mubr.f32.mxu0 0.0
      %4489 = vmatmul.mubr.f32.gmra.mrb[0].mxu0 %v4270
      %v4490 = vpop.f32.mrb[0].mxu0
      %v4491 = vadd.f32 %v4298, %v4490
      %v4492 = vpop.f32.mrb[0].mxu0
      %4493 = vmatprep.mubr.f32.mxu0 0.0
      %4494 = vmatmul.mubr.f32.gmra.mrb[0].mxu0 %v4271
      %v4495 = vpop.f32.mrb[0].mxu0
      %v4496 = vadd.f32 %v4298, %v4495
      %v4497 = vpop.f32.mrb[0].mxu0
      %4498 = vmatprep.mubr.f32.mxu0 0.0
      %4499 = vmatmul.mubr.f32.gmra.mrb[0].mxu0 %v4272
      %v4500 = vpop.f32.mrb[0].mxu0
      %v4501 = vadd.f32 %v4298, %v4500
      %v4502 = vpop.f32.mrb[0].mxu0
      %4503 = vmatprep.mubr.f32.mxu0 0.0
      %4504 = vmatmul.mubr.f32.gmra.mrb[0].mxu0 %v4273
      %v4505 = vpop.f32.mrb[0].mxu0
      %v4506 = vadd.f32 %v4298, %v4505
      %v4507 = vpop.f32.mrb[0].mxu0
      %4508 = vmatprep.mubr.f32.mxu0 0.0
      %4509 = vmatmul.mubr.f32.gmra.mrb[0].mxu0 %v4274
      %v4510 = vpop.f32.mrb[0].mxu0
      %v4511 = vadd.f32 %v4298, %v4510
      %v4512 = vpop.f32.mrb[0].mxu0
      %4513 = vmatprep.mubr.f32.mxu0 0.0
      %4514 = vmatmul.mubr.f32.gmra.mrb[0].mxu0 %v4275
      %v4515 = vpop.f32.mrb[0].mxu0
      %v4516 = vadd.f32 %v4298, %v4515
      %v4517 = vpop.f32.mrb[0].mxu0
      %4518 = vmatprep.mubr.f32.mxu0 0.0
      %4519 = vmatmul.mubr.f32.gmra.mrb[0].mxu0 %v4276
      %v4520 = vpop.f32.mrb[0].mxu0
      %v4521 = vadd.f32 %v4298, %v4520
      %v4522 = vpop.f32.mrb[0].mxu0
      %4523 = vdwg.mxu0
      %v4524 = vmul.f32 %v4366, 0.5
      %v4525 = vmul.f32 %v4371, 0.5
      %v4526 = vmul.f32 %v4376, 0.5
      %v4527 = vmul.f32 %v4381, 0.5
      %v4528 = vmul.f32 %v4386, 0.5
      %v4529 = vmul.f32 %v4391, 0.5
      %v4530 = vmul.f32 %v4396, 0.5
      %v4531 = vmul.f32 %v4401, 0.5
      %v4532 = vmul.f32 %v4406, 0.5
      %v4533 = vmul.f32 %v4411, 0.5
      %v4534 = vmul.f32 %v4416, 0.5
      %v4535 = vmul.f32 %v4421, 0.5
      %v4536 = vmul.f32 %v4426, 0.5
      %v4537 = vmul.f32 %v4431, 0.5
      %v4538 = vmul.f32 %v4436, 0.5
      %v4539 = vmul.f32 %v4441, 0.5
      %v4540 = vmul.f32 %v4446, 0.5
      %v4541 = vmul.f32 %v4451, 0.5
      %v4542 = vmul.f32 %v4456, 0.5
      %v4543 = vmul.f32 %v4461, 0.5
      %v4544 = vmul.f32 %v4466, 0.5
      %v4545 = vmul.f32 %v4471, 0.5
      %v4546 = vmul.f32 %v4476, 0.5
      %v4547 = vmul.f32 %v4481, 0.5
      %v4548 = vmul.f32 %v4486, 0.5
      %v4549 = vmul.f32 %v4491, 0.5
      %v4550 = vmul.f32 %v4496, 0.5
      %v4551 = vmul.f32 %v4501, 0.5
      %v4552 = vmul.f32 %v4506, 0.5
      %v4553 = vmul.f32 %v4511, 0.5
      %v4554 = vmul.f32 %v4516, 0.5
      %v4555 = vmul.f32 %v4521, 0.5
      %v4556 = vmul.f32 %v4366, 0.70710677
      %v4557 = vmul.f32 %v4371, 0.70710677
      %v4558 = vmul.f32 %v4376, 0.70710677
      %v4559 = vmul.f32 %v4381, 0.70710677
      %v4560 = vmul.f32 %v4386, 0.70710677
      %v4561 = vmul.f32 %v4391, 0.70710677
      %v4562 = vmul.f32 %v4396, 0.70710677
      %v4563 = vmul.f32 %v4401, 0.70710677
      %v4564 = vmul.f32 %v4406, 0.70710677
      %v4565 = vmul.f32 %v4411, 0.70710677
      %v4566 = vmul.f32 %v4416, 0.70710677
      %v4567 = vmul.f32 %v4421, 0.70710677
      %v4568 = vmul.f32 %v4426, 0.70710677
      %v4569 = vmul.f32 %v4431, 0.70710677
      %v4570 = vmul.f32 %v4436, 0.70710677
      %v4571 = vmul.f32 %v4441, 0.70710677
      %v4572 = vmul.f32 %v4446, 0.70710677
      %v4573 = vmul.f32 %v4451, 0.70710677
      %v4574 = vmul.f32 %v4456, 0.70710677
      %v4575 = vmul.f32 %v4461, 0.70710677
      %v4576 = vmul.f32 %v4466, 0.70710677
      %v4577 = vmul.f32 %v4471, 0.70710677
      %v4578 = vmul.f32 %v4476, 0.70710677
      %v4579 = vmul.f32 %v4481, 0.70710677
      %v4580 = vmul.f32 %v4486, 0.70710677
      %v4581 = vmul.f32 %v4491, 0.70710677
      %v4582 = vmul.f32 %v4496, 0.70710677
      %v4583 = vmul.f32 %v4501, 0.70710677
      %v4584 = vmul.f32 %v4506, 0.70710677
      %v4585 = vmul.f32 %v4511, 0.70710677
      %v4586 = vmul.f32 %v4516, 0.70710677
      %v4587 = vmul.f32 %v4521, 0.70710677
      %v4588 = vmax.f32 %v4556, -3.832507
      %v4589 = vmax.f32 %v4557, -3.832507
      %v4590 = vmax.f32 %v4558, -3.832507
      %v4591 = vmax.f32 %v4559, -3.832507
      %v4592 = vmax.f32 %v4560, -3.832507
      %v4593 = vmax.f32 %v4561, -3.832507
      %v4594 = vmax.f32 %v4562, -3.832507
      %v4595 = vmax.f32 %v4563, -3.832507
      %v4596 = vmax.f32 %v4564, -3.832507
      %v4597 = vmax.f32 %v4565, -3.832507
      %v4598 = vmax.f32 %v4566, -3.832507
      %v4599 = vmax.f32 %v4567, -3.832507
      %v4600 = vmax.f32 %v4568, -3.832507
      %v4601 = vmax.f32 %v4569, -3.832507
      %v4602 = vmax.f32 %v4570, -3.832507
      %v4603 = vmax.f32 %v4571, -3.832507
      %v4604 = vmax.f32 %v4572, -3.832507
      %v4605 = vmax.f32 %v4573, -3.832507
      %v4606 = vmax.f32 %v4574, -3.832507
      %v4607 = vmax.f32 %v4575, -3.832507
      %v4608 = vmax.f32 %v4576, -3.832507
      %v4609 = vmax.f32 %v4577, -3.832507
      %v4610 = vmax.f32 %v4578, -3.832507
      %v4611 = vmax.f32 %v4579, -3.832507
      %v4612 = vmax.f32 %v4580, -3.832507
      %v4613 = vmax.f32 %v4581, -3.832507
      %v4614 = vmax.f32 %v4582, -3.832507
      %v4615 = vmax.f32 %v4583, -3.832507
      %v4616 = vmax.f32 %v4584, -3.832507
      %v4617 = vmax.f32 %v4585, -3.832507
      %v4618 = vmax.f32 %v4586, -3.832507
      %v4619 = vmax.f32 %v4587, -3.832507
      %v4620 = vmin.f32 %v4588, 3.832507
      %v4621 = vmin.f32 %v4589, 3.832507
      %v4622 = vmin.f32 %v4590, 3.832507
      %v4623 = vmin.f32 %v4591, 3.832507
      %v4624 = vmin.f32 %v4592, 3.832507
      %v4625 = vmin.f32 %v4593, 3.832507
      %v4626 = vmin.f32 %v4594, 3.832507
      %v4627 = vmin.f32 %v4595, 3.832507
      %v4628 = vmin.f32 %v4596, 3.832507
      %v4629 = vmin.f32 %v4597, 3.832507
      %v4630 = vmin.f32 %v4598, 3.832507
      %v4631 = vmin.f32 %v4599, 3.832507
      %v4632 = vmin.f32 %v4600, 3.832507
      %v4633 = vmin.f32 %v4601, 3.832507
      %v4634 = vmin.f32 %v4602, 3.832507
      %v4635 = vmin.f32 %v4603, 3.832507
      %v4636 = vmin.f32 %v4604, 3.832507
      %v4637 = vmin.f32 %v4605, 3.832507
      %v4638 = vmin.f32 %v4606, 3.832507
      %v4639 = vmin.f32 %v4607, 3.832507
      %v4640 = vmin.f32 %v4608, 3.832507
      %v4641 = vmin.f32 %v4609, 3.832507
      %v4642 = vmin.f32 %v4610, 3.832507
      %v4643 = vmin.f32 %v4611, 3.832507
      %v4644 = vmin.f32 %v4612, 3.832507
      %v4645 = vmin.f32 %v4613, 3.832507
      %v4646 = vmin.f32 %v4614, 3.832507
      %v4647 = vmin.f32 %v4615, 3.832507
      %v4648 = vmin.f32 %v4616, 3.832507
      %v4649 = vmin.f32 %v4617, 3.832507
      %v4650 = vmin.f32 %v4618, 3.832507
      %v4651 = vmin.f32 %v4619, 3.832507
      %v4652 = vmul.f32 %v4620, %v4620
      %v4653 = vmul.f32 %v4621, %v4621
      %v4654 = vmul.f32 %v4622, %v4622
      %v4655 = vmul.f32 %v4623, %v4623
      %v4656 = vmul.f32 %v4624, %v4624
      %v4657 = vmul.f32 %v4625, %v4625
      %v4658 = vmul.f32 %v4626, %v4626
      %v4659 = vmul.f32 %v4627, %v4627
      %v4660 = vmul.f32 %v4628, %v4628
      %v4661 = vmul.f32 %v4629, %v4629
      %v4662 = vmul.f32 %v4630, %v4630
      %v4663 = vmul.f32 %v4631, %v4631
      %v4664 = vmul.f32 %v4632, %v4632
      %v4665 = vmul.f32 %v4633, %v4633
      %v4666 = vmul.f32 %v4634, %v4634
      %v4667 = vmul.f32 %v4635, %v4635
      %v4668 = vmul.f32 %v4636, %v4636
      %v4669 = vmul.f32 %v4637, %v4637
      %v4670 = vmul.f32 %v4638, %v4638
      %v4671 = vmul.f32 %v4639, %v4639
      %v4672 = vmul.f32 %v4640, %v4640
      %v4673 = vmul.f32 %v4641, %v4641
      %v4674 = vmul.f32 %v4642, %v4642
      %v4675 = vmul.f32 %v4643, %v4643
      %v4676 = vmul.f32 %v4644, %v4644
      %v4677 = vmul.f32 %v4645, %v4645
      %v4678 = vmul.f32 %v4646, %v4646
      %v4679 = vmul.f32 %v4647, %v4647
      %v4680 = vmul.f32 %v4648, %v4648
      %v4681 = vmul.f32 %v4649, %v4649
      %v4682 = vmul.f32 %v4650, %v4650
      %v4683 = vmul.f32 %v4651, %v4651
      %v4684 = vmul.f32 %v4652, -2.7261424e-10
      %v4685 = vmul.f32 %v4653, -2.7261424e-10
      %v4686 = vmul.f32 %v4654, -2.7261424e-10
      %v4687 = vmul.f32 %v4655, -2.7261424e-10
      %v4688 = vmul.f32 %v4656, -2.7261424e-10
      %v4689 = vmul.f32 %v4657, -2.7261424e-10
      %v4690 = vmul.f32 %v4658, -2.7261424e-10
      %v4691 = vmul.f32 %v4659, -2.7261424e-10
      %v4692 = vmul.f32 %v4660, -2.7261424e-10
      %v4693 = vmul.f32 %v4661, -2.7261424e-10
      %v4694 = vmul.f32 %v4662, -2.7261424e-10
      %v4695 = vmul.f32 %v4663, -2.7261424e-10
      %v4696 = vmul.f32 %v4664, -2.7261424e-10
      %v4697 = vmul.f32 %v4665, -2.7261424e-10
      %v4698 = vmul.f32 %v4666, -2.7261424e-10
      %v4699 = vmul.f32 %v4667, -2.7261424e-10
      %v4700 = vmul.f32 %v4668, -2.7261424e-10
      %v4701 = vmul.f32 %v4669, -2.7261424e-10
      %v4702 = vmul.f32 %v4670, -2.7261424e-10
      %v4703 = vmul.f32 %v4671, -2.7261424e-10
      %v4704 = vmul.f32 %v4672, -2.7261424e-10
      %v4705 = vmul.f32 %v4673, -2.7261424e-10
      %v4706 = vmul.f32 %v4674, -2.7261424e-10
      %v4707 = vmul.f32 %v4675, -2.7261424e-10
      %v4708 = vmul.f32 %v4676, -2.7261424e-10
      %v4709 = vmul.f32 %v4677, -2.7261424e-10
      %v4710 = vmul.f32 %v4678, -2.7261424e-10
      %v4711 = vmul.f32 %v4679, -2.7261424e-10
      %v4712 = vmul.f32 %v4680, -2.7261424e-10
      %v4713 = vmul.f32 %v4681, -2.7261424e-10
      %v4714 = vmul.f32 %v4682, -2.7261424e-10
      %v4715 = vmul.f32 %v4683, -2.7261424e-10
      %v4716 = vadd.f32 %v4684, 2.7706815e-08
      %v4717 = vadd.f32 %v4685, 2.7706815e-08
      %v4718 = vadd.f32 %v4686, 2.7706815e-08
      %v4719 = vadd.f32 %v4687, 2.7706815e-08
      %v4720 = vadd.f32 %v4688, 2.7706815e-08
      %v4721 = vadd.f32 %v4689, 2.7706815e-08
      %v4722 = vadd.f32 %v4690, 2.7706815e-08
      %v4723 = vadd.f32 %v4691, 2.7706815e-08
      %v4724 = vadd.f32 %v4692, 2.7706815e-08
      %v4725 = vadd.f32 %v4693, 2.7706815e-08
      %v4726 = vadd.f32 %v4694, 2.7706815e-08
      %v4727 = vadd.f32 %v4695, 2.7706815e-08
      %v4728 = vadd.f32 %v4696, 2.7706815e-08
      %v4729 = vadd.f32 %v4697, 2.7706815e-08
      %v4730 = vadd.f32 %v4698, 2.7706815e-08
      %v4731 = vadd.f32 %v4699, 2.7706815e-08
      %v4732 = vadd.f32 %v4700, 2.7706815e-08
      %v4733 = vadd.f32 %v4701, 2.7706815e-08
      %v4734 = vadd.f32 %v4702, 2.7706815e-08
      %v4735 = vadd.f32 %v4703, 2.7706815e-08
      %v4736 = vadd.f32 %v4704, 2.7706815e-08
      %v4737 = vadd.f32 %v4705, 2.7706815e-08
      %v4738 = vadd.f32 %v4706, 2.7706815e-08
      %v4739 = vadd.f32 %v4707, 2.7706815e-08
      %v4740 = vadd.f32 %v4708, 2.7706815e-08
      %v4741 = vadd.f32 %v4709, 2.7706815e-08
      %v4742 = vadd.f32 %v4710, 2.7706815e-08
      %v4743 = vadd.f32 %v4711, 2.7706815e-08
      %v4744 = vadd.f32 %v4712, 2.7706815e-08
      %v4745 = vadd.f32 %v4713, 2.7706815e-08
      %v4746 = vadd.f32 %v4714, 2.7706815e-08
      %v4747 = vadd.f32 %v4715, 2.7706815e-08
      %v4748 = vmul.f32 %v4716, %v4652
      %v4749 = vmul.f32 %v4717, %v4653
      %v4750 = vmul.f32 %v4718, %v4654
      %v4751 = vmul.f32 %v4719, %v4655
      %v4752 = vmul.f32 %v4720, %v4656
      %v4753 = vmul.f32 %v4721, %v4657
      %v4754 = vmul.f32 %v4722, %v4658
      %v4755 = vmul.f32 %v4723, %v4659
      %v4756 = vmul.f32 %v4724, %v4660
      %v4757 = vmul.f32 %v4725, %v4661
      %v4758 = vmul.f32 %v4726, %v4662
      %v4759 = vmul.f32 %v4727, %v4663
      %v4760 = vmul.f32 %v4728, %v4664
      %v4761 = vmul.f32 %v4729, %v4665
      %v4762 = vmul.f32 %v4730, %v4666
      %v4763 = vmul.f32 %v4731, %v4667
      %v4764 = vmul.f32 %v4732, %v4668
      %v4765 = vmul.f32 %v4733, %v4669
      %v4766 = vmul.f32 %v4734, %v4670
      %v4767 = vmul.f32 %v4735, %v4671
      %v4768 = vmul.f32 %v4736, %v4672
      %v4769 = vmul.f32 %v4737, %v4673
      %v4770 = vmul.f32 %v4738, %v4674
      %v4771 = vmul.f32 %v4739, %v4675
      %v4772 = vmul.f32 %v4740, %v4676
      %v4773 = vmul.f32 %v4741, %v4677
      %v4774 = vmul.f32 %v4742, %v4678
      %v4775 = vmul.f32 %v4743, %v4679
      %v4776 = vmul.f32 %v4744, %v4680
      %v4777 = vmul.f32 %v4745, %v4681
      %v4778 = vmul.f32 %v4746, %v4682
      %v4779 = vmul.f32 %v4747, %v4683
      %v4780 = vadd.f32 %v4748, -2.101024e-06
      %v4781 = vadd.f32 %v4749, -2.101024e-06
      %v4782 = vadd.f32 %v4750, -2.101024e-06
      %v4783 = vadd.f32 %v4751, -2.101024e-06
      %v4784 = vadd.f32 %v4752, -2.101024e-06
      %v4785 = vadd.f32 %v4753, -2.101024e-06
      %v4786 = vadd.f32 %v4754, -2.101024e-06
      %v4787 = vadd.f32 %v4755, -2.101024e-06
      %v4788 = vadd.f32 %v4756, -2.101024e-06
      %v4789 = vadd.f32 %v4757, -2.101024e-06
      %v4790 = vadd.f32 %v4758, -2.101024e-06
      %v4791 = vadd.f32 %v4759, -2.101024e-06
      %v4792 = vadd.f32 %v4760, -2.101024e-06
      %v4793 = vadd.f32 %v4761, -2.101024e-06
      %v4794 = vadd.f32 %v4762, -2.101024e-06
      %v4795 = vadd.f32 %v4763, -2.101024e-06
      %v4796 = vadd.f32 %v4764, -2.101024e-06
      %v4797 = vadd.f32 %v4765, -2.101024e-06
      %v4798 = vadd.f32 %v4766, -2.101024e-06
      %v4799 = vadd.f32 %v4767, -2.101024e-06
      %v4800 = vadd.f32 %v4768, -2.101024e-06
      %v4801 = vadd.f32 %v4769, -2.101024e-06
      %v4802 = vadd.f32 %v4770, -2.101024e-06
      %v4803 = vadd.f32 %v4771, -2.101024e-06
      %v4804 = vadd.f32 %v4772, -2.101024e-06
      %v4805 = vadd.f32 %v4773, -2.101024e-06
      %v4806 = vadd.f32 %v4774, -2.101024e-06
      %v4807 = vadd.f32 %v4775, -2.101024e-06
      %v4808 = vadd.f32 %v4776, -2.101024e-06
      %v4809 = vadd.f32 %v4777, -2.101024e-06
      %v4810 = vadd.f32 %v4778, -2.101024e-06
      %v4811 = vadd.f32 %v4779, -2.101024e-06
      %v4812 = vmul.f32 %v4780, %v4652
      %v4813 = vmul.f32 %v4781, %v4653
      %v4814 = vmul.f32 %v4782, %v4654
      %v4815 = vmul.f32 %v4783, %v4655
      %v4816 = vmul.f32 %v4784, %v4656
      %v4817 = vmul.f32 %v4785, %v4657
      %v4818 = vmul.f32 %v4786, %v4658
      %v4819 = vmul.f32 %v4787, %v4659
      %v4820 = vmul.f32 %v4788, %v4660
      %v4821 = vmul.f32 %v4789, %v4661
      %v4822 = vmul.f32 %v4790, %v4662
      %v4823 = vmul.f32 %v4791, %v4663
      %v4824 = vmul.f32 %v4792, %v4664
      %v4825 = vmul.f32 %v4793, %v4665
      %v4826 = vmul.f32 %v4794, %v4666
      %v4827 = vmul.f32 %v4795, %v4667
      %v4828 = vmul.f32 %v4796, %v4668
      %v4829 = vmul.f32 %v4797, %v4669
      %v4830 = vmul.f32 %v4798, %v4670
      %v4831 = vmul.f32 %v4799, %v4671
      %v4832 = vmul.f32 %v4800, %v4672
      %v4833 = vmul.f32 %v4801, %v4673
      %v4834 = vmul.f32 %v4802, %v4674
      %v4835 = vmul.f32 %v4803, %v4675
      %v4836 = vmul.f32 %v4804, %v4676
      %v4837 = vmul.f32 %v4805, %v4677
      %v4838 = vmul.f32 %v4806, %v4678
      %v4839 = vmul.f32 %v4807, %v4679
      %v4840 = vmul.f32 %v4808, %v4680
      %v4841 = vmul.f32 %v4809, %v4681
      %v4842 = vmul.f32 %v4810, %v4682
      %v4843 = vmul.f32 %v4811, %v4683
      %v4844 = vadd.f32 %v4812, -5.6925062e-05
      %v4845 = vadd.f32 %v4813, -5.6925062e-05
      %v4846 = vadd.f32 %v4814, -5.6925062e-05
      %v4847 = vadd.f32 %v4815, -5.6925062e-05
      %v4848 = vadd.f32 %v4816, -5.6925062e-05
      %v4849 = vadd.f32 %v4817, -5.6925062e-05
      %v4850 = vadd.f32 %v4818, -5.6925062e-05
      %v4851 = vadd.f32 %v4819, -5.6925062e-05
      %v4852 = vadd.f32 %v4820, -5.6925062e-05
      %v4853 = vadd.f32 %v4821, -5.6925062e-05
      %v4854 = vadd.f32 %v4822, -5.6925062e-05
      %v4855 = vadd.f32 %v4823, -5.6925062e-05
      %v4856 = vadd.f32 %v4824, -5.6925062e-05
      %v4857 = vadd.f32 %v4825, -5.6925062e-05
      %v4858 = vadd.f32 %v4826, -5.6925062e-05
      %v4859 = vadd.f32 %v4827, -5.6925062e-05
      %v4860 = vadd.f32 %v4828, -5.6925062e-05
      %v4861 = vadd.f32 %v4829, -5.6925062e-05
      %v4862 = vadd.f32 %v4830, -5.6925062e-05
      %v4863 = vadd.f32 %v4831, -5.6925062e-05
      %v4864 = vadd.f32 %v4832, -5.6925062e-05
      %v4865 = vadd.f32 %v4833, -5.6925062e-05
      %v4866 = vadd.f32 %v4834, -5.6925062e-05
      %v4867 = vadd.f32 %v4835, -5.6925062e-05
      %v4868 = vadd.f32 %v4836, -5.6925062e-05
      %v4869 = vadd.f32 %v4837, -5.6925062e-05
      %v4870 = vadd.f32 %v4838, -5.6925062e-05
      %v4871 = vadd.f32 %v4839, -5.6925062e-05
      %v4872 = vadd.f32 %v4840, -5.6925062e-05
      %v4873 = vadd.f32 %v4841, -5.6925062e-05
      %v4874 = vadd.f32 %v4842, -5.6925062e-05
      %v4875 = vadd.f32 %v4843, -5.6925062e-05
      %v4876 = vmul.f32 %v4844, %v4652
      %v4877 = vmul.f32 %v4845, %v4653
      %v4878 = vmul.f32 %v4846, %v4654
      %v4879 = vmul.f32 %v4847, %v4655
      %v4880 = vmul.f32 %v4848, %v4656
      %v4881 = vmul.f32 %v4849, %v4657
      %v4882 = vmul.f32 %v4850, %v4658
      %v4883 = vmul.f32 %v4851, %v4659
      %v4884 = vmul.f32 %v4852, %v4660
      %v4885 = vmul.f32 %v4853, %v4661
      %v4886 = vmul.f32 %v4854, %v4662
      %v4887 = vmul.f32 %v4855, %v4663
      %v4888 = vmul.f32 %v4856, %v4664
      %v4889 = vmul.f32 %v4857, %v4665
      %v4890 = vmul.f32 %v4858, %v4666
      %v4891 = vmul.f32 %v4859, %v4667
      %v4892 = vmul.f32 %v4860, %v4668
      %v4893 = vmul.f32 %v4861, %v4669
      %v4894 = vmul.f32 %v4862, %v4670
      %v4895 = vmul.f32 %v4863, %v4671
      %v4896 = vmul.f32 %v4864, %v4672
      %v4897 = vmul.f32 %v4865, %v4673
      %v4898 = vmul.f32 %v4866, %v4674
      %v4899 = vmul.f32 %v4867, %v4675
      %v4900 = vmul.f32 %v4868, %v4676
      %v4901 = vmul.f32 %v4869, %v4677
      %v4902 = vmul.f32 %v4870, %v4678
      %v4903 = vmul.f32 %v4871, %v4679
      %v4904 = vmul.f32 %v4872, %v4680
      %v4905 = vmul.f32 %v4873, %v4681
      %v4906 = vmul.f32 %v4874, %v4682
      %v4907 = vmul.f32 %v4875, %v4683
      %v4908 = vadd.f32 %v4876, -0.00073499064
      %v4909 = vadd.f32 %v4877, -0.00073499064
      %v4910 = vadd.f32 %v4878, -0.00073499064
      %v4911 = vadd.f32 %v4879, -0.00073499064
      %v4912 = vadd.f32 %v4880, -0.00073499064
      %v4913 = vadd.f32 %v4881, -0.00073499064
      %v4914 = vadd.f32 %v4882, -0.00073499064
      %v4915 = vadd.f32 %v4883, -0.00073499064
      %v4916 = vadd.f32 %v4884, -0.00073499064
      %v4917 = vadd.f32 %v4885, -0.00073499064
      %v4918 = vadd.f32 %v4886, -0.00073499064
      %v4919 = vadd.f32 %v4887, -0.00073499064
      %v4920 = vadd.f32 %v4888, -0.00073499064
      %v4921 = vadd.f32 %v4889, -0.00073499064
      %v4922 = vadd.f32 %v4890, -0.00073499064
      %v4923 = vadd.f32 %v4891, -0.00073499064
      %v4924 = vadd.f32 %v4892, -0.00073499064
      %v4925 = vadd.f32 %v4893, -0.00073499064
      %v4926 = vadd.f32 %v4894, -0.00073499064
      %v4927 = vadd.f32 %v4895, -0.00073499064
      %v4928 = vadd.f32 %v4896, -0.00073499064
      %v4929 = vadd.f32 %v4897, -0.00073499064
      %v4930 = vadd.f32 %v4898, -0.00073499064
      %v4931 = vadd.f32 %v4899, -0.00073499064
      %v4932 = vadd.f32 %v4900, -0.00073499064
      %v4933 = vadd.f32 %v4901, -0.00073499064
      %v4934 = vadd.f32 %v4902, -0.00073499064
      %v4935 = vadd.f32 %v4903, -0.00073499064
      %v4936 = vadd.f32 %v4904, -0.00073499064
      %v4937 = vadd.f32 %v4905, -0.00073499064
      %v4938 = vadd.f32 %v4906, -0.00073499064
      %v4939 = vadd.f32 %v4907, -0.00073499064
      %v4940 = vmul.f32 %v4908, %v4652
      %v4941 = vmul.f32 %v4909, %v4653
      %v4942 = vmul.f32 %v4910, %v4654
      %v4943 = vmul.f32 %v4911, %v4655
      %v4944 = vmul.f32 %v4912, %v4656
      %v4945 = vmul.f32 %v4913, %v4657
      %v4946 = vmul.f32 %v4914, %v4658
      %v4947 = vmul.f32 %v4915, %v4659
      %v4948 = vmul.f32 %v4916, %v4660
      %v4949 = vmul.f32 %v4917, %v4661
      %v4950 = vmul.f32 %v4918, %v4662
      %v4951 = vmul.f32 %v4919, %v4663
      %v4952 = vmul.f32 %v4920, %v4664
      %v4953 = vmul.f32 %v4921, %v4665
      %v4954 = vmul.f32 %v4922, %v4666
      %v4955 = vmul.f32 %v4923, %v4667
      %v4956 = vmul.f32 %v4924, %v4668
      %v4957 = vmul.f32 %v4925, %v4669
      %v4958 = vmul.f32 %v4926, %v4670
      %v4959 = vmul.f32 %v4927, %v4671
      %v4960 = vmul.f32 %v4928, %v4672
      %v4961 = vmul.f32 %v4929, %v4673
      %v4962 = vmul.f32 %v4930, %v4674
      %v4963 = vmul.f32 %v4931, %v4675
      %v4964 = vmul.f32 %v4932, %v4676
      %v4965 = vmul.f32 %v4933, %v4677
      %v4966 = vmul.f32 %v4934, %v4678
      %v4967 = vmul.f32 %v4935, %v4679
      %v4968 = vmul.f32 %v4936, %v4680
      %v4969 = vmul.f32 %v4937, %v4681
      %v4970 = vmul.f32 %v4938, %v4682
      %v4971 = vmul.f32 %v4939, %v4683
      %v4972 = vadd.f32 %v4940, -0.0029546
      %v4973 = vadd.f32 %v4941, -0.0029546
      %v4974 = vadd.f32 %v4942, -0.0029546
      %v4975 = vadd.f32 %v4943, -0.0029546
      %v4976 = vadd.f32 %v4944, -0.0029546
      %v4977 = vadd.f32 %v4945, -0.0029546
      %v4978 = vadd.f32 %v4946, -0.0029546
      %v4979 = vadd.f32 %v4947, -0.0029546
      %v4980 = vadd.f32 %v4948, -0.0029546
      %v4981 = vadd.f32 %v4949, -0.0029546
      %v4982 = vadd.f32 %v4950, -0.0029546
      %v4983 = vadd.f32 %v4951, -0.0029546
      %v4984 = vadd.f32 %v4952, -0.0029546
      %v4985 = vadd.f32 %v4953, -0.0029546
      %v4986 = vadd.f32 %v4954, -0.0029546
      %v4987 = vadd.f32 %v4955, -0.0029546
      %v4988 = vadd.f32 %v4956, -0.0029546
      %v4989 = vadd.f32 %v4957, -0.0029546
      %v4990 = vadd.f32 %v4958, -0.0029546
      %v4991 = vadd.f32 %v4959, -0.0029546
      %v4992 = vadd.f32 %v4960, -0.0029546
      %v4993 = vadd.f32 %v4961, -0.0029546
      %v4994 = vadd.f32 %v4962, -0.0029546
      %v4995 = vadd.f32 %v4963, -0.0029546
      %v4996 = vadd.f32 %v4964, -0.0029546
      %v4997 = vadd.f32 %v4965, -0.0029546
      %v4998 = vadd.f32 %v4966, -0.0029546
      %v4999 = vadd.f32 %v4967, -0.0029546
      %v5000 = vadd.f32 %v4968, -0.0029546
      %v5001 = vadd.f32 %v4969, -0.0029546
      %v5002 = vadd.f32 %v4970, -0.0029546
      %v5003 = vadd.f32 %v4971, -0.0029546
      %v5004 = vmul.f32 %v4972, %v4652
      %v5005 = vmul.f32 %v4973, %v4653
      %v5006 = vmul.f32 %v4974, %v4654
      %v5007 = vmul.f32 %v4975, %v4655
      %v5008 = vmul.f32 %v4976, %v4656
      %v5009 = vmul.f32 %v4977, %v4657
      %v5010 = vmul.f32 %v4978, %v4658
      %v5011 = vmul.f32 %v4979, %v4659
      %v5012 = vmul.f32 %v4980, %v4660
      %v5013 = vmul.f32 %v4981, %v4661
      %v5014 = vmul.f32 %v4982, %v4662
      %v5015 = vmul.f32 %v4983, %v4663
      %v5016 = vmul.f32 %v4984, %v4664
      %v5017 = vmul.f32 %v4985, %v4665
      %v5018 = vmul.f32 %v4986, %v4666
      %v5019 = vmul.f32 %v4987, %v4667
      %v5020 = vmul.f32 %v4988, %v4668
      %v5021 = vmul.f32 %v4989, %v4669
      %v5022 = vmul.f32 %v4990, %v4670
      %v5023 = vmul.f32 %v4991, %v4671
      %v5024 = vmul.f32 %v4992, %v4672
      %v5025 = vmul.f32 %v4993, %v4673
      %v5026 = vmul.f32 %v4994, %v4674
      %v5027 = vmul.f32 %v4995, %v4675
      %v5028 = vmul.f32 %v4996, %v4676
      %v5029 = vmul.f32 %v4997, %v4677
      %v5030 = vmul.f32 %v4998, %v4678
      %v5031 = vmul.f32 %v4999, %v4679
      %v5032 = vmul.f32 %v5000, %v4680
      %v5033 = vmul.f32 %v5001, %v4681
      %v5034 = vmul.f32 %v5002, %v4682
      %v5035 = vmul.f32 %v5003, %v4683
      %v5036 = vadd.f32 %v5004, -0.016096033
      %v5037 = vadd.f32 %v5005, -0.016096033
      %v5038 = vadd.f32 %v5006, -0.016096033
      %v5039 = vadd.f32 %v5007, -0.016096033
      %v5040 = vadd.f32 %v5008, -0.016096033
      %v5041 = vadd.f32 %v5009, -0.016096033
      %v5042 = vadd.f32 %v5010, -0.016096033
      %v5043 = vadd.f32 %v5011, -0.016096033
      %v5044 = vadd.f32 %v5012, -0.016096033
      %v5045 = vadd.f32 %v5013, -0.016096033
      %v5046 = vadd.f32 %v5014, -0.016096033
      %v5047 = vadd.f32 %v5015, -0.016096033
      %v5048 = vadd.f32 %v5016, -0.016096033
      %v5049 = vadd.f32 %v5017, -0.016096033
      %v5050 = vadd.f32 %v5018, -0.016096033
      %v5051 = vadd.f32 %v5019, -0.016096033
      %v5052 = vadd.f32 %v5020, -0.016096033
      %v5053 = vadd.f32 %v5021, -0.016096033
      %v5054 = vadd.f32 %v5022, -0.016096033
      %v5055 = vadd.f32 %v5023, -0.016096033
      %v5056 = vadd.f32 %v5024, -0.016096033
      %v5057 = vadd.f32 %v5025, -0.016096033
      %v5058 = vadd.f32 %v5026, -0.016096033
      %v5059 = vadd.f32 %v5027, -0.016096033
      %v5060 = vadd.f32 %v5028, -0.016096033
      %v5061 = vadd.f32 %v5029, -0.016096033
      %v5062 = vadd.f32 %v5030, -0.016096033
      %v5063 = vadd.f32 %v5031, -0.016096033
      %v5064 = vadd.f32 %v5032, -0.016096033
      %v5065 = vadd.f32 %v5033, -0.016096033
      %v5066 = vadd.f32 %v5034, -0.016096033
      %v5067 = vadd.f32 %v5035, -0.016096033
      %v5068 = vmul.f32 %v4652, -1.45660715e-05
      %v5069 = vmul.f32 %v4653, -1.45660715e-05
      %v5070 = vmul.f32 %v4654, -1.45660715e-05
      %v5071 = vmul.f32 %v4655, -1.45660715e-05
      %v5072 = vmul.f32 %v4656, -1.45660715e-05
      %v5073 = vmul.f32 %v4657, -1.45660715e-05
      %v5074 = vmul.f32 %v4658, -1.45660715e-05
      %v5075 = vmul.f32 %v4659, -1.45660715e-05
      %v5076 = vmul.f32 %v4660, -1.45660715e-05
      %v5077 = vmul.f32 %v4661, -1.45660715e-05
      %v5078 = vmul.f32 %v4662, -1.45660715e-05
      %v5079 = vmul.f32 %v4663, -1.45660715e-05
      %v5080 = vmul.f32 %v4664, -1.45660715e-05
      %v5081 = vmul.f32 %v4665, -1.45660715e-05
      %v5082 = vmul.f32 %v4666, -1.45660715e-05
      %v5083 = vmul.f32 %v4667, -1.45660715e-05
      %v5084 = vmul.f32 %v4668, -1.45660715e-05
      %v5085 = vmul.f32 %v4669, -1.45660715e-05
      %v5086 = vmul.f32 %v4670, -1.45660715e-05
      %v5087 = vmul.f32 %v4671, -1.45660715e-05
      %v5088 = vmul.f32 %v4672, -1.45660715e-05
      %v5089 = vmul.f32 %v4673, -1.45660715e-05
      %v5090 = vmul.f32 %v4674, -1.45660715e-05
      %v5091 = vmul.f32 %v4675, -1.45660715e-05
      %v5092 = vmul.f32 %v4676, -1.45660715e-05
      %v5093 = vmul.f32 %v4677, -1.45660715e-05
      %v5094 = vmul.f32 %v4678, -1.45660715e-05
      %v5095 = vmul.f32 %v4679, -1.45660715e-05
      %v5096 = vmul.f32 %v4680, -1.45660715e-05
      %v5097 = vmul.f32 %v4681, -1.45660715e-05
      %v5098 = vmul.f32 %v4682, -1.45660715e-05
      %v5099 = vmul.f32 %v4683, -1.45660715e-05
      %v5100 = vadd.f32 %v5068, -0.00021337405
      %v5101 = vadd.f32 %v5069, -0.00021337405
      %v5102 = vadd.f32 %v5070, -0.00021337405
      %v5103 = vadd.f32 %v5071, -0.00021337405
      %v5104 = vadd.f32 %v5072, -0.00021337405
      %v5105 = vadd.f32 %v5073, -0.00021337405
      %v5106 = vadd.f32 %v5074, -0.00021337405
      %v5107 = vadd.f32 %v5075, -0.00021337405
      %v5108 = vadd.f32 %v5076, -0.00021337405
      %v5109 = vadd.f32 %v5077, -0.00021337405
      %v5110 = vadd.f32 %v5078, -0.00021337405
      %v5111 = vadd.f32 %v5079, -0.00021337405
      %v5112 = vadd.f32 %v5080, -0.00021337405
      %v5113 = vadd.f32 %v5081, -0.00021337405
      %v5114 = vadd.f32 %v5082, -0.00021337405
      %v5115 = vadd.f32 %v5083, -0.00021337405
      %v5116 = vadd.f32 %v5084, -0.00021337405
      %v5117 = vadd.f32 %v5085, -0.00021337405
      %v5118 = vadd.f32 %v5086, -0.00021337405
      %v5119 = vadd.f32 %v5087, -0.00021337405
      %v5120 = vadd.f32 %v5088, -0.00021337405
      %v5121 = vadd.f32 %v5089, -0.00021337405
      %v5122 = vadd.f32 %v5090, -0.00021337405
      %v5123 = vadd.f32 %v5091, -0.00021337405
      %v5124 = vadd.f32 %v5092, -0.00021337405
      %v5125 = vadd.f32 %v5093, -0.00021337405
      %v5126 = vadd.f32 %v5094, -0.00021337405
      %v5127 = vadd.f32 %v5095, -0.00021337405
      %v5128 = vadd.f32 %v5096, -0.00021337405
      %v5129 = vadd.f32 %v5097, -0.00021337405
      %v5130 = vadd.f32 %v5098, -0.00021337405
      %v5131 = vadd.f32 %v5099, -0.00021337405
      %v5132 = vmul.f32 %v5100, %v4652
      %v5133 = vmul.f32 %v5101, %v4653
      %v5134 = vmul.f32 %v5102, %v4654
      %v5135 = vmul.f32 %v5103, %v4655
      %v5136 = vmul.f32 %v5104, %v4656
      %v5137 = vmul.f32 %v5105, %v4657
      %v5138 = vmul.f32 %v5106, %v4658
      %v5139 = vmul.f32 %v5107, %v4659
      %v5140 = vmul.f32 %v5108, %v4660
      %v5141 = vmul.f32 %v5109, %v4661
      %v5142 = vmul.f32 %v5110, %v4662
      %v5143 = vmul.f32 %v5111, %v4663
      %v5144 = vmul.f32 %v5112, %v4664
      %v5145 = vmul.f32 %v5113, %v4665
      %v5146 = vmul.f32 %v5114, %v4666
      %v5147 = vmul.f32 %v5115, %v4667
      %v5148 = vmul.f32 %v5116, %v4668
      %v5149 = vmul.f32 %v5117, %v4669
      %v5150 = vmul.f32 %v5118, %v4670
      %v5151 = vmul.f32 %v5119, %v4671
      %v5152 = vmul.f32 %v5120, %v4672
      %v5153 = vmul.f32 %v5121, %v4673
      %v5154 = vmul.f32 %v5122, %v4674
      %v5155 = vmul.f32 %v5123, %v4675
      %v5156 = vmul.f32 %v5124, %v4676
      %v5157 = vmul.f32 %v5125, %v4677
      %v5158 = vmul.f32 %v5126, %v4678
      %v5159 = vmul.f32 %v5127, %v4679
      %v5160 = vmul.f32 %v5128, %v4680
      %v5161 = vmul.f32 %v5129, %v4681
      %v5162 = vmul.f32 %v5130, %v4682
      %v5163 = vmul.f32 %v5131, %v4683
      %v5164 = vadd.f32 %v5132, -0.001682827
      %v5165 = vadd.f32 %v5133, -0.001682827
      %v5166 = vadd.f32 %v5134, -0.001682827
      %v5167 = vadd.f32 %v5135, -0.001682827
      %v5168 = vadd.f32 %v5136, -0.001682827
      %v5169 = vadd.f32 %v5137, -0.001682827
      %v5170 = vadd.f32 %v5138, -0.001682827
      %v5171 = vadd.f32 %v5139, -0.001682827
      %v5172 = vadd.f32 %v5140, -0.001682827
      %v5173 = vadd.f32 %v5141, -0.001682827
      %v5174 = vadd.f32 %v5142, -0.001682827
      %v5175 = vadd.f32 %v5143, -0.001682827
      %v5176 = vadd.f32 %v5144, -0.001682827
      %v5177 = vadd.f32 %v5145, -0.001682827
      %v5178 = vadd.f32 %v5146, -0.001682827
      %v5179 = vadd.f32 %v5147, -0.001682827
      %v5180 = vadd.f32 %v5148, -0.001682827
      %v5181 = vadd.f32 %v5149, -0.001682827
      %v5182 = vadd.f32 %v5150, -0.001682827
      %v5183 = vadd.f32 %v5151, -0.001682827
      %v5184 = vadd.f32 %v5152, -0.001682827
      %v5185 = vadd.f32 %v5153, -0.001682827
      %v5186 = vadd.f32 %v5154, -0.001682827
      %v5187 = vadd.f32 %v5155, -0.001682827
      %v5188 = vadd.f32 %v5156, -0.001682827
      %v5189 = vadd.f32 %v5157, -0.001682827
      %v5190 = vadd.f32 %v5158, -0.001682827
      %v5191 = vadd.f32 %v5159, -0.001682827
      %v5192 = vadd.f32 %v5160, -0.001682827
      %v5193 = vadd.f32 %v5161, -0.001682827
      %v5194 = vadd.f32 %v5162, -0.001682827
      %v5195 = vadd.f32 %v5163, -0.001682827
      %v5196 = vmul.f32 %v5164, %v4652
      %v5197 = vmul.f32 %v5165, %v4653
      %v5198 = vmul.f32 %v5166, %v4654
      %v5199 = vmul.f32 %v5167, %v4655
      %v5200 = vmul.f32 %v5168, %v4656
      %v5201 = vmul.f32 %v5169, %v4657
      %v5202 = vmul.f32 %v5170, %v4658
      %v5203 = vmul.f32 %v5171, %v4659
      %v5204 = vmul.f32 %v5172, %v4660
      %v5205 = vmul.f32 %v5173, %v4661
      %v5206 = vmul.f32 %v5174, %v4662
      %v5207 = vmul.f32 %v5175, %v4663
      %v5208 = vmul.f32 %v5176, %v4664
      %v5209 = vmul.f32 %v5177, %v4665
      %v5210 = vmul.f32 %v5178, %v4666
      %v5211 = vmul.f32 %v5179, %v4667
      %v5212 = vmul.f32 %v5180, %v4668
      %v5213 = vmul.f32 %v5181, %v4669
      %v5214 = vmul.f32 %v5182, %v4670
      %v5215 = vmul.f32 %v5183, %v4671
      %v5216 = vmul.f32 %v5184, %v4672
      %v5217 = vmul.f32 %v5185, %v4673
      %v5218 = vmul.f32 %v5186, %v4674
      %v5219 = vmul.f32 %v5187, %v4675
      %v5220 = vmul.f32 %v5188, %v4676
      %v5221 = vmul.f32 %v5189, %v4677
      %v5222 = vmul.f32 %v5190, %v4678
      %v5223 = vmul.f32 %v5191, %v4679
      %v5224 = vmul.f32 %v5192, %v4680
      %v5225 = vmul.f32 %v5193, %v4681
      %v5226 = vmul.f32 %v5194, %v4682
      %v5227 = vmul.f32 %v5195, %v4683
      %v5228 = vadd.f32 %v5196, -0.0073733293
      %v5229 = vadd.f32 %v5197, -0.0073733293
      %v5230 = vadd.f32 %v5198, -0.0073733293
      %v5231 = vadd.f32 %v5199, -0.0073733293
      %v5232 = vadd.f32 %v5200, -0.0073733293
      %v5233 = vadd.f32 %v5201, -0.0073733293
      %v5234 = vadd.f32 %v5202, -0.0073733293
      %v5235 = vadd.f32 %v5203, -0.0073733293
      %v5236 = vadd.f32 %v5204, -0.0073733293
      %v5237 = vadd.f32 %v5205, -0.0073733293
      %v5238 = vadd.f32 %v5206, -0.0073733293
      %v5239 = vadd.f32 %v5207, -0.0073733293
      %v5240 = vadd.f32 %v5208, -0.0073733293
      %v5241 = vadd.f32 %v5209, -0.0073733293
      %v5242 = vadd.f32 %v5210, -0.0073733293
      %v5243 = vadd.f32 %v5211, -0.0073733293
      %v5244 = vadd.f32 %v5212, -0.0073733293
      %v5245 = vadd.f32 %v5213, -0.0073733293
      %v5246 = vadd.f32 %v5214, -0.0073733293
      %v5247 = vadd.f32 %v5215, -0.0073733293
      %v5248 = vadd.f32 %v5216, -0.0073733293
      %v5249 = vadd.f32 %v5217, -0.0073733293
      %v5250 = vadd.f32 %v5218, -0.0073733293
      %v5251 = vadd.f32 %v5219, -0.0073733293
      %v5252 = vadd.f32 %v5220, -0.0073733293
      %v5253 = vadd.f32 %v5221, -0.0073733293
      %v5254 = vadd.f32 %v5222, -0.0073733293
      %v5255 = vadd.f32 %v5223, -0.0073733293
      %v5256 = vadd.f32 %v5224, -0.0073733293
      %v5257 = vadd.f32 %v5225, -0.0073733293
      %v5258 = vadd.f32 %v5226, -0.0073733293
      %v5259 = vadd.f32 %v5227, -0.0073733293
      %v5260 = vmul.f32 %v5228, %v4652
      %v5261 = vmul.f32 %v5229, %v4653
      %v5262 = vmul.f32 %v5230, %v4654
      %v5263 = vmul.f32 %v5231, %v4655
      %v5264 = vmul.f32 %v5232, %v4656
      %v5265 = vmul.f32 %v5233, %v4657
      %v5266 = vmul.f32 %v5234, %v4658
      %v5267 = vmul.f32 %v5235, %v4659
      %v5268 = vmul.f32 %v5236, %v4660
      %v5269 = vmul.f32 %v5237, %v4661
      %v5270 = vmul.f32 %v5238, %v4662
      %v5271 = vmul.f32 %v5239, %v4663
      %v5272 = vmul.f32 %v5240, %v4664
      %v5273 = vmul.f32 %v5241, %v4665
      %v5274 = vmul.f32 %v5242, %v4666
      %v5275 = vmul.f32 %v5243, %v4667
      %v5276 = vmul.f32 %v5244, %v4668
      %v5277 = vmul.f32 %v5245, %v4669
      %v5278 = vmul.f32 %v5246, %v4670
      %v5279 = vmul.f32 %v5247, %v4671
      %v5280 = vmul.f32 %v5248, %v4672
      %v5281 = vmul.f32 %v5249, %v4673
      %v5282 = vmul.f32 %v5250, %v4674
      %v5283 = vmul.f32 %v5251, %v4675
      %v5284 = vmul.f32 %v5252, %v4676
      %v5285 = vmul.f32 %v5253, %v4677
      %v5286 = vmul.f32 %v5254, %v4678
      %v5287 = vmul.f32 %v5255, %v4679
      %v5288 = vmul.f32 %v5256, %v4680
      %v5289 = vmul.f32 %v5257, %v4681
      %v5290 = vmul.f32 %v5258, %v4682
      %v5291 = vmul.f32 %v5259, %v4683
      %v5292 = vadd.f32 %v5260, -0.014264739
      %v5293 = vadd.f32 %v5261, -0.014264739
      %v5294 = vadd.f32 %v5262, -0.014264739
      %v5295 = vadd.f32 %v5263, -0.014264739
      %v5296 = vadd.f32 %v5264, -0.014264739
      %v5297 = vadd.f32 %v5265, -0.014264739
      %v5298 = vadd.f32 %v5266, -0.014264739
      %v5299 = vadd.f32 %v5267, -0.014264739
      %v5300 = vadd.f32 %v5268, -0.014264739
      %v5301 = vadd.f32 %v5269, -0.014264739
      %v5302 = vadd.f32 %v5270, -0.014264739
      %v5303 = vadd.f32 %v5271, -0.014264739
      %v5304 = vadd.f32 %v5272, -0.014264739
      %v5305 = vadd.f32 %v5273, -0.014264739
      %v5306 = vadd.f32 %v5274, -0.014264739
      %v5307 = vadd.f32 %v5275, -0.014264739
      %v5308 = vadd.f32 %v5276, -0.014264739
      %v5309 = vadd.f32 %v5277, -0.014264739
      %v5310 = vadd.f32 %v5278, -0.014264739
      %v5311 = vadd.f32 %v5279, -0.014264739
      %v5312 = vadd.f32 %v5280, -0.014264739
      %v5313 = vadd.f32 %v5281, -0.014264739
      %v5314 = vadd.f32 %v5282, -0.014264739
      %v5315 = vadd.f32 %v5283, -0.014264739
      %v5316 = vadd.f32 %v5284, -0.014264739
      %v5317 = vadd.f32 %v5285, -0.014264739
      %v5318 = vadd.f32 %v5286, -0.014264739
      %v5319 = vadd.f32 %v5287, -0.014264739
      %v5320 = vadd.f32 %v5288, -0.014264739
      %v5321 = vadd.f32 %v5289, -0.014264739
      %v5322 = vadd.f32 %v5290, -0.014264739
      %v5323 = vadd.f32 %v5291, -0.014264739
      %v5324 = vmul.f32 %v4620, %v5036
      %v5325 = vmul.f32 %v4621, %v5037
      %v5326 = vmul.f32 %v4622, %v5038
      %v5327 = vmul.f32 %v4623, %v5039
      %v5328 = vmul.f32 %v4624, %v5040
      %v5329 = vmul.f32 %v4625, %v5041
      %v5330 = vmul.f32 %v4626, %v5042
      %v5331 = vmul.f32 %v4627, %v5043
      %v5332 = vmul.f32 %v4628, %v5044
      %v5333 = vmul.f32 %v4629, %v5045
      %v5334 = vmul.f32 %v4630, %v5046
      %v5335 = vmul.f32 %v4631, %v5047
      %v5336 = vmul.f32 %v4632, %v5048
      %v5337 = vmul.f32 %v4633, %v5049
      %v5338 = vmul.f32 %v4634, %v5050
      %v5339 = vmul.f32 %v4635, %v5051
      %v5340 = vmul.f32 %v4636, %v5052
      %v5341 = vmul.f32 %v4637, %v5053
      %v5342 = vmul.f32 %v4638, %v5054
      %v5343 = vmul.f32 %v4639, %v5055
      %v5344 = vmul.f32 %v4640, %v5056
      %v5345 = vmul.f32 %v4641, %v5057
      %v5346 = vmul.f32 %v4642, %v5058
      %v5347 = vmul.f32 %v4643, %v5059
      %v5348 = vmul.f32 %v4644, %v5060
      %v5349 = vmul.f32 %v4645, %v5061
      %v5350 = vmul.f32 %v4646, %v5062
      %v5351 = vmul.f32 %v4647, %v5063
      %v5352 = vmul.f32 %v4648, %v5064
      %v5353 = vmul.f32 %v4649, %v5065
      %v5354 = vmul.f32 %v4650, %v5066
      %v5355 = vmul.f32 %v4651, %v5067
      %v5356 = vrcp.pop %v5292
      %v5357 = vrcp.pop %v5293
      %v5358 = vrcp.pop %v5294
      %v5359 = vrcp.pop %v5295
      %v5360 = vrcp.pop %v5296
      %v5361 = vrcp.pop %v5297
      %v5362 = vrcp.pop %v5298
      %v5363 = vrcp.pop %v5299
      %v5364 = vrcp.pop %v5300
      %v5365 = vrcp.pop %v5301
      %v5366 = vrcp.pop %v5302
      %v5367 = vrcp.pop %v5303
      %v5368 = vrcp.pop %v5304
      %v5369 = vrcp.pop %v5305
      %v5370 = vrcp.pop %v5306
      %v5371 = vrcp.pop %v5307
      %v5372 = vrcp.pop %v5308
      %v5373 = vrcp.pop %v5309
      %v5374 = vrcp.pop %v5310
      %v5375 = vrcp.pop %v5311
      %v5376 = vrcp.pop %v5312
      %v5377 = vrcp.pop %v5313
      %v5378 = vrcp.pop %v5314
      %v5379 = vrcp.pop %v5315
      %v5380 = vrcp.pop %v5316
      %v5381 = vrcp.pop %v5317
      %v5382 = vrcp.pop %v5318
      %v5383 = vrcp.pop %v5319
      %v5384 = vrcp.pop %v5320
      %v5385 = vrcp.pop %v5321
      %v5386 = vrcp.pop %v5322
      %v5387 = vrcp.pop %v5323
      %v5388 = vmul.f32 %v5292, %v5356
      %v5389 = vmul.f32 %v5293, %v5357
      %v5390 = vmul.f32 %v5294, %v5358
      %v5391 = vmul.f32 %v5295, %v5359
      %v5392 = vmul.f32 %v5296, %v5360
      %v5393 = vmul.f32 %v5297, %v5361
      %v5394 = vmul.f32 %v5298, %v5362
      %v5395 = vmul.f32 %v5299, %v5363
      %v5396 = vmul.f32 %v5300, %v5364
      %v5397 = vmul.f32 %v5301, %v5365
      %v5398 = vmul.f32 %v5302, %v5366
      %v5399 = vmul.f32 %v5303, %v5367
      %v5400 = vmul.f32 %v5304, %v5368
      %v5401 = vmul.f32 %v5305, %v5369
      %v5402 = vmul.f32 %v5306, %v5370
      %v5403 = vmul.f32 %v5307, %v5371
      %v5404 = vmul.f32 %v5308, %v5372
      %v5405 = vmul.f32 %v5309, %v5373
      %v5406 = vmul.f32 %v5310, %v5374
      %v5407 = vmul.f32 %v5311, %v5375
      %v5408 = vmul.f32 %v5312, %v5376
      %v5409 = vmul.f32 %v5313, %v5377
      %v5410 = vmul.f32 %v5314, %v5378
      %v5411 = vmul.f32 %v5315, %v5379
      %v5412 = vmul.f32 %v5316, %v5380
      %v5413 = vmul.f32 %v5317, %v5381
      %v5414 = vmul.f32 %v5318, %v5382
      %v5415 = vmul.f32 %v5319, %v5383
      %v5416 = vmul.f32 %v5320, %v5384
      %v5417 = vmul.f32 %v5321, %v5385
      %v5418 = vmul.f32 %v5322, %v5386
      %v5419 = vmul.f32 %v5323, %v5387
      %v5420 = vsub.f32 2.0, %v5388
      %v5421 = vsub.f32 2.0, %v5389
      %v5422 = vsub.f32 2.0, %v5390
      %v5423 = vsub.f32 2.0, %v5391
      %v5424 = vsub.f32 2.0, %v5392
      %v5425 = vsub.f32 2.0, %v5393
      %v5426 = vsub.f32 2.0, %v5394
      %v5427 = vsub.f32 2.0, %v5395
      %v5428 = vsub.f32 2.0, %v5396
      %v5429 = vsub.f32 2.0, %v5397
      %v5430 = vsub.f32 2.0, %v5398
      %v5431 = vsub.f32 2.0, %v5399
      %v5432 = vsub.f32 2.0, %v5400
      %v5433 = vsub.f32 2.0, %v5401
      %v5434 = vsub.f32 2.0, %v5402
      %v5435 = vsub.f32 2.0, %v5403
      %v5436 = vsub.f32 2.0, %v5404
      %v5437 = vsub.f32 2.0, %v5405
      %v5438 = vsub.f32 2.0, %v5406
      %v5439 = vsub.f32 2.0, %v5407
      %v5440 = vsub.f32 2.0, %v5408
      %v5441 = vsub.f32 2.0, %v5409
      %v5442 = vsub.f32 2.0, %v5410
      %v5443 = vsub.f32 2.0, %v5411
      %v5444 = vsub.f32 2.0, %v5412
      %v5445 = vsub.f32 2.0, %v5413
      %v5446 = vsub.f32 2.0, %v5414
      %v5447 = vsub.f32 2.0, %v5415
      %v5448 = vsub.f32 2.0, %v5416
      %v5449 = vsub.f32 2.0, %v5417
      %v5450 = vsub.f32 2.0, %v5418
      %v5451 = vsub.f32 2.0, %v5419
      %v5452 = vmul.f32 %v5356, %v5420
      %v5453 = vmul.f32 %v5357, %v5421
      %v5454 = vmul.f32 %v5358, %v5422
      %v5455 = vmul.f32 %v5359, %v5423
      %v5456 = vmul.f32 %v5360, %v5424
      %v5457 = vmul.f32 %v5361, %v5425
      %v5458 = vmul.f32 %v5362, %v5426
      %v5459 = vmul.f32 %v5363, %v5427
      %v5460 = vmul.f32 %v5364, %v5428
      %v5461 = vmul.f32 %v5365, %v5429
      %v5462 = vmul.f32 %v5366, %v5430
      %v5463 = vmul.f32 %v5367, %v5431
      %v5464 = vmul.f32 %v5368, %v5432
      %v5465 = vmul.f32 %v5369, %v5433
      %v5466 = vmul.f32 %v5370, %v5434
      %v5467 = vmul.f32 %v5371, %v5435
      %v5468 = vmul.f32 %v5372, %v5436
      %v5469 = vmul.f32 %v5373, %v5437
      %v5470 = vmul.f32 %v5374, %v5438
      %v5471 = vmul.f32 %v5375, %v5439
      %v5472 = vmul.f32 %v5376, %v5440
      %v5473 = vmul.f32 %v5377, %v5441
      %v5474 = vmul.f32 %v5378, %v5442
      %v5475 = vmul.f32 %v5379, %v5443
      %v5476 = vmul.f32 %v5380, %v5444
      %v5477 = vmul.f32 %v5381, %v5445
      %v5478 = vmul.f32 %v5382, %v5446
      %v5479 = vmul.f32 %v5383, %v5447
      %v5480 = vmul.f32 %v5384, %v5448
      %v5481 = vmul.f32 %v5385, %v5449
      %v5482 = vmul.f32 %v5386, %v5450
      %v5483 = vmul.f32 %v5387, %v5451
      %v5484 = vmul.f32 %v5324, %v5452
      %v5485 = vmul.f32 %v5325, %v5453
      %v5486 = vmul.f32 %v5326, %v5454
      %v5487 = vmul.f32 %v5327, %v5455
      %v5488 = vmul.f32 %v5328, %v5456
      %v5489 = vmul.f32 %v5329, %v5457
      %v5490 = vmul.f32 %v5330, %v5458
      %v5491 = vmul.f32 %v5331, %v5459
      %v5492 = vmul.f32 %v5332, %v5460
      %v5493 = vmul.f32 %v5333, %v5461
      %v5494 = vmul.f32 %v5334, %v5462
      %v5495 = vmul.f32 %v5335, %v5463
      %v5496 = vmul.f32 %v5336, %v5464
      %v5497 = vmul.f32 %v5337, %v5465
      %v5498 = vmul.f32 %v5338, %v5466
      %v5499 = vmul.f32 %v5339, %v5467
      %v5500 = vmul.f32 %v5340, %v5468
      %v5501 = vmul.f32 %v5341, %v5469
      %v5502 = vmul.f32 %v5342, %v5470
      %v5503 = vmul.f32 %v5343, %v5471
      %v5504 = vmul.f32 %v5344, %v5472
      %v5505 = vmul.f32 %v5345, %v5473
      %v5506 = vmul.f32 %v5346, %v5474
      %v5507 = vmul.f32 %v5347, %v5475
      %v5508 = vmul.f32 %v5348, %v5476
      %v5509 = vmul.f32 %v5349, %v5477
      %v5510 = vmul.f32 %v5350, %v5478
      %v5511 = vmul.f32 %v5351, %v5479
      %v5512 = vmul.f32 %v5352, %v5480
      %v5513 = vmul.f32 %v5353, %v5481
      %v5514 = vmul.f32 %v5354, %v5482
      %v5515 = vmul.f32 %v5355, %v5483
      %v5516 = vadd.f32 %v5484, 1.0
      %v5517 = vadd.f32 %v5485, 1.0
      %v5518 = vadd.f32 %v5486, 1.0
      %v5519 = vadd.f32 %v5487, 1.0
      %v5520 = vadd.f32 %v5488, 1.0
      %v5521 = vadd.f32 %v5489, 1.0
      %v5522 = vadd.f32 %v5490, 1.0
      %v5523 = vadd.f32 %v5491, 1.0
      %v5524 = vadd.f32 %v5492, 1.0
      %v5525 = vadd.f32 %v5493, 1.0
      %v5526 = vadd.f32 %v5494, 1.0
      %v5527 = vadd.f32 %v5495, 1.0
      %v5528 = vadd.f32 %v5496, 1.0
      %v5529 = vadd.f32 %v5497, 1.0
      %v5530 = vadd.f32 %v5498, 1.0
      %v5531 = vadd.f32 %v5499, 1.0
      %v5532 = vadd.f32 %v5500, 1.0
      %v5533 = vadd.f32 %v5501, 1.0
      %v5534 = vadd.f32 %v5502, 1.0
      %v5535 = vadd.f32 %v5503, 1.0
      %v5536 = vadd.f32 %v5504, 1.0
      %v5537 = vadd.f32 %v5505, 1.0
      %v5538 = vadd.f32 %v5506, 1.0
      %v5539 = vadd.f32 %v5507, 1.0
      %v5540 = vadd.f32 %v5508, 1.0
      %v5541 = vadd.f32 %v5509, 1.0
      %v5542 = vadd.f32 %v5510, 1.0
      %v5543 = vadd.f32 %v5511, 1.0
      %v5544 = vadd.f32 %v5512, 1.0
      %v5545 = vadd.f32 %v5513, 1.0
      %v5546 = vadd.f32 %v5514, 1.0
      %v5547 = vadd.f32 %v5515, 1.0
      %v5548 = vmul.f32 %v4524, %v5516
      %v5549 = vmul.f32 %v4525, %v5517
      %v5550 = vmul.f32 %v4526, %v5518
      %v5551 = vmul.f32 %v4527, %v5519
      %v5552 = vmul.f32 %v4528, %v5520
      %v5553 = vmul.f32 %v4529, %v5521
      %v5554 = vmul.f32 %v4530, %v5522
      %v5555 = vmul.f32 %v4531, %v5523
      %v5556 = vmul.f32 %v4532, %v5524
      %v5557 = vmul.f32 %v4533, %v5525
      %v5558 = vmul.f32 %v4534, %v5526
      %v5559 = vmul.f32 %v4535, %v5527
      %v5560 = vmul.f32 %v4536, %v5528
      %v5561 = vmul.f32 %v4537, %v5529
      %v5562 = vmul.f32 %v4538, %v5530
      %v5563 = vmul.f32 %v4539, %v5531
      %v5564 = vmul.f32 %v4540, %v5532
      %v5565 = vmul.f32 %v4541, %v5533
      %v5566 = vmul.f32 %v4542, %v5534
      %v5567 = vmul.f32 %v4543, %v5535
      %v5568 = vmul.f32 %v4544, %v5536
      %v5569 = vmul.f32 %v4545, %v5537
      %v5570 = vmul.f32 %v4546, %v5538
      %v5571 = vmul.f32 %v4547, %v5539
      %v5572 = vmul.f32 %v4548, %v5540
      %v5573 = vmul.f32 %v4549, %v5541
      %v5574 = vmul.f32 %v4550, %v5542
      %v5575 = vmul.f32 %v4551, %v5543
      %v5576 = vmul.f32 %v4552, %v5544
      %v5577 = vmul.f32 %v4553, %v5545
      %v5578 = vmul.f32 %v4554, %v5546
      %v5579 = vmul.f32 %v4555, %v5547
      %s5580 = scalar_lea.vmem %s2, 384
      %v5581 = vld [vmem:[%s5580] sm:$0xff]
      %v5582 = vld [vmem:[%s5580 + $0x8] sm:$0xff]
      %v5583 = vld [vmem:[%s5580 + $0x10] sm:$0xff]
      %v5584 = vld [vmem:[%s5580 + $0x18] sm:$0xff]
      %v5585 = vld [vmem:[%s5580 + $0x20] sm:$0xff]
      %v5586 = vld [vmem:[%s5580 + $0x28] sm:$0xff]
      %v5587 = vld [vmem:[%s5580 + $0x30] sm:$0xff]
      %v5588 = vld [vmem:[%s5580 + $0x38] sm:$0xff]
      %v5589 = vld [vmem:[%s5580 + $0x40] sm:$0xff]
      %v5590 = vld [vmem:[%s5580 + $0x48] sm:$0xff]
      %v5591 = vld [vmem:[%s5580 + $0x50] sm:$0xff]
      %v5592 = vld [vmem:[%s5580 + $0x58] sm:$0xff]
      %v5593 = vld [vmem:[%s5580 + $0x60] sm:$0xff]
      %v5594 = vld [vmem:[%s5580 + $0x68] sm:$0xff]
      %v5595 = vld [vmem:[%s5580 + $0x70] sm:$0xff]
      %v5596 = vld [vmem:[%s5580 + $0x78] sm:$0xff]
      %v5597 = vld [vmem:[%s3 + $0x4] sm:$0x1]
      %v5598 = vlaneseq
      %v5599 = vshrl.u32 %v5598, 7
      %v5600 = vsub.s32 0, %v5599
      %v5601 = vrot.slane %v5597, %v5600
      %5602 = vmatprep.subr.mxu0 0.0
      %5603 = vmatpush1.msra.mxu0 %v5581
      %5604 = vmatprep.subr.mxu0 0.0
      %5605 = vmatpush1.msra.mxu0 %v5582
      %5606 = vmatprep.subr.mxu0 0.0
      %5607 = vmatpush1.msra.mxu0 %v5583
      %5608 = vmatprep.subr.mxu0 0.0
      %5609 = vmatpush1.msra.mxu0 %v5584
      %5610 = vmatprep.subr.mxu0 0.0
      %5611 = vmatpush1.msra.mxu0 %v5585
      %5612 = vmatprep.subr.mxu0 0.0
      %5613 = vmatpush1.msra.mxu0 %v5586
      %5614 = vmatprep.subr.mxu0 0.0
      %5615 = vmatpush1.msra.mxu0 %v5587
      %5616 = vmatprep.subr.mxu0 0.0
      %5617 = vmatpush1.msra.mxu0 %v5588
      %5618 = vmatprep.subr.mxu0 0.0
      %5619 = vmatpush1.msra.mxu0 %v5589
      %5620 = vmatprep.subr.mxu0 0.0
      %5621 = vmatpush1.msra.mxu0 %v5590
      %5622 = vmatprep.subr.mxu0 0.0
      %5623 = vmatpush1.msra.mxu0 %v5591
      %5624 = vmatprep.subr.mxu0 0.0
      %5625 = vmatpush1.msra.mxu0 %v5592
      %5626 = vmatprep.subr.mxu0 0.0
      %5627 = vmatpush1.msra.mxu0 %v5593
      %5628 = vmatprep.subr.mxu0 0.0
      %5629 = vmatpush1.msra.mxu0 %v5594
      %5630 = vmatprep.subr.mxu0 0.0
      %5631 = vmatpush1.msra.mxu0 %v5595
      %5632 = vmatprep.subr.mxu0 0.0
      %5633 = vmatpush1.msra.mxu0 %v5596
      %5634 = vmatprep.subr.mxu0 0.0
      %5635 = vmatpush1.msra.mxu0 0.0
      %5636 = vmatprep.subr.mxu0 0.0
      %5637 = vmatpush1.msra.mxu0 0.0
      %5638 = vmatprep.subr.mxu0 0.0
      %5639 = vmatpush1.msra.mxu0 0.0
      %5640 = vmatprep.subr.mxu0 0.0
      %5641 = vmatpush1.msra.mxu0 0.0
      %5642 = vmatprep.subr.mxu0 0.0
      %5643 = vmatpush1.msra.mxu0 0.0
      %5644 = vmatprep.subr.mxu0 0.0
      %5645 = vmatpush1.msra.mxu0 0.0
      %5646 = vmatprep.subr.mxu0 0.0
      %5647 = vmatpush1.msra.mxu0 0.0
      %5648 = vmatprep.subr.mxu0 0.0
      %5649 = vmatpush1.msra.mxu0 0.0
      %5650 = vmatprep.subr.mxu0 0.0
      %5651 = vmatpush1.msra.mxu0 0.0
      %5652 = vmatprep.subr.mxu0 0.0
      %5653 = vmatpush1.msra.mxu0 0.0
      %5654 = vmatprep.subr.mxu0 0.0
      %5655 = vmatpush1.msra.mxu0 0.0
      %5656 = vmatprep.subr.mxu0 0.0
      %5657 = vmatpush1.msra.mxu0 0.0
      %5658 = vmatprep.subr.mxu0 0.0
      %5659 = vmatpush1.msra.mxu0 0.0
      %5660 = vmatprep.subr.mxu0 0.0
      %5661 = vmatpush1.msra.mxu0 0.0
      %5662 = vmatprep.subr.mxu0 0.0
      %5663 = vmatpush1.msra.mxu0 0.0
      %5664 = vmatprep.subr.mxu0 0.0
      %5665 = vmatpush1.msra.mxu0 0.0
      %5666 = vmatprep.mubr.f32.mxu0 0.0
      %5667 = vmatmul.mubr.f32.gmra.mrb[0].mxu0 %v5548
      %v5668 = vpop.f32.mrb[0].mxu0
      %v5669 = vadd.f32 %v5601, %v5668
      %v5670 = vpop.f32.mrb[0].mxu0
      %5671 = vmatprep.mubr.f32.mxu0 0.0
      %5672 = vmatmul.mubr.f32.gmra.mrb[0].mxu0 %v5549
      %v5673 = vpop.f32.mrb[0].mxu0
      %v5674 = vadd.f32 %v5601, %v5673
      %v5675 = vpop.f32.mrb[0].mxu0
      %5676 = vmatprep.mubr.f32.mxu0 0.0
      %5677 = vmatmul.mubr.f32.gmra.mrb[0].mxu0 %v5550
      %v5678 = vpop.f32.mrb[0].mxu0
      %v5679 = vadd.f32 %v5601, %v5678
      %v5680 = vpop.f32.mrb[0].mxu0
      %5681 = vmatprep.mubr.f32.mxu0 0.0
      %5682 = vmatmul.mubr.f32.gmra.mrb[0].mxu0 %v5551
      %v5683 = vpop.f32.mrb[0].mxu0
      %v5684 = vadd.f32 %v5601, %v5683
      %v5685 = vpop.f32.mrb[0].mxu0
      %5686 = vmatprep.mubr.f32.mxu0 0.0
      %5687 = vmatmul.mubr.f32.gmra.mrb[0].mxu0 %v5552
      %v5688 = vpop.f32.mrb[0].mxu0
      %v5689 = vadd.f32 %v5601, %v5688
      %v5690 = vpop.f32.mrb[0].mxu0
      %5691 = vmatprep.mubr.f32.mxu0 0.0
      %5692 = vmatmul.mubr.f32.gmra.mrb[0].mxu0 %v5553
      %v5693 = vpop.f32.mrb[0].mxu0
      %v5694 = vadd.f32 %v5601, %v5693
      %v5695 = vpop.f32.mrb[0].mxu0
      %5696 = vmatprep.mubr.f32.mxu0 0.0
      %5697 = vmatmul.mubr.f32.gmra.mrb[0].mxu0 %v5554
      %v5698 = vpop.f32.mrb[0].mxu0
      %v5699 = vadd.f32 %v5601, %v5698
      %v5700 = vpop.f32.mrb[0].mxu0
      %5701 = vmatprep.mubr.f32.mxu0 0.0
      %5702 = vmatmul.mubr.f32.gmra.mrb[0].mxu0 %v5555
      %v5703 = vpop.f32.mrb[0].mxu0
      %v5704 = vadd.f32 %v5601, %v5703
      %v5705 = vpop.f32.mrb[0].mxu0
      %5706 = vmatprep.mubr.f32.mxu0 0.0
      %5707 = vmatmul.mubr.f32.gmra.mrb[0].mxu0 %v5556
      %v5708 = vpop.f32.mrb[0].mxu0
      %v5709 = vadd.f32 %v5601, %v5708
      %v5710 = vpop.f32.mrb[0].mxu0
      %5711 = vmatprep.mubr.f32.mxu0 0.0
      %5712 = vmatmul.mubr.f32.gmra.mrb[0].mxu0 %v5557
      %v5713 = vpop.f32.mrb[0].mxu0
      %v5714 = vadd.f32 %v5601, %v5713
      %v5715 = vpop.f32.mrb[0].mxu0
      %5716 = vmatprep.mubr.f32.mxu0 0.0
      %5717 = vmatmul.mubr.f32.gmra.mrb[0].mxu0 %v5558
      %v5718 = vpop.f32.mrb[0].mxu0
      %v5719 = vadd.f32 %v5601, %v5718
      %v5720 = vpop.f32.mrb[0].mxu0
      %5721 = vmatprep.mubr.f32.mxu0 0.0
      %5722 = vmatmul.mubr.f32.gmra.mrb[0].mxu0 %v5559
      %v5723 = vpop.f32.mrb[0].mxu0
      %v5724 = vadd.f32 %v5601, %v5723
      %v5725 = vpop.f32.mrb[0].mxu0
      %5726 = vmatprep.mubr.f32.mxu0 0.0
      %5727 = vmatmul.mubr.f32.gmra.mrb[0].mxu0 %v5560
      %v5728 = vpop.f32.mrb[0].mxu0
      %v5729 = vadd.f32 %v5601, %v5728
      %v5730 = vpop.f32.mrb[0].mxu0
      %5731 = vmatprep.mubr.f32.mxu0 0.0
      %5732 = vmatmul.mubr.f32.gmra.mrb[0].mxu0 %v5561
      %v5733 = vpop.f32.mrb[0].mxu0
      %v5734 = vadd.f32 %v5601, %v5733
      %v5735 = vpop.f32.mrb[0].mxu0
      %5736 = vmatprep.mubr.f32.mxu0 0.0
      %5737 = vmatmul.mubr.f32.gmra.mrb[0].mxu0 %v5562
      %v5738 = vpop.f32.mrb[0].mxu0
      %v5739 = vadd.f32 %v5601, %v5738
      %v5740 = vpop.f32.mrb[0].mxu0
      %5741 = vmatprep.mubr.f32.mxu0 0.0
      %5742 = vmatmul.mubr.f32.gmra.mrb[0].mxu0 %v5563
      %v5743 = vpop.f32.mrb[0].mxu0
      %v5744 = vadd.f32 %v5601, %v5743
      %v5745 = vpop.f32.mrb[0].mxu0
      %5746 = vmatprep.mubr.f32.mxu0 0.0
      %5747 = vmatmul.mubr.f32.gmra.mrb[0].mxu0 %v5564
      %v5748 = vpop.f32.mrb[0].mxu0
      %v5749 = vadd.f32 %v5601, %v5748
      %v5750 = vpop.f32.mrb[0].mxu0
      %5751 = vmatprep.mubr.f32.mxu0 0.0
      %5752 = vmatmul.mubr.f32.gmra.mrb[0].mxu0 %v5565
      %v5753 = vpop.f32.mrb[0].mxu0
      %v5754 = vadd.f32 %v5601, %v5753
      %v5755 = vpop.f32.mrb[0].mxu0
      %5756 = vmatprep.mubr.f32.mxu0 0.0
      %5757 = vmatmul.mubr.f32.gmra.mrb[0].mxu0 %v5566
      %v5758 = vpop.f32.mrb[0].mxu0
      %v5759 = vadd.f32 %v5601, %v5758
      %v5760 = vpop.f32.mrb[0].mxu0
      %5761 = vmatprep.mubr.f32.mxu0 0.0
      %5762 = vmatmul.mubr.f32.gmra.mrb[0].mxu0 %v5567
      %v5763 = vpop.f32.mrb[0].mxu0
      %v5764 = vadd.f32 %v5601, %v5763
      %v5765 = vpop.f32.mrb[0].mxu0
      %5766 = vmatprep.mubr.f32.mxu0 0.0
      %5767 = vmatmul.mubr.f32.gmra.mrb[0].mxu0 %v5568
      %v5768 = vpop.f32.mrb[0].mxu0
      %v5769 = vadd.f32 %v5601, %v5768
      %v5770 = vpop.f32.mrb[0].mxu0
      %5771 = vmatprep.mubr.f32.mxu0 0.0
      %5772 = vmatmul.mubr.f32.gmra.mrb[0].mxu0 %v5569
      %v5773 = vpop.f32.mrb[0].mxu0
      %v5774 = vadd.f32 %v5601, %v5773
      %v5775 = vpop.f32.mrb[0].mxu0
      %5776 = vmatprep.mubr.f32.mxu0 0.0
      %5777 = vmatmul.mubr.f32.gmra.mrb[0].mxu0 %v5570
      %v5778 = vpop.f32.mrb[0].mxu0
      %v5779 = vadd.f32 %v5601, %v5778
      %v5780 = vpop.f32.mrb[0].mxu0
      %5781 = vmatprep.mubr.f32.mxu0 0.0
      %5782 = vmatmul.mubr.f32.gmra.mrb[0].mxu0 %v5571
      %v5783 = vpop.f32.mrb[0].mxu0
      %v5784 = vadd.f32 %v5601, %v5783
      %v5785 = vpop.f32.mrb[0].mxu0
      %5786 = vmatprep.mubr.f32.mxu0 0.0
      %5787 = vmatmul.mubr.f32.gmra.mrb[0].mxu0 %v5572
      %v5788 = vpop.f32.mrb[0].mxu0
      %v5789 = vadd.f32 %v5601, %v5788
      %v5790 = vpop.f32.mrb[0].mxu0
      %5791 = vmatprep.mubr.f32.mxu0 0.0
      %5792 = vmatmul.mubr.f32.gmra.mrb[0].mxu0 %v5573
      %v5793 = vpop.f32.mrb[0].mxu0
      %v5794 = vadd.f32 %v5601, %v5793
      %v5795 = vpop.f32.mrb[0].mxu0
      %5796 = vmatprep.mubr.f32.mxu0 0.0
      %5797 = vmatmul.mubr.f32.gmra.mrb[0].mxu0 %v5574
      %v5798 = vpop.f32.mrb[0].mxu0
      %v5799 = vadd.f32 %v5601, %v5798
      %v5800 = vpop.f32.mrb[0].mxu0
      %5801 = vmatprep.mubr.f32.mxu0 0.0
      %5802 = vmatmul.mubr.f32.gmra.mrb[0].mxu0 %v5575
      %v5803 = vpop.f32.mrb[0].mxu0
      %v5804 = vadd.f32 %v5601, %v5803
      %v5805 = vpop.f32.mrb[0].mxu0
      %5806 = vmatprep.mubr.f32.mxu0 0.0
      %5807 = vmatmul.mubr.f32.gmra.mrb[0].mxu0 %v5576
      %v5808 = vpop.f32.mrb[0].mxu0
      %v5809 = vadd.f32 %v5601, %v5808
      %v5810 = vpop.f32.mrb[0].mxu0
      %5811 = vmatprep.mubr.f32.mxu0 0.0
      %5812 = vmatmul.mubr.f32.gmra.mrb[0].mxu0 %v5577
      %v5813 = vpop.f32.mrb[0].mxu0
      %v5814 = vadd.f32 %v5601, %v5813
      %v5815 = vpop.f32.mrb[0].mxu0
      %5816 = vmatprep.mubr.f32.mxu0 0.0
      %5817 = vmatmul.mubr.f32.gmra.mrb[0].mxu0 %v5578
      %v5818 = vpop.f32.mrb[0].mxu0
      %v5819 = vadd.f32 %v5601, %v5818
      %v5820 = vpop.f32.mrb[0].mxu0
      %5821 = vmatprep.mubr.f32.mxu0 0.0
      %5822 = vmatmul.mubr.f32.gmra.mrb[0].mxu0 %v5579
      %v5823 = vpop.f32.mrb[0].mxu0
      %v5824 = vadd.f32 %v5601, %v5823
      %v5825 = vpop.f32.mrb[0].mxu0
      %5826 = vdwg.mxu0
      %v5827 = vmul.f32 %v5669, 0.5
      %v5828 = vmul.f32 %v5674, 0.5
      %v5829 = vmul.f32 %v5679, 0.5
      %v5830 = vmul.f32 %v5684, 0.5
      %v5831 = vmul.f32 %v5689, 0.5
      %v5832 = vmul.f32 %v5694, 0.5
      %v5833 = vmul.f32 %v5699, 0.5
      %v5834 = vmul.f32 %v5704, 0.5
      %v5835 = vmul.f32 %v5709, 0.5
      %v5836 = vmul.f32 %v5714, 0.5
      %v5837 = vmul.f32 %v5719, 0.5
      %v5838 = vmul.f32 %v5724, 0.5
      %v5839 = vmul.f32 %v5729, 0.5
      %v5840 = vmul.f32 %v5734, 0.5
      %v5841 = vmul.f32 %v5739, 0.5
      %v5842 = vmul.f32 %v5744, 0.5
      %v5843 = vmul.f32 %v5749, 0.5
      %v5844 = vmul.f32 %v5754, 0.5
      %v5845 = vmul.f32 %v5759, 0.5
      %v5846 = vmul.f32 %v5764, 0.5
      %v5847 = vmul.f32 %v5769, 0.5
      %v5848 = vmul.f32 %v5774, 0.5
      %v5849 = vmul.f32 %v5779, 0.5
      %v5850 = vmul.f32 %v5784, 0.5
      %v5851 = vmul.f32 %v5789, 0.5
      %v5852 = vmul.f32 %v5794, 0.5
      %v5853 = vmul.f32 %v5799, 0.5
      %v5854 = vmul.f32 %v5804, 0.5
      %v5855 = vmul.f32 %v5809, 0.5
      %v5856 = vmul.f32 %v5814, 0.5
      %v5857 = vmul.f32 %v5819, 0.5
      %v5858 = vmul.f32 %v5824, 0.5
      %v5859 = vmul.f32 %v5669, 0.70710677
      %v5860 = vmul.f32 %v5674, 0.70710677
      %v5861 = vmul.f32 %v5679, 0.70710677
      %v5862 = vmul.f32 %v5684, 0.70710677
      %v5863 = vmul.f32 %v5689, 0.70710677
      %v5864 = vmul.f32 %v5694, 0.70710677
      %v5865 = vmul.f32 %v5699, 0.70710677
      %v5866 = vmul.f32 %v5704, 0.70710677
      %v5867 = vmul.f32 %v5709, 0.70710677
      %v5868 = vmul.f32 %v5714, 0.70710677
      %v5869 = vmul.f32 %v5719, 0.70710677
      %v5870 = vmul.f32 %v5724, 0.70710677
      %v5871 = vmul.f32 %v5729, 0.70710677
      %v5872 = vmul.f32 %v5734, 0.70710677
      %v5873 = vmul.f32 %v5739, 0.70710677
      %v5874 = vmul.f32 %v5744, 0.70710677
      %v5875 = vmul.f32 %v5749, 0.70710677
      %v5876 = vmul.f32 %v5754, 0.70710677
      %v5877 = vmul.f32 %v5759, 0.70710677
      %v5878 = vmul.f32 %v5764, 0.70710677
      %v5879 = vmul.f32 %v5769, 0.70710677
      %v5880 = vmul.f32 %v5774, 0.70710677
      %v5881 = vmul.f32 %v5779, 0.70710677
      %v5882 = vmul.f32 %v5784, 0.70710677
      %v5883 = vmul.f32 %v5789, 0.70710677
      %v5884 = vmul.f32 %v5794, 0.70710677
      %v5885 = vmul.f32 %v5799, 0.70710677
      %v5886 = vmul.f32 %v5804, 0.70710677
      %v5887 = vmul.f32 %v5809, 0.70710677
      %v5888 = vmul.f32 %v5814, 0.70710677
      %v5889 = vmul.f32 %v5819, 0.70710677
      %v5890 = vmul.f32 %v5824, 0.70710677
      %v5891 = vmax.f32 %v5859, -3.832507
      %v5892 = vmax.f32 %v5860, -3.832507
      %v5893 = vmax.f32 %v5861, -3.832507
      %v5894 = vmax.f32 %v5862, -3.832507
      %v5895 = vmax.f32 %v5863, -3.832507
      %v5896 = vmax.f32 %v5864, -3.832507
      %v5897 = vmax.f32 %v5865, -3.832507
      %v5898 = vmax.f32 %v5866, -3.832507
      %v5899 = vmax.f32 %v5867, -3.832507
      %v5900 = vmax.f32 %v5868, -3.832507
      %v5901 = vmax.f32 %v5869, -3.832507
      %v5902 = vmax.f32 %v5870, -3.832507
      %v5903 = vmax.f32 %v5871, -3.832507
      %v5904 = vmax.f32 %v5872, -3.832507
      %v5905 = vmax.f32 %v5873, -3.832507
      %v5906 = vmax.f32 %v5874, -3.832507
      %v5907 = vmax.f32 %v5875, -3.832507
      %v5908 = vmax.f32 %v5876, -3.832507
      %v5909 = vmax.f32 %v5877, -3.832507
      %v5910 = vmax.f32 %v5878, -3.832507
      %v5911 = vmax.f32 %v5879, -3.832507
      %v5912 = vmax.f32 %v5880, -3.832507
      %v5913 = vmax.f32 %v5881, -3.832507
      %v5914 = vmax.f32 %v5882, -3.832507
      %v5915 = vmax.f32 %v5883, -3.832507
      %v5916 = vmax.f32 %v5884, -3.832507
      %v5917 = vmax.f32 %v5885, -3.832507
      %v5918 = vmax.f32 %v5886, -3.832507
      %v5919 = vmax.f32 %v5887, -3.832507
      %v5920 = vmax.f32 %v5888, -3.832507
      %v5921 = vmax.f32 %v5889, -3.832507
      %v5922 = vmax.f32 %v5890, -3.832507
      %v5923 = vmin.f32 %v5891, 3.832507
      %v5924 = vmin.f32 %v5892, 3.832507
      %v5925 = vmin.f32 %v5893, 3.832507
      %v5926 = vmin.f32 %v5894, 3.832507
      %v5927 = vmin.f32 %v5895, 3.832507
      %v5928 = vmin.f32 %v5896, 3.832507
      %v5929 = vmin.f32 %v5897, 3.832507
      %v5930 = vmin.f32 %v5898, 3.832507
      %v5931 = vmin.f32 %v5899, 3.832507
      %v5932 = vmin.f32 %v5900, 3.832507
      %v5933 = vmin.f32 %v5901, 3.832507
      %v5934 = vmin.f32 %v5902, 3.832507
      %v5935 = vmin.f32 %v5903, 3.832507
      %v5936 = vmin.f32 %v5904, 3.832507
      %v5937 = vmin.f32 %v5905, 3.832507
      %v5938 = vmin.f32 %v5906, 3.832507
      %v5939 = vmin.f32 %v5907, 3.832507
      %v5940 = vmin.f32 %v5908, 3.832507
      %v5941 = vmin.f32 %v5909, 3.832507
      %v5942 = vmin.f32 %v5910, 3.832507
      %v5943 = vmin.f32 %v5911, 3.832507
      %v5944 = vmin.f32 %v5912, 3.832507
      %v5945 = vmin.f32 %v5913, 3.832507
      %v5946 = vmin.f32 %v5914, 3.832507
      %v5947 = vmin.f32 %v5915, 3.832507
      %v5948 = vmin.f32 %v5916, 3.832507
      %v5949 = vmin.f32 %v5917, 3.832507
      %v5950 = vmin.f32 %v5918, 3.832507
      %v5951 = vmin.f32 %v5919, 3.832507
      %v5952 = vmin.f32 %v5920, 3.832507
      %v5953 = vmin.f32 %v5921, 3.832507
      %v5954 = vmin.f32 %v5922, 3.832507
      %v5955 = vmul.f32 %v5923, %v5923
      %v5956 = vmul.f32 %v5924, %v5924
      %v5957 = vmul.f32 %v5925, %v5925
      %v5958 = vmul.f32 %v5926, %v5926
      %v5959 = vmul.f32 %v5927, %v5927
      %v5960 = vmul.f32 %v5928, %v5928
      %v5961 = vmul.f32 %v5929, %v5929
      %v5962 = vmul.f32 %v5930, %v5930
      %v5963 = vmul.f32 %v5931, %v5931
      %v5964 = vmul.f32 %v5932, %v5932
      %v5965 = vmul.f32 %v5933, %v5933
      %v5966 = vmul.f32 %v5934, %v5934
      %v5967 = vmul.f32 %v5935, %v5935
      %v5968 = vmul.f32 %v5936, %v5936
      %v5969 = vmul.f32 %v5937, %v5937
      %v5970 = vmul.f32 %v5938, %v5938
      %v5971 = vmul.f32 %v5939, %v5939
      %v5972 = vmul.f32 %v5940, %v5940
      %v5973 = vmul.f32 %v5941, %v5941
      %v5974 = vmul.f32 %v5942, %v5942
      %v5975 = vmul.f32 %v5943, %v5943
      %v5976 = vmul.f32 %v5944, %v5944
      %v5977 = vmul.f32 %v5945, %v5945
      %v5978 = vmul.f32 %v5946, %v5946
      %v5979 = vmul.f32 %v5947, %v5947
      %v5980 = vmul.f32 %v5948, %v5948
      %v5981 = vmul.f32 %v5949, %v5949
      %v5982 = vmul.f32 %v5950, %v5950
      %v5983 = vmul.f32 %v5951, %v5951
      %v5984 = vmul.f32 %v5952, %v5952
      %v5985 = vmul.f32 %v5953, %v5953
      %v5986 = vmul.f32 %v5954, %v5954
      %v5987 = vmul.f32 %v5955, -2.7261424e-10
      %v5988 = vmul.f32 %v5956, -2.7261424e-10
      %v5989 = vmul.f32 %v5957, -2.7261424e-10
      %v5990 = vmul.f32 %v5958, -2.7261424e-10
      %v5991 = vmul.f32 %v5959, -2.7261424e-10
      %v5992 = vmul.f32 %v5960, -2.7261424e-10
      %v5993 = vmul.f32 %v5961, -2.7261424e-10
      %v5994 = vmul.f32 %v5962, -2.7261424e-10
      %v5995 = vmul.f32 %v5963, -2.7261424e-10
      %v5996 = vmul.f32 %v5964, -2.7261424e-10
      %v5997 = vmul.f32 %v5965, -2.7261424e-10
      %v5998 = vmul.f32 %v5966, -2.7261424e-10
      %v5999 = vmul.f32 %v5967, -2.7261424e-10
      %v6000 = vmul.f32 %v5968, -2.7261424e-10
      %v6001 = vmul.f32 %v5969, -2.7261424e-10
      %v6002 = vmul.f32 %v5970, -2.7261424e-10
      %v6003 = vmul.f32 %v5971, -2.7261424e-10
      %v6004 = vmul.f32 %v5972, -2.7261424e-10
      %v6005 = vmul.f32 %v5973, -2.7261424e-10
      %v6006 = vmul.f32 %v5974, -2.7261424e-10
      %v6007 = vmul.f32 %v5975, -2.7261424e-10
      %v6008 = vmul.f32 %v5976, -2.7261424e-10
      %v6009 = vmul.f32 %v5977, -2.7261424e-10
      %v6010 = vmul.f32 %v5978, -2.7261424e-10
      %v6011 = vmul.f32 %v5979, -2.7261424e-10
      %v6012 = vmul.f32 %v5980, -2.7261424e-10
      %v6013 = vmul.f32 %v5981, -2.7261424e-10
      %v6014 = vmul.f32 %v5982, -2.7261424e-10
      %v6015 = vmul.f32 %v5983, -2.7261424e-10
      %v6016 = vmul.f32 %v5984, -2.7261424e-10
      %v6017 = vmul.f32 %v5985, -2.7261424e-10
      %v6018 = vmul.f32 %v5986, -2.7261424e-10
      %v6019 = vadd.f32 %v5987, 2.7706815e-08
      %v6020 = vadd.f32 %v5988, 2.7706815e-08
      %v6021 = vadd.f32 %v5989, 2.7706815e-08
      %v6022 = vadd.f32 %v5990, 2.7706815e-08
      %v6023 = vadd.f32 %v5991, 2.7706815e-08
      %v6024 = vadd.f32 %v5992, 2.7706815e-08
      %v6025 = vadd.f32 %v5993, 2.7706815e-08
      %v6026 = vadd.f32 %v5994, 2.7706815e-08
      %v6027 = vadd.f32 %v5995, 2.7706815e-08
      %v6028 = vadd.f32 %v5996, 2.7706815e-08
      %v6029 = vadd.f32 %v5997, 2.7706815e-08
      %v6030 = vadd.f32 %v5998, 2.7706815e-08
      %v6031 = vadd.f32 %v5999, 2.7706815e-08
      %v6032 = vadd.f32 %v6000, 2.7706815e-08
      %v6033 = vadd.f32 %v6001, 2.7706815e-08
      %v6034 = vadd.f32 %v6002, 2.7706815e-08
      %v6035 = vadd.f32 %v6003, 2.7706815e-08
      %v6036 = vadd.f32 %v6004, 2.7706815e-08
      %v6037 = vadd.f32 %v6005, 2.7706815e-08
      %v6038 = vadd.f32 %v6006, 2.7706815e-08
      %v6039 = vadd.f32 %v6007, 2.7706815e-08
      %v6040 = vadd.f32 %v6008, 2.7706815e-08
      %v6041 = vadd.f32 %v6009, 2.7706815e-08
      %v6042 = vadd.f32 %v6010, 2.7706815e-08
      %v6043 = vadd.f32 %v6011, 2.7706815e-08
      %v6044 = vadd.f32 %v6012, 2.7706815e-08
      %v6045 = vadd.f32 %v6013, 2.7706815e-08
      %v6046 = vadd.f32 %v6014, 2.7706815e-08
      %v6047 = vadd.f32 %v6015, 2.7706815e-08
      %v6048 = vadd.f32 %v6016, 2.7706815e-08
      %v6049 = vadd.f32 %v6017, 2.7706815e-08
      %v6050 = vadd.f32 %v6018, 2.7706815e-08
      %v6051 = vmul.f32 %v6019, %v5955
      %v6052 = vmul.f32 %v6020, %v5956
      %v6053 = vmul.f32 %v6021, %v5957
      %v6054 = vmul.f32 %v6022, %v5958
      %v6055 = vmul.f32 %v6023, %v5959
      %v6056 = vmul.f32 %v6024, %v5960
      %v6057 = vmul.f32 %v6025, %v5961
      %v6058 = vmul.f32 %v6026, %v5962
      %v6059 = vmul.f32 %v6027, %v5963
      %v6060 = vmul.f32 %v6028, %v5964
      %v6061 = vmul.f32 %v6029, %v5965
      %v6062 = vmul.f32 %v6030, %v5966
      %v6063 = vmul.f32 %v6031, %v5967
      %v6064 = vmul.f32 %v6032, %v5968
      %v6065 = vmul.f32 %v6033, %v5969
      %v6066 = vmul.f32 %v6034, %v5970
      %v6067 = vmul.f32 %v6035, %v5971
      %v6068 = vmul.f32 %v6036, %v5972
      %v6069 = vmul.f32 %v6037, %v5973
      %v6070 = vmul.f32 %v6038, %v5974
      %v6071 = vmul.f32 %v6039, %v5975
      %v6072 = vmul.f32 %v6040, %v5976
      %v6073 = vmul.f32 %v6041, %v5977
      %v6074 = vmul.f32 %v6042, %v5978
      %v6075 = vmul.f32 %v6043, %v5979
      %v6076 = vmul.f32 %v6044, %v5980
      %v6077 = vmul.f32 %v6045, %v5981
      %v6078 = vmul.f32 %v6046, %v5982
      %v6079 = vmul.f32 %v6047, %v5983
      %v6080 = vmul.f32 %v6048, %v5984
      %v6081 = vmul.f32 %v6049, %v5985
      %v6082 = vmul.f32 %v6050, %v5986
      %v6083 = vadd.f32 %v6051, -2.101024e-06
      %v6084 = vadd.f32 %v6052, -2.101024e-06
      %v6085 = vadd.f32 %v6053, -2.101024e-06
      %v6086 = vadd.f32 %v6054, -2.101024e-06
      %v6087 = vadd.f32 %v6055, -2.101024e-06
      %v6088 = vadd.f32 %v6056, -2.101024e-06
      %v6089 = vadd.f32 %v6057, -2.101024e-06
      %v6090 = vadd.f32 %v6058, -2.101024e-06
      %v6091 = vadd.f32 %v6059, -2.101024e-06
      %v6092 = vadd.f32 %v6060, -2.101024e-06
      %v6093 = vadd.f32 %v6061, -2.101024e-06
      %v6094 = vadd.f32 %v6062, -2.101024e-06
      %v6095 = vadd.f32 %v6063, -2.101024e-06
      %v6096 = vadd.f32 %v6064, -2.101024e-06
      %v6097 = vadd.f32 %v6065, -2.101024e-06
      %v6098 = vadd.f32 %v6066, -2.101024e-06
      %v6099 = vadd.f32 %v6067, -2.101024e-06
      %v6100 = vadd.f32 %v6068, -2.101024e-06
      %v6101 = vadd.f32 %v6069, -2.101024e-06
      %v6102 = vadd.f32 %v6070, -2.101024e-06
      %v6103 = vadd.f32 %v6071, -2.101024e-06
      %v6104 = vadd.f32 %v6072, -2.101024e-06
      %v6105 = vadd.f32 %v6073, -2.101024e-06
      %v6106 = vadd.f32 %v6074, -2.101024e-06
      %v6107 = vadd.f32 %v6075, -2.101024e-06
      %v6108 = vadd.f32 %v6076, -2.101024e-06
      %v6109 = vadd.f32 %v6077, -2.101024e-06
      %v6110 = vadd.f32 %v6078, -2.101024e-06
      %v6111 = vadd.f32 %v6079, -2.101024e-06
      %v6112 = vadd.f32 %v6080, -2.101024e-06
      %v6113 = vadd.f32 %v6081, -2.101024e-06
      %v6114 = vadd.f32 %v6082, -2.101024e-06
      %v6115 = vmul.f32 %v6083, %v5955
      %v6116 = vmul.f32 %v6084, %v5956
      %v6117 = vmul.f32 %v6085, %v5957
      %v6118 = vmul.f32 %v6086, %v5958
      %v6119 = vmul.f32 %v6087, %v5959
      %v6120 = vmul.f32 %v6088, %v5960
      %v6121 = vmul.f32 %v6089, %v5961
      %v6122 = vmul.f32 %v6090, %v5962
      %v6123 = vmul.f32 %v6091, %v5963
      %v6124 = vmul.f32 %v6092, %v5964
      %v6125 = vmul.f32 %v6093, %v5965
      %v6126 = vmul.f32 %v6094, %v5966
      %v6127 = vmul.f32 %v6095, %v5967
      %v6128 = vmul.f32 %v6096, %v5968
      %v6129 = vmul.f32 %v6097, %v5969
      %v6130 = vmul.f32 %v6098, %v5970
      %v6131 = vmul.f32 %v6099, %v5971
      %v6132 = vmul.f32 %v6100, %v5972
      %v6133 = vmul.f32 %v6101, %v5973
      %v6134 = vmul.f32 %v6102, %v5974
      %v6135 = vmul.f32 %v6103, %v5975
      %v6136 = vmul.f32 %v6104, %v5976
      %v6137 = vmul.f32 %v6105, %v5977
      %v6138 = vmul.f32 %v6106, %v5978
      %v6139 = vmul.f32 %v6107, %v5979
      %v6140 = vmul.f32 %v6108, %v5980
      %v6141 = vmul.f32 %v6109, %v5981
      %v6142 = vmul.f32 %v6110, %v5982
      %v6143 = vmul.f32 %v6111, %v5983
      %v6144 = vmul.f32 %v6112, %v5984
      %v6145 = vmul.f32 %v6113, %v5985
      %v6146 = vmul.f32 %v6114, %v5986
      %v6147 = vadd.f32 %v6115, -5.6925062e-05
      %v6148 = vadd.f32 %v6116, -5.6925062e-05
      %v6149 = vadd.f32 %v6117, -5.6925062e-05
      %v6150 = vadd.f32 %v6118, -5.6925062e-05
      %v6151 = vadd.f32 %v6119, -5.6925062e-05
      %v6152 = vadd.f32 %v6120, -5.6925062e-05
      %v6153 = vadd.f32 %v6121, -5.6925062e-05
      %v6154 = vadd.f32 %v6122, -5.6925062e-05
      %v6155 = vadd.f32 %v6123, -5.6925062e-05
      %v6156 = vadd.f32 %v6124, -5.6925062e-05
      %v6157 = vadd.f32 %v6125, -5.6925062e-05
      %v6158 = vadd.f32 %v6126, -5.6925062e-05
      %v6159 = vadd.f32 %v6127, -5.6925062e-05
      %v6160 = vadd.f32 %v6128, -5.6925062e-05
      %v6161 = vadd.f32 %v6129, -5.6925062e-05
      %v6162 = vadd.f32 %v6130, -5.6925062e-05
      %v6163 = vadd.f32 %v6131, -5.6925062e-05
      %v6164 = vadd.f32 %v6132, -5.6925062e-05
      %v6165 = vadd.f32 %v6133, -5.6925062e-05
      %v6166 = vadd.f32 %v6134, -5.6925062e-05
      %v6167 = vadd.f32 %v6135, -5.6925062e-05
      %v6168 = vadd.f32 %v6136, -5.6925062e-05
      %v6169 = vadd.f32 %v6137, -5.6925062e-05
      %v6170 = vadd.f32 %v6138, -5.6925062e-05
      %v6171 = vadd.f32 %v6139, -5.6925062e-05
      %v6172 = vadd.f32 %v6140, -5.6925062e-05
      %v6173 = vadd.f32 %v6141, -5.6925062e-05
      %v6174 = vadd.f32 %v6142, -5.6925062e-05
      %v6175 = vadd.f32 %v6143, -5.6925062e-05
      %v6176 = vadd.f32 %v6144, -5.6925062e-05
      %v6177 = vadd.f32 %v6145, -5.6925062e-05
      %v6178 = vadd.f32 %v6146, -5.6925062e-05
      %v6179 = vmul.f32 %v6147, %v5955
      %v6180 = vmul.f32 %v6148, %v5956
      %v6181 = vmul.f32 %v6149, %v5957
      %v6182 = vmul.f32 %v6150, %v5958
      %v6183 = vmul.f32 %v6151, %v5959
      %v6184 = vmul.f32 %v6152, %v5960
      %v6185 = vmul.f32 %v6153, %v5961
      %v6186 = vmul.f32 %v6154, %v5962
      %v6187 = vmul.f32 %v6155, %v5963
      %v6188 = vmul.f32 %v6156, %v5964
      %v6189 = vmul.f32 %v6157, %v5965
      %v6190 = vmul.f32 %v6158, %v5966
      %v6191 = vmul.f32 %v6159, %v5967
      %v6192 = vmul.f32 %v6160, %v5968
      %v6193 = vmul.f32 %v6161, %v5969
      %v6194 = vmul.f32 %v6162, %v5970
      %v6195 = vmul.f32 %v6163, %v5971
      %v6196 = vmul.f32 %v6164, %v5972
      %v6197 = vmul.f32 %v6165, %v5973
      %v6198 = vmul.f32 %v6166, %v5974
      %v6199 = vmul.f32 %v6167, %v5975
      %v6200 = vmul.f32 %v6168, %v5976
      %v6201 = vmul.f32 %v6169, %v5977
      %v6202 = vmul.f32 %v6170, %v5978
      %v6203 = vmul.f32 %v6171, %v5979
      %v6204 = vmul.f32 %v6172, %v5980
      %v6205 = vmul.f32 %v6173, %v5981
      %v6206 = vmul.f32 %v6174, %v5982
      %v6207 = vmul.f32 %v6175, %v5983
      %v6208 = vmul.f32 %v6176, %v5984
      %v6209 = vmul.f32 %v6177, %v5985
      %v6210 = vmul.f32 %v6178, %v5986
      %v6211 = vadd.f32 %v6179, -0.00073499064
      %v6212 = vadd.f32 %v6180, -0.00073499064
      %v6213 = vadd.f32 %v6181, -0.00073499064
      %v6214 = vadd.f32 %v6182, -0.00073499064
      %v6215 = vadd.f32 %v6183, -0.00073499064
      %v6216 = vadd.f32 %v6184, -0.00073499064
      %v6217 = vadd.f32 %v6185, -0.00073499064
      %v6218 = vadd.f32 %v6186, -0.00073499064
      %v6219 = vadd.f32 %v6187, -0.00073499064
      %v6220 = vadd.f32 %v6188, -0.00073499064
      %v6221 = vadd.f32 %v6189, -0.00073499064
      %v6222 = vadd.f32 %v6190, -0.00073499064
      %v6223 = vadd.f32 %v6191, -0.00073499064
      %v6224 = vadd.f32 %v6192, -0.00073499064
      %v6225 = vadd.f32 %v6193, -0.00073499064
      %v6226 = vadd.f32 %v6194, -0.00073499064
      %v6227 = vadd.f32 %v6195, -0.00073499064
      %v6228 = vadd.f32 %v6196, -0.00073499064
      %v6229 = vadd.f32 %v6197, -0.00073499064
      %v6230 = vadd.f32 %v6198, -0.00073499064
      %v6231 = vadd.f32 %v6199, -0.00073499064
      %v6232 = vadd.f32 %v6200, -0.00073499064
      %v6233 = vadd.f32 %v6201, -0.00073499064
      %v6234 = vadd.f32 %v6202, -0.00073499064
      %v6235 = vadd.f32 %v6203, -0.00073499064
      %v6236 = vadd.f32 %v6204, -0.00073499064
      %v6237 = vadd.f32 %v6205, -0.00073499064
      %v6238 = vadd.f32 %v6206, -0.00073499064
      %v6239 = vadd.f32 %v6207, -0.00073499064
      %v6240 = vadd.f32 %v6208, -0.00073499064
      %v6241 = vadd.f32 %v6209, -0.00073499064
      %v6242 = vadd.f32 %v6210, -0.00073499064
      %v6243 = vmul.f32 %v6211, %v5955
      %v6244 = vmul.f32 %v6212, %v5956
      %v6245 = vmul.f32 %v6213, %v5957
      %v6246 = vmul.f32 %v6214, %v5958
      %v6247 = vmul.f32 %v6215, %v5959
      %v6248 = vmul.f32 %v6216, %v5960
      %v6249 = vmul.f32 %v6217, %v5961
      %v6250 = vmul.f32 %v6218, %v5962
      %v6251 = vmul.f32 %v6219, %v5963
      %v6252 = vmul.f32 %v6220, %v5964
      %v6253 = vmul.f32 %v6221, %v5965
      %v6254 = vmul.f32 %v6222, %v5966
      %v6255 = vmul.f32 %v6223, %v5967
      %v6256 = vmul.f32 %v6224, %v5968
      %v6257 = vmul.f32 %v6225, %v5969
      %v6258 = vmul.f32 %v6226, %v5970
      %v6259 = vmul.f32 %v6227, %v5971
      %v6260 = vmul.f32 %v6228, %v5972
      %v6261 = vmul.f32 %v6229, %v5973
      %v6262 = vmul.f32 %v6230, %v5974
      %v6263 = vmul.f32 %v6231, %v5975
      %v6264 = vmul.f32 %v6232, %v5976
      %v6265 = vmul.f32 %v6233, %v5977
      %v6266 = vmul.f32 %v6234, %v5978
      %v6267 = vmul.f32 %v6235, %v5979
      %v6268 = vmul.f32 %v6236, %v5980
      %v6269 = vmul.f32 %v6237, %v5981
      %v6270 = vmul.f32 %v6238, %v5982
      %v6271 = vmul.f32 %v6239, %v5983
      %v6272 = vmul.f32 %v6240, %v5984
      %v6273 = vmul.f32 %v6241, %v5985
      %v6274 = vmul.f32 %v6242, %v5986
      %v6275 = vadd.f32 %v6243, -0.0029546
      %v6276 = vadd.f32 %v6244, -0.0029546
      %v6277 = vadd.f32 %v6245, -0.0029546
      %v6278 = vadd.f32 %v6246, -0.0029546
      %v6279 = vadd.f32 %v6247, -0.0029546
      %v6280 = vadd.f32 %v6248, -0.0029546
      %v6281 = vadd.f32 %v6249, -0.0029546
      %v6282 = vadd.f32 %v6250, -0.0029546
      %v6283 = vadd.f32 %v6251, -0.0029546
      %v6284 = vadd.f32 %v6252, -0.0029546
      %v6285 = vadd.f32 %v6253, -0.0029546
      %v6286 = vadd.f32 %v6254, -0.0029546
      %v6287 = vadd.f32 %v6255, -0.0029546
      %v6288 = vadd.f32 %v6256, -0.0029546
      %v6289 = vadd.f32 %v6257, -0.0029546
      %v6290 = vadd.f32 %v6258, -0.0029546
      %v6291 = vadd.f32 %v6259, -0.0029546
      %v6292 = vadd.f32 %v6260, -0.0029546
      %v6293 = vadd.f32 %v6261, -0.0029546
      %v6294 = vadd.f32 %v6262, -0.0029546
      %v6295 = vadd.f32 %v6263, -0.0029546
      %v6296 = vadd.f32 %v6264, -0.0029546
      %v6297 = vadd.f32 %v6265, -0.0029546
      %v6298 = vadd.f32 %v6266, -0.0029546
      %v6299 = vadd.f32 %v6267, -0.0029546
      %v6300 = vadd.f32 %v6268, -0.0029546
      %v6301 = vadd.f32 %v6269, -0.0029546
      %v6302 = vadd.f32 %v6270, -0.0029546
      %v6303 = vadd.f32 %v6271, -0.0029546
      %v6304 = vadd.f32 %v6272, -0.0029546
      %v6305 = vadd.f32 %v6273, -0.0029546
      %v6306 = vadd.f32 %v6274, -0.0029546
      %v6307 = vmul.f32 %v6275, %v5955
      %v6308 = vmul.f32 %v6276, %v5956
      %v6309 = vmul.f32 %v6277, %v5957
      %v6310 = vmul.f32 %v6278, %v5958
      %v6311 = vmul.f32 %v6279, %v5959
      %v6312 = vmul.f32 %v6280, %v5960
      %v6313 = vmul.f32 %v6281, %v5961
      %v6314 = vmul.f32 %v6282, %v5962
      %v6315 = vmul.f32 %v6283, %v5963
      %v6316 = vmul.f32 %v6284, %v5964
      %v6317 = vmul.f32 %v6285, %v5965
      %v6318 = vmul.f32 %v6286, %v5966
      %v6319 = vmul.f32 %v6287, %v5967
      %v6320 = vmul.f32 %v6288, %v5968
      %v6321 = vmul.f32 %v6289, %v5969
      %v6322 = vmul.f32 %v6290, %v5970
      %v6323 = vmul.f32 %v6291, %v5971
      %v6324 = vmul.f32 %v6292, %v5972
      %v6325 = vmul.f32 %v6293, %v5973
      %v6326 = vmul.f32 %v6294, %v5974
      %v6327 = vmul.f32 %v6295, %v5975
      %v6328 = vmul.f32 %v6296, %v5976
      %v6329 = vmul.f32 %v6297, %v5977
      %v6330 = vmul.f32 %v6298, %v5978
      %v6331 = vmul.f32 %v6299, %v5979
      %v6332 = vmul.f32 %v6300, %v5980
      %v6333 = vmul.f32 %v6301, %v5981
      %v6334 = vmul.f32 %v6302, %v5982
      %v6335 = vmul.f32 %v6303, %v5983
      %v6336 = vmul.f32 %v6304, %v5984
      %v6337 = vmul.f32 %v6305, %v5985
      %v6338 = vmul.f32 %v6306, %v5986
      %v6339 = vadd.f32 %v6307, -0.016096033
      %v6340 = vadd.f32 %v6308, -0.016096033
      %v6341 = vadd.f32 %v6309, -0.016096033
      %v6342 = vadd.f32 %v6310, -0.016096033
      %v6343 = vadd.f32 %v6311, -0.016096033
      %v6344 = vadd.f32 %v6312, -0.016096033
      %v6345 = vadd.f32 %v6313, -0.016096033
      %v6346 = vadd.f32 %v6314, -0.016096033
      %v6347 = vadd.f32 %v6315, -0.016096033
      %v6348 = vadd.f32 %v6316, -0.016096033
      %v6349 = vadd.f32 %v6317, -0.016096033
      %v6350 = vadd.f32 %v6318, -0.016096033
      %v6351 = vadd.f32 %v6319, -0.016096033
      %v6352 = vadd.f32 %v6320, -0.016096033
      %v6353 = vadd.f32 %v6321, -0.016096033
      %v6354 = vadd.f32 %v6322, -0.016096033
      %v6355 = vadd.f32 %v6323, -0.016096033
      %v6356 = vadd.f32 %v6324, -0.016096033
      %v6357 = vadd.f32 %v6325, -0.016096033
      %v6358 = vadd.f32 %v6326, -0.016096033
      %v6359 = vadd.f32 %v6327, -0.016096033
      %v6360 = vadd.f32 %v6328, -0.016096033
      %v6361 = vadd.f32 %v6329, -0.016096033
      %v6362 = vadd.f32 %v6330, -0.016096033
      %v6363 = vadd.f32 %v6331, -0.016096033
      %v6364 = vadd.f32 %v6332, -0.016096033
      %v6365 = vadd.f32 %v6333, -0.016096033
      %v6366 = vadd.f32 %v6334, -0.016096033
      %v6367 = vadd.f32 %v6335, -0.016096033
      %v6368 = vadd.f32 %v6336, -0.016096033
      %v6369 = vadd.f32 %v6337, -0.016096033
      %v6370 = vadd.f32 %v6338, -0.016096033
      %v6371 = vmul.f32 %v5955, -1.45660715e-05
      %v6372 = vmul.f32 %v5956, -1.45660715e-05
      %v6373 = vmul.f32 %v5957, -1.45660715e-05
      %v6374 = vmul.f32 %v5958, -1.45660715e-05
      %v6375 = vmul.f32 %v5959, -1.45660715e-05
      %v6376 = vmul.f32 %v5960, -1.45660715e-05
      %v6377 = vmul.f32 %v5961, -1.45660715e-05
      %v6378 = vmul.f32 %v5962, -1.45660715e-05
      %v6379 = vmul.f32 %v5963, -1.45660715e-05
      %v6380 = vmul.f32 %v5964, -1.45660715e-05
      %v6381 = vmul.f32 %v5965, -1.45660715e-05
      %v6382 = vmul.f32 %v5966, -1.45660715e-05
      %v6383 = vmul.f32 %v5967, -1.45660715e-05
      %v6384 = vmul.f32 %v5968, -1.45660715e-05
      %v6385 = vmul.f32 %v5969, -1.45660715e-05
      %v6386 = vmul.f32 %v5970, -1.45660715e-05
      %v6387 = vmul.f32 %v5971, -1.45660715e-05
      %v6388 = vmul.f32 %v5972, -1.45660715e-05
      %v6389 = vmul.f32 %v5973, -1.45660715e-05
      %v6390 = vmul.f32 %v5974, -1.45660715e-05
      %v6391 = vmul.f32 %v5975, -1.45660715e-05
      %v6392 = vmul.f32 %v5976, -1.45660715e-05
      %v6393 = vmul.f32 %v5977, -1.45660715e-05
      %v6394 = vmul.f32 %v5978, -1.45660715e-05
      %v6395 = vmul.f32 %v5979, -1.45660715e-05
      %v6396 = vmul.f32 %v5980, -1.45660715e-05
      %v6397 = vmul.f32 %v5981, -1.45660715e-05
      %v6398 = vmul.f32 %v5982, -1.45660715e-05
      %v6399 = vmul.f32 %v5983, -1.45660715e-05
      %v6400 = vmul.f32 %v5984, -1.45660715e-05
      %v6401 = vmul.f32 %v5985, -1.45660715e-05
      %v6402 = vmul.f32 %v5986, -1.45660715e-05
      %v6403 = vadd.f32 %v6371, -0.00021337405
      %v6404 = vadd.f32 %v6372, -0.00021337405
      %v6405 = vadd.f32 %v6373, -0.00021337405
      %v6406 = vadd.f32 %v6374, -0.00021337405
      %v6407 = vadd.f32 %v6375, -0.00021337405
      %v6408 = vadd.f32 %v6376, -0.00021337405
      %v6409 = vadd.f32 %v6377, -0.00021337405
      %v6410 = vadd.f32 %v6378, -0.00021337405
      %v6411 = vadd.f32 %v6379, -0.00021337405
      %v6412 = vadd.f32 %v6380, -0.00021337405
      %v6413 = vadd.f32 %v6381, -0.00021337405
      %v6414 = vadd.f32 %v6382, -0.00021337405
      %v6415 = vadd.f32 %v6383, -0.00021337405
      %v6416 = vadd.f32 %v6384, -0.00021337405
      %v6417 = vadd.f32 %v6385, -0.00021337405
      %v6418 = vadd.f32 %v6386, -0.00021337405
      %v6419 = vadd.f32 %v6387, -0.00021337405
      %v6420 = vadd.f32 %v6388, -0.00021337405
      %v6421 = vadd.f32 %v6389, -0.00021337405
      %v6422 = vadd.f32 %v6390, -0.00021337405
      %v6423 = vadd.f32 %v6391, -0.00021337405
      %v6424 = vadd.f32 %v6392, -0.00021337405
      %v6425 = vadd.f32 %v6393, -0.00021337405
      %v6426 = vadd.f32 %v6394, -0.00021337405
      %v6427 = vadd.f32 %v6395, -0.00021337405
      %v6428 = vadd.f32 %v6396, -0.00021337405
      %v6429 = vadd.f32 %v6397, -0.00021337405
      %v6430 = vadd.f32 %v6398, -0.00021337405
      %v6431 = vadd.f32 %v6399, -0.00021337405
      %v6432 = vadd.f32 %v6400, -0.00021337405
      %v6433 = vadd.f32 %v6401, -0.00021337405
      %v6434 = vadd.f32 %v6402, -0.00021337405
      %v6435 = vmul.f32 %v6403, %v5955
      %v6436 = vmul.f32 %v6404, %v5956
      %v6437 = vmul.f32 %v6405, %v5957
      %v6438 = vmul.f32 %v6406, %v5958
      %v6439 = vmul.f32 %v6407, %v5959
      %v6440 = vmul.f32 %v6408, %v5960
      %v6441 = vmul.f32 %v6409, %v5961
      %v6442 = vmul.f32 %v6410, %v5962
      %v6443 = vmul.f32 %v6411, %v5963
      %v6444 = vmul.f32 %v6412, %v5964
      %v6445 = vmul.f32 %v6413, %v5965
      %v6446 = vmul.f32 %v6414, %v5966
      %v6447 = vmul.f32 %v6415, %v5967
      %v6448 = vmul.f32 %v6416, %v5968
      %v6449 = vmul.f32 %v6417, %v5969
      %v6450 = vmul.f32 %v6418, %v5970
      %v6451 = vmul.f32 %v6419, %v5971
      %v6452 = vmul.f32 %v6420, %v5972
      %v6453 = vmul.f32 %v6421, %v5973
      %v6454 = vmul.f32 %v6422, %v5974
      %v6455 = vmul.f32 %v6423, %v5975
      %v6456 = vmul.f32 %v6424, %v5976
      %v6457 = vmul.f32 %v6425, %v5977
      %v6458 = vmul.f32 %v6426, %v5978
      %v6459 = vmul.f32 %v6427, %v5979
      %v6460 = vmul.f32 %v6428, %v5980
      %v6461 = vmul.f32 %v6429, %v5981
      %v6462 = vmul.f32 %v6430, %v5982
      %v6463 = vmul.f32 %v6431, %v5983
      %v6464 = vmul.f32 %v6432, %v5984
      %v6465 = vmul.f32 %v6433, %v5985
      %v6466 = vmul.f32 %v6434, %v5986
      %v6467 = vadd.f32 %v6435, -0.001682827
      %v6468 = vadd.f32 %v6436, -0.001682827
      %v6469 = vadd.f32 %v6437, -0.001682827
      %v6470 = vadd.f32 %v6438, -0.001682827
      %v6471 = vadd.f32 %v6439, -0.001682827
      %v6472 = vadd.f32 %v6440, -0.001682827
      %v6473 = vadd.f32 %v6441, -0.001682827
      %v6474 = vadd.f32 %v6442, -0.001682827
      %v6475 = vadd.f32 %v6443, -0.001682827
      %v6476 = vadd.f32 %v6444, -0.001682827
      %v6477 = vadd.f32 %v6445, -0.001682827
      %v6478 = vadd.f32 %v6446, -0.001682827
      %v6479 = vadd.f32 %v6447, -0.001682827
      %v6480 = vadd.f32 %v6448, -0.001682827
      %v6481 = vadd.f32 %v6449, -0.001682827
      %v6482 = vadd.f32 %v6450, -0.001682827
      %v6483 = vadd.f32 %v6451, -0.001682827
      %v6484 = vadd.f32 %v6452, -0.001682827
      %v6485 = vadd.f32 %v6453, -0.001682827
      %v6486 = vadd.f32 %v6454, -0.001682827
      %v6487 = vadd.f32 %v6455, -0.001682827
      %v6488 = vadd.f32 %v6456, -0.001682827
      %v6489 = vadd.f32 %v6457, -0.001682827
      %v6490 = vadd.f32 %v6458, -0.001682827
      %v6491 = vadd.f32 %v6459, -0.001682827
      %v6492 = vadd.f32 %v6460, -0.001682827
      %v6493 = vadd.f32 %v6461, -0.001682827
      %v6494 = vadd.f32 %v6462, -0.001682827
      %v6495 = vadd.f32 %v6463, -0.001682827
      %v6496 = vadd.f32 %v6464, -0.001682827
      %v6497 = vadd.f32 %v6465, -0.001682827
      %v6498 = vadd.f32 %v6466, -0.001682827
      %v6499 = vmul.f32 %v6467, %v5955
      %v6500 = vmul.f32 %v6468, %v5956
      %v6501 = vmul.f32 %v6469, %v5957
      %v6502 = vmul.f32 %v6470, %v5958
      %v6503 = vmul.f32 %v6471, %v5959
      %v6504 = vmul.f32 %v6472, %v5960
      %v6505 = vmul.f32 %v6473, %v5961
      %v6506 = vmul.f32 %v6474, %v5962
      %v6507 = vmul.f32 %v6475, %v5963
      %v6508 = vmul.f32 %v6476, %v5964
      %v6509 = vmul.f32 %v6477, %v5965
      %v6510 = vmul.f32 %v6478, %v5966
      %v6511 = vmul.f32 %v6479, %v5967
      %v6512 = vmul.f32 %v6480, %v5968
      %v6513 = vmul.f32 %v6481, %v5969
      %v6514 = vmul.f32 %v6482, %v5970
      %v6515 = vmul.f32 %v6483, %v5971
      %v6516 = vmul.f32 %v6484, %v5972
      %v6517 = vmul.f32 %v6485, %v5973
      %v6518 = vmul.f32 %v6486, %v5974
      %v6519 = vmul.f32 %v6487, %v5975
      %v6520 = vmul.f32 %v6488, %v5976
      %v6521 = vmul.f32 %v6489, %v5977
      %v6522 = vmul.f32 %v6490, %v5978
      %v6523 = vmul.f32 %v6491, %v5979
      %v6524 = vmul.f32 %v6492, %v5980
      %v6525 = vmul.f32 %v6493, %v5981
      %v6526 = vmul.f32 %v6494, %v5982
      %v6527 = vmul.f32 %v6495, %v5983
      %v6528 = vmul.f32 %v6496, %v5984
      %v6529 = vmul.f32 %v6497, %v5985
      %v6530 = vmul.f32 %v6498, %v5986
      %v6531 = vadd.f32 %v6499, -0.0073733293
      %v6532 = vadd.f32 %v6500, -0.0073733293
      %v6533 = vadd.f32 %v6501, -0.0073733293
      %v6534 = vadd.f32 %v6502, -0.0073733293
      %v6535 = vadd.f32 %v6503, -0.0073733293
      %v6536 = vadd.f32 %v6504, -0.0073733293
      %v6537 = vadd.f32 %v6505, -0.0073733293
      %v6538 = vadd.f32 %v6506, -0.0073733293
      %v6539 = vadd.f32 %v6507, -0.0073733293
      %v6540 = vadd.f32 %v6508, -0.0073733293
      %v6541 = vadd.f32 %v6509, -0.0073733293
      %v6542 = vadd.f32 %v6510, -0.0073733293
      %v6543 = vadd.f32 %v6511, -0.0073733293
      %v6544 = vadd.f32 %v6512, -0.0073733293
      %v6545 = vadd.f32 %v6513, -0.0073733293
      %v6546 = vadd.f32 %v6514, -0.0073733293
      %v6547 = vadd.f32 %v6515, -0.0073733293
      %v6548 = vadd.f32 %v6516, -0.0073733293
      %v6549 = vadd.f32 %v6517, -0.0073733293
      %v6550 = vadd.f32 %v6518, -0.0073733293
      %v6551 = vadd.f32 %v6519, -0.0073733293
      %v6552 = vadd.f32 %v6520, -0.0073733293
      %v6553 = vadd.f32 %v6521, -0.0073733293
      %v6554 = vadd.f32 %v6522, -0.0073733293
      %v6555 = vadd.f32 %v6523, -0.0073733293
      %v6556 = vadd.f32 %v6524, -0.0073733293
      %v6557 = vadd.f32 %v6525, -0.0073733293
      %v6558 = vadd.f32 %v6526, -0.0073733293
      %v6559 = vadd.f32 %v6527, -0.0073733293
      %v6560 = vadd.f32 %v6528, -0.0073733293
      %v6561 = vadd.f32 %v6529, -0.0073733293
      %v6562 = vadd.f32 %v6530, -0.0073733293
      %v6563 = vmul.f32 %v6531, %v5955
      %v6564 = vmul.f32 %v6532, %v5956
      %v6565 = vmul.f32 %v6533, %v5957
      %v6566 = vmul.f32 %v6534, %v5958
      %v6567 = vmul.f32 %v6535, %v5959
      %v6568 = vmul.f32 %v6536, %v5960
      %v6569 = vmul.f32 %v6537, %v5961
      %v6570 = vmul.f32 %v6538, %v5962
      %v6571 = vmul.f32 %v6539, %v5963
      %v6572 = vmul.f32 %v6540, %v5964
      %v6573 = vmul.f32 %v6541, %v5965
      %v6574 = vmul.f32 %v6542, %v5966
      %v6575 = vmul.f32 %v6543, %v5967
      %v6576 = vmul.f32 %v6544, %v5968
      %v6577 = vmul.f32 %v6545, %v5969
      %v6578 = vmul.f32 %v6546, %v5970
      %v6579 = vmul.f32 %v6547, %v5971
      %v6580 = vmul.f32 %v6548, %v5972
      %v6581 = vmul.f32 %v6549, %v5973
      %v6582 = vmul.f32 %v6550, %v5974
      %v6583 = vmul.f32 %v6551, %v5975
      %v6584 = vmul.f32 %v6552, %v5976
      %v6585 = vmul.f32 %v6553, %v5977
      %v6586 = vmul.f32 %v6554, %v5978
      %v6587 = vmul.f32 %v6555, %v5979
      %v6588 = vmul.f32 %v6556, %v5980
      %v6589 = vmul.f32 %v6557, %v5981
      %v6590 = vmul.f32 %v6558, %v5982
      %v6591 = vmul.f32 %v6559, %v5983
      %v6592 = vmul.f32 %v6560, %v5984
      %v6593 = vmul.f32 %v6561, %v5985
      %v6594 = vmul.f32 %v6562, %v5986
      %v6595 = vadd.f32 %v6563, -0.014264739
      %v6596 = vadd.f32 %v6564, -0.014264739
      %v6597 = vadd.f32 %v6565, -0.014264739
      %v6598 = vadd.f32 %v6566, -0.014264739
      %v6599 = vadd.f32 %v6567, -0.014264739
      %v6600 = vadd.f32 %v6568, -0.014264739
      %v6601 = vadd.f32 %v6569, -0.014264739
      %v6602 = vadd.f32 %v6570, -0.014264739
      %v6603 = vadd.f32 %v6571, -0.014264739
      %v6604 = vadd.f32 %v6572, -0.014264739
      %v6605 = vadd.f32 %v6573, -0.014264739
      %v6606 = vadd.f32 %v6574, -0.014264739
      %v6607 = vadd.f32 %v6575, -0.014264739
      %v6608 = vadd.f32 %v6576, -0.014264739
      %v6609 = vadd.f32 %v6577, -0.014264739
      %v6610 = vadd.f32 %v6578, -0.014264739
      %v6611 = vadd.f32 %v6579, -0.014264739
      %v6612 = vadd.f32 %v6580, -0.014264739
      %v6613 = vadd.f32 %v6581, -0.014264739
      %v6614 = vadd.f32 %v6582, -0.014264739
      %v6615 = vadd.f32 %v6583, -0.014264739
      %v6616 = vadd.f32 %v6584, -0.014264739
      %v6617 = vadd.f32 %v6585, -0.014264739
      %v6618 = vadd.f32 %v6586, -0.014264739
      %v6619 = vadd.f32 %v6587, -0.014264739
      %v6620 = vadd.f32 %v6588, -0.014264739
      %v6621 = vadd.f32 %v6589, -0.014264739
      %v6622 = vadd.f32 %v6590, -0.014264739
      %v6623 = vadd.f32 %v6591, -0.014264739
      %v6624 = vadd.f32 %v6592, -0.014264739
      %v6625 = vadd.f32 %v6593, -0.014264739
      %v6626 = vadd.f32 %v6594, -0.014264739
      %v6627 = vmul.f32 %v5923, %v6339
      %v6628 = vmul.f32 %v5924, %v6340
      %v6629 = vmul.f32 %v5925, %v6341
      %v6630 = vmul.f32 %v5926, %v6342
      %v6631 = vmul.f32 %v5927, %v6343
      %v6632 = vmul.f32 %v5928, %v6344
      %v6633 = vmul.f32 %v5929, %v6345
      %v6634 = vmul.f32 %v5930, %v6346
      %v6635 = vmul.f32 %v5931, %v6347
      %v6636 = vmul.f32 %v5932, %v6348
      %v6637 = vmul.f32 %v5933, %v6349
      %v6638 = vmul.f32 %v5934, %v6350
      %v6639 = vmul.f32 %v5935, %v6351
      %v6640 = vmul.f32 %v5936, %v6352
      %v6641 = vmul.f32 %v5937, %v6353
      %v6642 = vmul.f32 %v5938, %v6354
      %v6643 = vmul.f32 %v5939, %v6355
      %v6644 = vmul.f32 %v5940, %v6356
      %v6645 = vmul.f32 %v5941, %v6357
      %v6646 = vmul.f32 %v5942, %v6358
      %v6647 = vmul.f32 %v5943, %v6359
      %v6648 = vmul.f32 %v5944, %v6360
      %v6649 = vmul.f32 %v5945, %v6361
      %v6650 = vmul.f32 %v5946, %v6362
      %v6651 = vmul.f32 %v5947, %v6363
      %v6652 = vmul.f32 %v5948, %v6364
      %v6653 = vmul.f32 %v5949, %v6365
      %v6654 = vmul.f32 %v5950, %v6366
      %v6655 = vmul.f32 %v5951, %v6367
      %v6656 = vmul.f32 %v5952, %v6368
      %v6657 = vmul.f32 %v5953, %v6369
      %v6658 = vmul.f32 %v5954, %v6370
      %v6659 = vrcp.pop %v6595
      %v6660 = vrcp.pop %v6596
      %v6661 = vrcp.pop %v6597
      %v6662 = vrcp.pop %v6598
      %v6663 = vrcp.pop %v6599
      %v6664 = vrcp.pop %v6600
      %v6665 = vrcp.pop %v6601
      %v6666 = vrcp.pop %v6602
      %v6667 = vrcp.pop %v6603
      %v6668 = vrcp.pop %v6604
      %v6669 = vrcp.pop %v6605
      %v6670 = vrcp.pop %v6606
      %v6671 = vrcp.pop %v6607
      %v6672 = vrcp.pop %v6608
      %v6673 = vrcp.pop %v6609
      %v6674 = vrcp.pop %v6610
      %v6675 = vrcp.pop %v6611
      %v6676 = vrcp.pop %v6612
      %v6677 = vrcp.pop %v6613
      %v6678 = vrcp.pop %v6614
      %v6679 = vrcp.pop %v6615
      %v6680 = vrcp.pop %v6616
      %v6681 = vrcp.pop %v6617
      %v6682 = vrcp.pop %v6618
      %v6683 = vrcp.pop %v6619
      %v6684 = vrcp.pop %v6620
      %v6685 = vrcp.pop %v6621
      %v6686 = vrcp.pop %v6622
      %v6687 = vrcp.pop %v6623
      %v6688 = vrcp.pop %v6624
      %v6689 = vrcp.pop %v6625
      %v6690 = vrcp.pop %v6626
      %v6691 = vmul.f32 %v6595, %v6659
      %v6692 = vmul.f32 %v6596, %v6660
      %v6693 = vmul.f32 %v6597, %v6661
      %v6694 = vmul.f32 %v6598, %v6662
      %v6695 = vmul.f32 %v6599, %v6663
      %v6696 = vmul.f32 %v6600, %v6664
      %v6697 = vmul.f32 %v6601, %v6665
      %v6698 = vmul.f32 %v6602, %v6666
      %v6699 = vmul.f32 %v6603, %v6667
      %v6700 = vmul.f32 %v6604, %v6668
      %v6701 = vmul.f32 %v6605, %v6669
      %v6702 = vmul.f32 %v6606, %v6670
      %v6703 = vmul.f32 %v6607, %v6671
      %v6704 = vmul.f32 %v6608, %v6672
      %v6705 = vmul.f32 %v6609, %v6673
      %v6706 = vmul.f32 %v6610, %v6674
      %v6707 = vmul.f32 %v6611, %v6675
      %v6708 = vmul.f32 %v6612, %v6676
      %v6709 = vmul.f32 %v6613, %v6677
      %v6710 = vmul.f32 %v6614, %v6678
      %v6711 = vmul.f32 %v6615, %v6679
      %v6712 = vmul.f32 %v6616, %v6680
      %v6713 = vmul.f32 %v6617, %v6681
      %v6714 = vmul.f32 %v6618, %v6682
      %v6715 = vmul.f32 %v6619, %v6683
      %v6716 = vmul.f32 %v6620, %v6684
      %v6717 = vmul.f32 %v6621, %v6685
      %v6718 = vmul.f32 %v6622, %v6686
      %v6719 = vmul.f32 %v6623, %v6687
      %v6720 = vmul.f32 %v6624, %v6688
      %v6721 = vmul.f32 %v6625, %v6689
      %v6722 = vmul.f32 %v6626, %v6690
      %v6723 = vsub.f32 2.0, %v6691
      %v6724 = vsub.f32 2.0, %v6692
      %v6725 = vsub.f32 2.0, %v6693
      %v6726 = vsub.f32 2.0, %v6694
      %v6727 = vsub.f32 2.0, %v6695
      %v6728 = vsub.f32 2.0, %v6696
      %v6729 = vsub.f32 2.0, %v6697
      %v6730 = vsub.f32 2.0, %v6698
      %v6731 = vsub.f32 2.0, %v6699
      %v6732 = vsub.f32 2.0, %v6700
      %v6733 = vsub.f32 2.0, %v6701
      %v6734 = vsub.f32 2.0, %v6702
      %v6735 = vsub.f32 2.0, %v6703
      %v6736 = vsub.f32 2.0, %v6704
      %v6737 = vsub.f32 2.0, %v6705
      %v6738 = vsub.f32 2.0, %v6706
      %v6739 = vsub.f32 2.0, %v6707
      %v6740 = vsub.f32 2.0, %v6708
      %v6741 = vsub.f32 2.0, %v6709
      %v6742 = vsub.f32 2.0, %v6710
      %v6743 = vsub.f32 2.0, %v6711
      %v6744 = vsub.f32 2.0, %v6712
      %v6745 = vsub.f32 2.0, %v6713
      %v6746 = vsub.f32 2.0, %v6714
      %v6747 = vsub.f32 2.0, %v6715
      %v6748 = vsub.f32 2.0, %v6716
      %v6749 = vsub.f32 2.0, %v6717
      %v6750 = vsub.f32 2.0, %v6718
      %v6751 = vsub.f32 2.0, %v6719
      %v6752 = vsub.f32 2.0, %v6720
      %v6753 = vsub.f32 2.0, %v6721
      %v6754 = vsub.f32 2.0, %v6722
      %v6755 = vmul.f32 %v6659, %v6723
      %v6756 = vmul.f32 %v6660, %v6724
      %v6757 = vmul.f32 %v6661, %v6725
      %v6758 = vmul.f32 %v6662, %v6726
      %v6759 = vmul.f32 %v6663, %v6727
      %v6760 = vmul.f32 %v6664, %v6728
      %v6761 = vmul.f32 %v6665, %v6729
      %v6762 = vmul.f32 %v6666, %v6730
      %v6763 = vmul.f32 %v6667, %v6731
      %v6764 = vmul.f32 %v6668, %v6732
      %v6765 = vmul.f32 %v6669, %v6733
      %v6766 = vmul.f32 %v6670, %v6734
      %v6767 = vmul.f32 %v6671, %v6735
      %v6768 = vmul.f32 %v6672, %v6736
      %v6769 = vmul.f32 %v6673, %v6737
      %v6770 = vmul.f32 %v6674, %v6738
      %v6771 = vmul.f32 %v6675, %v6739
      %v6772 = vmul.f32 %v6676, %v6740
      %v6773 = vmul.f32 %v6677, %v6741
      %v6774 = vmul.f32 %v6678, %v6742
      %v6775 = vmul.f32 %v6679, %v6743
      %v6776 = vmul.f32 %v6680, %v6744
      %v6777 = vmul.f32 %v6681, %v6745
      %v6778 = vmul.f32 %v6682, %v6746
      %v6779 = vmul.f32 %v6683, %v6747
      %v6780 = vmul.f32 %v6684, %v6748
      %v6781 = vmul.f32 %v6685, %v6749
      %v6782 = vmul.f32 %v6686, %v6750
      %v6783 = vmul.f32 %v6687, %v6751
      %v6784 = vmul.f32 %v6688, %v6752
      %v6785 = vmul.f32 %v6689, %v6753
      %v6786 = vmul.f32 %v6690, %v6754
      %v6787 = vmul.f32 %v6627, %v6755
      %v6788 = vmul.f32 %v6628, %v6756
      %v6789 = vmul.f32 %v6629, %v6757
      %v6790 = vmul.f32 %v6630, %v6758
      %v6791 = vmul.f32 %v6631, %v6759
      %v6792 = vmul.f32 %v6632, %v6760
      %v6793 = vmul.f32 %v6633, %v6761
      %v6794 = vmul.f32 %v6634, %v6762
      %v6795 = vmul.f32 %v6635, %v6763
      %v6796 = vmul.f32 %v6636, %v6764
      %v6797 = vmul.f32 %v6637, %v6765
      %v6798 = vmul.f32 %v6638, %v6766
      %v6799 = vmul.f32 %v6639, %v6767
      %v6800 = vmul.f32 %v6640, %v6768
      %v6801 = vmul.f32 %v6641, %v6769
      %v6802 = vmul.f32 %v6642, %v6770
      %v6803 = vmul.f32 %v6643, %v6771
      %v6804 = vmul.f32 %v6644, %v6772
      %v6805 = vmul.f32 %v6645, %v6773
      %v6806 = vmul.f32 %v6646, %v6774
      %v6807 = vmul.f32 %v6647, %v6775
      %v6808 = vmul.f32 %v6648, %v6776
      %v6809 = vmul.f32 %v6649, %v6777
      %v6810 = vmul.f32 %v6650, %v6778
      %v6811 = vmul.f32 %v6651, %v6779
      %v6812 = vmul.f32 %v6652, %v6780
      %v6813 = vmul.f32 %v6653, %v6781
      %v6814 = vmul.f32 %v6654, %v6782
      %v6815 = vmul.f32 %v6655, %v6783
      %v6816 = vmul.f32 %v6656, %v6784
      %v6817 = vmul.f32 %v6657, %v6785
      %v6818 = vmul.f32 %v6658, %v6786
      %v6819 = vadd.f32 %v6787, 1.0
      %v6820 = vadd.f32 %v6788, 1.0
      %v6821 = vadd.f32 %v6789, 1.0
      %v6822 = vadd.f32 %v6790, 1.0
      %v6823 = vadd.f32 %v6791, 1.0
      %v6824 = vadd.f32 %v6792, 1.0
      %v6825 = vadd.f32 %v6793, 1.0
      %v6826 = vadd.f32 %v6794, 1.0
      %v6827 = vadd.f32 %v6795, 1.0
      %v6828 = vadd.f32 %v6796, 1.0
      %v6829 = vadd.f32 %v6797, 1.0
      %v6830 = vadd.f32 %v6798, 1.0
      %v6831 = vadd.f32 %v6799, 1.0
      %v6832 = vadd.f32 %v6800, 1.0
      %v6833 = vadd.f32 %v6801, 1.0
      %v6834 = vadd.f32 %v6802, 1.0
      %v6835 = vadd.f32 %v6803, 1.0
      %v6836 = vadd.f32 %v6804, 1.0
      %v6837 = vadd.f32 %v6805, 1.0
      %v6838 = vadd.f32 %v6806, 1.0
      %v6839 = vadd.f32 %v6807, 1.0
      %v6840 = vadd.f32 %v6808, 1.0
      %v6841 = vadd.f32 %v6809, 1.0
      %v6842 = vadd.f32 %v6810, 1.0
      %v6843 = vadd.f32 %v6811, 1.0
      %v6844 = vadd.f32 %v6812, 1.0
      %v6845 = vadd.f32 %v6813, 1.0
      %v6846 = vadd.f32 %v6814, 1.0
      %v6847 = vadd.f32 %v6815, 1.0
      %v6848 = vadd.f32 %v6816, 1.0
      %v6849 = vadd.f32 %v6817, 1.0
      %v6850 = vadd.f32 %v6818, 1.0
      %v6851 = vmul.f32 %v5827, %v6819
      %v6852 = vmul.f32 %v5828, %v6820
      %v6853 = vmul.f32 %v5829, %v6821
      %v6854 = vmul.f32 %v5830, %v6822
      %v6855 = vmul.f32 %v5831, %v6823
      %v6856 = vmul.f32 %v5832, %v6824
      %v6857 = vmul.f32 %v5833, %v6825
      %v6858 = vmul.f32 %v5834, %v6826
      %v6859 = vmul.f32 %v5835, %v6827
      %v6860 = vmul.f32 %v5836, %v6828
      %v6861 = vmul.f32 %v5837, %v6829
      %v6862 = vmul.f32 %v5838, %v6830
      %v6863 = vmul.f32 %v5839, %v6831
      %v6864 = vmul.f32 %v5840, %v6832
      %v6865 = vmul.f32 %v5841, %v6833
      %v6866 = vmul.f32 %v5842, %v6834
      %v6867 = vmul.f32 %v5843, %v6835
      %v6868 = vmul.f32 %v5844, %v6836
      %v6869 = vmul.f32 %v5845, %v6837
      %v6870 = vmul.f32 %v5846, %v6838
      %v6871 = vmul.f32 %v5847, %v6839
      %v6872 = vmul.f32 %v5848, %v6840
      %v6873 = vmul.f32 %v5849, %v6841
      %v6874 = vmul.f32 %v5850, %v6842
      %v6875 = vmul.f32 %v5851, %v6843
      %v6876 = vmul.f32 %v5852, %v6844
      %v6877 = vmul.f32 %v5853, %v6845
      %v6878 = vmul.f32 %v5854, %v6846
      %v6879 = vmul.f32 %v5855, %v6847
      %v6880 = vmul.f32 %v5856, %v6848
      %v6881 = vmul.f32 %v5857, %v6849
      %v6882 = vmul.f32 %v5858, %v6850
      %s6883 = scalar_lea.vmem %s2, 512
      %v6884 = vld [vmem:[%s6883] sm:$0xff]
      %v6885 = vld [vmem:[%s6883 + $0x8] sm:$0xff]
      %v6886 = vld [vmem:[%s6883 + $0x10] sm:$0xff]
      %v6887 = vld [vmem:[%s6883 + $0x18] sm:$0xff]
      %v6888 = vld [vmem:[%s6883 + $0x20] sm:$0xff]
      %v6889 = vld [vmem:[%s6883 + $0x28] sm:$0xff]
      %v6890 = vld [vmem:[%s6883 + $0x30] sm:$0xff]
      %v6891 = vld [vmem:[%s6883 + $0x38] sm:$0xff]
      %v6892 = vld [vmem:[%s6883 + $0x40] sm:$0xff]
      %v6893 = vld [vmem:[%s6883 + $0x48] sm:$0xff]
      %v6894 = vld [vmem:[%s6883 + $0x50] sm:$0xff]
      %v6895 = vld [vmem:[%s6883 + $0x58] sm:$0xff]
      %v6896 = vld [vmem:[%s6883 + $0x60] sm:$0xff]
      %v6897 = vld [vmem:[%s6883 + $0x68] sm:$0xff]
      %v6898 = vld [vmem:[%s6883 + $0x70] sm:$0xff]
      %v6899 = vld [vmem:[%s6883 + $0x78] sm:$0xff]
      %v6900 = vld [vmem:[%s3 + $0x5] sm:$0x1]
      %v6901 = vlaneseq
      %v6902 = vshrl.u32 %v6901, 7
      %v6903 = vsub.s32 0, %v6902
      %v6904 = vrot.slane %v6900, %v6903
      %6905 = vmatprep.subr.mxu0 0.0
      %6906 = vmatpush1.msra.mxu0 %v6884
      %6907 = vmatprep.subr.mxu0 0.0
      %6908 = vmatpush1.msra.mxu0 %v6885
      %6909 = vmatprep.subr.mxu0 0.0
      %6910 = vmatpush1.msra.mxu0 %v6886
      %6911 = vmatprep.subr.mxu0 0.0
      %6912 = vmatpush1.msra.mxu0 %v6887
      %6913 = vmatprep.subr.mxu0 0.0
      %6914 = vmatpush1.msra.mxu0 %v6888
      %6915 = vmatprep.subr.mxu0 0.0
      %6916 = vmatpush1.msra.mxu0 %v6889
      %6917 = vmatprep.subr.mxu0 0.0
      %6918 = vmatpush1.msra.mxu0 %v6890
      %6919 = vmatprep.subr.mxu0 0.0
      %6920 = vmatpush1.msra.mxu0 %v6891
      %6921 = vmatprep.subr.mxu0 0.0
      %6922 = vmatpush1.msra.mxu0 %v6892
      %6923 = vmatprep.subr.mxu0 0.0
      %6924 = vmatpush1.msra.mxu0 %v6893
      %6925 = vmatprep.subr.mxu0 0.0
      %6926 = vmatpush1.msra.mxu0 %v6894
      %6927 = vmatprep.subr.mxu0 0.0
      %6928 = vmatpush1.msra.mxu0 %v6895
      %6929 = vmatprep.subr.mxu0 0.0
      %6930 = vmatpush1.msra.mxu0 %v6896
      %6931 = vmatprep.subr.mxu0 0.0
      %6932 = vmatpush1.msra.mxu0 %v6897
      %6933 = vmatprep.subr.mxu0 0.0
      %6934 = vmatpush1.msra.mxu0 %v6898
      %6935 = vmatprep.subr.mxu0 0.0
      %6936 = vmatpush1.msra.mxu0 %v6899
      %6937 = vmatprep.subr.mxu0 0.0
      %6938 = vmatpush1.msra.mxu0 0.0
      %6939 = vmatprep.subr.mxu0 0.0
      %6940 = vmatpush1.msra.mxu0 0.0
      %6941 = vmatprep.subr.mxu0 0.0
      %6942 = vmatpush1.msra.mxu0 0.0
      %6943 = vmatprep.subr.mxu0 0.0
      %6944 = vmatpush1.msra.mxu0 0.0
      %6945 = vmatprep.subr.mxu0 0.0
      %6946 = vmatpush1.msra.mxu0 0.0
      %6947 = vmatprep.subr.mxu0 0.0
      %6948 = vmatpush1.msra.mxu0 0.0
      %6949 = vmatprep.subr.mxu0 0.0
      %6950 = vmatpush1.msra.mxu0 0.0
      %6951 = vmatprep.subr.mxu0 0.0
      %6952 = vmatpush1.msra.mxu0 0.0
      %6953 = vmatprep.subr.mxu0 0.0
      %6954 = vmatpush1.msra.mxu0 0.0
      %6955 = vmatprep.subr.mxu0 0.0
      %6956 = vmatpush1.msra.mxu0 0.0
      %6957 = vmatprep.subr.mxu0 0.0
      %6958 = vmatpush1.msra.mxu0 0.0
      %6959 = vmatprep.subr.mxu0 0.0
      %6960 = vmatpush1.msra.mxu0 0.0
      %6961 = vmatprep.subr.mxu0 0.0
      %6962 = vmatpush1.msra.mxu0 0.0
      %6963 = vmatprep.subr.mxu0 0.0
      %6964 = vmatpush1.msra.mxu0 0.0
      %6965 = vmatprep.subr.mxu0 0.0
      %6966 = vmatpush1.msra.mxu0 0.0
      %6967 = vmatprep.subr.mxu0 0.0
      %6968 = vmatpush1.msra.mxu0 0.0
      %6969 = vmatprep.mubr.f32.mxu0 0.0
      %6970 = vmatmul.mubr.f32.gmra.mrb[0].mxu0 %v6851
      %v6971 = vpop.f32.mrb[0].mxu0
      %v6972 = vadd.f32 %v6904, %v6971
      %v6973 = vpop.f32.mrb[0].mxu0
      %6974 = vmatprep.mubr.f32.mxu0 0.0
      %6975 = vmatmul.mubr.f32.gmra.mrb[0].mxu0 %v6852
      %v6976 = vpop.f32.mrb[0].mxu0
      %v6977 = vadd.f32 %v6904, %v6976
      %v6978 = vpop.f32.mrb[0].mxu0
      %6979 = vmatprep.mubr.f32.mxu0 0.0
      %6980 = vmatmul.mubr.f32.gmra.mrb[0].mxu0 %v6853
      %v6981 = vpop.f32.mrb[0].mxu0
      %v6982 = vadd.f32 %v6904, %v6981
      %v6983 = vpop.f32.mrb[0].mxu0
      %6984 = vmatprep.mubr.f32.mxu0 0.0
      %6985 = vmatmul.mubr.f32.gmra.mrb[0].mxu0 %v6854
      %v6986 = vpop.f32.mrb[0].mxu0
      %v6987 = vadd.f32 %v6904, %v6986
      %v6988 = vpop.f32.mrb[0].mxu0
      %6989 = vmatprep.mubr.f32.mxu0 0.0
      %6990 = vmatmul.mubr.f32.gmra.mrb[0].mxu0 %v6855
      %v6991 = vpop.f32.mrb[0].mxu0
      %v6992 = vadd.f32 %v6904, %v6991
      %v6993 = vpop.f32.mrb[0].mxu0
      %6994 = vmatprep.mubr.f32.mxu0 0.0
      %6995 = vmatmul.mubr.f32.gmra.mrb[0].mxu0 %v6856
      %v6996 = vpop.f32.mrb[0].mxu0
      %v6997 = vadd.f32 %v6904, %v6996
      %v6998 = vpop.f32.mrb[0].mxu0
      %6999 = vmatprep.mubr.f32.mxu0 0.0
      %7000 = vmatmul.mubr.f32.gmra.mrb[0].mxu0 %v6857
      %v7001 = vpop.f32.mrb[0].mxu0
      %v7002 = vadd.f32 %v6904, %v7001
      %v7003 = vpop.f32.mrb[0].mxu0
      %7004 = vmatprep.mubr.f32.mxu0 0.0
      %7005 = vmatmul.mubr.f32.gmra.mrb[0].mxu0 %v6858
      %v7006 = vpop.f32.mrb[0].mxu0
      %v7007 = vadd.f32 %v6904, %v7006
      %v7008 = vpop.f32.mrb[0].mxu0
      %7009 = vmatprep.mubr.f32.mxu0 0.0
      %7010 = vmatmul.mubr.f32.gmra.mrb[0].mxu0 %v6859
      %v7011 = vpop.f32.mrb[0].mxu0
      %v7012 = vadd.f32 %v6904, %v7011
      %v7013 = vpop.f32.mrb[0].mxu0
      %7014 = vmatprep.mubr.f32.mxu0 0.0
      %7015 = vmatmul.mubr.f32.gmra.mrb[0].mxu0 %v6860
      %v7016 = vpop.f32.mrb[0].mxu0
      %v7017 = vadd.f32 %v6904, %v7016
      %v7018 = vpop.f32.mrb[0].mxu0
      %7019 = vmatprep.mubr.f32.mxu0 0.0
      %7020 = vmatmul.mubr.f32.gmra.mrb[0].mxu0 %v6861
      %v7021 = vpop.f32.mrb[0].mxu0
      %v7022 = vadd.f32 %v6904, %v7021
      %v7023 = vpop.f32.mrb[0].mxu0
      %7024 = vmatprep.mubr.f32.mxu0 0.0
      %7025 = vmatmul.mubr.f32.gmra.mrb[0].mxu0 %v6862
      %v7026 = vpop.f32.mrb[0].mxu0
      %v7027 = vadd.f32 %v6904, %v7026
      %v7028 = vpop.f32.mrb[0].mxu0
      %7029 = vmatprep.mubr.f32.mxu0 0.0
      %7030 = vmatmul.mubr.f32.gmra.mrb[0].mxu0 %v6863
      %v7031 = vpop.f32.mrb[0].mxu0
      %v7032 = vadd.f32 %v6904, %v7031
      %v7033 = vpop.f32.mrb[0].mxu0
      %7034 = vmatprep.mubr.f32.mxu0 0.0
      %7035 = vmatmul.mubr.f32.gmra.mrb[0].mxu0 %v6864
      %v7036 = vpop.f32.mrb[0].mxu0
      %v7037 = vadd.f32 %v6904, %v7036
      %v7038 = vpop.f32.mrb[0].mxu0
      %7039 = vmatprep.mubr.f32.mxu0 0.0
      %7040 = vmatmul.mubr.f32.gmra.mrb[0].mxu0 %v6865
      %v7041 = vpop.f32.mrb[0].mxu0
      %v7042 = vadd.f32 %v6904, %v7041
      %v7043 = vpop.f32.mrb[0].mxu0
      %7044 = vmatprep.mubr.f32.mxu0 0.0
      %7045 = vmatmul.mubr.f32.gmra.mrb[0].mxu0 %v6866
      %v7046 = vpop.f32.mrb[0].mxu0
      %v7047 = vadd.f32 %v6904, %v7046
      %v7048 = vpop.f32.mrb[0].mxu0
      %7049 = vmatprep.mubr.f32.mxu0 0.0
      %7050 = vmatmul.mubr.f32.gmra.mrb[0].mxu0 %v6867
      %v7051 = vpop.f32.mrb[0].mxu0
      %v7052 = vadd.f32 %v6904, %v7051
      %v7053 = vpop.f32.mrb[0].mxu0
      %7054 = vmatprep.mubr.f32.mxu0 0.0
      %7055 = vmatmul.mubr.f32.gmra.mrb[0].mxu0 %v6868
      %v7056 = vpop.f32.mrb[0].mxu0
      %v7057 = vadd.f32 %v6904, %v7056
      %v7058 = vpop.f32.mrb[0].mxu0
      %7059 = vmatprep.mubr.f32.mxu0 0.0
      %7060 = vmatmul.mubr.f32.gmra.mrb[0].mxu0 %v6869
      %v7061 = vpop.f32.mrb[0].mxu0
      %v7062 = vadd.f32 %v6904, %v7061
      %v7063 = vpop.f32.mrb[0].mxu0
      %7064 = vmatprep.mubr.f32.mxu0 0.0
      %7065 = vmatmul.mubr.f32.gmra.mrb[0].mxu0 %v6870
      %v7066 = vpop.f32.mrb[0].mxu0
      %v7067 = vadd.f32 %v6904, %v7066
      %v7068 = vpop.f32.mrb[0].mxu0
      %7069 = vmatprep.mubr.f32.mxu0 0.0
      %7070 = vmatmul.mubr.f32.gmra.mrb[0].mxu0 %v6871
      %v7071 = vpop.f32.mrb[0].mxu0
      %v7072 = vadd.f32 %v6904, %v7071
      %v7073 = vpop.f32.mrb[0].mxu0
      %7074 = vmatprep.mubr.f32.mxu0 0.0
      %7075 = vmatmul.mubr.f32.gmra.mrb[0].mxu0 %v6872
      %v7076 = vpop.f32.mrb[0].mxu0
      %v7077 = vadd.f32 %v6904, %v7076
      %v7078 = vpop.f32.mrb[0].mxu0
      %7079 = vmatprep.mubr.f32.mxu0 0.0
      %7080 = vmatmul.mubr.f32.gmra.mrb[0].mxu0 %v6873
      %v7081 = vpop.f32.mrb[0].mxu0
      %v7082 = vadd.f32 %v6904, %v7081
      %v7083 = vpop.f32.mrb[0].mxu0
      %7084 = vmatprep.mubr.f32.mxu0 0.0
      %7085 = vmatmul.mubr.f32.gmra.mrb[0].mxu0 %v6874
      %v7086 = vpop.f32.mrb[0].mxu0
      %v7087 = vadd.f32 %v6904, %v7086
      %v7088 = vpop.f32.mrb[0].mxu0
      %7089 = vmatprep.mubr.f32.mxu0 0.0
      %7090 = vmatmul.mubr.f32.gmra.mrb[0].mxu0 %v6875
      %v7091 = vpop.f32.mrb[0].mxu0
      %v7092 = vadd.f32 %v6904, %v7091
      %v7093 = vpop.f32.mrb[0].mxu0
      %7094 = vmatprep.mubr.f32.mxu0 0.0
      %7095 = vmatmul.mubr.f32.gmra.mrb[0].mxu0 %v6876
      %v7096 = vpop.f32.mrb[0].mxu0
      %v7097 = vadd.f32 %v6904, %v7096
      %v7098 = vpop.f32.mrb[0].mxu0
      %7099 = vmatprep.mubr.f32.mxu0 0.0
      %7100 = vmatmul.mubr.f32.gmra.mrb[0].mxu0 %v6877
      %v7101 = vpop.f32.mrb[0].mxu0
      %v7102 = vadd.f32 %v6904, %v7101
      %v7103 = vpop.f32.mrb[0].mxu0
      %7104 = vmatprep.mubr.f32.mxu0 0.0
      %7105 = vmatmul.mubr.f32.gmra.mrb[0].mxu0 %v6878
      %v7106 = vpop.f32.mrb[0].mxu0
      %v7107 = vadd.f32 %v6904, %v7106
      %v7108 = vpop.f32.mrb[0].mxu0
      %7109 = vmatprep.mubr.f32.mxu0 0.0
      %7110 = vmatmul.mubr.f32.gmra.mrb[0].mxu0 %v6879
      %v7111 = vpop.f32.mrb[0].mxu0
      %v7112 = vadd.f32 %v6904, %v7111
      %v7113 = vpop.f32.mrb[0].mxu0
      %7114 = vmatprep.mubr.f32.mxu0 0.0
      %7115 = vmatmul.mubr.f32.gmra.mrb[0].mxu0 %v6880
      %v7116 = vpop.f32.mrb[0].mxu0
      %v7117 = vadd.f32 %v6904, %v7116
      %v7118 = vpop.f32.mrb[0].mxu0
      %7119 = vmatprep.mubr.f32.mxu0 0.0
      %7120 = vmatmul.mubr.f32.gmra.mrb[0].mxu0 %v6881
      %v7121 = vpop.f32.mrb[0].mxu0
      %v7122 = vadd.f32 %v6904, %v7121
      %v7123 = vpop.f32.mrb[0].mxu0
      %7124 = vmatprep.mubr.f32.mxu0 0.0
      %7125 = vmatmul.mubr.f32.gmra.mrb[0].mxu0 %v6882
      %v7126 = vpop.f32.mrb[0].mxu0
      %v7127 = vadd.f32 %v6904, %v7126
      %v7128 = vpop.f32.mrb[0].mxu0
      %7129 = vdwg.mxu0
      %v7130 = vmul.f32 %v6972, 0.5
      %v7131 = vmul.f32 %v6977, 0.5
      %v7132 = vmul.f32 %v6982, 0.5
      %v7133 = vmul.f32 %v6987, 0.5
      %v7134 = vmul.f32 %v6992, 0.5
      %v7135 = vmul.f32 %v6997, 0.5
      %v7136 = vmul.f32 %v7002, 0.5
      %v7137 = vmul.f32 %v7007, 0.5
      %v7138 = vmul.f32 %v7012, 0.5
      %v7139 = vmul.f32 %v7017, 0.5
      %v7140 = vmul.f32 %v7022, 0.5
      %v7141 = vmul.f32 %v7027, 0.5
      %v7142 = vmul.f32 %v7032, 0.5
      %v7143 = vmul.f32 %v7037, 0.5
      %v7144 = vmul.f32 %v7042, 0.5
      %v7145 = vmul.f32 %v7047, 0.5
      %v7146 = vmul.f32 %v7052, 0.5
      %v7147 = vmul.f32 %v7057, 0.5
      %v7148 = vmul.f32 %v7062, 0.5
      %v7149 = vmul.f32 %v7067, 0.5
      %v7150 = vmul.f32 %v7072, 0.5
      %v7151 = vmul.f32 %v7077, 0.5
      %v7152 = vmul.f32 %v7082, 0.5
      %v7153 = vmul.f32 %v7087, 0.5
      %v7154 = vmul.f32 %v7092, 0.5
      %v7155 = vmul.f32 %v7097, 0.5
      %v7156 = vmul.f32 %v7102, 0.5
      %v7157 = vmul.f32 %v7107, 0.5
      %v7158 = vmul.f32 %v7112, 0.5
      %v7159 = vmul.f32 %v7117, 0.5
      %v7160 = vmul.f32 %v7122, 0.5
      %v7161 = vmul.f32 %v7127, 0.5
      %v7162 = vmul.f32 %v6972, 0.70710677
      %v7163 = vmul.f32 %v6977, 0.70710677
      %v7164 = vmul.f32 %v6982, 0.70710677
      %v7165 = vmul.f32 %v6987, 0.70710677
      %v7166 = vmul.f32 %v6992, 0.70710677
      %v7167 = vmul.f32 %v6997, 0.70710677
      %v7168 = vmul.f32 %v7002, 0.70710677
      %v7169 = vmul.f32 %v7007, 0.70710677
      %v7170 = vmul.f32 %v7012, 0.70710677
      %v7171 = vmul.f32 %v7017, 0.70710677
      %v7172 = vmul.f32 %v7022, 0.70710677
      %v7173 = vmul.f32 %v7027, 0.70710677
      %v7174 = vmul.f32 %v7032, 0.70710677
      %v7175 = vmul.f32 %v7037, 0.70710677
      %v7176 = vmul.f32 %v7042, 0.70710677
      %v7177 = vmul.f32 %v7047, 0.70710677
      %v7178 = vmul.f32 %v7052, 0.70710677
      %v7179 = vmul.f32 %v7057, 0.70710677
      %v7180 = vmul.f32 %v7062, 0.70710677
      %v7181 = vmul.f32 %v7067, 0.70710677
      %v7182 = vmul.f32 %v7072, 0.70710677
      %v7183 = vmul.f32 %v7077, 0.70710677
      %v7184 = vmul.f32 %v7082, 0.70710677
      %v7185 = vmul.f32 %v7087, 0.70710677
      %v7186 = vmul.f32 %v7092, 0.70710677
      %v7187 = vmul.f32 %v7097, 0.70710677
      %v7188 = vmul.f32 %v7102, 0.70710677
      %v7189 = vmul.f32 %v7107, 0.70710677
      %v7190 = vmul.f32 %v7112, 0.70710677
      %v7191 = vmul.f32 %v7117, 0.70710677
      %v7192 = vmul.f32 %v7122, 0.70710677
      %v7193 = vmul.f32 %v7127, 0.70710677
      %v7194 = vmax.f32 %v7162, -3.832507
      %v7195 = vmax.f32 %v7163, -3.832507
      %v7196 = vmax.f32 %v7164, -3.832507
      %v7197 = vmax.f32 %v7165, -3.832507
      %v7198 = vmax.f32 %v7166, -3.832507
      %v7199 = vmax.f32 %v7167, -3.832507
      %v7200 = vmax.f32 %v7168, -3.832507
      %v7201 = vmax.f32 %v7169, -3.832507
      %v7202 = vmax.f32 %v7170, -3.832507
      %v7203 = vmax.f32 %v7171, -3.832507
      %v7204 = vmax.f32 %v7172, -3.832507
      %v7205 = vmax.f32 %v7173, -3.832507
      %v7206 = vmax.f32 %v7174, -3.832507
      %v7207 = vmax.f32 %v7175, -3.832507
      %v7208 = vmax.f32 %v7176, -3.832507
      %v7209 = vmax.f32 %v7177, -3.832507
      %v7210 = vmax.f32 %v7178, -3.832507
      %v7211 = vmax.f32 %v7179, -3.832507
      %v7212 = vmax.f32 %v7180, -3.832507
      %v7213 = vmax.f32 %v7181, -3.832507
      %v7214 = vmax.f32 %v7182, -3.832507
      %v7215 = vmax.f32 %v7183, -3.832507
      %v7216 = vmax.f32 %v7184, -3.832507
      %v7217 = vmax.f32 %v7185, -3.832507
      %v7218 = vmax.f32 %v7186, -3.832507
      %v7219 = vmax.f32 %v7187, -3.832507
      %v7220 = vmax.f32 %v7188, -3.832507
      %v7221 = vmax.f32 %v7189, -3.832507
      %v7222 = vmax.f32 %v7190, -3.832507
      %v7223 = vmax.f32 %v7191, -3.832507
      %v7224 = vmax.f32 %v7192, -3.832507
      %v7225 = vmax.f32 %v7193, -3.832507
      %v7226 = vmin.f32 %v7194, 3.832507
      %v7227 = vmin.f32 %v7195, 3.832507
      %v7228 = vmin.f32 %v7196, 3.832507
      %v7229 = vmin.f32 %v7197, 3.832507
      %v7230 = vmin.f32 %v7198, 3.832507
      %v7231 = vmin.f32 %v7199, 3.832507
      %v7232 = vmin.f32 %v7200, 3.832507
      %v7233 = vmin.f32 %v7201, 3.832507
      %v7234 = vmin.f32 %v7202, 3.832507
      %v7235 = vmin.f32 %v7203, 3.832507
      %v7236 = vmin.f32 %v7204, 3.832507
      %v7237 = vmin.f32 %v7205, 3.832507
      %v7238 = vmin.f32 %v7206, 3.832507
      %v7239 = vmin.f32 %v7207, 3.832507
      %v7240 = vmin.f32 %v7208, 3.832507
      %v7241 = vmin.f32 %v7209, 3.832507
      %v7242 = vmin.f32 %v7210, 3.832507
      %v7243 = vmin.f32 %v7211, 3.832507
      %v7244 = vmin.f32 %v7212, 3.832507
      %v7245 = vmin.f32 %v7213, 3.832507
      %v7246 = vmin.f32 %v7214, 3.832507
      %v7247 = vmin.f32 %v7215, 3.832507
      %v7248 = vmin.f32 %v7216, 3.832507
      %v7249 = vmin.f32 %v7217, 3.832507
      %v7250 = vmin.f32 %v7218, 3.832507
      %v7251 = vmin.f32 %v7219, 3.832507
      %v7252 = vmin.f32 %v7220, 3.832507
      %v7253 = vmin.f32 %v7221, 3.832507
      %v7254 = vmin.f32 %v7222, 3.832507
      %v7255 = vmin.f32 %v7223, 3.832507
      %v7256 = vmin.f32 %v7224, 3.832507
      %v7257 = vmin.f32 %v7225, 3.832507
      %v7258 = vmul.f32 %v7226, %v7226
      %v7259 = vmul.f32 %v7227, %v7227
      %v7260 = vmul.f32 %v7228, %v7228
      %v7261 = vmul.f32 %v7229, %v7229
      %v7262 = vmul.f32 %v7230, %v7230
      %v7263 = vmul.f32 %v7231, %v7231
      %v7264 = vmul.f32 %v7232, %v7232
      %v7265 = vmul.f32 %v7233, %v7233
      %v7266 = vmul.f32 %v7234, %v7234
      %v7267 = vmul.f32 %v7235, %v7235
      %v7268 = vmul.f32 %v7236, %v7236
      %v7269 = vmul.f32 %v7237, %v7237
      %v7270 = vmul.f32 %v7238, %v7238
      %v7271 = vmul.f32 %v7239, %v7239
      %v7272 = vmul.f32 %v7240, %v7240
      %v7273 = vmul.f32 %v7241, %v7241
      %v7274 = vmul.f32 %v7242, %v7242
      %v7275 = vmul.f32 %v7243, %v7243
      %v7276 = vmul.f32 %v7244, %v7244
      %v7277 = vmul.f32 %v7245, %v7245
      %v7278 = vmul.f32 %v7246, %v7246
      %v7279 = vmul.f32 %v7247, %v7247
      %v7280 = vmul.f32 %v7248, %v7248
      %v7281 = vmul.f32 %v7249, %v7249
      %v7282 = vmul.f32 %v7250, %v7250
      %v7283 = vmul.f32 %v7251, %v7251
      %v7284 = vmul.f32 %v7252, %v7252
      %v7285 = vmul.f32 %v7253, %v7253
      %v7286 = vmul.f32 %v7254, %v7254
      %v7287 = vmul.f32 %v7255, %v7255
      %v7288 = vmul.f32 %v7256, %v7256
      %v7289 = vmul.f32 %v7257, %v7257
      %v7290 = vmul.f32 %v7258, -2.7261424e-10
      %v7291 = vmul.f32 %v7259, -2.7261424e-10
      %v7292 = vmul.f32 %v7260, -2.7261424e-10
      %v7293 = vmul.f32 %v7261, -2.7261424e-10
      %v7294 = vmul.f32 %v7262, -2.7261424e-10
      %v7295 = vmul.f32 %v7263, -2.7261424e-10
      %v7296 = vmul.f32 %v7264, -2.7261424e-10
      %v7297 = vmul.f32 %v7265, -2.7261424e-10
      %v7298 = vmul.f32 %v7266, -2.7261424e-10
      %v7299 = vmul.f32 %v7267, -2.7261424e-10
      %v7300 = vmul.f32 %v7268, -2.7261424e-10
      %v7301 = vmul.f32 %v7269, -2.7261424e-10
      %v7302 = vmul.f32 %v7270, -2.7261424e-10
      %v7303 = vmul.f32 %v7271, -2.7261424e-10
      %v7304 = vmul.f32 %v7272, -2.7261424e-10
      %v7305 = vmul.f32 %v7273, -2.7261424e-10
      %v7306 = vmul.f32 %v7274, -2.7261424e-10
      %v7307 = vmul.f32 %v7275, -2.7261424e-10
      %v7308 = vmul.f32 %v7276, -2.7261424e-10
      %v7309 = vmul.f32 %v7277, -2.7261424e-10
      %v7310 = vmul.f32 %v7278, -2.7261424e-10
      %v7311 = vmul.f32 %v7279, -2.7261424e-10
      %v7312 = vmul.f32 %v7280, -2.7261424e-10
      %v7313 = vmul.f32 %v7281, -2.7261424e-10
      %v7314 = vmul.f32 %v7282, -2.7261424e-10
      %v7315 = vmul.f32 %v7283, -2.7261424e-10
      %v7316 = vmul.f32 %v7284, -2.7261424e-10
      %v7317 = vmul.f32 %v7285, -2.7261424e-10
      %v7318 = vmul.f32 %v7286, -2.7261424e-10
      %v7319 = vmul.f32 %v7287, -2.7261424e-10
      %v7320 = vmul.f32 %v7288, -2.7261424e-10
      %v7321 = vmul.f32 %v7289, -2.7261424e-10
      %v7322 = vadd.f32 %v7290, 2.7706815e-08
      %v7323 = vadd.f32 %v7291, 2.7706815e-08
      %v7324 = vadd.f32 %v7292, 2.7706815e-08
      %v7325 = vadd.f32 %v7293, 2.7706815e-08
      %v7326 = vadd.f32 %v7294, 2.7706815e-08
      %v7327 = vadd.f32 %v7295, 2.7706815e-08
      %v7328 = vadd.f32 %v7296, 2.7706815e-08
      %v7329 = vadd.f32 %v7297, 2.7706815e-08
      %v7330 = vadd.f32 %v7298, 2.7706815e-08
      %v7331 = vadd.f32 %v7299, 2.7706815e-08
      %v7332 = vadd.f32 %v7300, 2.7706815e-08
      %v7333 = vadd.f32 %v7301, 2.7706815e-08
      %v7334 = vadd.f32 %v7302, 2.7706815e-08
      %v7335 = vadd.f32 %v7303, 2.7706815e-08
      %v7336 = vadd.f32 %v7304, 2.7706815e-08
      %v7337 = vadd.f32 %v7305, 2.7706815e-08
      %v7338 = vadd.f32 %v7306, 2.7706815e-08
      %v7339 = vadd.f32 %v7307, 2.7706815e-08
      %v7340 = vadd.f32 %v7308, 2.7706815e-08
      %v7341 = vadd.f32 %v7309, 2.7706815e-08
      %v7342 = vadd.f32 %v7310, 2.7706815e-08
      %v7343 = vadd.f32 %v7311, 2.7706815e-08
      %v7344 = vadd.f32 %v7312, 2.7706815e-08
      %v7345 = vadd.f32 %v7313, 2.7706815e-08
      %v7346 = vadd.f32 %v7314, 2.7706815e-08
      %v7347 = vadd.f32 %v7315, 2.7706815e-08
      %v7348 = vadd.f32 %v7316, 2.7706815e-08
      %v7349 = vadd.f32 %v7317, 2.7706815e-08
      %v7350 = vadd.f32 %v7318, 2.7706815e-08
      %v7351 = vadd.f32 %v7319, 2.7706815e-08
      %v7352 = vadd.f32 %v7320, 2.7706815e-08
      %v7353 = vadd.f32 %v7321, 2.7706815e-08
      %v7354 = vmul.f32 %v7322, %v7258
      %v7355 = vmul.f32 %v7323, %v7259
      %v7356 = vmul.f32 %v7324, %v7260
      %v7357 = vmul.f32 %v7325, %v7261
      %v7358 = vmul.f32 %v7326, %v7262
      %v7359 = vmul.f32 %v7327, %v7263
      %v7360 = vmul.f32 %v7328, %v7264
      %v7361 = vmul.f32 %v7329, %v7265
      %v7362 = vmul.f32 %v7330, %v7266
      %v7363 = vmul.f32 %v7331, %v7267
      %v7364 = vmul.f32 %v7332, %v7268
      %v7365 = vmul.f32 %v7333, %v7269
      %v7366 = vmul.f32 %v7334, %v7270
      %v7367 = vmul.f32 %v7335, %v7271
      %v7368 = vmul.f32 %v7336, %v7272
      %v7369 = vmul.f32 %v7337, %v7273
      %v7370 = vmul.f32 %v7338, %v7274
      %v7371 = vmul.f32 %v7339, %v7275
      %v7372 = vmul.f32 %v7340, %v7276
      %v7373 = vmul.f32 %v7341, %v7277
      %v7374 = vmul.f32 %v7342, %v7278
      %v7375 = vmul.f32 %v7343, %v7279
      %v7376 = vmul.f32 %v7344, %v7280
      %v7377 = vmul.f32 %v7345, %v7281
      %v7378 = vmul.f32 %v7346, %v7282
      %v7379 = vmul.f32 %v7347, %v7283
      %v7380 = vmul.f32 %v7348, %v7284
      %v7381 = vmul.f32 %v7349, %v7285
      %v7382 = vmul.f32 %v7350, %v7286
      %v7383 = vmul.f32 %v7351, %v7287
      %v7384 = vmul.f32 %v7352, %v7288
      %v7385 = vmul.f32 %v7353, %v7289
      %v7386 = vadd.f32 %v7354, -2.101024e-06
      %v7387 = vadd.f32 %v7355, -2.101024e-06
      %v7388 = vadd.f32 %v7356, -2.101024e-06
      %v7389 = vadd.f32 %v7357, -2.101024e-06
      %v7390 = vadd.f32 %v7358, -2.101024e-06
      %v7391 = vadd.f32 %v7359, -2.101024e-06
      %v7392 = vadd.f32 %v7360, -2.101024e-06
      %v7393 = vadd.f32 %v7361, -2.101024e-06
      %v7394 = vadd.f32 %v7362, -2.101024e-06
      %v7395 = vadd.f32 %v7363, -2.101024e-06
      %v7396 = vadd.f32 %v7364, -2.101024e-06
      %v7397 = vadd.f32 %v7365, -2.101024e-06
      %v7398 = vadd.f32 %v7366, -2.101024e-06
      %v7399 = vadd.f32 %v7367, -2.101024e-06
      %v7400 = vadd.f32 %v7368, -2.101024e-06
      %v7401 = vadd.f32 %v7369, -2.101024e-06
      %v7402 = vadd.f32 %v7370, -2.101024e-06
      %v7403 = vadd.f32 %v7371, -2.101024e-06
      %v7404 = vadd.f32 %v7372, -2.101024e-06
      %v7405 = vadd.f32 %v7373, -2.101024e-06
      %v7406 = vadd.f32 %v7374, -2.101024e-06
      %v7407 = vadd.f32 %v7375, -2.101024e-06
      %v7408 = vadd.f32 %v7376, -2.101024e-06
      %v7409 = vadd.f32 %v7377, -2.101024e-06
      %v7410 = vadd.f32 %v7378, -2.101024e-06
      %v7411 = vadd.f32 %v7379, -2.101024e-06
      %v7412 = vadd.f32 %v7380, -2.101024e-06
      %v7413 = vadd.f32 %v7381, -2.101024e-06
      %v7414 = vadd.f32 %v7382, -2.101024e-06
      %v7415 = vadd.f32 %v7383, -2.101024e-06
      %v7416 = vadd.f32 %v7384, -2.101024e-06
      %v7417 = vadd.f32 %v7385, -2.101024e-06
      %v7418 = vmul.f32 %v7386, %v7258
      %v7419 = vmul.f32 %v7387, %v7259
      %v7420 = vmul.f32 %v7388, %v7260
      %v7421 = vmul.f32 %v7389, %v7261
      %v7422 = vmul.f32 %v7390, %v7262
      %v7423 = vmul.f32 %v7391, %v7263
      %v7424 = vmul.f32 %v7392, %v7264
      %v7425 = vmul.f32 %v7393, %v7265
      %v7426 = vmul.f32 %v7394, %v7266
      %v7427 = vmul.f32 %v7395, %v7267
      %v7428 = vmul.f32 %v7396, %v7268
      %v7429 = vmul.f32 %v7397, %v7269
      %v7430 = vmul.f32 %v7398, %v7270
      %v7431 = vmul.f32 %v7399, %v7271
      %v7432 = vmul.f32 %v7400, %v7272
      %v7433 = vmul.f32 %v7401, %v7273
      %v7434 = vmul.f32 %v7402, %v7274
      %v7435 = vmul.f32 %v7403, %v7275
      %v7436 = vmul.f32 %v7404, %v7276
      %v7437 = vmul.f32 %v7405, %v7277
      %v7438 = vmul.f32 %v7406, %v7278
      %v7439 = vmul.f32 %v7407, %v7279
      %v7440 = vmul.f32 %v7408, %v7280
      %v7441 = vmul.f32 %v7409, %v7281
      %v7442 = vmul.f32 %v7410, %v7282
      %v7443 = vmul.f32 %v7411, %v7283
      %v7444 = vmul.f32 %v7412, %v7284
      %v7445 = vmul.f32 %v7413, %v7285
      %v7446 = vmul.f32 %v7414, %v7286
      %v7447 = vmul.f32 %v7415, %v7287
      %v7448 = vmul.f32 %v7416, %v7288
      %v7449 = vmul.f32 %v7417, %v7289
      %v7450 = vadd.f32 %v7418, -5.6925062e-05
      %v7451 = vadd.f32 %v7419, -5.6925062e-05
      %v7452 = vadd.f32 %v7420, -5.6925062e-05
      %v7453 = vadd.f32 %v7421, -5.6925062e-05
      %v7454 = vadd.f32 %v7422, -5.6925062e-05
      %v7455 = vadd.f32 %v7423, -5.6925062e-05
      %v7456 = vadd.f32 %v7424, -5.6925062e-05
      %v7457 = vadd.f32 %v7425, -5.6925062e-05
      %v7458 = vadd.f32 %v7426, -5.6925062e-05
      %v7459 = vadd.f32 %v7427, -5.6925062e-05
      %v7460 = vadd.f32 %v7428, -5.6925062e-05
      %v7461 = vadd.f32 %v7429, -5.6925062e-05
      %v7462 = vadd.f32 %v7430, -5.6925062e-05
      %v7463 = vadd.f32 %v7431, -5.6925062e-05
      %v7464 = vadd.f32 %v7432, -5.6925062e-05
      %v7465 = vadd.f32 %v7433, -5.6925062e-05
      %v7466 = vadd.f32 %v7434, -5.6925062e-05
      %v7467 = vadd.f32 %v7435, -5.6925062e-05
      %v7468 = vadd.f32 %v7436, -5.6925062e-05
      %v7469 = vadd.f32 %v7437, -5.6925062e-05
      %v7470 = vadd.f32 %v7438, -5.6925062e-05
      %v7471 = vadd.f32 %v7439, -5.6925062e-05
      %v7472 = vadd.f32 %v7440, -5.6925062e-05
      %v7473 = vadd.f32 %v7441, -5.6925062e-05
      %v7474 = vadd.f32 %v7442, -5.6925062e-05
      %v7475 = vadd.f32 %v7443, -5.6925062e-05
      %v7476 = vadd.f32 %v7444, -5.6925062e-05
      %v7477 = vadd.f32 %v7445, -5.6925062e-05
      %v7478 = vadd.f32 %v7446, -5.6925062e-05
      %v7479 = vadd.f32 %v7447, -5.6925062e-05
      %v7480 = vadd.f32 %v7448, -5.6925062e-05
      %v7481 = vadd.f32 %v7449, -5.6925062e-05
      %v7482 = vmul.f32 %v7450, %v7258
      %v7483 = vmul.f32 %v7451, %v7259
      %v7484 = vmul.f32 %v7452, %v7260
      %v7485 = vmul.f32 %v7453, %v7261
      %v7486 = vmul.f32 %v7454, %v7262
      %v7487 = vmul.f32 %v7455, %v7263
      %v7488 = vmul.f32 %v7456, %v7264
      %v7489 = vmul.f32 %v7457, %v7265
      %v7490 = vmul.f32 %v7458, %v7266
      %v7491 = vmul.f32 %v7459, %v7267
      %v7492 = vmul.f32 %v7460, %v7268
      %v7493 = vmul.f32 %v7461, %v7269
      %v7494 = vmul.f32 %v7462, %v7270
      %v7495 = vmul.f32 %v7463, %v7271
      %v7496 = vmul.f32 %v7464, %v7272
      %v7497 = vmul.f32 %v7465, %v7273
      %v7498 = vmul.f32 %v7466, %v7274
      %v7499 = vmul.f32 %v7467, %v7275
      %v7500 = vmul.f32 %v7468, %v7276
      %v7501 = vmul.f32 %v7469, %v7277
      %v7502 = vmul.f32 %v7470, %v7278
      %v7503 = vmul.f32 %v7471, %v7279
      %v7504 = vmul.f32 %v7472, %v7280
      %v7505 = vmul.f32 %v7473, %v7281
      %v7506 = vmul.f32 %v7474, %v7282
      %v7507 = vmul.f32 %v7475, %v7283
      %v7508 = vmul.f32 %v7476, %v7284
      %v7509 = vmul.f32 %v7477, %v7285
      %v7510 = vmul.f32 %v7478, %v7286
      %v7511 = vmul.f32 %v7479, %v7287
      %v7512 = vmul.f32 %v7480, %v7288
      %v7513 = vmul.f32 %v7481, %v7289
      %v7514 = vadd.f32 %v7482, -0.00073499064
      %v7515 = vadd.f32 %v7483, -0.00073499064
      %v7516 = vadd.f32 %v7484, -0.00073499064
      %v7517 = vadd.f32 %v7485, -0.00073499064
      %v7518 = vadd.f32 %v7486, -0.00073499064
      %v7519 = vadd.f32 %v7487, -0.00073499064
      %v7520 = vadd.f32 %v7488, -0.00073499064
      %v7521 = vadd.f32 %v7489, -0.00073499064
      %v7522 = vadd.f32 %v7490, -0.00073499064
      %v7523 = vadd.f32 %v7491, -0.00073499064
      %v7524 = vadd.f32 %v7492, -0.00073499064
      %v7525 = vadd.f32 %v7493, -0.00073499064
      %v7526 = vadd.f32 %v7494, -0.00073499064
      %v7527 = vadd.f32 %v7495, -0.00073499064
      %v7528 = vadd.f32 %v7496, -0.00073499064
      %v7529 = vadd.f32 %v7497, -0.00073499064
      %v7530 = vadd.f32 %v7498, -0.00073499064
      %v7531 = vadd.f32 %v7499, -0.00073499064
      %v7532 = vadd.f32 %v7500, -0.00073499064
      %v7533 = vadd.f32 %v7501, -0.00073499064
      %v7534 = vadd.f32 %v7502, -0.00073499064
      %v7535 = vadd.f32 %v7503, -0.00073499064
      %v7536 = vadd.f32 %v7504, -0.00073499064
      %v7537 = vadd.f32 %v7505, -0.00073499064
      %v7538 = vadd.f32 %v7506, -0.00073499064
      %v7539 = vadd.f32 %v7507, -0.00073499064
      %v7540 = vadd.f32 %v7508, -0.00073499064
      %v7541 = vadd.f32 %v7509, -0.00073499064
      %v7542 = vadd.f32 %v7510, -0.00073499064
      %v7543 = vadd.f32 %v7511, -0.00073499064
      %v7544 = vadd.f32 %v7512, -0.00073499064
      %v7545 = vadd.f32 %v7513, -0.00073499064
      %v7546 = vmul.f32 %v7514, %v7258
      %v7547 = vmul.f32 %v7515, %v7259
      %v7548 = vmul.f32 %v7516, %v7260
      %v7549 = vmul.f32 %v7517, %v7261
      %v7550 = vmul.f32 %v7518, %v7262
      %v7551 = vmul.f32 %v7519, %v7263
      %v7552 = vmul.f32 %v7520, %v7264
      %v7553 = vmul.f32 %v7521, %v7265
      %v7554 = vmul.f32 %v7522, %v7266
      %v7555 = vmul.f32 %v7523, %v7267
      %v7556 = vmul.f32 %v7524, %v7268
      %v7557 = vmul.f32 %v7525, %v7269
      %v7558 = vmul.f32 %v7526, %v7270
      %v7559 = vmul.f32 %v7527, %v7271
      %v7560 = vmul.f32 %v7528, %v7272
      %v7561 = vmul.f32 %v7529, %v7273
      %v7562 = vmul.f32 %v7530, %v7274
      %v7563 = vmul.f32 %v7531, %v7275
      %v7564 = vmul.f32 %v7532, %v7276
      %v7565 = vmul.f32 %v7533, %v7277
      %v7566 = vmul.f32 %v7534, %v7278
      %v7567 = vmul.f32 %v7535, %v7279
      %v7568 = vmul.f32 %v7536, %v7280
      %v7569 = vmul.f32 %v7537, %v7281
      %v7570 = vmul.f32 %v7538, %v7282
      %v7571 = vmul.f32 %v7539, %v7283
      %v7572 = vmul.f32 %v7540, %v7284
      %v7573 = vmul.f32 %v7541, %v7285
      %v7574 = vmul.f32 %v7542, %v7286
      %v7575 = vmul.f32 %v7543, %v7287
      %v7576 = vmul.f32 %v7544, %v7288
      %v7577 = vmul.f32 %v7545, %v7289
      %v7578 = vadd.f32 %v7546, -0.0029546
      %v7579 = vadd.f32 %v7547, -0.0029546
      %v7580 = vadd.f32 %v7548, -0.0029546
      %v7581 = vadd.f32 %v7549, -0.0029546
      %v7582 = vadd.f32 %v7550, -0.0029546
      %v7583 = vadd.f32 %v7551, -0.0029546
      %v7584 = vadd.f32 %v7552, -0.0029546
      %v7585 = vadd.f32 %v7553, -0.0029546
      %v7586 = vadd.f32 %v7554, -0.0029546
      %v7587 = vadd.f32 %v7555, -0.0029546
      %v7588 = vadd.f32 %v7556, -0.0029546
      %v7589 = vadd.f32 %v7557, -0.0029546
      %v7590 = vadd.f32 %v7558, -0.0029546
      %v7591 = vadd.f32 %v7559, -0.0029546
      %v7592 = vadd.f32 %v7560, -0.0029546
      %v7593 = vadd.f32 %v7561, -0.0029546
      %v7594 = vadd.f32 %v7562, -0.0029546
      %v7595 = vadd.f32 %v7563, -0.0029546
      %v7596 = vadd.f32 %v7564, -0.0029546
      %v7597 = vadd.f32 %v7565, -0.0029546
      %v7598 = vadd.f32 %v7566, -0.0029546
      %v7599 = vadd.f32 %v7567, -0.0029546
      %v7600 = vadd.f32 %v7568, -0.0029546
      %v7601 = vadd.f32 %v7569, -0.0029546
      %v7602 = vadd.f32 %v7570, -0.0029546
      %v7603 = vadd.f32 %v7571, -0.0029546
      %v7604 = vadd.f32 %v7572, -0.0029546
      %v7605 = vadd.f32 %v7573, -0.0029546
      %v7606 = vadd.f32 %v7574, -0.0029546
      %v7607 = vadd.f32 %v7575, -0.0029546
      %v7608 = vadd.f32 %v7576, -0.0029546
      %v7609 = vadd.f32 %v7577, -0.0029546
      %v7610 = vmul.f32 %v7578, %v7258
      %v7611 = vmul.f32 %v7579, %v7259
      %v7612 = vmul.f32 %v7580, %v7260
      %v7613 = vmul.f32 %v7581, %v7261
      %v7614 = vmul.f32 %v7582, %v7262
      %v7615 = vmul.f32 %v7583, %v7263
      %v7616 = vmul.f32 %v7584, %v7264
      %v7617 = vmul.f32 %v7585, %v7265
      %v7618 = vmul.f32 %v7586, %v7266
      %v7619 = vmul.f32 %v7587, %v7267
      %v7620 = vmul.f32 %v7588, %v7268
      %v7621 = vmul.f32 %v7589, %v7269
      %v7622 = vmul.f32 %v7590, %v7270
      %v7623 = vmul.f32 %v7591, %v7271
      %v7624 = vmul.f32 %v7592, %v7272
      %v7625 = vmul.f32 %v7593, %v7273
      %v7626 = vmul.f32 %v7594, %v7274
      %v7627 = vmul.f32 %v7595, %v7275
      %v7628 = vmul.f32 %v7596, %v7276
      %v7629 = vmul.f32 %v7597, %v7277
      %v7630 = vmul.f32 %v7598, %v7278
      %v7631 = vmul.f32 %v7599, %v7279
      %v7632 = vmul.f32 %v7600, %v7280
      %v7633 = vmul.f32 %v7601, %v7281
      %v7634 = vmul.f32 %v7602, %v7282
      %v7635 = vmul.f32 %v7603, %v7283
      %v7636 = vmul.f32 %v7604, %v7284
      %v7637 = vmul.f32 %v7605, %v7285
      %v7638 = vmul.f32 %v7606, %v7286
      %v7639 = vmul.f32 %v7607, %v7287
      %v7640 = vmul.f32 %v7608, %v7288
      %v7641 = vmul.f32 %v7609, %v7289
      %v7642 = vadd.f32 %v7610, -0.016096033
      %v7643 = vadd.f32 %v7611, -0.016096033
      %v7644 = vadd.f32 %v7612, -0.016096033
      %v7645 = vadd.f32 %v7613, -0.016096033
      %v7646 = vadd.f32 %v7614, -0.016096033
      %v7647 = vadd.f32 %v7615, -0.016096033
      %v7648 = vadd.f32 %v7616, -0.016096033
      %v7649 = vadd.f32 %v7617, -0.016096033
      %v7650 = vadd.f32 %v7618, -0.016096033
      %v7651 = vadd.f32 %v7619, -0.016096033
      %v7652 = vadd.f32 %v7620, -0.016096033
      %v7653 = vadd.f32 %v7621, -0.016096033
      %v7654 = vadd.f32 %v7622, -0.016096033
      %v7655 = vadd.f32 %v7623, -0.016096033
      %v7656 = vadd.f32 %v7624, -0.016096033
      %v7657 = vadd.f32 %v7625, -0.016096033
      %v7658 = vadd.f32 %v7626, -0.016096033
      %v7659 = vadd.f32 %v7627, -0.016096033
      %v7660 = vadd.f32 %v7628, -0.016096033
      %v7661 = vadd.f32 %v7629, -0.016096033
      %v7662 = vadd.f32 %v7630, -0.016096033
      %v7663 = vadd.f32 %v7631, -0.016096033
      %v7664 = vadd.f32 %v7632, -0.016096033
      %v7665 = vadd.f32 %v7633, -0.016096033
      %v7666 = vadd.f32 %v7634, -0.016096033
      %v7667 = vadd.f32 %v7635, -0.016096033
      %v7668 = vadd.f32 %v7636, -0.016096033
      %v7669 = vadd.f32 %v7637, -0.016096033
      %v7670 = vadd.f32 %v7638, -0.016096033
      %v7671 = vadd.f32 %v7639, -0.016096033
      %v7672 = vadd.f32 %v7640, -0.016096033
      %v7673 = vadd.f32 %v7641, -0.016096033
      %v7674 = vmul.f32 %v7258, -1.45660715e-05
      %v7675 = vmul.f32 %v7259, -1.45660715e-05
      %v7676 = vmul.f32 %v7260, -1.45660715e-05
      %v7677 = vmul.f32 %v7261, -1.45660715e-05
      %v7678 = vmul.f32 %v7262, -1.45660715e-05
      %v7679 = vmul.f32 %v7263, -1.45660715e-05
      %v7680 = vmul.f32 %v7264, -1.45660715e-05
      %v7681 = vmul.f32 %v7265, -1.45660715e-05
      %v7682 = vmul.f32 %v7266, -1.45660715e-05
      %v7683 = vmul.f32 %v7267, -1.45660715e-05
      %v7684 = vmul.f32 %v7268, -1.45660715e-05
      %v7685 = vmul.f32 %v7269, -1.45660715e-05
      %v7686 = vmul.f32 %v7270, -1.45660715e-05
      %v7687 = vmul.f32 %v7271, -1.45660715e-05
      %v7688 = vmul.f32 %v7272, -1.45660715e-05
      %v7689 = vmul.f32 %v7273, -1.45660715e-05
      %v7690 = vmul.f32 %v7274, -1.45660715e-05
      %v7691 = vmul.f32 %v7275, -1.45660715e-05
      %v7692 = vmul.f32 %v7276, -1.45660715e-05
      %v7693 = vmul.f32 %v7277, -1.45660715e-05
      %v7694 = vmul.f32 %v7278, -1.45660715e-05
      %v7695 = vmul.f32 %v7279, -1.45660715e-05
      %v7696 = vmul.f32 %v7280, -1.45660715e-05
      %v7697 = vmul.f32 %v7281, -1.45660715e-05
      %v7698 = vmul.f32 %v7282, -1.45660715e-05
      %v7699 = vmul.f32 %v7283, -1.45660715e-05
      %v7700 = vmul.f32 %v7284, -1.45660715e-05
      %v7701 = vmul.f32 %v7285, -1.45660715e-05
      %v7702 = vmul.f32 %v7286, -1.45660715e-05
      %v7703 = vmul.f32 %v7287, -1.45660715e-05
      %v7704 = vmul.f32 %v7288, -1.45660715e-05
      %v7705 = vmul.f32 %v7289, -1.45660715e-05
      %v7706 = vadd.f32 %v7674, -0.00021337405
      %v7707 = vadd.f32 %v7675, -0.00021337405
      %v7708 = vadd.f32 %v7676, -0.00021337405
      %v7709 = vadd.f32 %v7677, -0.00021337405
      %v7710 = vadd.f32 %v7678, -0.00021337405
      %v7711 = vadd.f32 %v7679, -0.00021337405
      %v7712 = vadd.f32 %v7680, -0.00021337405
      %v7713 = vadd.f32 %v7681, -0.00021337405
      %v7714 = vadd.f32 %v7682, -0.00021337405
      %v7715 = vadd.f32 %v7683, -0.00021337405
      %v7716 = vadd.f32 %v7684, -0.00021337405
      %v7717 = vadd.f32 %v7685, -0.00021337405
      %v7718 = vadd.f32 %v7686, -0.00021337405
      %v7719 = vadd.f32 %v7687, -0.00021337405
      %v7720 = vadd.f32 %v7688, -0.00021337405
      %v7721 = vadd.f32 %v7689, -0.00021337405
      %v7722 = vadd.f32 %v7690, -0.00021337405
      %v7723 = vadd.f32 %v7691, -0.00021337405
      %v7724 = vadd.f32 %v7692, -0.00021337405
      %v7725 = vadd.f32 %v7693, -0.00021337405
      %v7726 = vadd.f32 %v7694, -0.00021337405
      %v7727 = vadd.f32 %v7695, -0.00021337405
      %v7728 = vadd.f32 %v7696, -0.00021337405
      %v7729 = vadd.f32 %v7697, -0.00021337405
      %v7730 = vadd.f32 %v7698, -0.00021337405
      %v7731 = vadd.f32 %v7699, -0.00021337405
      %v7732 = vadd.f32 %v7700, -0.00021337405
      %v7733 = vadd.f32 %v7701, -0.00021337405
      %v7734 = vadd.f32 %v7702, -0.00021337405
      %v7735 = vadd.f32 %v7703, -0.00021337405
      %v7736 = vadd.f32 %v7704, -0.00021337405
      %v7737 = vadd.f32 %v7705, -0.00021337405
      %v7738 = vmul.f32 %v7706, %v7258
      %v7739 = vmul.f32 %v7707, %v7259
      %v7740 = vmul.f32 %v7708, %v7260
      %v7741 = vmul.f32 %v7709, %v7261
      %v7742 = vmul.f32 %v7710, %v7262
      %v7743 = vmul.f32 %v7711, %v7263
      %v7744 = vmul.f32 %v7712, %v7264
      %v7745 = vmul.f32 %v7713, %v7265
      %v7746 = vmul.f32 %v7714, %v7266
      %v7747 = vmul.f32 %v7715, %v7267
      %v7748 = vmul.f32 %v7716, %v7268
      %v7749 = vmul.f32 %v7717, %v7269
      %v7750 = vmul.f32 %v7718, %v7270
      %v7751 = vmul.f32 %v7719, %v7271
      %v7752 = vmul.f32 %v7720, %v7272
      %v7753 = vmul.f32 %v7721, %v7273
      %v7754 = vmul.f32 %v7722, %v7274
      %v7755 = vmul.f32 %v7723, %v7275
      %v7756 = vmul.f32 %v7724, %v7276
      %v7757 = vmul.f32 %v7725, %v7277
      %v7758 = vmul.f32 %v7726, %v7278
      %v7759 = vmul.f32 %v7727, %v7279
      %v7760 = vmul.f32 %v7728, %v7280
      %v7761 = vmul.f32 %v7729, %v7281
      %v7762 = vmul.f32 %v7730, %v7282
      %v7763 = vmul.f32 %v7731, %v7283
      %v7764 = vmul.f32 %v7732, %v7284
      %v7765 = vmul.f32 %v7733, %v7285
      %v7766 = vmul.f32 %v7734, %v7286
      %v7767 = vmul.f32 %v7735, %v7287
      %v7768 = vmul.f32 %v7736, %v7288
      %v7769 = vmul.f32 %v7737, %v7289
      %v7770 = vadd.f32 %v7738, -0.001682827
      %v7771 = vadd.f32 %v7739, -0.001682827
      %v7772 = vadd.f32 %v7740, -0.001682827
      %v7773 = vadd.f32 %v7741, -0.001682827
      %v7774 = vadd.f32 %v7742, -0.001682827
      %v7775 = vadd.f32 %v7743, -0.001682827
      %v7776 = vadd.f32 %v7744, -0.001682827
      %v7777 = vadd.f32 %v7745, -0.001682827
      %v7778 = vadd.f32 %v7746, -0.001682827
      %v7779 = vadd.f32 %v7747, -0.001682827
      %v7780 = vadd.f32 %v7748, -0.001682827
      %v7781 = vadd.f32 %v7749, -0.001682827
      %v7782 = vadd.f32 %v7750, -0.001682827
      %v7783 = vadd.f32 %v7751, -0.001682827
      %v7784 = vadd.f32 %v7752, -0.001682827
      %v7785 = vadd.f32 %v7753, -0.001682827
      %v7786 = vadd.f32 %v7754, -0.001682827
      %v7787 = vadd.f32 %v7755, -0.001682827
      %v7788 = vadd.f32 %v7756, -0.001682827
      %v7789 = vadd.f32 %v7757, -0.001682827
      %v7790 = vadd.f32 %v7758, -0.001682827
      %v7791 = vadd.f32 %v7759, -0.001682827
      %v7792 = vadd.f32 %v7760, -0.001682827
      %v7793 = vadd.f32 %v7761, -0.001682827
      %v7794 = vadd.f32 %v7762, -0.001682827
      %v7795 = vadd.f32 %v7763, -0.001682827
      %v7796 = vadd.f32 %v7764, -0.001682827
      %v7797 = vadd.f32 %v7765, -0.001682827
      %v7798 = vadd.f32 %v7766, -0.001682827
      %v7799 = vadd.f32 %v7767, -0.001682827
      %v7800 = vadd.f32 %v7768, -0.001682827
      %v7801 = vadd.f32 %v7769, -0.001682827
      %v7802 = vmul.f32 %v7770, %v7258
      %v7803 = vmul.f32 %v7771, %v7259
      %v7804 = vmul.f32 %v7772, %v7260
      %v7805 = vmul.f32 %v7773, %v7261
      %v7806 = vmul.f32 %v7774, %v7262
      %v7807 = vmul.f32 %v7775, %v7263
      %v7808 = vmul.f32 %v7776, %v7264
      %v7809 = vmul.f32 %v7777, %v7265
      %v7810 = vmul.f32 %v7778, %v7266
      %v7811 = vmul.f32 %v7779, %v7267
      %v7812 = vmul.f32 %v7780, %v7268
      %v7813 = vmul.f32 %v7781, %v7269
      %v7814 = vmul.f32 %v7782, %v7270
      %v7815 = vmul.f32 %v7783, %v7271
      %v7816 = vmul.f32 %v7784, %v7272
      %v7817 = vmul.f32 %v7785, %v7273
      %v7818 = vmul.f32 %v7786, %v7274
      %v7819 = vmul.f32 %v7787, %v7275
      %v7820 = vmul.f32 %v7788, %v7276
      %v7821 = vmul.f32 %v7789, %v7277
      %v7822 = vmul.f32 %v7790, %v7278
      %v7823 = vmul.f32 %v7791, %v7279
      %v7824 = vmul.f32 %v7792, %v7280
      %v7825 = vmul.f32 %v7793, %v7281
      %v7826 = vmul.f32 %v7794, %v7282
      %v7827 = vmul.f32 %v7795, %v7283
      %v7828 = vmul.f32 %v7796, %v7284
      %v7829 = vmul.f32 %v7797, %v7285
      %v7830 = vmul.f32 %v7798, %v7286
      %v7831 = vmul.f32 %v7799, %v7287
      %v7832 = vmul.f32 %v7800, %v7288
      %v7833 = vmul.f32 %v7801, %v7289
      %v7834 = vadd.f32 %v7802, -0.0073733293
      %v7835 = vadd.f32 %v7803, -0.0073733293
      %v7836 = vadd.f32 %v7804, -0.0073733293
      %v7837 = vadd.f32 %v7805, -0.0073733293
      %v7838 = vadd.f32 %v7806, -0.0073733293
      %v7839 = vadd.f32 %v7807, -0.0073733293
      %v7840 = vadd.f32 %v7808, -0.0073733293
      %v7841 = vadd.f32 %v7809, -0.0073733293
      %v7842 = vadd.f32 %v7810, -0.0073733293
      %v7843 = vadd.f32 %v7811, -0.0073733293
      %v7844 = vadd.f32 %v7812, -0.0073733293
      %v7845 = vadd.f32 %v7813, -0.0073733293
      %v7846 = vadd.f32 %v7814, -0.0073733293
      %v7847 = vadd.f32 %v7815, -0.0073733293
      %v7848 = vadd.f32 %v7816, -0.0073733293
      %v7849 = vadd.f32 %v7817, -0.0073733293
      %v7850 = vadd.f32 %v7818, -0.0073733293
      %v7851 = vadd.f32 %v7819, -0.0073733293
      %v7852 = vadd.f32 %v7820, -0.0073733293
      %v7853 = vadd.f32 %v7821, -0.0073733293
      %v7854 = vadd.f32 %v7822, -0.0073733293
      %v7855 = vadd.f32 %v7823, -0.0073733293
      %v7856 = vadd.f32 %v7824, -0.0073733293
      %v7857 = vadd.f32 %v7825, -0.0073733293
      %v7858 = vadd.f32 %v7826, -0.0073733293
      %v7859 = vadd.f32 %v7827, -0.0073733293
      %v7860 = vadd.f32 %v7828, -0.0073733293
      %v7861 = vadd.f32 %v7829, -0.0073733293
      %v7862 = vadd.f32 %v7830, -0.0073733293
      %v7863 = vadd.f32 %v7831, -0.0073733293
      %v7864 = vadd.f32 %v7832, -0.0073733293
      %v7865 = vadd.f32 %v7833, -0.0073733293
      %v7866 = vmul.f32 %v7834, %v7258
      %v7867 = vmul.f32 %v7835, %v7259
      %v7868 = vmul.f32 %v7836, %v7260
      %v7869 = vmul.f32 %v7837, %v7261
      %v7870 = vmul.f32 %v7838, %v7262
      %v7871 = vmul.f32 %v7839, %v7263
      %v7872 = vmul.f32 %v7840, %v7264
      %v7873 = vmul.f32 %v7841, %v7265
      %v7874 = vmul.f32 %v7842, %v7266
      %v7875 = vmul.f32 %v7843, %v7267
      %v7876 = vmul.f32 %v7844, %v7268
      %v7877 = vmul.f32 %v7845, %v7269
      %v7878 = vmul.f32 %v7846, %v7270
      %v7879 = vmul.f32 %v7847, %v7271
      %v7880 = vmul.f32 %v7848, %v7272
      %v7881 = vmul.f32 %v7849, %v7273
      %v7882 = vmul.f32 %v7850, %v7274
      %v7883 = vmul.f32 %v7851, %v7275
      %v7884 = vmul.f32 %v7852, %v7276
      %v7885 = vmul.f32 %v7853, %v7277
      %v7886 = vmul.f32 %v7854, %v7278
      %v7887 = vmul.f32 %v7855, %v7279
      %v7888 = vmul.f32 %v7856, %v7280
      %v7889 = vmul.f32 %v7857, %v7281
      %v7890 = vmul.f32 %v7858, %v7282
      %v7891 = vmul.f32 %v7859, %v7283
      %v7892 = vmul.f32 %v7860, %v7284
      %v7893 = vmul.f32 %v7861, %v7285
      %v7894 = vmul.f32 %v7862, %v7286
      %v7895 = vmul.f32 %v7863, %v7287
      %v7896 = vmul.f32 %v7864, %v7288
      %v7897 = vmul.f32 %v7865, %v7289
      %v7898 = vadd.f32 %v7866, -0.014264739
      %v7899 = vadd.f32 %v7867, -0.014264739
      %v7900 = vadd.f32 %v7868, -0.014264739
      %v7901 = vadd.f32 %v7869, -0.014264739
      %v7902 = vadd.f32 %v7870, -0.014264739
      %v7903 = vadd.f32 %v7871, -0.014264739
      %v7904 = vadd.f32 %v7872, -0.014264739
      %v7905 = vadd.f32 %v7873, -0.014264739
      %v7906 = vadd.f32 %v7874, -0.014264739
      %v7907 = vadd.f32 %v7875, -0.014264739
      %v7908 = vadd.f32 %v7876, -0.014264739
      %v7909 = vadd.f32 %v7877, -0.014264739
      %v7910 = vadd.f32 %v7878, -0.014264739
      %v7911 = vadd.f32 %v7879, -0.014264739
      %v7912 = vadd.f32 %v7880, -0.014264739
      %v7913 = vadd.f32 %v7881, -0.014264739
      %v7914 = vadd.f32 %v7882, -0.014264739
      %v7915 = vadd.f32 %v7883, -0.014264739
      %v7916 = vadd.f32 %v7884, -0.014264739
      %v7917 = vadd.f32 %v7885, -0.014264739
      %v7918 = vadd.f32 %v7886, -0.014264739
      %v7919 = vadd.f32 %v7887, -0.014264739
      %v7920 = vadd.f32 %v7888, -0.014264739
      %v7921 = vadd.f32 %v7889, -0.014264739
      %v7922 = vadd.f32 %v7890, -0.014264739
      %v7923 = vadd.f32 %v7891, -0.014264739
      %v7924 = vadd.f32 %v7892, -0.014264739
      %v7925 = vadd.f32 %v7893, -0.014264739
      %v7926 = vadd.f32 %v7894, -0.014264739
      %v7927 = vadd.f32 %v7895, -0.014264739
      %v7928 = vadd.f32 %v7896, -0.014264739
      %v7929 = vadd.f32 %v7897, -0.014264739
      %v7930 = vmul.f32 %v7226, %v7642
      %v7931 = vmul.f32 %v7227, %v7643
      %v7932 = vmul.f32 %v7228, %v7644
      %v7933 = vmul.f32 %v7229, %v7645
      %v7934 = vmul.f32 %v7230, %v7646
      %v7935 = vmul.f32 %v7231, %v7647
      %v7936 = vmul.f32 %v7232, %v7648
      %v7937 = vmul.f32 %v7233, %v7649
      %v7938 = vmul.f32 %v7234, %v7650
      %v7939 = vmul.f32 %v7235, %v7651
      %v7940 = vmul.f32 %v7236, %v7652
      %v7941 = vmul.f32 %v7237, %v7653
      %v7942 = vmul.f32 %v7238, %v7654
      %v7943 = vmul.f32 %v7239, %v7655
      %v7944 = vmul.f32 %v7240, %v7656
      %v7945 = vmul.f32 %v7241, %v7657
      %v7946 = vmul.f32 %v7242, %v7658
      %v7947 = vmul.f32 %v7243, %v7659
      %v7948 = vmul.f32 %v7244, %v7660
      %v7949 = vmul.f32 %v7245, %v7661
      %v7950 = vmul.f32 %v7246, %v7662
      %v7951 = vmul.f32 %v7247, %v7663
      %v7952 = vmul.f32 %v7248, %v7664
      %v7953 = vmul.f32 %v7249, %v7665
      %v7954 = vmul.f32 %v7250, %v7666
      %v7955 = vmul.f32 %v7251, %v7667
      %v7956 = vmul.f32 %v7252, %v7668
      %v7957 = vmul.f32 %v7253, %v7669
      %v7958 = vmul.f32 %v7254, %v7670
      %v7959 = vmul.f32 %v7255, %v7671
      %v7960 = vmul.f32 %v7256, %v7672
      %v7961 = vmul.f32 %v7257, %v7673
      %v7962 = vrcp.pop %v7898
      %v7963 = vrcp.pop %v7899
      %v7964 = vrcp.pop %v7900
      %v7965 = vrcp.pop %v7901
      %v7966 = vrcp.pop %v7902
      %v7967 = vrcp.pop %v7903
      %v7968 = vrcp.pop %v7904
      %v7969 = vrcp.pop %v7905
      %v7970 = vrcp.pop %v7906
      %v7971 = vrcp.pop %v7907
      %v7972 = vrcp.pop %v7908
      %v7973 = vrcp.pop %v7909
      %v7974 = vrcp.pop %v7910
      %v7975 = vrcp.pop %v7911
      %v7976 = vrcp.pop %v7912
      %v7977 = vrcp.pop %v7913
      %v7978 = vrcp.pop %v7914
      %v7979 = vrcp.pop %v7915
      %v7980 = vrcp.pop %v7916
      %v7981 = vrcp.pop %v7917
      %v7982 = vrcp.pop %v7918
      %v7983 = vrcp.pop %v7919
      %v7984 = vrcp.pop %v7920
      %v7985 = vrcp.pop %v7921
      %v7986 = vrcp.pop %v7922
      %v7987 = vrcp.pop %v7923
      %v7988 = vrcp.pop %v7924
      %v7989 = vrcp.pop %v7925
      %v7990 = vrcp.pop %v7926
      %v7991 = vrcp.pop %v7927
      %v7992 = vrcp.pop %v7928
      %v7993 = vrcp.pop %v7929
      %v7994 = vmul.f32 %v7898, %v7962
      %v7995 = vmul.f32 %v7899, %v7963
      %v7996 = vmul.f32 %v7900, %v7964
      %v7997 = vmul.f32 %v7901, %v7965
      %v7998 = vmul.f32 %v7902, %v7966
      %v7999 = vmul.f32 %v7903, %v7967
      %v8000 = vmul.f32 %v7904, %v7968
      %v8001 = vmul.f32 %v7905, %v7969
      %v8002 = vmul.f32 %v7906, %v7970
      %v8003 = vmul.f32 %v7907, %v7971
      %v8004 = vmul.f32 %v7908, %v7972
      %v8005 = vmul.f32 %v7909, %v7973
      %v8006 = vmul.f32 %v7910, %v7974
      %v8007 = vmul.f32 %v7911, %v7975
      %v8008 = vmul.f32 %v7912, %v7976
      %v8009 = vmul.f32 %v7913, %v7977
      %v8010 = vmul.f32 %v7914, %v7978
      %v8011 = vmul.f32 %v7915, %v7979
      %v8012 = vmul.f32 %v7916, %v7980
      %v8013 = vmul.f32 %v7917, %v7981
      %v8014 = vmul.f32 %v7918, %v7982
      %v8015 = vmul.f32 %v7919, %v7983
      %v8016 = vmul.f32 %v7920, %v7984
      %v8017 = vmul.f32 %v7921, %v7985
      %v8018 = vmul.f32 %v7922, %v7986
      %v8019 = vmul.f32 %v7923, %v7987
      %v8020 = vmul.f32 %v7924, %v7988
      %v8021 = vmul.f32 %v7925, %v7989
      %v8022 = vmul.f32 %v7926, %v7990
      %v8023 = vmul.f32 %v7927, %v7991
      %v8024 = vmul.f32 %v7928, %v7992
      %v8025 = vmul.f32 %v7929, %v7993
      %v8026 = vsub.f32 2.0, %v7994
      %v8027 = vsub.f32 2.0, %v7995
      %v8028 = vsub.f32 2.0, %v7996
      %v8029 = vsub.f32 2.0, %v7997
      %v8030 = vsub.f32 2.0, %v7998
      %v8031 = vsub.f32 2.0, %v7999
      %v8032 = vsub.f32 2.0, %v8000
      %v8033 = vsub.f32 2.0, %v8001
      %v8034 = vsub.f32 2.0, %v8002
      %v8035 = vsub.f32 2.0, %v8003
      %v8036 = vsub.f32 2.0, %v8004
      %v8037 = vsub.f32 2.0, %v8005
      %v8038 = vsub.f32 2.0, %v8006
      %v8039 = vsub.f32 2.0, %v8007
      %v8040 = vsub.f32 2.0, %v8008
      %v8041 = vsub.f32 2.0, %v8009
      %v8042 = vsub.f32 2.0, %v8010
      %v8043 = vsub.f32 2.0, %v8011
      %v8044 = vsub.f32 2.0, %v8012
      %v8045 = vsub.f32 2.0, %v8013
      %v8046 = vsub.f32 2.0, %v8014
      %v8047 = vsub.f32 2.0, %v8015
      %v8048 = vsub.f32 2.0, %v8016
      %v8049 = vsub.f32 2.0, %v8017
      %v8050 = vsub.f32 2.0, %v8018
      %v8051 = vsub.f32 2.0, %v8019
      %v8052 = vsub.f32 2.0, %v8020
      %v8053 = vsub.f32 2.0, %v8021
      %v8054 = vsub.f32 2.0, %v8022
      %v8055 = vsub.f32 2.0, %v8023
      %v8056 = vsub.f32 2.0, %v8024
      %v8057 = vsub.f32 2.0, %v8025
      %v8058 = vmul.f32 %v7962, %v8026
      %v8059 = vmul.f32 %v7963, %v8027
      %v8060 = vmul.f32 %v7964, %v8028
      %v8061 = vmul.f32 %v7965, %v8029
      %v8062 = vmul.f32 %v7966, %v8030
      %v8063 = vmul.f32 %v7967, %v8031
      %v8064 = vmul.f32 %v7968, %v8032
      %v8065 = vmul.f32 %v7969, %v8033
      %v8066 = vmul.f32 %v7970, %v8034
      %v8067 = vmul.f32 %v7971, %v8035
      %v8068 = vmul.f32 %v7972, %v8036
      %v8069 = vmul.f32 %v7973, %v8037
      %v8070 = vmul.f32 %v7974, %v8038
      %v8071 = vmul.f32 %v7975, %v8039
      %v8072 = vmul.f32 %v7976, %v8040
      %v8073 = vmul.f32 %v7977, %v8041
      %v8074 = vmul.f32 %v7978, %v8042
      %v8075 = vmul.f32 %v7979, %v8043
      %v8076 = vmul.f32 %v7980, %v8044
      %v8077 = vmul.f32 %v7981, %v8045
      %v8078 = vmul.f32 %v7982, %v8046
      %v8079 = vmul.f32 %v7983, %v8047
      %v8080 = vmul.f32 %v7984, %v8048
      %v8081 = vmul.f32 %v7985, %v8049
      %v8082 = vmul.f32 %v7986, %v8050
      %v8083 = vmul.f32 %v7987, %v8051
      %v8084 = vmul.f32 %v7988, %v8052
      %v8085 = vmul.f32 %v7989, %v8053
      %v8086 = vmul.f32 %v7990, %v8054
      %v8087 = vmul.f32 %v7991, %v8055
      %v8088 = vmul.f32 %v7992, %v8056
      %v8089 = vmul.f32 %v7993, %v8057
      %v8090 = vmul.f32 %v7930, %v8058
      %v8091 = vmul.f32 %v7931, %v8059
      %v8092 = vmul.f32 %v7932, %v8060
      %v8093 = vmul.f32 %v7933, %v8061
      %v8094 = vmul.f32 %v7934, %v8062
      %v8095 = vmul.f32 %v7935, %v8063
      %v8096 = vmul.f32 %v7936, %v8064
      %v8097 = vmul.f32 %v7937, %v8065
      %v8098 = vmul.f32 %v7938, %v8066
      %v8099 = vmul.f32 %v7939, %v8067
      %v8100 = vmul.f32 %v7940, %v8068
      %v8101 = vmul.f32 %v7941, %v8069
      %v8102 = vmul.f32 %v7942, %v8070
      %v8103 = vmul.f32 %v7943, %v8071
      %v8104 = vmul.f32 %v7944, %v8072
      %v8105 = vmul.f32 %v7945, %v8073
      %v8106 = vmul.f32 %v7946, %v8074
      %v8107 = vmul.f32 %v7947, %v8075
      %v8108 = vmul.f32 %v7948, %v8076
      %v8109 = vmul.f32 %v7949, %v8077
      %v8110 = vmul.f32 %v7950, %v8078
      %v8111 = vmul.f32 %v7951, %v8079
      %v8112 = vmul.f32 %v7952, %v8080
      %v8113 = vmul.f32 %v7953, %v8081
      %v8114 = vmul.f32 %v7954, %v8082
      %v8115 = vmul.f32 %v7955, %v8083
      %v8116 = vmul.f32 %v7956, %v8084
      %v8117 = vmul.f32 %v7957, %v8085
      %v8118 = vmul.f32 %v7958, %v8086
      %v8119 = vmul.f32 %v7959, %v8087
      %v8120 = vmul.f32 %v7960, %v8088
      %v8121 = vmul.f32 %v7961, %v8089
      %v8122 = vadd.f32 %v8090, 1.0
      %v8123 = vadd.f32 %v8091, 1.0
      %v8124 = vadd.f32 %v8092, 1.0
      %v8125 = vadd.f32 %v8093, 1.0
      %v8126 = vadd.f32 %v8094, 1.0
      %v8127 = vadd.f32 %v8095, 1.0
      %v8128 = vadd.f32 %v8096, 1.0
      %v8129 = vadd.f32 %v8097, 1.0
      %v8130 = vadd.f32 %v8098, 1.0
      %v8131 = vadd.f32 %v8099, 1.0
      %v8132 = vadd.f32 %v8100, 1.0
      %v8133 = vadd.f32 %v8101, 1.0
      %v8134 = vadd.f32 %v8102, 1.0
      %v8135 = vadd.f32 %v8103, 1.0
      %v8136 = vadd.f32 %v8104, 1.0
      %v8137 = vadd.f32 %v8105, 1.0
      %v8138 = vadd.f32 %v8106, 1.0
      %v8139 = vadd.f32 %v8107, 1.0
      %v8140 = vadd.f32 %v8108, 1.0
      %v8141 = vadd.f32 %v8109, 1.0
      %v8142 = vadd.f32 %v8110, 1.0
      %v8143 = vadd.f32 %v8111, 1.0
      %v8144 = vadd.f32 %v8112, 1.0
      %v8145 = vadd.f32 %v8113, 1.0
      %v8146 = vadd.f32 %v8114, 1.0
      %v8147 = vadd.f32 %v8115, 1.0
      %v8148 = vadd.f32 %v8116, 1.0
      %v8149 = vadd.f32 %v8117, 1.0
      %v8150 = vadd.f32 %v8118, 1.0
      %v8151 = vadd.f32 %v8119, 1.0
      %v8152 = vadd.f32 %v8120, 1.0
      %v8153 = vadd.f32 %v8121, 1.0
      %v8154 = vmul.f32 %v7130, %v8122
      %v8155 = vmul.f32 %v7131, %v8123
      %v8156 = vmul.f32 %v7132, %v8124
      %v8157 = vmul.f32 %v7133, %v8125
      %v8158 = vmul.f32 %v7134, %v8126
      %v8159 = vmul.f32 %v7135, %v8127
      %v8160 = vmul.f32 %v7136, %v8128
      %v8161 = vmul.f32 %v7137, %v8129
      %v8162 = vmul.f32 %v7138, %v8130
      %v8163 = vmul.f32 %v7139, %v8131
      %v8164 = vmul.f32 %v7140, %v8132
      %v8165 = vmul.f32 %v7141, %v8133
      %v8166 = vmul.f32 %v7142, %v8134
      %v8167 = vmul.f32 %v7143, %v8135
      %v8168 = vmul.f32 %v7144, %v8136
      %v8169 = vmul.f32 %v7145, %v8137
      %v8170 = vmul.f32 %v7146, %v8138
      %v8171 = vmul.f32 %v7147, %v8139
      %v8172 = vmul.f32 %v7148, %v8140
      %v8173 = vmul.f32 %v7149, %v8141
      %v8174 = vmul.f32 %v7150, %v8142
      %v8175 = vmul.f32 %v7151, %v8143
      %v8176 = vmul.f32 %v7152, %v8144
      %v8177 = vmul.f32 %v7153, %v8145
      %v8178 = vmul.f32 %v7154, %v8146
      %v8179 = vmul.f32 %v7155, %v8147
      %v8180 = vmul.f32 %v7156, %v8148
      %v8181 = vmul.f32 %v7157, %v8149
      %v8182 = vmul.f32 %v7158, %v8150
      %v8183 = vmul.f32 %v7159, %v8151
      %v8184 = vmul.f32 %v7160, %v8152
      %v8185 = vmul.f32 %v7161, %v8153
      %v8186 = vld [vmem:[%s4] sm:$0xff]
      %v8187 = vld [vmem:[%s4 + $0x8] sm:$0xff]
      %v8188 = vld [vmem:[%s4 + $0x10] sm:$0xff]
      %v8189 = vld [vmem:[%s4 + $0x18] sm:$0xff]
      %v8190 = vld [vmem:[%s4 + $0x20] sm:$0xff]
      %v8191 = vld [vmem:[%s4 + $0x28] sm:$0xff]
      %v8192 = vld [vmem:[%s4 + $0x30] sm:$0xff]
      %v8193 = vld [vmem:[%s4 + $0x38] sm:$0xff]
      %v8194 = vld [vmem:[%s4 + $0x40] sm:$0xff]
      %v8195 = vld [vmem:[%s4 + $0x48] sm:$0xff]
      %v8196 = vld [vmem:[%s4 + $0x50] sm:$0xff]
      %v8197 = vld [vmem:[%s4 + $0x58] sm:$0xff]
      %v8198 = vld [vmem:[%s4 + $0x60] sm:$0xff]
      %v8199 = vld [vmem:[%s4 + $0x68] sm:$0xff]
      %v8200 = vld [vmem:[%s4 + $0x70] sm:$0xff]
      %v8201 = vld [vmem:[%s4 + $0x78] sm:$0xff]
      %v8202 = vld [vmem:[%s5] sm:$0x1]
      %v8204 = vlaneseq
      %v8205 = vshrl.u32 %v8204, 7
      %v8206 = vsub.s32 0, %v8205
      %v8207 = vrot.slane %v8202, %v8206
      %8209 = vmatprep.subr.mxu0 0.0
      %8210 = vmatpush1.msra.mxu0 %v8186
      %8211 = vmatprep.subr.mxu0 0.0
      %8212 = vmatpush1.msra.mxu0 %v8187
      %8213 = vmatprep.subr.mxu0 0.0
      %8214 = vmatpush1.msra.mxu0 %v8188
      %8215 = vmatprep.subr.mxu0 0.0
      %8216 = vmatpush1.msra.mxu0 %v8189
      %8217 = vmatprep.subr.mxu0 0.0
      %8218 = vmatpush1.msra.mxu0 %v8190
      %8219 = vmatprep.subr.mxu0 0.0
      %8220 = vmatpush1.msra.mxu0 %v8191
      %8221 = vmatprep.subr.mxu0 0.0
      %8222 = vmatpush1.msra.mxu0 %v8192
      %8223 = vmatprep.subr.mxu0 0.0
      %8224 = vmatpush1.msra.mxu0 %v8193
      %8225 = vmatprep.subr.mxu0 0.0
      %8226 = vmatpush1.msra.mxu0 %v8194
      %8227 = vmatprep.subr.mxu0 0.0
      %8228 = vmatpush1.msra.mxu0 %v8195
      %8229 = vmatprep.subr.mxu0 0.0
      %8230 = vmatpush1.msra.mxu0 %v8196
      %8231 = vmatprep.subr.mxu0 0.0
      %8232 = vmatpush1.msra.mxu0 %v8197
      %8233 = vmatprep.subr.mxu0 0.0
      %8234 = vmatpush1.msra.mxu0 %v8198
      %8235 = vmatprep.subr.mxu0 0.0
      %8236 = vmatpush1.msra.mxu0 %v8199
      %8237 = vmatprep.subr.mxu0 0.0
      %8238 = vmatpush1.msra.mxu0 %v8200
      %8239 = vmatprep.subr.mxu0 0.0
      %8240 = vmatpush1.msra.mxu0 %v8201
      %8241 = vmatprep.subr.mxu0 0.0
      %8242 = vmatpush1.msra.mxu0 0.0
      %8243 = vmatprep.subr.mxu0 0.0
      %8244 = vmatpush1.msra.mxu0 0.0
      %8245 = vmatprep.subr.mxu0 0.0
      %8246 = vmatpush1.msra.mxu0 0.0
      %8247 = vmatprep.subr.mxu0 0.0
      %8248 = vmatpush1.msra.mxu0 0.0
      %8249 = vmatprep.subr.mxu0 0.0
      %8250 = vmatpush1.msra.mxu0 0.0
      %8251 = vmatprep.subr.mxu0 0.0
      %8252 = vmatpush1.msra.mxu0 0.0
      %8253 = vmatprep.subr.mxu0 0.0
      %8254 = vmatpush1.msra.mxu0 0.0
      %8255 = vmatprep.subr.mxu0 0.0
      %8256 = vmatpush1.msra.mxu0 0.0
      %8257 = vmatprep.subr.mxu0 0.0
      %8258 = vmatpush1.msra.mxu0 0.0
      %8259 = vmatprep.subr.mxu0 0.0
      %8260 = vmatpush1.msra.mxu0 0.0
      %8261 = vmatprep.subr.mxu0 0.0
      %8262 = vmatpush1.msra.mxu0 0.0
      %8263 = vmatprep.subr.mxu0 0.0
      %8264 = vmatpush1.msra.mxu0 0.0
      %8265 = vmatprep.subr.mxu0 0.0
      %8266 = vmatpush1.msra.mxu0 0.0
      %8267 = vmatprep.subr.mxu0 0.0
      %8268 = vmatpush1.msra.mxu0 0.0
      %8269 = vmatprep.subr.mxu0 0.0
      %8270 = vmatpush1.msra.mxu0 0.0
      %8271 = vmatprep.subr.mxu0 0.0
      %8272 = vmatpush1.msra.mxu0 0.0
      %8273 = vmatprep.mubr.f32.mxu0 0.0
      %8274 = vmatmul.mubr.f32.gmra.mrb[0].mxu0 %v8154
      %v8275 = vpop.f32.mrb[0].mxu0
      %v8276 = vadd.f32 %v8207, %v8275
      %v8277 = vpop.f32.mrb[0].mxu0
      %8278 = vmatprep.mubr.f32.mxu0 0.0
      %8279 = vmatmul.mubr.f32.gmra.mrb[0].mxu0 %v8155
      %v8280 = vpop.f32.mrb[0].mxu0
      %v8281 = vadd.f32 %v8207, %v8280
      %v8282 = vpop.f32.mrb[0].mxu0
      %8283 = vmatprep.mubr.f32.mxu0 0.0
      %8284 = vmatmul.mubr.f32.gmra.mrb[0].mxu0 %v8156
      %v8285 = vpop.f32.mrb[0].mxu0
      %v8286 = vadd.f32 %v8207, %v8285
      %v8287 = vpop.f32.mrb[0].mxu0
      %8288 = vmatprep.mubr.f32.mxu0 0.0
      %8289 = vmatmul.mubr.f32.gmra.mrb[0].mxu0 %v8157
      %v8290 = vpop.f32.mrb[0].mxu0
      %v8291 = vadd.f32 %v8207, %v8290
      %v8292 = vpop.f32.mrb[0].mxu0
      %8293 = vmatprep.mubr.f32.mxu0 0.0
      %8294 = vmatmul.mubr.f32.gmra.mrb[0].mxu0 %v8158
      %v8295 = vpop.f32.mrb[0].mxu0
      %v8296 = vadd.f32 %v8207, %v8295
      %v8297 = vpop.f32.mrb[0].mxu0
      %8298 = vmatprep.mubr.f32.mxu0 0.0
      %8299 = vmatmul.mubr.f32.gmra.mrb[0].mxu0 %v8159
      %v8300 = vpop.f32.mrb[0].mxu0
      %v8301 = vadd.f32 %v8207, %v8300
      %v8302 = vpop.f32.mrb[0].mxu0
      %8303 = vmatprep.mubr.f32.mxu0 0.0
      %8304 = vmatmul.mubr.f32.gmra.mrb[0].mxu0 %v8160
      %v8305 = vpop.f32.mrb[0].mxu0
      %v8306 = vadd.f32 %v8207, %v8305
      %v8307 = vpop.f32.mrb[0].mxu0
      %8308 = vmatprep.mubr.f32.mxu0 0.0
      %8309 = vmatmul.mubr.f32.gmra.mrb[0].mxu0 %v8161
      %v8310 = vpop.f32.mrb[0].mxu0
      %v8311 = vadd.f32 %v8207, %v8310
      %v8312 = vpop.f32.mrb[0].mxu0
      %8313 = vmatprep.mubr.f32.mxu0 0.0
      %8314 = vmatmul.mubr.f32.gmra.mrb[0].mxu0 %v8162
      %v8315 = vpop.f32.mrb[0].mxu0
      %v8316 = vadd.f32 %v8207, %v8315
      %v8317 = vpop.f32.mrb[0].mxu0
      %8318 = vmatprep.mubr.f32.mxu0 0.0
      %8319 = vmatmul.mubr.f32.gmra.mrb[0].mxu0 %v8163
      %v8320 = vpop.f32.mrb[0].mxu0
      %v8321 = vadd.f32 %v8207, %v8320
      %v8322 = vpop.f32.mrb[0].mxu0
      %8323 = vmatprep.mubr.f32.mxu0 0.0
      %8324 = vmatmul.mubr.f32.gmra.mrb[0].mxu0 %v8164
      %v8325 = vpop.f32.mrb[0].mxu0
      %v8326 = vadd.f32 %v8207, %v8325
      %v8327 = vpop.f32.mrb[0].mxu0
      %8328 = vmatprep.mubr.f32.mxu0 0.0
      %8329 = vmatmul.mubr.f32.gmra.mrb[0].mxu0 %v8165
      %v8330 = vpop.f32.mrb[0].mxu0
      %v8331 = vadd.f32 %v8207, %v8330
      %v8332 = vpop.f32.mrb[0].mxu0
      %8333 = vmatprep.mubr.f32.mxu0 0.0
      %8334 = vmatmul.mubr.f32.gmra.mrb[0].mxu0 %v8166
      %v8335 = vpop.f32.mrb[0].mxu0
      %v8336 = vadd.f32 %v8207, %v8335
      %v8337 = vpop.f32.mrb[0].mxu0
      %8338 = vmatprep.mubr.f32.mxu0 0.0
      %8339 = vmatmul.mubr.f32.gmra.mrb[0].mxu0 %v8167
      %v8340 = vpop.f32.mrb[0].mxu0
      %v8341 = vadd.f32 %v8207, %v8340
      %v8342 = vpop.f32.mrb[0].mxu0
      %8343 = vmatprep.mubr.f32.mxu0 0.0
      %8344 = vmatmul.mubr.f32.gmra.mrb[0].mxu0 %v8168
      %v8345 = vpop.f32.mrb[0].mxu0
      %v8346 = vadd.f32 %v8207, %v8345
      %v8347 = vpop.f32.mrb[0].mxu0
      %8348 = vmatprep.mubr.f32.mxu0 0.0
      %8349 = vmatmul.mubr.f32.gmra.mrb[0].mxu0 %v8169
      %v8350 = vpop.f32.mrb[0].mxu0
      %v8351 = vadd.f32 %v8207, %v8350
      %v8352 = vpop.f32.mrb[0].mxu0
      %8353 = vmatprep.mubr.f32.mxu0 0.0
      %8354 = vmatmul.mubr.f32.gmra.mrb[0].mxu0 %v8170
      %v8355 = vpop.f32.mrb[0].mxu0
      %v8356 = vadd.f32 %v8207, %v8355
      %v8357 = vpop.f32.mrb[0].mxu0
      %8358 = vmatprep.mubr.f32.mxu0 0.0
      %8359 = vmatmul.mubr.f32.gmra.mrb[0].mxu0 %v8171
      %v8360 = vpop.f32.mrb[0].mxu0
      %v8361 = vadd.f32 %v8207, %v8360
      %v8362 = vpop.f32.mrb[0].mxu0
      %8363 = vmatprep.mubr.f32.mxu0 0.0
      %8364 = vmatmul.mubr.f32.gmra.mrb[0].mxu0 %v8172
      %v8365 = vpop.f32.mrb[0].mxu0
      %v8366 = vadd.f32 %v8207, %v8365
      %v8367 = vpop.f32.mrb[0].mxu0
      %8368 = vmatprep.mubr.f32.mxu0 0.0
      %8369 = vmatmul.mubr.f32.gmra.mrb[0].mxu0 %v8173
      %v8370 = vpop.f32.mrb[0].mxu0
      %v8371 = vadd.f32 %v8207, %v8370
      %v8372 = vpop.f32.mrb[0].mxu0
      %8373 = vmatprep.mubr.f32.mxu0 0.0
      %8374 = vmatmul.mubr.f32.gmra.mrb[0].mxu0 %v8174
      %v8375 = vpop.f32.mrb[0].mxu0
      %v8376 = vadd.f32 %v8207, %v8375
      %v8377 = vpop.f32.mrb[0].mxu0
      %8378 = vmatprep.mubr.f32.mxu0 0.0
      %8379 = vmatmul.mubr.f32.gmra.mrb[0].mxu0 %v8175
      %v8380 = vpop.f32.mrb[0].mxu0
      %v8381 = vadd.f32 %v8207, %v8380
      %v8382 = vpop.f32.mrb[0].mxu0
      %8383 = vmatprep.mubr.f32.mxu0 0.0
      %8384 = vmatmul.mubr.f32.gmra.mrb[0].mxu0 %v8176
      %v8385 = vpop.f32.mrb[0].mxu0
      %v8386 = vadd.f32 %v8207, %v8385
      %v8387 = vpop.f32.mrb[0].mxu0
      %8388 = vmatprep.mubr.f32.mxu0 0.0
      %8389 = vmatmul.mubr.f32.gmra.mrb[0].mxu0 %v8177
      %v8390 = vpop.f32.mrb[0].mxu0
      %v8391 = vadd.f32 %v8207, %v8390
      %v8392 = vpop.f32.mrb[0].mxu0
      %8393 = vmatprep.mubr.f32.mxu0 0.0
      %8394 = vmatmul.mubr.f32.gmra.mrb[0].mxu0 %v8178
      %v8395 = vpop.f32.mrb[0].mxu0
      %v8396 = vadd.f32 %v8207, %v8395
      %v8397 = vpop.f32.mrb[0].mxu0
      %8398 = vmatprep.mubr.f32.mxu0 0.0
      %8399 = vmatmul.mubr.f32.gmra.mrb[0].mxu0 %v8179
      %v8400 = vpop.f32.mrb[0].mxu0
      %v8401 = vadd.f32 %v8207, %v8400
      %v8402 = vpop.f32.mrb[0].mxu0
      %8403 = vmatprep.mubr.f32.mxu0 0.0
      %8404 = vmatmul.mubr.f32.gmra.mrb[0].mxu0 %v8180
      %v8405 = vpop.f32.mrb[0].mxu0
      %v8406 = vadd.f32 %v8207, %v8405
      %v8407 = vpop.f32.mrb[0].mxu0
      %8408 = vmatprep.mubr.f32.mxu0 0.0
      %8409 = vmatmul.mubr.f32.gmra.mrb[0].mxu0 %v8181
      %v8410 = vpop.f32.mrb[0].mxu0
      %v8411 = vadd.f32 %v8207, %v8410
      %v8412 = vpop.f32.mrb[0].mxu0
      %8413 = vmatprep.mubr.f32.mxu0 0.0
      %8414 = vmatmul.mubr.f32.gmra.mrb[0].mxu0 %v8182
      %v8415 = vpop.f32.mrb[0].mxu0
      %v8416 = vadd.f32 %v8207, %v8415
      %v8417 = vpop.f32.mrb[0].mxu0
      %8418 = vmatprep.mubr.f32.mxu0 0.0
      %8419 = vmatmul.mubr.f32.gmra.mrb[0].mxu0 %v8183
      %v8420 = vpop.f32.mrb[0].mxu0
      %v8421 = vadd.f32 %v8207, %v8420
      %v8422 = vpop.f32.mrb[0].mxu0
      %8423 = vmatprep.mubr.f32.mxu0 0.0
      %8424 = vmatmul.mubr.f32.gmra.mrb[0].mxu0 %v8184
      %v8425 = vpop.f32.mrb[0].mxu0
      %v8426 = vadd.f32 %v8207, %v8425
      %v8427 = vpop.f32.mrb[0].mxu0
      %8428 = vmatprep.mubr.f32.mxu0 0.0
      %8429 = vmatmul.mubr.f32.gmra.mrb[0].mxu0 %v8185
      %v8430 = vpop.f32.mrb[0].mxu0
      %v8431 = vadd.f32 %v8207, %v8430
      %v8432 = vpop.f32.mrb[0].mxu0
      %8433 = vdwg.mxu0
      %8434 = vst.msk [vmem:[%s253] sm:$0xff] %vm294, %v8276
      %8435 = vst.msk [vmem:[%s253 + $0x8] sm:$0xff] %vm294, %v8281
      %8436 = vst.msk [vmem:[%s253 + $0x10] sm:$0xff] %vm294, %v8286
      %8437 = vst.msk [vmem:[%s253 + $0x18] sm:$0xff] %vm294, %v8291
      %8438 = vst.msk [vmem:[%s253 + $0x20] sm:$0xff] %vm294, %v8296
      %8439 = vst.msk [vmem:[%s253 + $0x28] sm:$0xff] %vm294, %v8301
      %8440 = vst.msk [vmem:[%s253 + $0x30] sm:$0xff] %vm294, %v8306
      %8441 = vst.msk [vmem:[%s253 + $0x38] sm:$0xff] %vm294, %v8311
      %8442 = vst.msk [vmem:[%s253 + $0x40] sm:$0xff] %vm294, %v8316
      %8443 = vst.msk [vmem:[%s253 + $0x48] sm:$0xff] %vm294, %v8321
      %8444 = vst.msk [vmem:[%s253 + $0x50] sm:$0xff] %vm294, %v8326
      %8445 = vst.msk [vmem:[%s253 + $0x58] sm:$0xff] %vm294, %v8331
      %8446 = vst.msk [vmem:[%s253 + $0x60] sm:$0xff] %vm294, %v8336
      %8447 = vst.msk [vmem:[%s253 + $0x68] sm:$0xff] %vm294, %v8341
      %8448 = vst.msk [vmem:[%s253 + $0x70] sm:$0xff] %vm294, %v8346
      %8449 = vst.msk [vmem:[%s253 + $0x78] sm:$0xff] %vm294, %v8351
      %8450 = vst.msk [vmem:[%s253 + $0x80] sm:$0xff] %vm294, %v8356
      %8451 = vst.msk [vmem:[%s253 + $0x88] sm:$0xff] %vm294, %v8361
      %8452 = vst.msk [vmem:[%s253 + $0x90] sm:$0xff] %vm294, %v8366
      %8453 = vst.msk [vmem:[%s253 + $0x98] sm:$0xff] %vm294, %v8371
      %8454 = vst.msk [vmem:[%s253 + $0xa0] sm:$0xff] %vm294, %v8376
      %8455 = vst.msk [vmem:[%s253 + $0xa8] sm:$0xff] %vm294, %v8381
      %8456 = vst.msk [vmem:[%s253 + $0xb0] sm:$0xff] %vm294, %v8386
      %8457 = vst.msk [vmem:[%s253 + $0xb8] sm:$0xff] %vm294, %v8391
      %8458 = vst.msk [vmem:[%s253 + $0xc0] sm:$0xff] %vm294, %v8396
      %8459 = vst.msk [vmem:[%s253 + $0xc8] sm:$0xff] %vm294, %v8401
      %8460 = vst.msk [vmem:[%s253 + $0xd0] sm:$0xff] %vm294, %v8406
      %8461 = vst.msk [vmem:[%s253 + $0xd8] sm:$0xff] %vm294, %v8411
      %8462 = vst.msk [vmem:[%s253 + $0xe0] sm:$0xff] %vm294, %v8416
      %8463 = vst.msk [vmem:[%s253 + $0xe8] sm:$0xff] %vm294, %v8421
      %8464 = vst.msk [vmem:[%s253 + $0xf0] sm:$0xff] %vm294, %v8426
      %8465 = vst.msk [vmem:[%s253 + $0xf8] sm:$0xff] %vm294, %v8431
      %s8466 = smul.u32 32, %s17
      %p8467 = scmp.lt.s32.totalorder %s8466, 63
      %s8468 = scalar_select %p8467, %s8466, 63
      %s8469 = smul.addr %s8468, 8
      %s8470 = scalar_lea.vmem %s6, %s8469
      // Predicated region
      $region45: #{tpu_custom_call.1} parent=43 // pred_check
        %p8471 = pneg %p166
      $region46: #{tpu_custom_call.1} parent=43 // pred_check_branch
        %8473 = sbr.rel (%p8471) target = $region48
      $region47: #{tpu_custom_call.1} parent=43 // pred_region
        %s8474 = smul.u32 32, %s17
      $region48: #{tpu_custom_call.1} parent=43 // pred_fallthru
        _
    $region44: #{tpu_custom_call.1} parent=5 // pred_fallthru
      _
    %p8475 = scmp.le.s32.totalorder 2, %s12
    // Predicated region
    $region49: #{tpu_custom_call.1} parent=5 // pred_check
      %p8476 = pneg %p8475
    $region50: #{tpu_custom_call.1} parent=5 // pred_check_branch
      %8478 = sbr.rel (%p8476) target = $region52
    $region51: #{tpu_custom_call.1} parent=5 // pred_region
      %s8479 = ssub.s32 %s12, 2
      // Predicated region
      $region53: #{tpu_custom_call.1} parent=51 // pred_check
        %p8480 = pneg %p172
      $region54: #{tpu_custom_call.1} parent=51 // pred_check_branch
        %8482 = sbr.rel (%p8480) target = $region56
      $region55: #{tpu_custom_call.1} parent=51 // pred_region
        %s8483 = smul.u32 32, %s18
        %p8484 = scmp.lt.s32.totalorder %s8483, 63
        %s8485 = scalar_select %p8484, %s8483, 63
        %s8486 = smul.addr %s8485, 8
        %s8487 = scalar_lea.vmem %s6, %s8486
      $region56: #{tpu_custom_call.1} parent=51 // pred_fallthru
        _
    $region52: #{tpu_custom_call.1} parent=5 // pred_fallthru
      _
  $region6: #{tpu_custom_call.1} parent=0 // loop_footer
    %s16 = sadd.s32 1, %s12
  $region7: #{tpu_custom_call.1} parent=0 // loop_footer_branch
    %11 = sbr.rel target = $region3
  $region8: #{tpu_custom_call.1} parent=0 // loop_exit
    _

</llo_original>
